<compile_context>
chip_gen: v6e
topology: v6e:2x2x1
jax: 0.10.0
libtpu: 0.0.40
codegen_flags: <defaults>
</compile_context>

<pallas_src>
import functools

import jax
import jax.numpy as jnp
import numpy as np
from jax.experimental import pallas as pl
from jax.experimental.pallas import tpu as pltpu


# ---------------------------------------------------------------------------
# Fused kernel: 2 BasicBlocks (4 convs) -> global average pool -> fc
# ---------------------------------------------------------------------------
def resnet_f_fused_kernel(x_ref, s_ref, w_ref, fcw_ref, fcb_ref, o_ref):
    """One grid step = one batch element; all intermediates stay in VMEM/vregs.

    x_ref  : (1, H*W, C)    f32   flattened NHWC activation (residual stream)
    s_ref  : (9, H*W, H*W)  bf16  0/1 shift operators, tap t = ky*3 + kx
                                  (zero rows implement the conv zero-padding)
    w_ref  : (L=4, 9, C, C) bf16  BN-folded conv weights, w[layer, t, cin, cout]
    fcw_ref: (C, NC)        bf16
    fcb_ref: (1, NC)        f32
    o_ref  : (1, 1, NC)     f32   logits
    """
    hw, c = x_ref.shape[1], x_ref.shape[2]
    n_layers = w_ref.shape[0]

    def conv3x3_relu(x_f32, layer):
        """relu(3x3 conv, stride 1, pad 1) on the flat (H*W, C) stream.

        Each tap: out += (S_t @ x) @ W_t   -- two small bf16 MXU matmuls with
        f32 accumulation; S_t is a 0/1 selection matrix so S_t @ x is exact.
        """
        x_bf = x_f32.astype(jnp.bfloat16)
        acc = jnp.zeros((hw, c), jnp.float32)
        for t in range(9):
            if t == 4:                      # center tap: shift op is identity
                shifted = x_bf
            else:
                shifted = jnp.dot(
                    s_ref[t], x_bf,
                    preferred_element_type=jnp.float32).astype(jnp.bfloat16)
            acc = acc + jnp.dot(shifted, w_ref[layer, t],
                                preferred_element_type=jnp.float32)
        return jnp.maximum(acc, 0.0)

    x = x_ref[0].astype(jnp.float32)                 # (H*W, C) residual stream
    for blk in range(n_layers // 2):
        h = conv3x3_relu(x, 2 * blk)                 # ConvBlock1: conv+BN+ReLU
        # BasicBlock: out = activate(conv2(conv1(x))) + shortcut
        x = conv3x3_relu(h, 2 * blk + 1) + x

    # Global average pool + fc fused in the tail (pool and fc commute).
    t = jnp.dot(x.astype(jnp.bfloat16), fcw_ref[...],
                preferred_element_type=jnp.float32)  # (H*W, NC)
    logits = jnp.mean(t, axis=0, keepdims=True) + fcb_ref[...]
    o_ref[0] = logits.astype(o_ref.dtype)


# ---------------------------------------------------------------------------
# Constant 0/1 shift operators (built once at trace time with numpy)
# ---------------------------------------------------------------------------
def _make_shift_operators(H, W):
    hw = H * W
    S = np.zeros((9, hw, hw), np.float32)
    for ky in range(3):
        for kx in range(3):
            t = ky * 3 + kx
            dy, dx = ky - 1, kx - 1
            for y in range(H):
                for x in range(W):
                    ys, xs = y + dy, x + dx
                    if 0 <= ys < H and 0 <= xs < W:
                        S[t, y * W + x, ys * W + xs] = 1.0
    return S


# ---------------------------------------------------------------------------
# Wrapper around the single pallas_call
# ---------------------------------------------------------------------------
def resnet_f_forward(x_nchw, params):
    x = jnp.transpose(x_nchw, (0, 2, 3, 1))          # NCHW -> NHWC
    B, H, W, C = x.shape
    hw = H * W
    x_flat = x.reshape(B, hw, C).astype(jnp.float32)

    shift = jnp.asarray(_make_shift_operators(H, W), jnp.bfloat16)
    conv_w = params["conv_w"]                        # (4, 9, C, C) bf16
    fc_w = params["fc_w"]                            # (C, NC)      bf16
    fc_b = params["fc_b"]                            # (1, NC)      f32
    nc = fc_w.shape[-1]

    logits = pl.pallas_call(
        resnet_f_fused_kernel,
        out_shape=jax.ShapeDtypeStruct((B, 1, nc), jnp.float32),
        grid=(B,),
        in_specs=[
            pl.BlockSpec((1, hw, C), lambda b: (b, 0, 0)),
            pl.BlockSpec(shift.shape, lambda b: (0, 0, 0)),      # resident
            pl.BlockSpec(conv_w.shape, lambda b: (0, 0, 0, 0)),  # resident
            pl.BlockSpec(fc_w.shape, lambda b: (0, 0)),
            pl.BlockSpec(fc_b.shape, lambda b: (0, 0)),
        ],
        out_specs=pl.BlockSpec((1, 1, nc), lambda b: (b, 0, 0)),
        compiler_params=pltpu.CompilerParams(
            dimension_semantics=("parallel",)),      # dual-TC on v7x
    )(x_flat, shift, conv_w, fc_w, fc_b)
    return logits.reshape(B, nc)


# ---------------------------------------------------------------------------
# Parameters (deterministic init matching the module's shapes / init scheme)
# ---------------------------------------------------------------------------
def init_params(key, channels=64, num_classes=10, num_blocks=2):
    bn_scale = 1.0 / np.sqrt(1.0 + 1e-5)          # eval-mode BN folded in
    fan_out = channels * 3 * 3
    conv_std = np.sqrt(2.0 / fan_out)             # kaiming_normal, fan_out
    key, kc = jax.random.split(key)
    conv_w = (jax.random.normal(kc, (2 * num_blocks, 9, channels, channels),
                                jnp.float32) * conv_std * bn_scale
              ).astype(jnp.bfloat16)              # [layer, tap(ky*3+kx), cin, cout]
    key, kw, kb = jax.random.split(key, 3)
    bound = 1.0 / np.sqrt(channels)               # torch nn.Linear default init
    fc_w = jax.random.uniform(kw, (channels, num_classes), jnp.float32,
                              minval=-bound, maxval=bound).astype(jnp.bfloat16)
    fc_b = jax.random.uniform(kb, (1, num_classes), jnp.float32,
                              minval=-bound, maxval=bound)
    return {"conv_w": conv_w, "fc_w": fc_w, "fc_b": fc_b}


# ---------------------------------------------------------------------------
# Pure-JAX reference (mirrors the kernel's bf16-operand / f32-accumulate math)
# ---------------------------------------------------------------------------
def ref_forward(x_nchw, params):
    x = jnp.transpose(x_nchw, (0, 2, 3, 1)).astype(jnp.float32)
    conv_w = params["conv_w"].astype(jnp.float32)          # bf16 values in f32
    n_layers, _, C, _ = conv_w.shape

    def conv3x3(v, w9):
        w = w9.reshape(3, 3, C, C)                         # [ky, kx, cin, cout]
        v = v.astype(jnp.bfloat16).astype(jnp.float32)     # mirror bf16 operands
        return jax.lax.conv_general_dilated(
            v, w, window_strides=(1, 1), padding="SAME",
            dimension_numbers=("NHWC", "HWIO", "NHWC"))

    for blk in range(n_layers // 2):
        h = jnp.maximum(conv3x3(x, conv_w[2 * blk]), 0.0)
        x = jnp.maximum(conv3x3(h, conv_w[2 * blk + 1]), 0.0) + x

    xb = x.astype(jnp.bfloat16).astype(jnp.float32)
    t = jnp.einsum("bhwc,cn->bhwn", xb, params["fc_w"].astype(jnp.float32))
    return jnp.mean(t, axis=(1, 2)) + params["fc_b"]


if __name__ == "__main__":
    key = jax.random.PRNGKey(0)
    kp, kx = jax.random.split(key)

    # Input to ResNet_F (cifar, depth=32, ver2=False) is the group2 output:
    # 64 channels, 8x8 spatial for a 32x32 CIFAR image.  Small batch of 2.
    B, C, H, W = 2, 64, 8, 8
    x = jax.random.normal(kx, (B, C, H, W), jnp.float32)   # NCHW like PyTorch

    params = init_params(kp, channels=C, num_classes=10, num_blocks=2)

    fwd = jax.jit(functools.partial(resnet_f_forward, params=params))
    out = jax.block_until_ready(fwd(x))

    assert out.shape == (B, 10) and out.dtype == jnp.float32
    assert bool(jnp.all(jnp.isfinite(out)))

    ref = ref_forward(x, params)
    assert bool(jnp.allclose(out, ref, rtol=1e-2, atol=1e-2)), (out, ref)
    print("KERNEL_OK")
</pallas_src>

<mosaic_0001>
module attributes {stable_mosaic.version = 11 : i64} {
  func.func @resnet_f_fused_kernel(%arg0: i32, %arg1: memref<1x64x64xf32, #tpu.memory_space<vmem>>, %arg2: memref<9x64x64xbf16, #tpu.memory_space<vmem>>, %arg3: memref<4x9x64x64xbf16, #tpu.memory_space<vmem>>, %arg4: memref<64x10xbf16, #tpu.memory_space<vmem>>, %arg5: memref<1x10xf32, #tpu.memory_space<vmem>>, %arg6: memref<1x1x10xf32, #tpu.memory_space<vmem>>) attributes {dimension_semantics = [#tpu.dimension_semantics<parallel>], iteration_bounds = array<i64: 2>, scalar_prefetch = 0 : i64, scratch_operands = 0 : i64, tpu.core_type = #tpu.core_type<tc>, window_params = [{transform_indices = @transform_0, window_bounds = array<i64: 1, 64, 64>}, {pipeline_mode = #tpu.pipeline_mode<synchronous>, transform_indices = @transform_1, window_bounds = array<i64: 9, 64, 64>}, {pipeline_mode = #tpu.pipeline_mode<synchronous>, transform_indices = @transform_2, window_bounds = array<i64: 4, 9, 64, 64>}, {pipeline_mode = #tpu.pipeline_mode<synchronous>, transform_indices = @transform_3, window_bounds = array<i64: 64, 10>}, {pipeline_mode = #tpu.pipeline_mode<synchronous>, transform_indices = @transform_4, window_bounds = array<i64: 1, 10>}, {transform_indices = @transform_5, window_bounds = array<i64: 1, 1, 10>}]} {
    %c0 = arith.constant 0 : index
    %c0_0 = arith.constant 0 : index
    %c0_1 = arith.constant 0 : index
    %0 = vector.load %arg1[%c0, %c0_0, %c0_1] : memref<1x64x64xf32, #tpu.memory_space<vmem>>, vector<1x64x64xf32>
    %1 = vector.shape_cast %0 : vector<1x64x64xf32> to vector<64x64xf32>
    %2 = arith.truncf %1 : vector<64x64xf32> to vector<64x64xbf16>
    %cst = arith.constant 0.000000e+00 : f32
    %3 = vector.broadcast %cst : f32 to vector<64x64xf32>
    %c0_2 = arith.constant 0 : index
    %c0_3 = arith.constant 0 : index
    %c0_4 = arith.constant 0 : index
    %4 = vector.load %arg2[%c0_2, %c0_3, %c0_4] : memref<9x64x64xbf16, #tpu.memory_space<vmem>>, vector<1x64x64xbf16>
    %5 = vector.shape_cast %4 : vector<1x64x64xbf16> to vector<64x64xbf16>
    %cst_5 = arith.constant dense<0.000000e+00> : vector<64x64xf32>
    %6 = tpu.matmul %5, %2, %cst_5 {dimension_numbers = #tpu.dot_dimension_numbers<[1], [0], [0], [1], [0, 0, 1, 1], [], []>} : vector<64x64xbf16>, vector<64x64xbf16>, vector<64x64xf32> -> vector<64x64xf32>
    %7 = arith.truncf %6 : vector<64x64xf32> to vector<64x64xbf16>
    %c0_6 = arith.constant 0 : index
    %c0_7 = arith.constant 0 : index
    %c0_8 = arith.constant 0 : index
    %c0_9 = arith.constant 0 : index
    %8 = vector.load %arg3[%c0_6, %c0_7, %c0_8, %c0_9] : memref<4x9x64x64xbf16, #tpu.memory_space<vmem>>, vector<1x1x64x64xbf16>
    %9 = vector.shape_cast %8 : vector<1x1x64x64xbf16> to vector<64x64xbf16>
    %cst_10 = arith.constant dense<0.000000e+00> : vector<64x64xf32>
    %10 = tpu.matmul %7, %9, %cst_10 {dimension_numbers = #tpu.dot_dimension_numbers<[1], [0], [0], [1], [0, 0, 1, 1], [], []>} : vector<64x64xbf16>, vector<64x64xbf16>, vector<64x64xf32> -> vector<64x64xf32>
    %11 = arith.addf %3, %10 : vector<64x64xf32>
    %c1 = arith.constant 1 : index
    %c0_11 = arith.constant 0 : index
    %c0_12 = arith.constant 0 : index
    %12 = vector.load %arg2[%c1, %c0_11, %c0_12] : memref<9x64x64xbf16, #tpu.memory_space<vmem>>, vector<1x64x64xbf16>
    %13 = vector.shape_cast %12 : vector<1x64x64xbf16> to vector<64x64xbf16>
    %cst_13 = arith.constant dense<0.000000e+00> : vector<64x64xf32>
    %14 = tpu.matmul %13, %2, %cst_13 {dimension_numbers = #tpu.dot_dimension_numbers<[1], [0], [0], [1], [0, 0, 1, 1], [], []>} : vector<64x64xbf16>, vector<64x64xbf16>, vector<64x64xf32> -> vector<64x64xf32>
    %15 = arith.truncf %14 : vector<64x64xf32> to vector<64x64xbf16>
    %c0_14 = arith.constant 0 : index
    %c1_15 = arith.constant 1 : index
    %c0_16 = arith.constant 0 : index
    %c0_17 = arith.constant 0 : index
    %16 = vector.load %arg3[%c0_14, %c1_15, %c0_16, %c0_17] : memref<4x9x64x64xbf16, #tpu.memory_space<vmem>>, vector<1x1x64x64xbf16>
    %17 = vector.shape_cast %16 : vector<1x1x64x64xbf16> to vector<64x64xbf16>
    %cst_18 = arith.constant dense<0.000000e+00> : vector<64x64xf32>
    %18 = tpu.matmul %15, %17, %cst_18 {dimension_numbers = #tpu.dot_dimension_numbers<[1], [0], [0], [1], [0, 0, 1, 1], [], []>} : vector<64x64xbf16>, vector<64x64xbf16>, vector<64x64xf32> -> vector<64x64xf32>
    %19 = arith.addf %11, %18 : vector<64x64xf32>
    %c2 = arith.constant 2 : index
    %c0_19 = arith.constant 0 : index
    %c0_20 = arith.constant 0 : index
    %20 = vector.load %arg2[%c2, %c0_19, %c0_20] : memref<9x64x64xbf16, #tpu.memory_space<vmem>>, vector<1x64x64xbf16>
    %21 = vector.shape_cast %20 : vector<1x64x64xbf16> to vector<64x64xbf16>
    %cst_21 = arith.constant dense<0.000000e+00> : vector<64x64xf32>
    %22 = tpu.matmul %21, %2, %cst_21 {dimension_numbers = #tpu.dot_dimension_numbers<[1], [0], [0], [1], [0, 0, 1, 1], [], []>} : vector<64x64xbf16>, vector<64x64xbf16>, vector<64x64xf32> -> vector<64x64xf32>
    %23 = arith.truncf %22 : vector<64x64xf32> to vector<64x64xbf16>
    %c0_22 = arith.constant 0 : index
    %c2_23 = arith.constant 2 : index
    %c0_24 = arith.constant 0 : index
    %c0_25 = arith.constant 0 : index
    %24 = vector.load %arg3[%c0_22, %c2_23, %c0_24, %c0_25] : memref<4x9x64x64xbf16, #tpu.memory_space<vmem>>, vector<1x1x64x64xbf16>
    %25 = vector.shape_cast %24 : vector<1x1x64x64xbf16> to vector<64x64xbf16>
    %cst_26 = arith.constant dense<0.000000e+00> : vector<64x64xf32>
    %26 = tpu.matmul %23, %25, %cst_26 {dimension_numbers = #tpu.dot_dimension_numbers<[1], [0], [0], [1], [0, 0, 1, 1], [], []>} : vector<64x64xbf16>, vector<64x64xbf16>, vector<64x64xf32> -> vector<64x64xf32>
    %27 = arith.addf %19, %26 : vector<64x64xf32>
    %c3 = arith.constant 3 : index
    %c0_27 = arith.constant 0 : index
    %c0_28 = arith.constant 0 : index
    %28 = vector.load %arg2[%c3, %c0_27, %c0_28] : memref<9x64x64xbf16, #tpu.memory_space<vmem>>, vector<1x64x64xbf16>
    %29 = vector.shape_cast %28 : vector<1x64x64xbf16> to vector<64x64xbf16>
    %cst_29 = arith.constant dense<0.000000e+00> : vector<64x64xf32>
    %30 = tpu.matmul %29, %2, %cst_29 {dimension_numbers = #tpu.dot_dimension_numbers<[1], [0], [0], [1], [0, 0, 1, 1], [], []>} : vector<64x64xbf16>, vector<64x64xbf16>, vector<64x64xf32> -> vector<64x64xf32>
    %31 = arith.truncf %30 : vector<64x64xf32> to vector<64x64xbf16>
    %c0_30 = arith.constant 0 : index
    %c3_31 = arith.constant 3 : index
    %c0_32 = arith.constant 0 : index
    %c0_33 = arith.constant 0 : index
    %32 = vector.load %arg3[%c0_30, %c3_31, %c0_32, %c0_33] : memref<4x9x64x64xbf16, #tpu.memory_space<vmem>>, vector<1x1x64x64xbf16>
    %33 = vector.shape_cast %32 : vector<1x1x64x64xbf16> to vector<64x64xbf16>
    %cst_34 = arith.constant dense<0.000000e+00> : vector<64x64xf32>
    %34 = tpu.matmul %31, %33, %cst_34 {dimension_numbers = #tpu.dot_dimension_numbers<[1], [0], [0], [1], [0, 0, 1, 1], [], []>} : vector<64x64xbf16>, vector<64x64xbf16>, vector<64x64xf32> -> vector<64x64xf32>
    %35 = arith.addf %27, %34 : vector<64x64xf32>
    %c0_35 = arith.constant 0 : index
    %c4 = arith.constant 4 : index
    %c0_36 = arith.constant 0 : index
    %c0_37 = arith.constant 0 : index
    %36 = vector.load %arg3[%c0_35, %c4, %c0_36, %c0_37] : memref<4x9x64x64xbf16, #tpu.memory_space<vmem>>, vector<1x1x64x64xbf16>
    %37 = vector.shape_cast %36 : vector<1x1x64x64xbf16> to vector<64x64xbf16>
    %cst_38 = arith.constant dense<0.000000e+00> : vector<64x64xf32>
    %38 = tpu.matmul %2, %37, %cst_38 {dimension_numbers = #tpu.dot_dimension_numbers<[1], [0], [0], [1], [0, 0, 1, 1], [], []>} : vector<64x64xbf16>, vector<64x64xbf16>, vector<64x64xf32> -> vector<64x64xf32>
    %39 = arith.addf %35, %38 : vector<64x64xf32>
    %c5 = arith.constant 5 : index
    %c0_39 = arith.constant 0 : index
    %c0_40 = arith.constant 0 : index
    %40 = vector.load %arg2[%c5, %c0_39, %c0_40] : memref<9x64x64xbf16, #tpu.memory_space<vmem>>, vector<1x64x64xbf16>
    %41 = vector.shape_cast %40 : vector<1x64x64xbf16> to vector<64x64xbf16>
    %cst_41 = arith.constant dense<0.000000e+00> : vector<64x64xf32>
    %42 = tpu.matmul %41, %2, %cst_41 {dimension_numbers = #tpu.dot_dimension_numbers<[1], [0], [0], [1], [0, 0, 1, 1], [], []>} : vector<64x64xbf16>, vector<64x64xbf16>, vector<64x64xf32> -> vector<64x64xf32>
    %43 = arith.truncf %42 : vector<64x64xf32> to vector<64x64xbf16>
    %c0_42 = arith.constant 0 : index
    %c5_43 = arith.constant 5 : index
    %c0_44 = arith.constant 0 : index
    %c0_45 = arith.constant 0 : index
    %44 = vector.load %arg3[%c0_42, %c5_43, %c0_44, %c0_45] : memref<4x9x64x64xbf16, #tpu.memory_space<vmem>>, vector<1x1x64x64xbf16>
    %45 = vector.shape_cast %44 : vector<1x1x64x64xbf16> to vector<64x64xbf16>
    %cst_46 = arith.constant dense<0.000000e+00> : vector<64x64xf32>
    %46 = tpu.matmul %43, %45, %cst_46 {dimension_numbers = #tpu.dot_dimension_numbers<[1], [0], [0], [1], [0, 0, 1, 1], [], []>} : vector<64x64xbf16>, vector<64x64xbf16>, vector<64x64xf32> -> vector<64x64xf32>
    %47 = arith.addf %39, %46 : vector<64x64xf32>
    %c6 = arith.constant 6 : index
    %c0_47 = arith.constant 0 : index
    %c0_48 = arith.constant 0 : index
    %48 = vector.load %arg2[%c6, %c0_47, %c0_48] : memref<9x64x64xbf16, #tpu.memory_space<vmem>>, vector<1x64x64xbf16>
    %49 = vector.shape_cast %48 : vector<1x64x64xbf16> to vector<64x64xbf16>
    %cst_49 = arith.constant dense<0.000000e+00> : vector<64x64xf32>
    %50 = tpu.matmul %49, %2, %cst_49 {dimension_numbers = #tpu.dot_dimension_numbers<[1], [0], [0], [1], [0, 0, 1, 1], [], []>} : vector<64x64xbf16>, vector<64x64xbf16>, vector<64x64xf32> -> vector<64x64xf32>
    %51 = arith.truncf %50 : vector<64x64xf32> to vector<64x64xbf16>
    %c0_50 = arith.constant 0 : index
    %c6_51 = arith.constant 6 : index
    %c0_52 = arith.constant 0 : index
    %c0_53 = arith.constant 0 : index
    %52 = vector.load %arg3[%c0_50, %c6_51, %c0_52, %c0_53] : memref<4x9x64x64xbf16, #tpu.memory_space<vmem>>, vector<1x1x64x64xbf16>
    %53 = vector.shape_cast %52 : vector<1x1x64x64xbf16> to vector<64x64xbf16>
    %cst_54 = arith.constant dense<0.000000e+00> : vector<64x64xf32>
    %54 = tpu.matmul %51, %53, %cst_54 {dimension_numbers = #tpu.dot_dimension_numbers<[1], [0], [0], [1], [0, 0, 1, 1], [], []>} : vector<64x64xbf16>, vector<64x64xbf16>, vector<64x64xf32> -> vector<64x64xf32>
    %55 = arith.addf %47, %54 : vector<64x64xf32>
    %c7 = arith.constant 7 : index
    %c0_55 = arith.constant 0 : index
    %c0_56 = arith.constant 0 : index
    %56 = vector.load %arg2[%c7, %c0_55, %c0_56] : memref<9x64x64xbf16, #tpu.memory_space<vmem>>, vector<1x64x64xbf16>
    %57 = vector.shape_cast %56 : vector<1x64x64xbf16> to vector<64x64xbf16>
    %cst_57 = arith.constant dense<0.000000e+00> : vector<64x64xf32>
    %58 = tpu.matmul %57, %2, %cst_57 {dimension_numbers = #tpu.dot_dimension_numbers<[1], [0], [0], [1], [0, 0, 1, 1], [], []>} : vector<64x64xbf16>, vector<64x64xbf16>, vector<64x64xf32> -> vector<64x64xf32>
    %59 = arith.truncf %58 : vector<64x64xf32> to vector<64x64xbf16>
    %c0_58 = arith.constant 0 : index
    %c7_59 = arith.constant 7 : index
    %c0_60 = arith.constant 0 : index
    %c0_61 = arith.constant 0 : index
    %60 = vector.load %arg3[%c0_58, %c7_59, %c0_60, %c0_61] : memref<4x9x64x64xbf16, #tpu.memory_space<vmem>>, vector<1x1x64x64xbf16>
    %61 = vector.shape_cast %60 : vector<1x1x64x64xbf16> to vector<64x64xbf16>
    %cst_62 = arith.constant dense<0.000000e+00> : vector<64x64xf32>
    %62 = tpu.matmul %59, %61, %cst_62 {dimension_numbers = #tpu.dot_dimension_numbers<[1], [0], [0], [1], [0, 0, 1, 1], [], []>} : vector<64x64xbf16>, vector<64x64xbf16>, vector<64x64xf32> -> vector<64x64xf32>
    %63 = arith.addf %55, %62 : vector<64x64xf32>
    %c8 = arith.constant 8 : index
    %c0_63 = arith.constant 0 : index
    %c0_64 = arith.constant 0 : index
    %64 = vector.load %arg2[%c8, %c0_63, %c0_64] : memref<9x64x64xbf16, #tpu.memory_space<vmem>>, vector<1x64x64xbf16>
    %65 = vector.shape_cast %64 : vector<1x64x64xbf16> to vector<64x64xbf16>
    %cst_65 = arith.constant dense<0.000000e+00> : vector<64x64xf32>
    %66 = tpu.matmul %65, %2, %cst_65 {dimension_numbers = #tpu.dot_dimension_numbers<[1], [0], [0], [1], [0, 0, 1, 1], [], []>} : vector<64x64xbf16>, vector<64x64xbf16>, vector<64x64xf32> -> vector<64x64xf32>
    %67 = arith.truncf %66 : vector<64x64xf32> to vector<64x64xbf16>
    %c0_66 = arith.constant 0 : index
    %c8_67 = arith.constant 8 : index
    %c0_68 = arith.constant 0 : index
    %c0_69 = arith.constant 0 : index
    %68 = vector.load %arg3[%c0_66, %c8_67, %c0_68, %c0_69] : memref<4x9x64x64xbf16, #tpu.memory_space<vmem>>, vector<1x1x64x64xbf16>
    %69 = vector.shape_cast %68 : vector<1x1x64x64xbf16> to vector<64x64xbf16>
    %cst_70 = arith.constant dense<0.000000e+00> : vector<64x64xf32>
    %70 = tpu.matmul %67, %69, %cst_70 {dimension_numbers = #tpu.dot_dimension_numbers<[1], [0], [0], [1], [0, 0, 1, 1], [], []>} : vector<64x64xbf16>, vector<64x64xbf16>, vector<64x64xf32> -> vector<64x64xf32>
    %71 = arith.addf %63, %70 : vector<64x64xf32>
    %cst_71 = arith.constant 0.000000e+00 : f32
    %72 = vector.broadcast %cst_71 : f32 to vector<64x64xf32>
    %73 = arith.maximumf %71, %72 : vector<64x64xf32>
    %74 = arith.truncf %73 : vector<64x64xf32> to vector<64x64xbf16>
    %cst_72 = arith.constant 0.000000e+00 : f32
    %75 = vector.broadcast %cst_72 : f32 to vector<64x64xf32>
    %c0_73 = arith.constant 0 : index
    %c0_74 = arith.constant 0 : index
    %c0_75 = arith.constant 0 : index
    %76 = vector.load %arg2[%c0_73, %c0_74, %c0_75] : memref<9x64x64xbf16, #tpu.memory_space<vmem>>, vector<1x64x64xbf16>
    %77 = vector.shape_cast %76 : vector<1x64x64xbf16> to vector<64x64xbf16>
    %cst_76 = arith.constant dense<0.000000e+00> : vector<64x64xf32>
    %78 = tpu.matmul %77, %74, %cst_76 {dimension_numbers = #tpu.dot_dimension_numbers<[1], [0], [0], [1], [0, 0, 1, 1], [], []>} : vector<64x64xbf16>, vector<64x64xbf16>, vector<64x64xf32> -> vector<64x64xf32>
    %79 = arith.truncf %78 : vector<64x64xf32> to vector<64x64xbf16>
    %c1_77 = arith.constant 1 : index
    %c0_78 = arith.constant 0 : index
    %c0_79 = arith.constant 0 : index
    %c0_80 = arith.constant 0 : index
    %80 = vector.load %arg3[%c1_77, %c0_78, %c0_79, %c0_80] : memref<4x9x64x64xbf16, #tpu.memory_space<vmem>>, vector<1x1x64x64xbf16>
    %81 = vector.shape_cast %80 : vector<1x1x64x64xbf16> to vector<64x64xbf16>
    %cst_81 = arith.constant dense<0.000000e+00> : vector<64x64xf32>
    %82 = tpu.matmul %79, %81, %cst_81 {dimension_numbers = #tpu.dot_dimension_numbers<[1], [0], [0], [1], [0, 0, 1, 1], [], []>} : vector<64x64xbf16>, vector<64x64xbf16>, vector<64x64xf32> -> vector<64x64xf32>
    %83 = arith.addf %75, %82 : vector<64x64xf32>
    %c1_82 = arith.constant 1 : index
    %c0_83 = arith.constant 0 : index
    %c0_84 = arith.constant 0 : index
    %84 = vector.load %arg2[%c1_82, %c0_83, %c0_84] : memref<9x64x64xbf16, #tpu.memory_space<vmem>>, vector<1x64x64xbf16>
    %85 = vector.shape_cast %84 : vector<1x64x64xbf16> to vector<64x64xbf16>
    %cst_85 = arith.constant dense<0.000000e+00> : vector<64x64xf32>
    %86 = tpu.matmul %85, %74, %cst_85 {dimension_numbers = #tpu.dot_dimension_numbers<[1], [0], [0], [1], [0, 0, 1, 1], [], []>} : vector<64x64xbf16>, vector<64x64xbf16>, vector<64x64xf32> -> vector<64x64xf32>
    %87 = arith.truncf %86 : vector<64x64xf32> to vector<64x64xbf16>
    %c1_86 = arith.constant 1 : index
    %c1_87 = arith.constant 1 : index
    %c0_88 = arith.constant 0 : index
    %c0_89 = arith.constant 0 : index
    %88 = vector.load %arg3[%c1_86, %c1_87, %c0_88, %c0_89] : memref<4x9x64x64xbf16, #tpu.memory_space<vmem>>, vector<1x1x64x64xbf16>
    %89 = vector.shape_cast %88 : vector<1x1x64x64xbf16> to vector<64x64xbf16>
    %cst_90 = arith.constant dense<0.000000e+00> : vector<64x64xf32>
    %90 = tpu.matmul %87, %89, %cst_90 {dimension_numbers = #tpu.dot_dimension_numbers<[1], [0], [0], [1], [0, 0, 1, 1], [], []>} : vector<64x64xbf16>, vector<64x64xbf16>, vector<64x64xf32> -> vector<64x64xf32>
    %91 = arith.addf %83, %90 : vector<64x64xf32>
    %c2_91 = arith.constant 2 : index
    %c0_92 = arith.constant 0 : index
    %c0_93 = arith.constant 0 : index
    %92 = vector.load %arg2[%c2_91, %c0_92, %c0_93] : memref<9x64x64xbf16, #tpu.memory_space<vmem>>, vector<1x64x64xbf16>
    %93 = vector.shape_cast %92 : vector<1x64x64xbf16> to vector<64x64xbf16>
    %cst_94 = arith.constant dense<0.000000e+00> : vector<64x64xf32>
    %94 = tpu.matmul %93, %74, %cst_94 {dimension_numbers = #tpu.dot_dimension_numbers<[1], [0], [0], [1], [0, 0, 1, 1], [], []>} : vector<64x64xbf16>, vector<64x64xbf16>, vector<64x64xf32> -> vector<64x64xf32>
    %95 = arith.truncf %94 : vector<64x64xf32> to vector<64x64xbf16>
    %c1_95 = arith.constant 1 : index
    %c2_96 = arith.constant 2 : index
    %c0_97 = arith.constant 0 : index
    %c0_98 = arith.constant 0 : index
    %96 = vector.load %arg3[%c1_95, %c2_96, %c0_97, %c0_98] : memref<4x9x64x64xbf16, #tpu.memory_space<vmem>>, vector<1x1x64x64xbf16>
    %97 = vector.shape_cast %96 : vector<1x1x64x64xbf16> to vector<64x64xbf16>
    %cst_99 = arith.constant dense<0.000000e+00> : vector<64x64xf32>
    %98 = tpu.matmul %95, %97, %cst_99 {dimension_numbers = #tpu.dot_dimension_numbers<[1], [0], [0], [1], [0, 0, 1, 1], [], []>} : vector<64x64xbf16>, vector<64x64xbf16>, vector<64x64xf32> -> vector<64x64xf32>
    %99 = arith.addf %91, %98 : vector<64x64xf32>
    %c3_100 = arith.constant 3 : index
    %c0_101 = arith.constant 0 : index
    %c0_102 = arith.constant 0 : index
    %100 = vector.load %arg2[%c3_100, %c0_101, %c0_102] : memref<9x64x64xbf16, #tpu.memory_space<vmem>>, vector<1x64x64xbf16>
    %101 = vector.shape_cast %100 : vector<1x64x64xbf16> to vector<64x64xbf16>
    %cst_103 = arith.constant dense<0.000000e+00> : vector<64x64xf32>
    %102 = tpu.matmul %101, %74, %cst_103 {dimension_numbers = #tpu.dot_dimension_numbers<[1], [0], [0], [1], [0, 0, 1, 1], [], []>} : vector<64x64xbf16>, vector<64x64xbf16>, vector<64x64xf32> -> vector<64x64xf32>
    %103 = arith.truncf %102 : vector<64x64xf32> to vector<64x64xbf16>
    %c1_104 = arith.constant 1 : index
    %c3_105 = arith.constant 3 : index
    %c0_106 = arith.constant 0 : index
    %c0_107 = arith.constant 0 : index
    %104 = vector.load %arg3[%c1_104, %c3_105, %c0_106, %c0_107] : memref<4x9x64x64xbf16, #tpu.memory_space<vmem>>, vector<1x1x64x64xbf16>
    %105 = vector.shape_cast %104 : vector<1x1x64x64xbf16> to vector<64x64xbf16>
    %cst_108 = arith.constant dense<0.000000e+00> : vector<64x64xf32>
    %106 = tpu.matmul %103, %105, %cst_108 {dimension_numbers = #tpu.dot_dimension_numbers<[1], [0], [0], [1], [0, 0, 1, 1], [], []>} : vector<64x64xbf16>, vector<64x64xbf16>, vector<64x64xf32> -> vector<64x64xf32>
    %107 = arith.addf %99, %106 : vector<64x64xf32>
    %c1_109 = arith.constant 1 : index
    %c4_110 = arith.constant 4 : index
    %c0_111 = arith.constant 0 : index
    %c0_112 = arith.constant 0 : index
    %108 = vector.load %arg3[%c1_109, %c4_110, %c0_111, %c0_112] : memref<4x9x64x64xbf16, #tpu.memory_space<vmem>>, vector<1x1x64x64xbf16>
    %109 = vector.shape_cast %108 : vector<1x1x64x64xbf16> to vector<64x64xbf16>
    %cst_113 = arith.constant dense<0.000000e+00> : vector<64x64xf32>
    %110 = tpu.matmul %74, %109, %cst_113 {dimension_numbers = #tpu.dot_dimension_numbers<[1], [0], [0], [1], [0, 0, 1, 1], [], []>} : vector<64x64xbf16>, vector<64x64xbf16>, vector<64x64xf32> -> vector<64x64xf32>
    %111 = arith.addf %107, %110 : vector<64x64xf32>
    %c5_114 = arith.constant 5 : index
    %c0_115 = arith.constant 0 : index
    %c0_116 = arith.constant 0 : index
    %112 = vector.load %arg2[%c5_114, %c0_115, %c0_116] : memref<9x64x64xbf16, #tpu.memory_space<vmem>>, vector<1x64x64xbf16>
    %113 = vector.shape_cast %112 : vector<1x64x64xbf16> to vector<64x64xbf16>
    %cst_117 = arith.constant dense<0.000000e+00> : vector<64x64xf32>
    %114 = tpu.matmul %113, %74, %cst_117 {dimension_numbers = #tpu.dot_dimension_numbers<[1], [0], [0], [1], [0, 0, 1, 1], [], []>} : vector<64x64xbf16>, vector<64x64xbf16>, vector<64x64xf32> -> vector<64x64xf32>
    %115 = arith.truncf %114 : vector<64x64xf32> to vector<64x64xbf16>
    %c1_118 = arith.constant 1 : index
    %c5_119 = arith.constant 5 : index
    %c0_120 = arith.constant 0 : index
    %c0_121 = arith.constant 0 : index
    %116 = vector.load %arg3[%c1_118, %c5_119, %c0_120, %c0_121] : memref<4x9x64x64xbf16, #tpu.memory_space<vmem>>, vector<1x1x64x64xbf16>
    %117 = vector.shape_cast %116 : vector<1x1x64x64xbf16> to vector<64x64xbf16>
    %cst_122 = arith.constant dense<0.000000e+00> : vector<64x64xf32>
    %118 = tpu.matmul %115, %117, %cst_122 {dimension_numbers = #tpu.dot_dimension_numbers<[1], [0], [0], [1], [0, 0, 1, 1], [], []>} : vector<64x64xbf16>, vector<64x64xbf16>, vector<64x64xf32> -> vector<64x64xf32>
    %119 = arith.addf %111, %118 : vector<64x64xf32>
    %c6_123 = arith.constant 6 : index
    %c0_124 = arith.constant 0 : index
    %c0_125 = arith.constant 0 : index
    %120 = vector.load %arg2[%c6_123, %c0_124, %c0_125] : memref<9x64x64xbf16, #tpu.memory_space<vmem>>, vector<1x64x64xbf16>
    %121 = vector.shape_cast %120 : vector<1x64x64xbf16> to vector<64x64xbf16>
    %cst_126 = arith.constant dense<0.000000e+00> : vector<64x64xf32>
    %122 = tpu.matmul %121, %74, %cst_126 {dimension_numbers = #tpu.dot_dimension_numbers<[1], [0], [0], [1], [0, 0, 1, 1], [], []>} : vector<64x64xbf16>, vector<64x64xbf16>, vector<64x64xf32> -> vector<64x64xf32>
    %123 = arith.truncf %122 : vector<64x64xf32> to vector<64x64xbf16>
    %c1_127 = arith.constant 1 : index
    %c6_128 = arith.constant 6 : index
    %c0_129 = arith.constant 0 : index
    %c0_130 = arith.constant 0 : index
    %124 = vector.load %arg3[%c1_127, %c6_128, %c0_129, %c0_130] : memref<4x9x64x64xbf16, #tpu.memory_space<vmem>>, vector<1x1x64x64xbf16>
    %125 = vector.shape_cast %124 : vector<1x1x64x64xbf16> to vector<64x64xbf16>
    %cst_131 = arith.constant dense<0.000000e+00> : vector<64x64xf32>
    %126 = tpu.matmul %123, %125, %cst_131 {dimension_numbers = #tpu.dot_dimension_numbers<[1], [0], [0], [1], [0, 0, 1, 1], [], []>} : vector<64x64xbf16>, vector<64x64xbf16>, vector<64x64xf32> -> vector<64x64xf32>
    %127 = arith.addf %119, %126 : vector<64x64xf32>
    %c7_132 = arith.constant 7 : index
    %c0_133 = arith.constant 0 : index
    %c0_134 = arith.constant 0 : index
    %128 = vector.load %arg2[%c7_132, %c0_133, %c0_134] : memref<9x64x64xbf16, #tpu.memory_space<vmem>>, vector<1x64x64xbf16>
    %129 = vector.shape_cast %128 : vector<1x64x64xbf16> to vector<64x64xbf16>
    %cst_135 = arith.constant dense<0.000000e+00> : vector<64x64xf32>
    %130 = tpu.matmul %129, %74, %cst_135 {dimension_numbers = #tpu.dot_dimension_numbers<[1], [0], [0], [1], [0, 0, 1, 1], [], []>} : vector<64x64xbf16>, vector<64x64xbf16>, vector<64x64xf32> -> vector<64x64xf32>
    %131 = arith.truncf %130 : vector<64x64xf32> to vector<64x64xbf16>
    %c1_136 = arith.constant 1 : index
    %c7_137 = arith.constant 7 : index
    %c0_138 = arith.constant 0 : index
    %c0_139 = arith.constant 0 : index
    %132 = vector.load %arg3[%c1_136, %c7_137, %c0_138, %c0_139] : memref<4x9x64x64xbf16, #tpu.memory_space<vmem>>, vector<1x1x64x64xbf16>
    %133 = vector.shape_cast %132 : vector<1x1x64x64xbf16> to vector<64x64xbf16>
    %cst_140 = arith.constant dense<0.000000e+00> : vector<64x64xf32>
    %134 = tpu.matmul %131, %133, %cst_140 {dimension_numbers = #tpu.dot_dimension_numbers<[1], [0], [0], [1], [0, 0, 1, 1], [], []>} : vector<64x64xbf16>, vector<64x64xbf16>, vector<64x64xf32> -> vector<64x64xf32>
    %135 = arith.addf %127, %134 : vector<64x64xf32>
    %c8_141 = arith.constant 8 : index
    %c0_142 = arith.constant 0 : index
    %c0_143 = arith.constant 0 : index
    %136 = vector.load %arg2[%c8_141, %c0_142, %c0_143] : memref<9x64x64xbf16, #tpu.memory_space<vmem>>, vector<1x64x64xbf16>
    %137 = vector.shape_cast %136 : vector<1x64x64xbf16> to vector<64x64xbf16>
    %cst_144 = arith.constant dense<0.000000e+00> : vector<64x64xf32>
    %138 = tpu.matmul %137, %74, %cst_144 {dimension_numbers = #tpu.dot_dimension_numbers<[1], [0], [0], [1], [0, 0, 1, 1], [], []>} : vector<64x64xbf16>, vector<64x64xbf16>, vector<64x64xf32> -> vector<64x64xf32>
    %139 = arith.truncf %138 : vector<64x64xf32> to vector<64x64xbf16>
    %c1_145 = arith.constant 1 : index
    %c8_146 = arith.constant 8 : index
    %c0_147 = arith.constant 0 : index
    %c0_148 = arith.constant 0 : index
    %140 = vector.load %arg3[%c1_145, %c8_146, %c0_147, %c0_148] : memref<4x9x64x64xbf16, #tpu.memory_space<vmem>>, vector<1x1x64x64xbf16>
    %141 = vector.shape_cast %140 : vector<1x1x64x64xbf16> to vector<64x64xbf16>
    %cst_149 = arith.constant dense<0.000000e+00> : vector<64x64xf32>
    %142 = tpu.matmul %139, %141, %cst_149 {dimension_numbers = #tpu.dot_dimension_numbers<[1], [0], [0], [1], [0, 0, 1, 1], [], []>} : vector<64x64xbf16>, vector<64x64xbf16>, vector<64x64xf32> -> vector<64x64xf32>
    %143 = arith.addf %135, %142 : vector<64x64xf32>
    %cst_150 = arith.constant 0.000000e+00 : f32
    %144 = vector.broadcast %cst_150 : f32 to vector<64x64xf32>
    %145 = arith.maximumf %143, %144 : vector<64x64xf32>
    %146 = arith.addf %145, %1 : vector<64x64xf32>
    %147 = arith.truncf %146 : vector<64x64xf32> to vector<64x64xbf16>
    %cst_151 = arith.constant 0.000000e+00 : f32
    %148 = vector.broadcast %cst_151 : f32 to vector<64x64xf32>
    %c0_152 = arith.constant 0 : index
    %c0_153 = arith.constant 0 : index
    %c0_154 = arith.constant 0 : index
    %149 = vector.load %arg2[%c0_152, %c0_153, %c0_154] : memref<9x64x64xbf16, #tpu.memory_space<vmem>>, vector<1x64x64xbf16>
    %150 = vector.shape_cast %149 : vector<1x64x64xbf16> to vector<64x64xbf16>
    %cst_155 = arith.constant dense<0.000000e+00> : vector<64x64xf32>
    %151 = tpu.matmul %150, %147, %cst_155 {dimension_numbers = #tpu.dot_dimension_numbers<[1], [0], [0], [1], [0, 0, 1, 1], [], []>} : vector<64x64xbf16>, vector<64x64xbf16>, vector<64x64xf32> -> vector<64x64xf32>
    %152 = arith.truncf %151 : vector<64x64xf32> to vector<64x64xbf16>
    %c2_156 = arith.constant 2 : index
    %c0_157 = arith.constant 0 : index
    %c0_158 = arith.constant 0 : index
    %c0_159 = arith.constant 0 : index
    %153 = vector.load %arg3[%c2_156, %c0_157, %c0_158, %c0_159] : memref<4x9x64x64xbf16, #tpu.memory_space<vmem>>, vector<1x1x64x64xbf16>
    %154 = vector.shape_cast %153 : vector<1x1x64x64xbf16> to vector<64x64xbf16>
    %cst_160 = arith.constant dense<0.000000e+00> : vector<64x64xf32>
    %155 = tpu.matmul %152, %154, %cst_160 {dimension_numbers = #tpu.dot_dimension_numbers<[1], [0], [0], [1], [0, 0, 1, 1], [], []>} : vector<64x64xbf16>, vector<64x64xbf16>, vector<64x64xf32> -> vector<64x64xf32>
    %156 = arith.addf %148, %155 : vector<64x64xf32>
    %c1_161 = arith.constant 1 : index
    %c0_162 = arith.constant 0 : index
    %c0_163 = arith.constant 0 : index
    %157 = vector.load %arg2[%c1_161, %c0_162, %c0_163] : memref<9x64x64xbf16, #tpu.memory_space<vmem>>, vector<1x64x64xbf16>
    %158 = vector.shape_cast %157 : vector<1x64x64xbf16> to vector<64x64xbf16>
    %cst_164 = arith.constant dense<0.000000e+00> : vector<64x64xf32>
    %159 = tpu.matmul %158, %147, %cst_164 {dimension_numbers = #tpu.dot_dimension_numbers<[1], [0], [0], [1], [0, 0, 1, 1], [], []>} : vector<64x64xbf16>, vector<64x64xbf16>, vector<64x64xf32> -> vector<64x64xf32>
    %160 = arith.truncf %159 : vector<64x64xf32> to vector<64x64xbf16>
    %c2_165 = arith.constant 2 : index
    %c1_166 = arith.constant 1 : index
    %c0_167 = arith.constant 0 : index
    %c0_168 = arith.constant 0 : index
    %161 = vector.load %arg3[%c2_165, %c1_166, %c0_167, %c0_168] : memref<4x9x64x64xbf16, #tpu.memory_space<vmem>>, vector<1x1x64x64xbf16>
    %162 = vector.shape_cast %161 : vector<1x1x64x64xbf16> to vector<64x64xbf16>
    %cst_169 = arith.constant dense<0.000000e+00> : vector<64x64xf32>
    %163 = tpu.matmul %160, %162, %cst_169 {dimension_numbers = #tpu.dot_dimension_numbers<[1], [0], [0], [1], [0, 0, 1, 1], [], []>} : vector<64x64xbf16>, vector<64x64xbf16>, vector<64x64xf32> -> vector<64x64xf32>
    %164 = arith.addf %156, %163 : vector<64x64xf32>
    %c2_170 = arith.constant 2 : index
    %c0_171 = arith.constant 0 : index
    %c0_172 = arith.constant 0 : index
    %165 = vector.load %arg2[%c2_170, %c0_171, %c0_172] : memref<9x64x64xbf16, #tpu.memory_space<vmem>>, vector<1x64x64xbf16>
    %166 = vector.shape_cast %165 : vector<1x64x64xbf16> to vector<64x64xbf16>
    %cst_173 = arith.constant dense<0.000000e+00> : vector<64x64xf32>
    %167 = tpu.matmul %166, %147, %cst_173 {dimension_numbers = #tpu.dot_dimension_numbers<[1], [0], [0], [1], [0, 0, 1, 1], [], []>} : vector<64x64xbf16>, vector<64x64xbf16>, vector<64x64xf32> -> vector<64x64xf32>
    %168 = arith.truncf %167 : vector<64x64xf32> to vector<64x64xbf16>
    %c2_174 = arith.constant 2 : index
    %c2_175 = arith.constant 2 : index
    %c0_176 = arith.constant 0 : index
    %c0_177 = arith.constant 0 : index
    %169 = vector.load %arg3[%c2_174, %c2_175, %c0_176, %c0_177] : memref<4x9x64x64xbf16, #tpu.memory_space<vmem>>, vector<1x1x64x64xbf16>
    %170 = vector.shape_cast %169 : vector<1x1x64x64xbf16> to vector<64x64xbf16>
    %cst_178 = arith.constant dense<0.000000e+00> : vector<64x64xf32>
    %171 = tpu.matmul %168, %170, %cst_178 {dimension_numbers = #tpu.dot_dimension_numbers<[1], [0], [0], [1], [0, 0, 1, 1], [], []>} : vector<64x64xbf16>, vector<64x64xbf16>, vector<64x64xf32> -> vector<64x64xf32>
    %172 = arith.addf %164, %171 : vector<64x64xf32>
    %c3_179 = arith.constant 3 : index
    %c0_180 = arith.constant 0 : index
    %c0_181 = arith.constant 0 : index
    %173 = vector.load %arg2[%c3_179, %c0_180, %c0_181] : memref<9x64x64xbf16, #tpu.memory_space<vmem>>, vector<1x64x64xbf16>
    %174 = vector.shape_cast %173 : vector<1x64x64xbf16> to vector<64x64xbf16>
    %cst_182 = arith.constant dense<0.000000e+00> : vector<64x64xf32>
    %175 = tpu.matmul %174, %147, %cst_182 {dimension_numbers = #tpu.dot_dimension_numbers<[1], [0], [0], [1], [0, 0, 1, 1], [], []>} : vector<64x64xbf16>, vector<64x64xbf16>, vector<64x64xf32> -> vector<64x64xf32>
    %176 = arith.truncf %175 : vector<64x64xf32> to vector<64x64xbf16>
    %c2_183 = arith.constant 2 : index
    %c3_184 = arith.constant 3 : index
    %c0_185 = arith.constant 0 : index
    %c0_186 = arith.constant 0 : index
    %177 = vector.load %arg3[%c2_183, %c3_184, %c0_185, %c0_186] : memref<4x9x64x64xbf16, #tpu.memory_space<vmem>>, vector<1x1x64x64xbf16>
    %178 = vector.shape_cast %177 : vector<1x1x64x64xbf16> to vector<64x64xbf16>
    %cst_187 = arith.constant dense<0.000000e+00> : vector<64x64xf32>
    %179 = tpu.matmul %176, %178, %cst_187 {dimension_numbers = #tpu.dot_dimension_numbers<[1], [0], [0], [1], [0, 0, 1, 1], [], []>} : vector<64x64xbf16>, vector<64x64xbf16>, vector<64x64xf32> -> vector<64x64xf32>
    %180 = arith.addf %172, %179 : vector<64x64xf32>
    %c2_188 = arith.constant 2 : index
    %c4_189 = arith.constant 4 : index
    %c0_190 = arith.constant 0 : index
    %c0_191 = arith.constant 0 : index
    %181 = vector.load %arg3[%c2_188, %c4_189, %c0_190, %c0_191] : memref<4x9x64x64xbf16, #tpu.memory_space<vmem>>, vector<1x1x64x64xbf16>
    %182 = vector.shape_cast %181 : vector<1x1x64x64xbf16> to vector<64x64xbf16>
    %cst_192 = arith.constant dense<0.000000e+00> : vector<64x64xf32>
    %183 = tpu.matmul %147, %182, %cst_192 {dimension_numbers = #tpu.dot_dimension_numbers<[1], [0], [0], [1], [0, 0, 1, 1], [], []>} : vector<64x64xbf16>, vector<64x64xbf16>, vector<64x64xf32> -> vector<64x64xf32>
    %184 = arith.addf %180, %183 : vector<64x64xf32>
    %c5_193 = arith.constant 5 : index
    %c0_194 = arith.constant 0 : index
    %c0_195 = arith.constant 0 : index
    %185 = vector.load %arg2[%c5_193, %c0_194, %c0_195] : memref<9x64x64xbf16, #tpu.memory_space<vmem>>, vector<1x64x64xbf16>
    %186 = vector.shape_cast %185 : vector<1x64x64xbf16> to vector<64x64xbf16>
    %cst_196 = arith.constant dense<0.000000e+00> : vector<64x64xf32>
    %187 = tpu.matmul %186, %147, %cst_196 {dimension_numbers = #tpu.dot_dimension_numbers<[1], [0], [0], [1], [0, 0, 1, 1], [], []>} : vector<64x64xbf16>, vector<64x64xbf16>, vector<64x64xf32> -> vector<64x64xf32>
    %188 = arith.truncf %187 : vector<64x64xf32> to vector<64x64xbf16>
    %c2_197 = arith.constant 2 : index
    %c5_198 = arith.constant 5 : index
    %c0_199 = arith.constant 0 : index
    %c0_200 = arith.constant 0 : index
    %189 = vector.load %arg3[%c2_197, %c5_198, %c0_199, %c0_200] : memref<4x9x64x64xbf16, #tpu.memory_space<vmem>>, vector<1x1x64x64xbf16>
    %190 = vector.shape_cast %189 : vector<1x1x64x64xbf16> to vector<64x64xbf16>
    %cst_201 = arith.constant dense<0.000000e+00> : vector<64x64xf32>
    %191 = tpu.matmul %188, %190, %cst_201 {dimension_numbers = #tpu.dot_dimension_numbers<[1], [0], [0], [1], [0, 0, 1, 1], [], []>} : vector<64x64xbf16>, vector<64x64xbf16>, vector<64x64xf32> -> vector<64x64xf32>
    %192 = arith.addf %184, %191 : vector<64x64xf32>
    %c6_202 = arith.constant 6 : index
    %c0_203 = arith.constant 0 : index
    %c0_204 = arith.constant 0 : index
    %193 = vector.load %arg2[%c6_202, %c0_203, %c0_204] : memref<9x64x64xbf16, #tpu.memory_space<vmem>>, vector<1x64x64xbf16>
    %194 = vector.shape_cast %193 : vector<1x64x64xbf16> to vector<64x64xbf16>
    %cst_205 = arith.constant dense<0.000000e+00> : vector<64x64xf32>
    %195 = tpu.matmul %194, %147, %cst_205 {dimension_numbers = #tpu.dot_dimension_numbers<[1], [0], [0], [1], [0, 0, 1, 1], [], []>} : vector<64x64xbf16>, vector<64x64xbf16>, vector<64x64xf32> -> vector<64x64xf32>
    %196 = arith.truncf %195 : vector<64x64xf32> to vector<64x64xbf16>
    %c2_206 = arith.constant 2 : index
    %c6_207 = arith.constant 6 : index
    %c0_208 = arith.constant 0 : index
    %c0_209 = arith.constant 0 : index
    %197 = vector.load %arg3[%c2_206, %c6_207, %c0_208, %c0_209] : memref<4x9x64x64xbf16, #tpu.memory_space<vmem>>, vector<1x1x64x64xbf16>
    %198 = vector.shape_cast %197 : vector<1x1x64x64xbf16> to vector<64x64xbf16>
    %cst_210 = arith.constant dense<0.000000e+00> : vector<64x64xf32>
    %199 = tpu.matmul %196, %198, %cst_210 {dimension_numbers = #tpu.dot_dimension_numbers<[1], [0], [0], [1], [0, 0, 1, 1], [], []>} : vector<64x64xbf16>, vector<64x64xbf16>, vector<64x64xf32> -> vector<64x64xf32>
    %200 = arith.addf %192, %199 : vector<64x64xf32>
    %c7_211 = arith.constant 7 : index
    %c0_212 = arith.constant 0 : index
    %c0_213 = arith.constant 0 : index
    %201 = vector.load %arg2[%c7_211, %c0_212, %c0_213] : memref<9x64x64xbf16, #tpu.memory_space<vmem>>, vector<1x64x64xbf16>
    %202 = vector.shape_cast %201 : vector<1x64x64xbf16> to vector<64x64xbf16>
    %cst_214 = arith.constant dense<0.000000e+00> : vector<64x64xf32>
    %203 = tpu.matmul %202, %147, %cst_214 {dimension_numbers = #tpu.dot_dimension_numbers<[1], [0], [0], [1], [0, 0, 1, 1], [], []>} : vector<64x64xbf16>, vector<64x64xbf16>, vector<64x64xf32> -> vector<64x64xf32>
    %204 = arith.truncf %203 : vector<64x64xf32> to vector<64x64xbf16>
    %c2_215 = arith.constant 2 : index
    %c7_216 = arith.constant 7 : index
    %c0_217 = arith.constant 0 : index
    %c0_218 = arith.constant 0 : index
    %205 = vector.load %arg3[%c2_215, %c7_216, %c0_217, %c0_218] : memref<4x9x64x64xbf16, #tpu.memory_space<vmem>>, vector<1x1x64x64xbf16>
    %206 = vector.shape_cast %205 : vector<1x1x64x64xbf16> to vector<64x64xbf16>
    %cst_219 = arith.constant dense<0.000000e+00> : vector<64x64xf32>
    %207 = tpu.matmul %204, %206, %cst_219 {dimension_numbers = #tpu.dot_dimension_numbers<[1], [0], [0], [1], [0, 0, 1, 1], [], []>} : vector<64x64xbf16>, vector<64x64xbf16>, vector<64x64xf32> -> vector<64x64xf32>
    %208 = arith.addf %200, %207 : vector<64x64xf32>
    %c8_220 = arith.constant 8 : index
    %c0_221 = arith.constant 0 : index
    %c0_222 = arith.constant 0 : index
    %209 = vector.load %arg2[%c8_220, %c0_221, %c0_222] : memref<9x64x64xbf16, #tpu.memory_space<vmem>>, vector<1x64x64xbf16>
    %210 = vector.shape_cast %209 : vector<1x64x64xbf16> to vector<64x64xbf16>
    %cst_223 = arith.constant dense<0.000000e+00> : vector<64x64xf32>
    %211 = tpu.matmul %210, %147, %cst_223 {dimension_numbers = #tpu.dot_dimension_numbers<[1], [0], [0], [1], [0, 0, 1, 1], [], []>} : vector<64x64xbf16>, vector<64x64xbf16>, vector<64x64xf32> -> vector<64x64xf32>
    %212 = arith.truncf %211 : vector<64x64xf32> to vector<64x64xbf16>
    %c2_224 = arith.constant 2 : index
    %c8_225 = arith.constant 8 : index
    %c0_226 = arith.constant 0 : index
    %c0_227 = arith.constant 0 : index
    %213 = vector.load %arg3[%c2_224, %c8_225, %c0_226, %c0_227] : memref<4x9x64x64xbf16, #tpu.memory_space<vmem>>, vector<1x1x64x64xbf16>
    %214 = vector.shape_cast %213 : vector<1x1x64x64xbf16> to vector<64x64xbf16>
    %cst_228 = arith.constant dense<0.000000e+00> : vector<64x64xf32>
    %215 = tpu.matmul %212, %214, %cst_228 {dimension_numbers = #tpu.dot_dimension_numbers<[1], [0], [0], [1], [0, 0, 1, 1], [], []>} : vector<64x64xbf16>, vector<64x64xbf16>, vector<64x64xf32> -> vector<64x64xf32>
    %216 = arith.addf %208, %215 : vector<64x64xf32>
    %cst_229 = arith.constant 0.000000e+00 : f32
    %217 = vector.broadcast %cst_229 : f32 to vector<64x64xf32>
    %218 = arith.maximumf %216, %217 : vector<64x64xf32>
    %219 = arith.truncf %218 : vector<64x64xf32> to vector<64x64xbf16>
    %cst_230 = arith.constant 0.000000e+00 : f32
    %220 = vector.broadcast %cst_230 : f32 to vector<64x64xf32>
    %c0_231 = arith.constant 0 : index
    %c0_232 = arith.constant 0 : index
    %c0_233 = arith.constant 0 : index
    %221 = vector.load %arg2[%c0_231, %c0_232, %c0_233] : memref<9x64x64xbf16, #tpu.memory_space<vmem>>, vector<1x64x64xbf16>
    %222 = vector.shape_cast %221 : vector<1x64x64xbf16> to vector<64x64xbf16>
    %cst_234 = arith.constant dense<0.000000e+00> : vector<64x64xf32>
    %223 = tpu.matmul %222, %219, %cst_234 {dimension_numbers = #tpu.dot_dimension_numbers<[1], [0], [0], [1], [0, 0, 1, 1], [], []>} : vector<64x64xbf16>, vector<64x64xbf16>, vector<64x64xf32> -> vector<64x64xf32>
    %224 = arith.truncf %223 : vector<64x64xf32> to vector<64x64xbf16>
    %c3_235 = arith.constant 3 : index
    %c0_236 = arith.constant 0 : index
    %c0_237 = arith.constant 0 : index
    %c0_238 = arith.constant 0 : index
    %225 = vector.load %arg3[%c3_235, %c0_236, %c0_237, %c0_238] : memref<4x9x64x64xbf16, #tpu.memory_space<vmem>>, vector<1x1x64x64xbf16>
    %226 = vector.shape_cast %225 : vector<1x1x64x64xbf16> to vector<64x64xbf16>
    %cst_239 = arith.constant dense<0.000000e+00> : vector<64x64xf32>
    %227 = tpu.matmul %224, %226, %cst_239 {dimension_numbers = #tpu.dot_dimension_numbers<[1], [0], [0], [1], [0, 0, 1, 1], [], []>} : vector<64x64xbf16>, vector<64x64xbf16>, vector<64x64xf32> -> vector<64x64xf32>
    %228 = arith.addf %220, %227 : vector<64x64xf32>
    %c1_240 = arith.constant 1 : index
    %c0_241 = arith.constant 0 : index
    %c0_242 = arith.constant 0 : index
    %229 = vector.load %arg2[%c1_240, %c0_241, %c0_242] : memref<9x64x64xbf16, #tpu.memory_space<vmem>>, vector<1x64x64xbf16>
    %230 = vector.shape_cast %229 : vector<1x64x64xbf16> to vector<64x64xbf16>
    %cst_243 = arith.constant dense<0.000000e+00> : vector<64x64xf32>
    %231 = tpu.matmul %230, %219, %cst_243 {dimension_numbers = #tpu.dot_dimension_numbers<[1], [0], [0], [1], [0, 0, 1, 1], [], []>} : vector<64x64xbf16>, vector<64x64xbf16>, vector<64x64xf32> -> vector<64x64xf32>
    %232 = arith.truncf %231 : vector<64x64xf32> to vector<64x64xbf16>
    %c3_244 = arith.constant 3 : index
    %c1_245 = arith.constant 1 : index
    %c0_246 = arith.constant 0 : index
    %c0_247 = arith.constant 0 : index
    %233 = vector.load %arg3[%c3_244, %c1_245, %c0_246, %c0_247] : memref<4x9x64x64xbf16, #tpu.memory_space<vmem>>, vector<1x1x64x64xbf16>
    %234 = vector.shape_cast %233 : vector<1x1x64x64xbf16> to vector<64x64xbf16>
    %cst_248 = arith.constant dense<0.000000e+00> : vector<64x64xf32>
    %235 = tpu.matmul %232, %234, %cst_248 {dimension_numbers = #tpu.dot_dimension_numbers<[1], [0], [0], [1], [0, 0, 1, 1], [], []>} : vector<64x64xbf16>, vector<64x64xbf16>, vector<64x64xf32> -> vector<64x64xf32>
    %236 = arith.addf %228, %235 : vector<64x64xf32>
    %c2_249 = arith.constant 2 : index
    %c0_250 = arith.constant 0 : index
    %c0_251 = arith.constant 0 : index
    %237 = vector.load %arg2[%c2_249, %c0_250, %c0_251] : memref<9x64x64xbf16, #tpu.memory_space<vmem>>, vector<1x64x64xbf16>
    %238 = vector.shape_cast %237 : vector<1x64x64xbf16> to vector<64x64xbf16>
    %cst_252 = arith.constant dense<0.000000e+00> : vector<64x64xf32>
    %239 = tpu.matmul %238, %219, %cst_252 {dimension_numbers = #tpu.dot_dimension_numbers<[1], [0], [0], [1], [0, 0, 1, 1], [], []>} : vector<64x64xbf16>, vector<64x64xbf16>, vector<64x64xf32> -> vector<64x64xf32>
    %240 = arith.truncf %239 : vector<64x64xf32> to vector<64x64xbf16>
    %c3_253 = arith.constant 3 : index
    %c2_254 = arith.constant 2 : index
    %c0_255 = arith.constant 0 : index
    %c0_256 = arith.constant 0 : index
    %241 = vector.load %arg3[%c3_253, %c2_254, %c0_255, %c0_256] : memref<4x9x64x64xbf16, #tpu.memory_space<vmem>>, vector<1x1x64x64xbf16>
    %242 = vector.shape_cast %241 : vector<1x1x64x64xbf16> to vector<64x64xbf16>
    %cst_257 = arith.constant dense<0.000000e+00> : vector<64x64xf32>
    %243 = tpu.matmul %240, %242, %cst_257 {dimension_numbers = #tpu.dot_dimension_numbers<[1], [0], [0], [1], [0, 0, 1, 1], [], []>} : vector<64x64xbf16>, vector<64x64xbf16>, vector<64x64xf32> -> vector<64x64xf32>
    %244 = arith.addf %236, %243 : vector<64x64xf32>
    %c3_258 = arith.constant 3 : index
    %c0_259 = arith.constant 0 : index
    %c0_260 = arith.constant 0 : index
    %245 = vector.load %arg2[%c3_258, %c0_259, %c0_260] : memref<9x64x64xbf16, #tpu.memory_space<vmem>>, vector<1x64x64xbf16>
    %246 = vector.shape_cast %245 : vector<1x64x64xbf16> to vector<64x64xbf16>
    %cst_261 = arith.constant dense<0.000000e+00> : vector<64x64xf32>
    %247 = tpu.matmul %246, %219, %cst_261 {dimension_numbers = #tpu.dot_dimension_numbers<[1], [0], [0], [1], [0, 0, 1, 1], [], []>} : vector<64x64xbf16>, vector<64x64xbf16>, vector<64x64xf32> -> vector<64x64xf32>
    %248 = arith.truncf %247 : vector<64x64xf32> to vector<64x64xbf16>
    %c3_262 = arith.constant 3 : index
    %c3_263 = arith.constant 3 : index
    %c0_264 = arith.constant 0 : index
    %c0_265 = arith.constant 0 : index
    %249 = vector.load %arg3[%c3_262, %c3_263, %c0_264, %c0_265] : memref<4x9x64x64xbf16, #tpu.memory_space<vmem>>, vector<1x1x64x64xbf16>
    %250 = vector.shape_cast %249 : vector<1x1x64x64xbf16> to vector<64x64xbf16>
    %cst_266 = arith.constant dense<0.000000e+00> : vector<64x64xf32>
    %251 = tpu.matmul %248, %250, %cst_266 {dimension_numbers = #tpu.dot_dimension_numbers<[1], [0], [0], [1], [0, 0, 1, 1], [], []>} : vector<64x64xbf16>, vector<64x64xbf16>, vector<64x64xf32> -> vector<64x64xf32>
    %252 = arith.addf %244, %251 : vector<64x64xf32>
    %c3_267 = arith.constant 3 : index
    %c4_268 = arith.constant 4 : index
    %c0_269 = arith.constant 0 : index
    %c0_270 = arith.constant 0 : index
    %253 = vector.load %arg3[%c3_267, %c4_268, %c0_269, %c0_270] : memref<4x9x64x64xbf16, #tpu.memory_space<vmem>>, vector<1x1x64x64xbf16>
    %254 = vector.shape_cast %253 : vector<1x1x64x64xbf16> to vector<64x64xbf16>
    %cst_271 = arith.constant dense<0.000000e+00> : vector<64x64xf32>
    %255 = tpu.matmul %219, %254, %cst_271 {dimension_numbers = #tpu.dot_dimension_numbers<[1], [0], [0], [1], [0, 0, 1, 1], [], []>} : vector<64x64xbf16>, vector<64x64xbf16>, vector<64x64xf32> -> vector<64x64xf32>
    %256 = arith.addf %252, %255 : vector<64x64xf32>
    %c5_272 = arith.constant 5 : index
    %c0_273 = arith.constant 0 : index
    %c0_274 = arith.constant 0 : index
    %257 = vector.load %arg2[%c5_272, %c0_273, %c0_274] : memref<9x64x64xbf16, #tpu.memory_space<vmem>>, vector<1x64x64xbf16>
    %258 = vector.shape_cast %257 : vector<1x64x64xbf16> to vector<64x64xbf16>
    %cst_275 = arith.constant dense<0.000000e+00> : vector<64x64xf32>
    %259 = tpu.matmul %258, %219, %cst_275 {dimension_numbers = #tpu.dot_dimension_numbers<[1], [0], [0], [1], [0, 0, 1, 1], [], []>} : vector<64x64xbf16>, vector<64x64xbf16>, vector<64x64xf32> -> vector<64x64xf32>
    %260 = arith.truncf %259 : vector<64x64xf32> to vector<64x64xbf16>
    %c3_276 = arith.constant 3 : index
    %c5_277 = arith.constant 5 : index
    %c0_278 = arith.constant 0 : index
    %c0_279 = arith.constant 0 : index
    %261 = vector.load %arg3[%c3_276, %c5_277, %c0_278, %c0_279] : memref<4x9x64x64xbf16, #tpu.memory_space<vmem>>, vector<1x1x64x64xbf16>
    %262 = vector.shape_cast %261 : vector<1x1x64x64xbf16> to vector<64x64xbf16>
    %cst_280 = arith.constant dense<0.000000e+00> : vector<64x64xf32>
    %263 = tpu.matmul %260, %262, %cst_280 {dimension_numbers = #tpu.dot_dimension_numbers<[1], [0], [0], [1], [0, 0, 1, 1], [], []>} : vector<64x64xbf16>, vector<64x64xbf16>, vector<64x64xf32> -> vector<64x64xf32>
    %264 = arith.addf %256, %263 : vector<64x64xf32>
    %c6_281 = arith.constant 6 : index
    %c0_282 = arith.constant 0 : index
    %c0_283 = arith.constant 0 : index
    %265 = vector.load %arg2[%c6_281, %c0_282, %c0_283] : memref<9x64x64xbf16, #tpu.memory_space<vmem>>, vector<1x64x64xbf16>
    %266 = vector.shape_cast %265 : vector<1x64x64xbf16> to vector<64x64xbf16>
    %cst_284 = arith.constant dense<0.000000e+00> : vector<64x64xf32>
    %267 = tpu.matmul %266, %219, %cst_284 {dimension_numbers = #tpu.dot_dimension_numbers<[1], [0], [0], [1], [0, 0, 1, 1], [], []>} : vector<64x64xbf16>, vector<64x64xbf16>, vector<64x64xf32> -> vector<64x64xf32>
    %268 = arith.truncf %267 : vector<64x64xf32> to vector<64x64xbf16>
    %c3_285 = arith.constant 3 : index
    %c6_286 = arith.constant 6 : index
    %c0_287 = arith.constant 0 : index
    %c0_288 = arith.constant 0 : index
    %269 = vector.load %arg3[%c3_285, %c6_286, %c0_287, %c0_288] : memref<4x9x64x64xbf16, #tpu.memory_space<vmem>>, vector<1x1x64x64xbf16>
    %270 = vector.shape_cast %269 : vector<1x1x64x64xbf16> to vector<64x64xbf16>
    %cst_289 = arith.constant dense<0.000000e+00> : vector<64x64xf32>
    %271 = tpu.matmul %268, %270, %cst_289 {dimension_numbers = #tpu.dot_dimension_numbers<[1], [0], [0], [1], [0, 0, 1, 1], [], []>} : vector<64x64xbf16>, vector<64x64xbf16>, vector<64x64xf32> -> vector<64x64xf32>
    %272 = arith.addf %264, %271 : vector<64x64xf32>
    %c7_290 = arith.constant 7 : index
    %c0_291 = arith.constant 0 : index
    %c0_292 = arith.constant 0 : index
    %273 = vector.load %arg2[%c7_290, %c0_291, %c0_292] : memref<9x64x64xbf16, #tpu.memory_space<vmem>>, vector<1x64x64xbf16>
    %274 = vector.shape_cast %273 : vector<1x64x64xbf16> to vector<64x64xbf16>
    %cst_293 = arith.constant dense<0.000000e+00> : vector<64x64xf32>
    %275 = tpu.matmul %274, %219, %cst_293 {dimension_numbers = #tpu.dot_dimension_numbers<[1], [0], [0], [1], [0, 0, 1, 1], [], []>} : vector<64x64xbf16>, vector<64x64xbf16>, vector<64x64xf32> -> vector<64x64xf32>
    %276 = arith.truncf %275 : vector<64x64xf32> to vector<64x64xbf16>
    %c3_294 = arith.constant 3 : index
    %c7_295 = arith.constant 7 : index
    %c0_296 = arith.constant 0 : index
    %c0_297 = arith.constant 0 : index
    %277 = vector.load %arg3[%c3_294, %c7_295, %c0_296, %c0_297] : memref<4x9x64x64xbf16, #tpu.memory_space<vmem>>, vector<1x1x64x64xbf16>
    %278 = vector.shape_cast %277 : vector<1x1x64x64xbf16> to vector<64x64xbf16>
    %cst_298 = arith.constant dense<0.000000e+00> : vector<64x64xf32>
    %279 = tpu.matmul %276, %278, %cst_298 {dimension_numbers = #tpu.dot_dimension_numbers<[1], [0], [0], [1], [0, 0, 1, 1], [], []>} : vector<64x64xbf16>, vector<64x64xbf16>, vector<64x64xf32> -> vector<64x64xf32>
    %280 = arith.addf %272, %279 : vector<64x64xf32>
    %c8_299 = arith.constant 8 : index
    %c0_300 = arith.constant 0 : index
    %c0_301 = arith.constant 0 : index
    %281 = vector.load %arg2[%c8_299, %c0_300, %c0_301] : memref<9x64x64xbf16, #tpu.memory_space<vmem>>, vector<1x64x64xbf16>
    %282 = vector.shape_cast %281 : vector<1x64x64xbf16> to vector<64x64xbf16>
    %cst_302 = arith.constant dense<0.000000e+00> : vector<64x64xf32>
    %283 = tpu.matmul %282, %219, %cst_302 {dimension_numbers = #tpu.dot_dimension_numbers<[1], [0], [0], [1], [0, 0, 1, 1], [], []>} : vector<64x64xbf16>, vector<64x64xbf16>, vector<64x64xf32> -> vector<64x64xf32>
    %284 = arith.truncf %283 : vector<64x64xf32> to vector<64x64xbf16>
    %c3_303 = arith.constant 3 : index
    %c8_304 = arith.constant 8 : index
    %c0_305 = arith.constant 0 : index
    %c0_306 = arith.constant 0 : index
    %285 = vector.load %arg3[%c3_303, %c8_304, %c0_305, %c0_306] : memref<4x9x64x64xbf16, #tpu.memory_space<vmem>>, vector<1x1x64x64xbf16>
    %286 = vector.shape_cast %285 : vector<1x1x64x64xbf16> to vector<64x64xbf16>
    %cst_307 = arith.constant dense<0.000000e+00> : vector<64x64xf32>
    %287 = tpu.matmul %284, %286, %cst_307 {dimension_numbers = #tpu.dot_dimension_numbers<[1], [0], [0], [1], [0, 0, 1, 1], [], []>} : vector<64x64xbf16>, vector<64x64xbf16>, vector<64x64xf32> -> vector<64x64xf32>
    %288 = arith.addf %280, %287 : vector<64x64xf32>
    %cst_308 = arith.constant 0.000000e+00 : f32
    %289 = vector.broadcast %cst_308 : f32 to vector<64x64xf32>
    %290 = arith.maximumf %288, %289 : vector<64x64xf32>
    %291 = arith.addf %290, %146 : vector<64x64xf32>
    %292 = arith.truncf %291 : vector<64x64xf32> to vector<64x64xbf16>
    %c0_309 = arith.constant 0 : index
    %c0_310 = arith.constant 0 : index
    %293 = vector.load %arg4[%c0_309, %c0_310] : memref<64x10xbf16, #tpu.memory_space<vmem>>, vector<64x10xbf16>
    %cst_311 = arith.constant dense<0.000000e+00> : vector<64x10xf32>
    %294 = tpu.matmul %292, %293, %cst_311 {dimension_numbers = #tpu.dot_dimension_numbers<[1], [0], [0], [1], [0, 0, 1, 1], [], []>} : vector<64x64xbf16>, vector<64x10xbf16>, vector<64x10xf32> -> vector<64x10xf32>
    %cst_312 = arith.constant dense<0.000000e+00> : vector<10xf32>
    %295 = vector.multi_reduction <add>, %294, %cst_312 [0] : vector<64x10xf32> to vector<10xf32>
    %296 = vector.shape_cast %295 : vector<10xf32> to vector<1x10xf32>
    %cst_313 = arith.constant 6.400000e+01 : f32
    %297 = vector.broadcast %cst_313 : f32 to vector<1x10xf32>
    %298 = arith.divf %296, %297 : vector<1x10xf32>
    %c0_314 = arith.constant 0 : index
    %c0_315 = arith.constant 0 : index
    %299 = vector.load %arg5[%c0_314, %c0_315] : memref<1x10xf32, #tpu.memory_space<vmem>>, vector<1x10xf32>
    %300 = arith.addf %298, %299 : vector<1x10xf32>
    %c0_316 = arith.constant 0 : index
    %c0_317 = arith.constant 0 : index
    %c0_318 = arith.constant 0 : index
    %301 = vector.load %arg6[%c0_316, %c0_317, %c0_318] : memref<1x1x10xf32, #tpu.memory_space<vmem>>, vector<1x1x10xf32>
    %302 = vector.shape_cast %301 : vector<1x1x10xf32> to vector<1x10xf32>
    %303 = vector.shape_cast %300 : vector<1x10xf32> to vector<1x1x10xf32>
    tpu.vector_store %arg6[%c0_316, %c0_317, %c0_318], %303 {strides = array<i32>} : memref<1x1x10xf32, #tpu.memory_space<vmem>>, vector<1x1x10xf32>,
    return
  }
  func.func @transform_0(%arg0: i32) -> (i32, i32, i32) {
    %c0_i32 = arith.constant 0 : i32
    %c0_i32_0 = arith.constant 0 : i32
    %c0_i32_1 = arith.constant 0 : i32
    return %arg0, %c0_i32, %c0_i32_0 : i32, i32, i32
  }
  func.func @transform_1(%arg0: i32) -> (i32, i32, i32) {
    %c0_i32 = arith.constant 0 : i32
    %c0_i32_0 = arith.constant 0 : i32
    %c0_i32_1 = arith.constant 0 : i32
    %c0_i32_2 = arith.constant 0 : i32
    return %c0_i32, %c0_i32_0, %c0_i32_1 : i32, i32, i32
  }
  func.func @transform_2(%arg0: i32) -> (i32, i32, i32, i32) {
    %c0_i32 = arith.constant 0 : i32
    %c0_i32_0 = arith.constant 0 : i32
    %c0_i32_1 = arith.constant 0 : i32
    %c0_i32_2 = arith.constant 0 : i32
    %c0_i32_3 = arith.constant 0 : i32
    return %c0_i32, %c0_i32_0, %c0_i32_1, %c0_i32_2 : i32, i32, i32, i32
  }
  func.func @transform_3(%arg0: i32) -> (i32, i32) {
    %c0_i32 = arith.constant 0 : i32
    %c0_i32_0 = arith.constant 0 : i32
    %c0_i32_1 = arith.constant 0 : i32
    return %c0_i32, %c0_i32_0 : i32, i32
  }
  func.func @transform_4(%arg0: i32) -> (i32, i32) {
    %c0_i32 = arith.constant 0 : i32
    %c0_i32_0 = arith.constant 0 : i32
    %c0_i32_1 = arith.constant 0 : i32
    return %c0_i32, %c0_i32_0 : i32, i32
  }
  func.func @transform_5(%arg0: i32) -> (i32, i32, i32) {
    %c0_i32 = arith.constant 0 : i32
    %c0_i32_0 = arith.constant 0 : i32
    %c0_i32_1 = arith.constant 0 : i32
    return %arg0, %c0_i32, %c0_i32_0 : i32, i32, i32
  }
}

</mosaic_0001>

<llo_original>
// kernel: resnet_f_forward.1
$region0: #{resnet_f_forward.1}
  #allocation0 [shape = 'u32[]', space=smem, size = 0x4, offset = 0x4, fixed_abs, tag = 'smem constant byte address 0x4 - core index']
  #allocation1 [shape = 'u32[144,128]{1,0:T(1,128)}', space=vmem, size = 0x12000, scoped, tag = 'internal scratch']
  %s0 = inlined_call_operand.hbm [shape: f32[2,64,64], index: 0, kind: input, shape index: {}]
  %s1 = inlined_call_operand.hbm [shape: bf16[9,64,64], index: 1, kind: input, shape index: {}]
  %s2 = inlined_call_operand.hbm [shape: bf16[4,9,64,64], index: 2, kind: input, shape index: {}]
  %s3 = inlined_call_operand.hbm [shape: bf16[64,10], index: 3, kind: input, shape index: {}]
  %s4 = inlined_call_operand.vmem [shape: f32[1,10], index: 4, kind: input, shape index: {}]
  %s5 = inlined_call_operand.hbm [shape: f32[2,1,10], index: 5, kind: output, shape index: {}]
  %s6 = sld [smem:[#allocation0]]
  $region69: #{resnet_f_forward.1} parent=0
    _
  %s8 = ssub.s32 1, %s6
  %s9 = scalar_select 0, %s8, %s6
  $region1: #{resnet_f_forward.1} parent=0
    #allocation2 [shape = 'u8[65536]{0}', space=vmem, size = 0x10000, scoped, tag = 'input window, operand 0']
    #allocation3 [shape = 's32[2]{0}', space=sflag, size = 0x8, scoped, tag = 'scoped memory for resnet_f_forward.1']
    #allocation4 [shape = 's32[2]{0}', space=sflag, size = 0x8, scoped, tag = 'scoped memory for resnet_f_forward.1']
    #allocation5 [shape = 'u8[147456]{0}', space=vmem, size = 0x24000, scoped, tag = 'input window, operand 1, single buffered']
    #allocation6 [shape = 's32[1]{0}', space=sflag, size = 0x4, scoped, tag = 'scoped memory for resnet_f_forward.1']
    #allocation7 [shape = 'u8[589824]{0}', space=vmem, size = 0x90000, scoped, tag = 'input window, operand 2, single buffered']
    #allocation8 [shape = 'u8[16384]{0}', space=vmem, size = 0x4000, scoped, tag = 'input window, operand 3, single buffered']
    #allocation9 [shape = 's32[1]{0}', space=sflag, size = 0x4, scoped, tag = 'scoped memory for resnet_f_forward.1']
    #allocation10 [shape = 'u8[1024]{0}', space=vmem, size = 0x400, scoped, tag = 'output window, operand 0']
    %10 = vsyncpa [#allocation3], 0
    %s11 = scalar_lea.sflag [#allocation3], 1
    %12 = vsyncpa %s11, 0
    %13 = vsyncpa [#allocation6], 0
    %14 = vsyncpa [#allocation9], 0
    %15 = vsyncpa [#allocation4], 0
    %s16 = scalar_lea.sflag [#allocation4], 1
    %17 = vsyncpa %s16, 0
    loop: start=0, step=1, limit=4
    $region2: #{resnet_f_forward.1} parent=1 // loop_pre_header
      _
    $region3: #{resnet_f_forward.1} parent=1 // loop_header
      %s19 = sphi 0, %s23
      %p20 = scmp.ge.s32.totalorder %s19, 4
      %s29 = sphi 0, %s31
      %s32 = sphi 0, %s29
      %s33 = sphi 0, %s32
      %s49 = sphi 0, %s33
      %s53 = sphi 0, %s53
      %s55 = sphi 0, %s53
      %s56 = sphi 0, %s55
      %s70 = sphi 0, %s56
      %s74 = sphi 0, %s74
      %s76 = sphi 0, %s74
      %s77 = sphi 0, %s76
      %s91 = sphi 0, %s77
      %s95 = sphi 0, %s95
      %s97 = sphi 0, %s95
      %s98 = sphi 0, %s97
      %s112 = sphi 0, %s98
      %s116 = sphi 0, %s116
      %s118 = sphi 0, %s116
      %s119 = sphi 0, %s118
      %s133 = sphi 0, %s119
      %s139 = sphi 0, %s141
      %s142 = sphi 0, %s139
      %s143 = sphi 0, %s142
      %s159 = sphi 0, %s143
    $region4: #{resnet_f_forward.1} parent=1 // loop_header_branch
      %22 = sbr.rel (%p20) target = $region8
    $region5: #{resnet_f_forward.1} parent=1 // loop_body
      %s24 = ssub.s32 %s19, 1
      %s25 = ssub.s32 %s19, 2
      %s26 = sadd.s32 %s19, 1
      %s27 = ssub.s32 %s19, %s26
      %p28 = scmp.eq.s32.totalorder %s27, 0
      %s30 = sadd.s32 %s29, 1
      %s31 = scalar_select %p28, %s29, %s30
      %p34 = pneg %p28
      %p35 = scmp.eq.s32.totalorder %s19, 1
      %p36 = por %p34, %p35
      %p37 = scmp.ne.s32.totalorder %s29, %s32
      %p38 = scmp.eq.s32.totalorder %s19, 0
      %p39 = por %p37, %p38
      %p40 = scmp.ne.s32.totalorder %s29, %s32
      %p41 = scmp.eq.s32.totalorder %s24, 1
      %p42 = por %p40, %p41
      %p43 = scmp.ne.s32.totalorder %s32, %s33
      %p44 = scmp.eq.s32.totalorder %s24, 0
      %p45 = por %p43, %p44
      %p46 = scmp.ne.s32.totalorder %s32, %s33
      %p47 = scmp.eq.s32.totalorder %s25, 1
      %p48 = por %p46, %p47
      %p50 = scmp.ne.s32.totalorder %s33, %s49
      %p51 = scmp.eq.s32.totalorder %s25, 0
      %p52 = por %p50, %p51
      %s54 = sadd.s32 %s53, 1
      %p57 = scmp.eq.s32.totalorder %s19, 1
      %p58 = scmp.ne.s32.totalorder %s53, %s55
      %p59 = scmp.eq.s32.totalorder %s19, 0
      %p60 = por %p58, %p59
      %p61 = scmp.ne.s32.totalorder %s53, %s55
      %p62 = scmp.eq.s32.totalorder %s24, 1
      %p63 = por %p61, %p62
      %p64 = scmp.ne.s32.totalorder %s55, %s56
      %p65 = scmp.eq.s32.totalorder %s24, 0
      %p66 = por %p64, %p65
      %p67 = scmp.ne.s32.totalorder %s55, %s56
      %p68 = scmp.eq.s32.totalorder %s25, 1
      %p69 = por %p67, %p68
      %p71 = scmp.ne.s32.totalorder %s56, %s70
      %p72 = scmp.eq.s32.totalorder %s25, 0
      %p73 = por %p71, %p72
      %s75 = sadd.s32 %s74, 1
      %p78 = scmp.eq.s32.totalorder %s19, 1
      %p79 = scmp.ne.s32.totalorder %s74, %s76
      %p80 = scmp.eq.s32.totalorder %s19, 0
      %p81 = por %p79, %p80
      %p82 = scmp.ne.s32.totalorder %s74, %s76
      %p83 = scmp.eq.s32.totalorder %s24, 1
      %p84 = por %p82, %p83
      %p85 = scmp.ne.s32.totalorder %s76, %s77
      %p86 = scmp.eq.s32.totalorder %s24, 0
      %p87 = por %p85, %p86
      %p88 = scmp.ne.s32.totalorder %s76, %s77
      %p89 = scmp.eq.s32.totalorder %s25, 1
      %p90 = por %p88, %p89
      %p92 = scmp.ne.s32.totalorder %s77, %s91
      %p93 = scmp.eq.s32.totalorder %s25, 0
      %p94 = por %p92, %p93
      %s96 = sadd.s32 %s95, 1
      %p99 = scmp.eq.s32.totalorder %s19, 1
      %p100 = scmp.ne.s32.totalorder %s95, %s97
      %p101 = scmp.eq.s32.totalorder %s19, 0
      %p102 = por %p100, %p101
      %p103 = scmp.ne.s32.totalorder %s95, %s97
      %p104 = scmp.eq.s32.totalorder %s24, 1
      %p105 = por %p103, %p104
      %p106 = scmp.ne.s32.totalorder %s97, %s98
      %p107 = scmp.eq.s32.totalorder %s24, 0
      %p108 = por %p106, %p107
      %p109 = scmp.ne.s32.totalorder %s97, %s98
      %p110 = scmp.eq.s32.totalorder %s25, 1
      %p111 = por %p109, %p110
      %p113 = scmp.ne.s32.totalorder %s98, %s112
      %p114 = scmp.eq.s32.totalorder %s25, 0
      %p115 = por %p113, %p114
      %s117 = sadd.s32 %s116, 1
      %p120 = scmp.eq.s32.totalorder %s19, 1
      %p121 = scmp.ne.s32.totalorder %s116, %s118
      %p122 = scmp.eq.s32.totalorder %s19, 0
      %p123 = por %p121, %p122
      %p124 = scmp.ne.s32.totalorder %s116, %s118
      %p125 = scmp.eq.s32.totalorder %s24, 1
      %p126 = por %p124, %p125
      %p127 = scmp.ne.s32.totalorder %s118, %s119
      %p128 = scmp.eq.s32.totalorder %s24, 0
      %p129 = por %p127, %p128
      %p130 = scmp.ne.s32.totalorder %s118, %s119
      %p131 = scmp.eq.s32.totalorder %s25, 1
      %p132 = por %p130, %p131
      %p134 = scmp.ne.s32.totalorder %s119, %s133
      %p135 = scmp.eq.s32.totalorder %s25, 0
      %p136 = por %p134, %p135
      %s137 = ssub.s32 %s19, %s26
      %p138 = scmp.eq.s32.totalorder %s137, 0
      %s140 = sadd.s32 %s139, 1
      %s141 = scalar_select %p138, %s139, %s140
      %p144 = pneg %p138
      %p145 = scmp.eq.s32.totalorder %s19, 1
      %p146 = por %p144, %p145
      %p147 = scmp.ne.s32.totalorder %s139, %s142
      %p148 = scmp.eq.s32.totalorder %s19, 0
      %p149 = por %p147, %p148
      %p150 = scmp.ne.s32.totalorder %s139, %s142
      %p151 = scmp.eq.s32.totalorder %s24, 1
      %p152 = por %p150, %p151
      %p153 = scmp.ne.s32.totalorder %s142, %s143
      %p154 = scmp.eq.s32.totalorder %s24, 0
      %p155 = por %p153, %p154
      %p156 = scmp.ne.s32.totalorder %s142, %s143
      %p157 = scmp.eq.s32.totalorder %s25, 1
      %p158 = por %p156, %p157
      %p160 = scmp.ne.s32.totalorder %s143, %s159
      %p161 = scmp.eq.s32.totalorder %s25, 0
      %p162 = por %p160, %p161
      %p163 = scmp.le.s32.totalorder 1, %s19
      %p164 = scmp.lt.s32.totalorder %s19, 3
      %p165 = pnand %p163, %p164
      %p166 = pneg %p165
      // Predicated region
      $region9: #{resnet_f_forward.1} parent=5 // pred_check
        _
      $region10: #{resnet_f_forward.1} parent=5 // pred_check_branch
        %168 = sbr.rel (%p165) target = $region12
      $region11: #{resnet_f_forward.1} parent=5 // pred_region
        %s169 = ssub.s32 %s19, 1
        // Predicated region
        $region13: #{resnet_f_forward.1} parent=11 // pred_check
          %p170 = pneg %p66
        $region14: #{resnet_f_forward.1} parent=11 // pred_check_branch
          %172 = sbr.rel (%p170) target = $region16
        $region15: #{resnet_f_forward.1} parent=11 // pred_region
          %s174 = ssub.s32 4608, 4608
          %175 = vsyncadd [#allocation6], %s174
          %s176 = sshll.u32 [#allocation5], 4
          %s177 = int_to_ptr.vmem [resolvable:$true] %s176
          %182 = dma.hbm_to_vmem [thread:$0]  %s1, 4608, %s177, [#allocation6], 64, 64, 4
        $region16: #{resnet_f_forward.1} parent=11 // pred_fallthru
          _
        // Predicated region
        $region17: #{resnet_f_forward.1} parent=11 // pred_check
          %p183 = pneg %p87
        $region18: #{resnet_f_forward.1} parent=11 // pred_check_branch
          %185 = sbr.rel (%p183) target = $region20
        $region19: #{resnet_f_forward.1} parent=11 // pred_region
          %s187 = ssub.s32 18432, 18432
          %188 = vsyncadd [#allocation6], %s187
          %s189 = sshll.u32 [#allocation7], 4
          %s190 = int_to_ptr.vmem [resolvable:$true] %s189
          %195 = dma.hbm_to_vmem [thread:$0]  %s2, 18432, %s190, [#allocation6], 64, 64, 4
        $region20: #{resnet_f_forward.1} parent=11 // pred_fallthru
          _
        // Predicated region
        $region21: #{resnet_f_forward.1} parent=11 // pred_check
          %p196 = pneg %p108
        $region22: #{resnet_f_forward.1} parent=11 // pred_check_branch
          %198 = sbr.rel (%p196) target = $region24
        $region23: #{resnet_f_forward.1} parent=11 // pred_region
          %s200 = ssub.s32 512, 512
          %201 = vsyncadd [#allocation9], %s200
          %s202 = sshll.u32 [#allocation8], 4
          %s203 = int_to_ptr.vmem [resolvable:$true] %s202
          %208 = dma.hbm_to_vmem [thread:$0]  %s3, 512, %s203, [#allocation9], 64, 64, 4
        $region24: #{resnet_f_forward.1} parent=11 // pred_fallthru
          _
        // Predicated region
        $region25: #{resnet_f_forward.1} parent=11 // pred_check
          %p209 = pneg %p129
        $region26: #{resnet_f_forward.1} parent=11 // pred_check_branch
          %211 = sbr.rel (%p209) target = $region28
        $region27: #{resnet_f_forward.1} parent=11 // pred_region
          _
        $region28: #{resnet_f_forward.1} parent=11 // pred_fallthru
          _
      $region12: #{resnet_f_forward.1} parent=5 // pred_fallthru
        _
      %p212 = scmp.lt.s32.totalorder %s19, 2
      // Predicated region
      $region29: #{resnet_f_forward.1} parent=5 // pred_check
        %p213 = pneg %p212
      $region30: #{resnet_f_forward.1} parent=5 // pred_check_branch
        %215 = sbr.rel (%p213) target = $region32
      $region31: #{resnet_f_forward.1} parent=5 // pred_region
        // Predicated region
        $region33: #{resnet_f_forward.1} parent=31 // pred_check
          %p216 = pneg %p39
        $region34: #{resnet_f_forward.1} parent=31 // pred_check_branch
          %218 = sbr.rel (%p216) target = $region36
        $region35: #{resnet_f_forward.1} parent=31 // pred_region
          %s219 = sand.u32 %s29, 1
          %s220 = scalar_lea.sflag [#allocation3], %s219
          %s221 = sand.u32 %s29, 1
          %s222 = smul.addr %s221, 64
          %s223 = scalar_lea.vmem [#allocation2], %s222
          %s225 = ssub.s32 1024, 1024
          %226 = vsyncadd %s220, %s225
          %s227 = smul.addr %s19, 8
          %s228 = smul.addr %s227, 128
          %s229 = scalar_lea.hbm %s0, %s228
          %s230 = sshll.u32 %s223, 4
          %s231 = int_to_ptr.vmem [resolvable:$true] %s230
          %236 = dma.hbm_to_vmem [thread:$0]  %s229, 1024, %s231, %s220, 128, 128, 8
        $region36: #{resnet_f_forward.1} parent=31 // pred_fallthru
          _
      $region32: #{resnet_f_forward.1} parent=5 // pred_fallthru
        _
      %p237 = scmp.le.s32.totalorder 1, %s19
      %p238 = scmp.lt.s32.totalorder %s19, 3
      %p239 = pnand %p237, %p238
      %p240 = pneg %p239
      // Predicated region
      $region37: #{resnet_f_forward.1} parent=5 // pred_check
        _
      $region38: #{resnet_f_forward.1} parent=5 // pred_check_branch
        %242 = sbr.rel (%p239) target = $region40
      $region39: #{resnet_f_forward.1} parent=5 // pred_region
        %s243 = ssub.s32 %s19, 1
        %s244 = sand.u32 %s32, 1
        %s245 = scalar_lea.sflag [#allocation3], %s244
        %s246 = sand.u32 %s32, 1
        %s247 = smul.addr %s246, 64
        %s248 = scalar_lea.vmem [#allocation2], %s247
        // Predicated region
        $region41: #{resnet_f_forward.1} parent=39 // pred_check
          %p249 = pneg %p45
        $region42: #{resnet_f_forward.1} parent=39 // pred_check_branch
          %251 = sbr.rel (%p249) target = $region44
        $region43: #{resnet_f_forward.1} parent=39 // pred_region
          %252 = dma.done %s245, 1024
        $region44: #{resnet_f_forward.1} parent=39 // pred_fallthru
          _
        // Predicated region
        $region45: #{resnet_f_forward.1} parent=39 // pred_check
          %p253 = pneg %p66
        $region46: #{resnet_f_forward.1} parent=39 // pred_check_branch
          %255 = sbr.rel (%p253) target = $region48
        $region47: #{resnet_f_forward.1} parent=39 // pred_region
          %256 = dma.done [#allocation6], 4608
        $region48: #{resnet_f_forward.1} parent=39 // pred_fallthru
          _
        // Predicated region
        $region49: #{resnet_f_forward.1} parent=39 // pred_check
          %p257 = pneg %p87
        $region50: #{resnet_f_forward.1} parent=39 // pred_check_branch
          %259 = sbr.rel (%p257) target = $region52
        $region51: #{resnet_f_forward.1} parent=39 // pred_region
          %260 = dma.done [#allocation6], 18432
        $region52: #{resnet_f_forward.1} parent=39 // pred_fallthru
          _
        // Predicated region
        $region53: #{resnet_f_forward.1} parent=39 // pred_check
          %p261 = pneg %p108
        $region54: #{resnet_f_forward.1} parent=39 // pred_check_branch
          %263 = sbr.rel (%p261) target = $region56
        $region55: #{resnet_f_forward.1} parent=39 // pred_region
          %264 = dma.done [#allocation9], 512
        $region56: #{resnet_f_forward.1} parent=39 // pred_fallthru
          _
        %s265 = sand.u32 %s32, 1
        %s266 = scalar_lea.sflag [#allocation3], %s265
        %s267 = sand.u32 %s32, 1
        %s268 = smul.addr %s267, 64
        %s269 = scalar_lea.vmem [#allocation2], %s268
        %p270 = pneg %p45
        %p271 = pneg %p42
        %p272 = pneg %p66
        %p273 = pneg %p63
        %p274 = pneg %p87
        %p275 = pneg %p84
        %p276 = pneg %p108
        %p277 = pneg %p105
        %p278 = pneg %p129
        %p279 = pneg %p126
        %p280 = pneg %p155
        %p281 = pneg %p152
        %s282 = sand.u32 %s142, 1
        %s283 = scalar_lea.sflag [#allocation4], %s282
        %s284 = sand.u32 %s142, 1
        %s285 = scalar_lea.vmem [#allocation10], %s284
        %v287 = vld [vmem:[%s248] sm:$0xff]
        %v288 = vld [vmem:[%s248 + $0x8] sm:$0xff]
        %v289 = vld [vmem:[%s248 + $0x10] sm:$0xff]
        %v290 = vld [vmem:[%s248 + $0x18] sm:$0xff]
        %v291 = vld [vmem:[%s248 + $0x20] sm:$0xff]
        %v292 = vld [vmem:[%s248 + $0x28] sm:$0xff]
        %v293 = vld [vmem:[%s248 + $0x30] sm:$0xff]
        %v294 = vld [vmem:[%s248 + $0x38] sm:$0xff]
        %v295 = vpack.c.bf16 %v288, %v287
        %v296 = vpack.c.bf16 %v290, %v289
        %v297 = vpack.c.bf16 %v292, %v291
        %v298 = vpack.c.bf16 %v294, %v293
        %v299 = vld [vmem:[#allocation5] sm:$0xf]
        %v300 = vld [vmem:[#allocation5 + $0x4] sm:$0xf]
        %v301 = vld [vmem:[#allocation5 + $0x8] sm:$0xf]
        %v302 = vld [vmem:[#allocation5 + $0xc] sm:$0xf]
        %v303 = vld [vmem:[#allocation5 + $0x10] sm:$0xf]
        %v304 = vld [vmem:[#allocation5 + $0x14] sm:$0xf]
        %v305 = vld [vmem:[#allocation5 + $0x18] sm:$0xf]
        %v306 = vld [vmem:[#allocation5 + $0x1c] sm:$0xf]
        %v315 = vunpack.c.l.b16 %v299
        %v316 = vunpack.c.l.b16 %v300
        %v317 = vunpack.c.l.b16 %v301
        %v318 = vunpack.c.l.b16 %v302
        %v319 = vunpack.c.l.b16 %v303
        %v320 = vunpack.c.l.b16 %v304
        %v321 = vunpack.c.l.b16 %v305
        %v322 = vunpack.c.l.b16 %v306
        %v323 = vpack.c.b16 %v316, %v315
        %v324 = vpack.c.b16 %v318, %v317
        %v325 = vpack.c.b16 %v320, %v319
        %v326 = vpack.c.b16 %v322, %v321
        %vm327 = vcmask 523264
        %v329 = vsel %vm327, %v323, 0
        %v332 = vsel %vm327, %v324, 0
        %v335 = vsel %vm327, %v325, 0
        %v338 = vsel %vm327, %v326, 0
        %340 = vmatprep.subr.bf16.mxu0 0
        %341 = vmatpush1.bf16.msra.mxu0 0
        %342 = vmatprep.subr.bf16.mxu0 0
        %343 = vmatpush1.bf16.msra.mxu0 0
        %344 = vmatprep.subr.bf16.mxu0 0
        %345 = vmatpush1.bf16.msra.mxu0 0
        %346 = vmatprep.subr.bf16.mxu0 0
        %347 = vmatpush1.bf16.msra.mxu0 0
        %348 = vmatprep.subr.bf16.mxu0 0
        %349 = vmatpush1.bf16.msra.mxu0 %v298
        %350 = vmatprep.subr.bf16.mxu0 0
        %351 = vmatpush1.bf16.msra.mxu0 %v297
        %352 = vmatprep.subr.bf16.mxu0 0
        %353 = vmatpush1.bf16.msra.mxu0 %v296
        %354 = vmatprep.subr.bf16.mxu0 0
        %355 = vmatpush1.bf16.msra.mxu0 %v295
        %356 = vmatprep.subr.bf16.mxu0 0
        %357 = vmatpush2.bf16.msra.mxu0 0
        %358 = vmatprep.subr.bf16.mxu0 0
        %359 = vmatpush2.bf16.msra.mxu0 0
        %360 = vmatprep.subr.bf16.mxu0 0
        %361 = vmatpush2.bf16.msra.mxu0 0
        %362 = vmatprep.subr.bf16.mxu0 0
        %363 = vmatpush2.bf16.msra.mxu0 0
        %364 = vmatprep.subr.bf16.mxu0 0
        %365 = vmatpush2.bf16.msra.mxu0 0
        %366 = vmatprep.subr.bf16.mxu0 0
        %367 = vmatpush2.bf16.msra.mxu0 0
        %368 = vmatprep.subr.bf16.mxu0 0
        %369 = vmatpush2.bf16.msra.mxu0 0
        %370 = vmatprep.subr.bf16.mxu0 0
        %371 = vmatpush2.bf16.msra.mxu0 0
        %372 = vmatprep.mubr.bf16.mxu0 0
        %373 = vmatmul.mubr.bf16.gmra.mxu0 %v329
        %v374 = vpop.f32.mrf.mxu0
        %v375 = vadd.f32 0.0, %v374
        %v376 = vpop.f32.mrf.mxu0
        %v377 = vpop.f32.mrf.mxu0
        %v378 = vadd.f32 0.0, %v377
        %v379 = vpop.f32.mrf.mxu0
        %380 = vmatprep.mubr.bf16.mxu0 0
        %381 = vmatmul.mubr.bf16.gmra.mxu0 %v332
        %v382 = vpop.f32.mrf.mxu0
        %v383 = vadd.f32 0.0, %v382
        %v384 = vpop.f32.mrf.mxu0
        %v385 = vpop.f32.mrf.mxu0
        %v386 = vadd.f32 0.0, %v385
        %v387 = vpop.f32.mrf.mxu0
        %388 = vmatprep.mubr.bf16.mxu0 0
        %389 = vmatmul.mubr.bf16.gmra.mxu0 %v335
        %v390 = vpop.f32.mrf.mxu0
        %v391 = vadd.f32 0.0, %v390
        %v392 = vpop.f32.mrf.mxu0
        %v393 = vpop.f32.mrf.mxu0
        %v394 = vadd.f32 0.0, %v393
        %v395 = vpop.f32.mrf.mxu0
        %396 = vmatprep.mubr.bf16.mxu0 0
        %397 = vmatmul.mubr.bf16.gmra.mxu0 %v338
        %v398 = vpop.f32.mrf.mxu0
        %v399 = vadd.f32 0.0, %v398
        %v400 = vpop.f32.mrf.mxu0
        %v401 = vpop.f32.mrf.mxu0
        %v402 = vadd.f32 0.0, %v401
        %v403 = vpop.f32.mrf.mxu0
        %404 = vdwg.mxu0
        %v405 = vpack.c.bf16 %v378, %v375
        %v406 = vpack.c.bf16 %v386, %v383
        %v407 = vpack.c.bf16 %v394, %v391
        %v408 = vpack.c.bf16 %v402, %v399
        %v409 = vld [vmem:[#allocation7] sm:$0xf]
        %v410 = vld [vmem:[#allocation7 + $0x4] sm:$0xf]
        %v411 = vld [vmem:[#allocation7 + $0x8] sm:$0xf]
        %v412 = vld [vmem:[#allocation7 + $0xc] sm:$0xf]
        %v413 = vld [vmem:[#allocation7 + $0x10] sm:$0xf]
        %v414 = vld [vmem:[#allocation7 + $0x14] sm:$0xf]
        %v415 = vld [vmem:[#allocation7 + $0x18] sm:$0xf]
        %v416 = vld [vmem:[#allocation7 + $0x1c] sm:$0xf]
        %s417 = scalar_lea.vmem [#allocation5], 32
        %v418 = vld [vmem:[%s417] sm:$0xf]
        %v419 = vld [vmem:[%s417 + $0x4] sm:$0xf]
        %v420 = vld [vmem:[%s417 + $0x8] sm:$0xf]
        %v421 = vld [vmem:[%s417 + $0xc] sm:$0xf]
        %v422 = vld [vmem:[%s417 + $0x10] sm:$0xf]
        %v423 = vld [vmem:[%s417 + $0x14] sm:$0xf]
        %v424 = vld [vmem:[%s417 + $0x18] sm:$0xf]
        %v425 = vld [vmem:[%s417 + $0x1c] sm:$0xf]
        %v434 = vunpack.c.l.b16 %v418
        %v435 = vunpack.c.l.b16 %v419
        %v436 = vunpack.c.l.b16 %v420
        %v437 = vunpack.c.l.b16 %v421
        %v438 = vunpack.c.l.b16 %v422
        %v439 = vunpack.c.l.b16 %v423
        %v440 = vunpack.c.l.b16 %v424
        %v441 = vunpack.c.l.b16 %v425
        %v442 = vpack.c.b16 %v435, %v434
        %v443 = vpack.c.b16 %v437, %v436
        %v444 = vpack.c.b16 %v439, %v438
        %v445 = vpack.c.b16 %v441, %v440
        %v447 = vsel %vm327, %v442, 0
        %v450 = vsel %vm327, %v443, 0
        %v453 = vsel %vm327, %v444, 0
        %v456 = vsel %vm327, %v445, 0
        %458 = vmatprep.subr.bf16.mxu0 0
        %459 = vmatpush1.bf16.msra.mxu0 0
        %460 = vmatprep.subr.bf16.mxu0 0
        %461 = vmatpush1.bf16.msra.mxu0 0
        %462 = vmatprep.subr.bf16.mxu0 0
        %463 = vmatpush1.bf16.msra.mxu0 0
        %464 = vmatprep.subr.bf16.mxu0 0
        %465 = vmatpush1.bf16.msra.mxu0 0
        %466 = vmatprep.subr.bf16.mxu0 0
        %467 = vmatpush1.bf16.msra.mxu0 %v298
        %468 = vmatprep.subr.bf16.mxu0 0
        %469 = vmatpush1.bf16.msra.mxu0 %v297
        %470 = vmatprep.subr.bf16.mxu0 0
        %471 = vmatpush1.bf16.msra.mxu0 %v296
        %472 = vmatprep.subr.bf16.mxu0 0
        %473 = vmatpush1.bf16.msra.mxu0 %v295
        %474 = vmatprep.subr.bf16.mxu0 0
        %475 = vmatpush2.bf16.msra.mxu0 0
        %476 = vmatprep.subr.bf16.mxu0 0
        %477 = vmatpush2.bf16.msra.mxu0 0
        %478 = vmatprep.subr.bf16.mxu0 0
        %479 = vmatpush2.bf16.msra.mxu0 0
        %480 = vmatprep.subr.bf16.mxu0 0
        %481 = vmatpush2.bf16.msra.mxu0 0
        %482 = vmatprep.subr.bf16.mxu0 0
        %483 = vmatpush2.bf16.msra.mxu0 0
        %484 = vmatprep.subr.bf16.mxu0 0
        %485 = vmatpush2.bf16.msra.mxu0 0
        %486 = vmatprep.subr.bf16.mxu0 0
        %487 = vmatpush2.bf16.msra.mxu0 0
        %488 = vmatprep.subr.bf16.mxu0 0
        %489 = vmatpush2.bf16.msra.mxu0 0
        %490 = vmatprep.mubr.bf16.mxu0 0
        %491 = vmatmul.mubr.bf16.gmra.mxu0 %v447
        %v492 = vpop.f32.mrf.mxu0
        %v493 = vadd.f32 0.0, %v492
        %v494 = vpop.f32.mrf.mxu0
        %v495 = vpop.f32.mrf.mxu0
        %v496 = vadd.f32 0.0, %v495
        %v497 = vpop.f32.mrf.mxu0
        %498 = vmatprep.mubr.bf16.mxu0 0
        %499 = vmatmul.mubr.bf16.gmra.mxu0 %v450
        %v500 = vpop.f32.mrf.mxu0
        %v501 = vadd.f32 0.0, %v500
        %v502 = vpop.f32.mrf.mxu0
        %v503 = vpop.f32.mrf.mxu0
        %v504 = vadd.f32 0.0, %v503
        %v505 = vpop.f32.mrf.mxu0
        %506 = vmatprep.mubr.bf16.mxu0 0
        %507 = vmatmul.mubr.bf16.gmra.mxu0 %v453
        %v508 = vpop.f32.mrf.mxu0
        %v509 = vadd.f32 0.0, %v508
        %v510 = vpop.f32.mrf.mxu0
        %v511 = vpop.f32.mrf.mxu0
        %v512 = vadd.f32 0.0, %v511
        %v513 = vpop.f32.mrf.mxu0
        %514 = vmatprep.mubr.bf16.mxu0 0
        %515 = vmatmul.mubr.bf16.gmra.mxu0 %v456
        %v516 = vpop.f32.mrf.mxu0
        %v517 = vadd.f32 0.0, %v516
        %v518 = vpop.f32.mrf.mxu0
        %v519 = vpop.f32.mrf.mxu0
        %v520 = vadd.f32 0.0, %v519
        %v521 = vpop.f32.mrf.mxu0
        %522 = vdwg.mxu0
        %v523 = vpack.c.bf16 %v496, %v493
        %v524 = vpack.c.bf16 %v504, %v501
        %v525 = vpack.c.bf16 %v512, %v509
        %v526 = vpack.c.bf16 %v520, %v517
        %s527 = scalar_lea.vmem [#allocation7], 32
        %v528 = vld [vmem:[%s527] sm:$0xf]
        %v529 = vld [vmem:[%s527 + $0x4] sm:$0xf]
        %v530 = vld [vmem:[%s527 + $0x8] sm:$0xf]
        %v531 = vld [vmem:[%s527 + $0xc] sm:$0xf]
        %v532 = vld [vmem:[%s527 + $0x10] sm:$0xf]
        %v533 = vld [vmem:[%s527 + $0x14] sm:$0xf]
        %v534 = vld [vmem:[%s527 + $0x18] sm:$0xf]
        %v535 = vld [vmem:[%s527 + $0x1c] sm:$0xf]
        %v544 = vunpack.c.l.b16 %v528
        %v545 = vunpack.c.l.b16 %v529
        %v546 = vunpack.c.l.b16 %v530
        %v547 = vunpack.c.l.b16 %v531
        %v548 = vunpack.c.l.b16 %v532
        %v549 = vunpack.c.l.b16 %v533
        %v550 = vunpack.c.l.b16 %v534
        %v551 = vunpack.c.l.b16 %v535
        %v552 = vpack.c.b16 %v545, %v544
        %v553 = vpack.c.b16 %v547, %v546
        %v554 = vpack.c.b16 %v549, %v548
        %v555 = vpack.c.b16 %v551, %v550
        %v561 = vsel %vm327, %v523, 0
        %v564 = vsel %vm327, %v524, 0
        %v567 = vsel %vm327, %v525, 0
        %v570 = vsel %vm327, %v526, 0
        %572 = vmatprep.subr.bf16.mxu0 0
        %573 = vmatpush1.bf16.msra.mxu0 0
        %574 = vmatprep.subr.bf16.mxu0 0
        %575 = vmatpush1.bf16.msra.mxu0 0
        %576 = vmatprep.subr.bf16.mxu0 0
        %577 = vmatpush1.bf16.msra.mxu0 0
        %578 = vmatprep.subr.bf16.mxu0 0
        %579 = vmatpush1.bf16.msra.mxu0 0
        %580 = vmatprep.subr.bf16.mxu0 0
        %581 = vmatpush1.bf16.msra.mxu0 %v555
        %582 = vmatprep.subr.bf16.mxu0 0
        %583 = vmatpush1.bf16.msra.mxu0 %v554
        %584 = vmatprep.subr.bf16.mxu0 0
        %585 = vmatpush1.bf16.msra.mxu0 %v553
        %586 = vmatprep.subr.bf16.mxu0 0
        %587 = vmatpush1.bf16.msra.mxu0 %v552
        %588 = vmatprep.subr.bf16.mxu0 0
        %589 = vmatpush2.bf16.msra.mxu0 0
        %590 = vmatprep.subr.bf16.mxu0 0
        %591 = vmatpush2.bf16.msra.mxu0 0
        %592 = vmatprep.subr.bf16.mxu0 0
        %593 = vmatpush2.bf16.msra.mxu0 0
        %594 = vmatprep.subr.bf16.mxu0 0
        %595 = vmatpush2.bf16.msra.mxu0 0
        %596 = vmatprep.subr.bf16.mxu0 0
        %597 = vmatpush2.bf16.msra.mxu0 0
        %598 = vmatprep.subr.bf16.mxu0 0
        %599 = vmatpush2.bf16.msra.mxu0 0
        %600 = vmatprep.subr.bf16.mxu0 0
        %601 = vmatpush2.bf16.msra.mxu0 0
        %602 = vmatprep.subr.bf16.mxu0 0
        %603 = vmatpush2.bf16.msra.mxu0 0
        %604 = vmatprep.mubr.bf16.mxu0 0
        %605 = vmatmul.mubr.bf16.gmra.mxu0 %v561
        %v606 = vpop.f32.mrf.mxu0
        %v607 = vadd.f32 0.0, %v606
        %v608 = vpop.f32.mrf.mxu0
        %v609 = vpop.f32.mrf.mxu0
        %v610 = vadd.f32 0.0, %v609
        %v611 = vpop.f32.mrf.mxu0
        %612 = vmatprep.mubr.bf16.mxu0 0
        %613 = vmatmul.mubr.bf16.gmra.mxu0 %v564
        %v614 = vpop.f32.mrf.mxu0
        %v615 = vadd.f32 0.0, %v614
        %v616 = vpop.f32.mrf.mxu0
        %v617 = vpop.f32.mrf.mxu0
        %v618 = vadd.f32 0.0, %v617
        %v619 = vpop.f32.mrf.mxu0
        %620 = vmatprep.mubr.bf16.mxu0 0
        %621 = vmatmul.mubr.bf16.gmra.mxu0 %v567
        %v622 = vpop.f32.mrf.mxu0
        %v623 = vadd.f32 0.0, %v622
        %v624 = vpop.f32.mrf.mxu0
        %v625 = vpop.f32.mrf.mxu0
        %v626 = vadd.f32 0.0, %v625
        %v627 = vpop.f32.mrf.mxu0
        %628 = vmatprep.mubr.bf16.mxu0 0
        %629 = vmatmul.mubr.bf16.gmra.mxu0 %v570
        %v630 = vpop.f32.mrf.mxu0
        %v631 = vadd.f32 0.0, %v630
        %v632 = vpop.f32.mrf.mxu0
        %v633 = vpop.f32.mrf.mxu0
        %v634 = vadd.f32 0.0, %v633
        %v635 = vpop.f32.mrf.mxu0
        %636 = vdwg.mxu0
        %v645 = vunpack.c.l.b16 %v409
        %v646 = vunpack.c.l.b16 %v410
        %v647 = vunpack.c.l.b16 %v411
        %v648 = vunpack.c.l.b16 %v412
        %v649 = vunpack.c.l.b16 %v413
        %v650 = vunpack.c.l.b16 %v414
        %v651 = vunpack.c.l.b16 %v415
        %v652 = vunpack.c.l.b16 %v416
        %v653 = vpack.c.b16 %v646, %v645
        %v654 = vpack.c.b16 %v648, %v647
        %v655 = vpack.c.b16 %v650, %v649
        %v656 = vpack.c.b16 %v652, %v651
        %v662 = vsel %vm327, %v405, 0
        %v665 = vsel %vm327, %v406, 0
        %v668 = vsel %vm327, %v407, 0
        %v671 = vsel %vm327, %v408, 0
        %673 = vmatprep.subr.bf16.mxu0 0
        %674 = vmatpush1.bf16.msra.mxu0 0
        %675 = vmatprep.subr.bf16.mxu0 0
        %676 = vmatpush1.bf16.msra.mxu0 0
        %677 = vmatprep.subr.bf16.mxu0 0
        %678 = vmatpush1.bf16.msra.mxu0 0
        %679 = vmatprep.subr.bf16.mxu0 0
        %680 = vmatpush1.bf16.msra.mxu0 0
        %681 = vmatprep.subr.bf16.mxu0 0
        %682 = vmatpush1.bf16.msra.mxu0 %v656
        %683 = vmatprep.subr.bf16.mxu0 0
        %684 = vmatpush1.bf16.msra.mxu0 %v655
        %685 = vmatprep.subr.bf16.mxu0 0
        %686 = vmatpush1.bf16.msra.mxu0 %v654
        %687 = vmatprep.subr.bf16.mxu0 0
        %688 = vmatpush1.bf16.msra.mxu0 %v653
        %689 = vmatprep.subr.bf16.mxu0 0
        %690 = vmatpush2.bf16.msra.mxu0 0
        %691 = vmatprep.subr.bf16.mxu0 0
        %692 = vmatpush2.bf16.msra.mxu0 0
        %693 = vmatprep.subr.bf16.mxu0 0
        %694 = vmatpush2.bf16.msra.mxu0 0
        %695 = vmatprep.subr.bf16.mxu0 0
        %696 = vmatpush2.bf16.msra.mxu0 0
        %697 = vmatprep.subr.bf16.mxu0 0
        %698 = vmatpush2.bf16.msra.mxu0 0
        %699 = vmatprep.subr.bf16.mxu0 0
        %700 = vmatpush2.bf16.msra.mxu0 0
        %701 = vmatprep.subr.bf16.mxu0 0
        %702 = vmatpush2.bf16.msra.mxu0 0
        %703 = vmatprep.subr.bf16.mxu0 0
        %704 = vmatpush2.bf16.msra.mxu0 0
        %705 = vmatprep.mubr.bf16.mxu0 0
        %706 = vmatmul.mubr.bf16.gmra.mxu0 %v662
        %v707 = vpop.f32.mrf.mxu0
        %v708 = vadd.f32 %v607, %v707
        %v709 = vpop.f32.mrf.mxu0
        %v710 = vpop.f32.mrf.mxu0
        %v711 = vadd.f32 %v610, %v710
        %v712 = vpop.f32.mrf.mxu0
        %713 = vmatprep.mubr.bf16.mxu0 0
        %714 = vmatmul.mubr.bf16.gmra.mxu0 %v665
        %v715 = vpop.f32.mrf.mxu0
        %v716 = vadd.f32 %v615, %v715
        %v717 = vpop.f32.mrf.mxu0
        %v718 = vpop.f32.mrf.mxu0
        %v719 = vadd.f32 %v618, %v718
        %v720 = vpop.f32.mrf.mxu0
        %721 = vmatprep.mubr.bf16.mxu0 0
        %722 = vmatmul.mubr.bf16.gmra.mxu0 %v668
        %v723 = vpop.f32.mrf.mxu0
        %v724 = vadd.f32 %v623, %v723
        %v725 = vpop.f32.mrf.mxu0
        %v726 = vpop.f32.mrf.mxu0
        %v727 = vadd.f32 %v626, %v726
        %v728 = vpop.f32.mrf.mxu0
        %729 = vmatprep.mubr.bf16.mxu0 0
        %730 = vmatmul.mubr.bf16.gmra.mxu0 %v671
        %v731 = vpop.f32.mrf.mxu0
        %v732 = vadd.f32 %v631, %v731
        %v733 = vpop.f32.mrf.mxu0
        %v734 = vpop.f32.mrf.mxu0
        %v735 = vadd.f32 %v634, %v734
        %v736 = vpop.f32.mrf.mxu0
        %737 = vdwg.mxu0
        %s738 = scalar_lea.vmem [#allocation5], 64
        %v739 = vld [vmem:[%s738] sm:$0xf]
        %v740 = vld [vmem:[%s738 + $0x4] sm:$0xf]
        %v741 = vld [vmem:[%s738 + $0x8] sm:$0xf]
        %v742 = vld [vmem:[%s738 + $0xc] sm:$0xf]
        %v743 = vld [vmem:[%s738 + $0x10] sm:$0xf]
        %v744 = vld [vmem:[%s738 + $0x14] sm:$0xf]
        %v745 = vld [vmem:[%s738 + $0x18] sm:$0xf]
        %v746 = vld [vmem:[%s738 + $0x1c] sm:$0xf]
        %v755 = vunpack.c.l.b16 %v739
        %v756 = vunpack.c.l.b16 %v740
        %v757 = vunpack.c.l.b16 %v741
        %v758 = vunpack.c.l.b16 %v742
        %v759 = vunpack.c.l.b16 %v743
        %v760 = vunpack.c.l.b16 %v744
        %v761 = vunpack.c.l.b16 %v745
        %v762 = vunpack.c.l.b16 %v746
        %v763 = vpack.c.b16 %v756, %v755
        %v764 = vpack.c.b16 %v758, %v757
        %v765 = vpack.c.b16 %v760, %v759
        %v766 = vpack.c.b16 %v762, %v761
        %v768 = vsel %vm327, %v763, 0
        %v771 = vsel %vm327, %v764, 0
        %v774 = vsel %vm327, %v765, 0
        %v777 = vsel %vm327, %v766, 0
        %779 = vmatprep.subr.bf16.mxu0 0
        %780 = vmatpush1.bf16.msra.mxu0 0
        %781 = vmatprep.subr.bf16.mxu0 0
        %782 = vmatpush1.bf16.msra.mxu0 0
        %783 = vmatprep.subr.bf16.mxu0 0
        %784 = vmatpush1.bf16.msra.mxu0 0
        %785 = vmatprep.subr.bf16.mxu0 0
        %786 = vmatpush1.bf16.msra.mxu0 0
        %787 = vmatprep.subr.bf16.mxu0 0
        %788 = vmatpush1.bf16.msra.mxu0 %v298
        %789 = vmatprep.subr.bf16.mxu0 0
        %790 = vmatpush1.bf16.msra.mxu0 %v297
        %791 = vmatprep.subr.bf16.mxu0 0
        %792 = vmatpush1.bf16.msra.mxu0 %v296
        %793 = vmatprep.subr.bf16.mxu0 0
        %794 = vmatpush1.bf16.msra.mxu0 %v295
        %795 = vmatprep.subr.bf16.mxu0 0
        %796 = vmatpush2.bf16.msra.mxu0 0
        %797 = vmatprep.subr.bf16.mxu0 0
        %798 = vmatpush2.bf16.msra.mxu0 0
        %799 = vmatprep.subr.bf16.mxu0 0
        %800 = vmatpush2.bf16.msra.mxu0 0
        %801 = vmatprep.subr.bf16.mxu0 0
        %802 = vmatpush2.bf16.msra.mxu0 0
        %803 = vmatprep.subr.bf16.mxu0 0
        %804 = vmatpush2.bf16.msra.mxu0 0
        %805 = vmatprep.subr.bf16.mxu0 0
        %806 = vmatpush2.bf16.msra.mxu0 0
        %807 = vmatprep.subr.bf16.mxu0 0
        %808 = vmatpush2.bf16.msra.mxu0 0
        %809 = vmatprep.subr.bf16.mxu0 0
        %810 = vmatpush2.bf16.msra.mxu0 0
        %811 = vmatprep.mubr.bf16.mxu0 0
        %812 = vmatmul.mubr.bf16.gmra.mxu0 %v768
        %v813 = vpop.f32.mrf.mxu0
        %v814 = vadd.f32 0.0, %v813
        %v815 = vpop.f32.mrf.mxu0
        %v816 = vpop.f32.mrf.mxu0
        %v817 = vadd.f32 0.0, %v816
        %v818 = vpop.f32.mrf.mxu0
        %819 = vmatprep.mubr.bf16.mxu0 0
        %820 = vmatmul.mubr.bf16.gmra.mxu0 %v771
        %v821 = vpop.f32.mrf.mxu0
        %v822 = vadd.f32 0.0, %v821
        %v823 = vpop.f32.mrf.mxu0
        %v824 = vpop.f32.mrf.mxu0
        %v825 = vadd.f32 0.0, %v824
        %v826 = vpop.f32.mrf.mxu0
        %827 = vmatprep.mubr.bf16.mxu0 0
        %828 = vmatmul.mubr.bf16.gmra.mxu0 %v774
        %v829 = vpop.f32.mrf.mxu0
        %v830 = vadd.f32 0.0, %v829
        %v831 = vpop.f32.mrf.mxu0
        %v832 = vpop.f32.mrf.mxu0
        %v833 = vadd.f32 0.0, %v832
        %v834 = vpop.f32.mrf.mxu0
        %835 = vmatprep.mubr.bf16.mxu0 0
        %836 = vmatmul.mubr.bf16.gmra.mxu0 %v777
        %v837 = vpop.f32.mrf.mxu0
        %v838 = vadd.f32 0.0, %v837
        %v839 = vpop.f32.mrf.mxu0
        %v840 = vpop.f32.mrf.mxu0
        %v841 = vadd.f32 0.0, %v840
        %v842 = vpop.f32.mrf.mxu0
        %843 = vdwg.mxu0
        %v844 = vpack.c.bf16 %v817, %v814
        %v845 = vpack.c.bf16 %v825, %v822
        %v846 = vpack.c.bf16 %v833, %v830
        %v847 = vpack.c.bf16 %v841, %v838
        %s848 = scalar_lea.vmem [#allocation7], 64
        %v849 = vld [vmem:[%s848] sm:$0xf]
        %v850 = vld [vmem:[%s848 + $0x4] sm:$0xf]
        %v851 = vld [vmem:[%s848 + $0x8] sm:$0xf]
        %v852 = vld [vmem:[%s848 + $0xc] sm:$0xf]
        %v853 = vld [vmem:[%s848 + $0x10] sm:$0xf]
        %v854 = vld [vmem:[%s848 + $0x14] sm:$0xf]
        %v855 = vld [vmem:[%s848 + $0x18] sm:$0xf]
        %v856 = vld [vmem:[%s848 + $0x1c] sm:$0xf]
        %v865 = vunpack.c.l.b16 %v849
        %v866 = vunpack.c.l.b16 %v850
        %v867 = vunpack.c.l.b16 %v851
        %v868 = vunpack.c.l.b16 %v852
        %v869 = vunpack.c.l.b16 %v853
        %v870 = vunpack.c.l.b16 %v854
        %v871 = vunpack.c.l.b16 %v855
        %v872 = vunpack.c.l.b16 %v856
        %v873 = vpack.c.b16 %v866, %v865
        %v874 = vpack.c.b16 %v868, %v867
        %v875 = vpack.c.b16 %v870, %v869
        %v876 = vpack.c.b16 %v872, %v871
        %v882 = vsel %vm327, %v844, 0
        %v885 = vsel %vm327, %v845, 0
        %v888 = vsel %vm327, %v846, 0
        %v891 = vsel %vm327, %v847, 0
        %893 = vmatprep.subr.bf16.mxu0 0
        %894 = vmatpush1.bf16.msra.mxu0 0
        %895 = vmatprep.subr.bf16.mxu0 0
        %896 = vmatpush1.bf16.msra.mxu0 0
        %897 = vmatprep.subr.bf16.mxu0 0
        %898 = vmatpush1.bf16.msra.mxu0 0
        %899 = vmatprep.subr.bf16.mxu0 0
        %900 = vmatpush1.bf16.msra.mxu0 0
        %901 = vmatprep.subr.bf16.mxu0 0
        %902 = vmatpush1.bf16.msra.mxu0 %v876
        %903 = vmatprep.subr.bf16.mxu0 0
        %904 = vmatpush1.bf16.msra.mxu0 %v875
        %905 = vmatprep.subr.bf16.mxu0 0
        %906 = vmatpush1.bf16.msra.mxu0 %v874
        %907 = vmatprep.subr.bf16.mxu0 0
        %908 = vmatpush1.bf16.msra.mxu0 %v873
        %909 = vmatprep.subr.bf16.mxu0 0
        %910 = vmatpush2.bf16.msra.mxu0 0
        %911 = vmatprep.subr.bf16.mxu0 0
        %912 = vmatpush2.bf16.msra.mxu0 0
        %913 = vmatprep.subr.bf16.mxu0 0
        %914 = vmatpush2.bf16.msra.mxu0 0
        %915 = vmatprep.subr.bf16.mxu0 0
        %916 = vmatpush2.bf16.msra.mxu0 0
        %917 = vmatprep.subr.bf16.mxu0 0
        %918 = vmatpush2.bf16.msra.mxu0 0
        %919 = vmatprep.subr.bf16.mxu0 0
        %920 = vmatpush2.bf16.msra.mxu0 0
        %921 = vmatprep.subr.bf16.mxu0 0
        %922 = vmatpush2.bf16.msra.mxu0 0
        %923 = vmatprep.subr.bf16.mxu0 0
        %924 = vmatpush2.bf16.msra.mxu0 0
        %925 = vmatprep.mubr.bf16.mxu0 0
        %926 = vmatmul.mubr.bf16.gmra.mxu0 %v882
        %v927 = vpop.f32.mrf.mxu0
        %v928 = vadd.f32 0.0, %v927
        %v929 = vpop.f32.mrf.mxu0
        %v930 = vpop.f32.mrf.mxu0
        %v931 = vadd.f32 0.0, %v930
        %v932 = vpop.f32.mrf.mxu0
        %933 = vmatprep.mubr.bf16.mxu0 0
        %934 = vmatmul.mubr.bf16.gmra.mxu0 %v885
        %v935 = vpop.f32.mrf.mxu0
        %v936 = vadd.f32 0.0, %v935
        %v937 = vpop.f32.mrf.mxu0
        %v938 = vpop.f32.mrf.mxu0
        %v939 = vadd.f32 0.0, %v938
        %v940 = vpop.f32.mrf.mxu0
        %941 = vmatprep.mubr.bf16.mxu0 0
        %942 = vmatmul.mubr.bf16.gmra.mxu0 %v888
        %v943 = vpop.f32.mrf.mxu0
        %v944 = vadd.f32 0.0, %v943
        %v945 = vpop.f32.mrf.mxu0
        %v946 = vpop.f32.mrf.mxu0
        %v947 = vadd.f32 0.0, %v946
        %v948 = vpop.f32.mrf.mxu0
        %949 = vmatprep.mubr.bf16.mxu0 0
        %950 = vmatmul.mubr.bf16.gmra.mxu0 %v891
        %v951 = vpop.f32.mrf.mxu0
        %v952 = vadd.f32 0.0, %v951
        %v953 = vpop.f32.mrf.mxu0
        %v954 = vpop.f32.mrf.mxu0
        %v955 = vadd.f32 0.0, %v954
        %v956 = vpop.f32.mrf.mxu0
        %957 = vdwg.mxu0
        %v958 = vadd.f32 %v708, %v928
        %v959 = vadd.f32 %v711, %v931
        %v960 = vadd.f32 %v716, %v936
        %v961 = vadd.f32 %v719, %v939
        %v962 = vadd.f32 %v724, %v944
        %v963 = vadd.f32 %v727, %v947
        %v964 = vadd.f32 %v732, %v952
        %v965 = vadd.f32 %v735, %v955
        %s966 = scalar_lea.vmem [#allocation5], 96
        %v967 = vld [vmem:[%s966] sm:$0xf]
        %v968 = vld [vmem:[%s966 + $0x4] sm:$0xf]
        %v969 = vld [vmem:[%s966 + $0x8] sm:$0xf]
        %v970 = vld [vmem:[%s966 + $0xc] sm:$0xf]
        %v971 = vld [vmem:[%s966 + $0x10] sm:$0xf]
        %v972 = vld [vmem:[%s966 + $0x14] sm:$0xf]
        %v973 = vld [vmem:[%s966 + $0x18] sm:$0xf]
        %v974 = vld [vmem:[%s966 + $0x1c] sm:$0xf]
        %v983 = vunpack.c.l.b16 %v967
        %v984 = vunpack.c.l.b16 %v968
        %v985 = vunpack.c.l.b16 %v969
        %v986 = vunpack.c.l.b16 %v970
        %v987 = vunpack.c.l.b16 %v971
        %v988 = vunpack.c.l.b16 %v972
        %v989 = vunpack.c.l.b16 %v973
        %v990 = vunpack.c.l.b16 %v974
        %v991 = vpack.c.b16 %v984, %v983
        %v992 = vpack.c.b16 %v986, %v985
        %v993 = vpack.c.b16 %v988, %v987
        %v994 = vpack.c.b16 %v990, %v989
        %v996 = vsel %vm327, %v991, 0
        %v999 = vsel %vm327, %v992, 0
        %v1002 = vsel %vm327, %v993, 0
        %v1005 = vsel %vm327, %v994, 0
        %1007 = vmatprep.subr.bf16.mxu0 0
        %1008 = vmatpush1.bf16.msra.mxu0 0
        %1009 = vmatprep.subr.bf16.mxu0 0
        %1010 = vmatpush1.bf16.msra.mxu0 0
        %1011 = vmatprep.subr.bf16.mxu0 0
        %1012 = vmatpush1.bf16.msra.mxu0 0
        %1013 = vmatprep.subr.bf16.mxu0 0
        %1014 = vmatpush1.bf16.msra.mxu0 0
        %1015 = vmatprep.subr.bf16.mxu0 0
        %1016 = vmatpush1.bf16.msra.mxu0 %v298
        %1017 = vmatprep.subr.bf16.mxu0 0
        %1018 = vmatpush1.bf16.msra.mxu0 %v297
        %1019 = vmatprep.subr.bf16.mxu0 0
        %1020 = vmatpush1.bf16.msra.mxu0 %v296
        %1021 = vmatprep.subr.bf16.mxu0 0
        %1022 = vmatpush1.bf16.msra.mxu0 %v295
        %1023 = vmatprep.subr.bf16.mxu0 0
        %1024 = vmatpush2.bf16.msra.mxu0 0
        %1025 = vmatprep.subr.bf16.mxu0 0
        %1026 = vmatpush2.bf16.msra.mxu0 0
        %1027 = vmatprep.subr.bf16.mxu0 0
        %1028 = vmatpush2.bf16.msra.mxu0 0
        %1029 = vmatprep.subr.bf16.mxu0 0
        %1030 = vmatpush2.bf16.msra.mxu0 0
        %1031 = vmatprep.subr.bf16.mxu0 0
        %1032 = vmatpush2.bf16.msra.mxu0 0
        %1033 = vmatprep.subr.bf16.mxu0 0
        %1034 = vmatpush2.bf16.msra.mxu0 0
        %1035 = vmatprep.subr.bf16.mxu0 0
        %1036 = vmatpush2.bf16.msra.mxu0 0
        %1037 = vmatprep.subr.bf16.mxu0 0
        %1038 = vmatpush2.bf16.msra.mxu0 0
        %1039 = vmatprep.mubr.bf16.mxu0 0
        %1040 = vmatmul.mubr.bf16.gmra.mxu0 %v996
        %v1041 = vpop.f32.mrf.mxu0
        %v1042 = vadd.f32 0.0, %v1041
        %v1043 = vpop.f32.mrf.mxu0
        %v1044 = vpop.f32.mrf.mxu0
        %v1045 = vadd.f32 0.0, %v1044
        %v1046 = vpop.f32.mrf.mxu0
        %1047 = vmatprep.mubr.bf16.mxu0 0
        %1048 = vmatmul.mubr.bf16.gmra.mxu0 %v999
        %v1049 = vpop.f32.mrf.mxu0
        %v1050 = vadd.f32 0.0, %v1049
        %v1051 = vpop.f32.mrf.mxu0
        %v1052 = vpop.f32.mrf.mxu0
        %v1053 = vadd.f32 0.0, %v1052
        %v1054 = vpop.f32.mrf.mxu0
        %1055 = vmatprep.mubr.bf16.mxu0 0
        %1056 = vmatmul.mubr.bf16.gmra.mxu0 %v1002
        %v1057 = vpop.f32.mrf.mxu0
        %v1058 = vadd.f32 0.0, %v1057
        %v1059 = vpop.f32.mrf.mxu0
        %v1060 = vpop.f32.mrf.mxu0
        %v1061 = vadd.f32 0.0, %v1060
        %v1062 = vpop.f32.mrf.mxu0
        %1063 = vmatprep.mubr.bf16.mxu0 0
        %1064 = vmatmul.mubr.bf16.gmra.mxu0 %v1005
        %v1065 = vpop.f32.mrf.mxu0
        %v1066 = vadd.f32 0.0, %v1065
        %v1067 = vpop.f32.mrf.mxu0
        %v1068 = vpop.f32.mrf.mxu0
        %v1069 = vadd.f32 0.0, %v1068
        %v1070 = vpop.f32.mrf.mxu0
        %1071 = vdwg.mxu0
        %v1072 = vpack.c.bf16 %v1045, %v1042
        %v1073 = vpack.c.bf16 %v1053, %v1050
        %v1074 = vpack.c.bf16 %v1061, %v1058
        %v1075 = vpack.c.bf16 %v1069, %v1066
        %s1076 = scalar_lea.vmem [#allocation7], 96
        %v1077 = vld [vmem:[%s1076] sm:$0xf]
        %v1078 = vld [vmem:[%s1076 + $0x4] sm:$0xf]
        %v1079 = vld [vmem:[%s1076 + $0x8] sm:$0xf]
        %v1080 = vld [vmem:[%s1076 + $0xc] sm:$0xf]
        %v1081 = vld [vmem:[%s1076 + $0x10] sm:$0xf]
        %v1082 = vld [vmem:[%s1076 + $0x14] sm:$0xf]
        %v1083 = vld [vmem:[%s1076 + $0x18] sm:$0xf]
        %v1084 = vld [vmem:[%s1076 + $0x1c] sm:$0xf]
        %v1093 = vunpack.c.l.b16 %v1077
        %v1094 = vunpack.c.l.b16 %v1078
        %v1095 = vunpack.c.l.b16 %v1079
        %v1096 = vunpack.c.l.b16 %v1080
        %v1097 = vunpack.c.l.b16 %v1081
        %v1098 = vunpack.c.l.b16 %v1082
        %v1099 = vunpack.c.l.b16 %v1083
        %v1100 = vunpack.c.l.b16 %v1084
        %v1101 = vpack.c.b16 %v1094, %v1093
        %v1102 = vpack.c.b16 %v1096, %v1095
        %v1103 = vpack.c.b16 %v1098, %v1097
        %v1104 = vpack.c.b16 %v1100, %v1099
        %v1110 = vsel %vm327, %v1072, 0
        %v1113 = vsel %vm327, %v1073, 0
        %v1116 = vsel %vm327, %v1074, 0
        %v1119 = vsel %vm327, %v1075, 0
        %1121 = vmatprep.subr.bf16.mxu0 0
        %1122 = vmatpush1.bf16.msra.mxu0 0
        %1123 = vmatprep.subr.bf16.mxu0 0
        %1124 = vmatpush1.bf16.msra.mxu0 0
        %1125 = vmatprep.subr.bf16.mxu0 0
        %1126 = vmatpush1.bf16.msra.mxu0 0
        %1127 = vmatprep.subr.bf16.mxu0 0
        %1128 = vmatpush1.bf16.msra.mxu0 0
        %1129 = vmatprep.subr.bf16.mxu0 0
        %1130 = vmatpush1.bf16.msra.mxu0 %v1104
        %1131 = vmatprep.subr.bf16.mxu0 0
        %1132 = vmatpush1.bf16.msra.mxu0 %v1103
        %1133 = vmatprep.subr.bf16.mxu0 0
        %1134 = vmatpush1.bf16.msra.mxu0 %v1102
        %1135 = vmatprep.subr.bf16.mxu0 0
        %1136 = vmatpush1.bf16.msra.mxu0 %v1101
        %1137 = vmatprep.subr.bf16.mxu0 0
        %1138 = vmatpush2.bf16.msra.mxu0 0
        %1139 = vmatprep.subr.bf16.mxu0 0
        %1140 = vmatpush2.bf16.msra.mxu0 0
        %1141 = vmatprep.subr.bf16.mxu0 0
        %1142 = vmatpush2.bf16.msra.mxu0 0
        %1143 = vmatprep.subr.bf16.mxu0 0
        %1144 = vmatpush2.bf16.msra.mxu0 0
        %1145 = vmatprep.subr.bf16.mxu0 0
        %1146 = vmatpush2.bf16.msra.mxu0 0
        %1147 = vmatprep.subr.bf16.mxu0 0
        %1148 = vmatpush2.bf16.msra.mxu0 0
        %1149 = vmatprep.subr.bf16.mxu0 0
        %1150 = vmatpush2.bf16.msra.mxu0 0
        %1151 = vmatprep.subr.bf16.mxu0 0
        %1152 = vmatpush2.bf16.msra.mxu0 0
        %1153 = vmatprep.mubr.bf16.mxu0 0
        %1154 = vmatmul.mubr.bf16.gmra.mxu0 %v1110
        %v1155 = vpop.f32.mrf.mxu0
        %v1156 = vadd.f32 0.0, %v1155
        %v1157 = vpop.f32.mrf.mxu0
        %v1158 = vpop.f32.mrf.mxu0
        %v1159 = vadd.f32 0.0, %v1158
        %v1160 = vpop.f32.mrf.mxu0
        %1161 = vmatprep.mubr.bf16.mxu0 0
        %1162 = vmatmul.mubr.bf16.gmra.mxu0 %v1113
        %v1163 = vpop.f32.mrf.mxu0
        %v1164 = vadd.f32 0.0, %v1163
        %v1165 = vpop.f32.mrf.mxu0
        %v1166 = vpop.f32.mrf.mxu0
        %v1167 = vadd.f32 0.0, %v1166
        %v1168 = vpop.f32.mrf.mxu0
        %1169 = vmatprep.mubr.bf16.mxu0 0
        %1170 = vmatmul.mubr.bf16.gmra.mxu0 %v1116
        %v1171 = vpop.f32.mrf.mxu0
        %v1172 = vadd.f32 0.0, %v1171
        %v1173 = vpop.f32.mrf.mxu0
        %v1174 = vpop.f32.mrf.mxu0
        %v1175 = vadd.f32 0.0, %v1174
        %v1176 = vpop.f32.mrf.mxu0
        %1177 = vmatprep.mubr.bf16.mxu0 0
        %1178 = vmatmul.mubr.bf16.gmra.mxu0 %v1119
        %v1179 = vpop.f32.mrf.mxu0
        %v1180 = vadd.f32 0.0, %v1179
        %v1181 = vpop.f32.mrf.mxu0
        %v1182 = vpop.f32.mrf.mxu0
        %v1183 = vadd.f32 0.0, %v1182
        %v1184 = vpop.f32.mrf.mxu0
        %1185 = vdwg.mxu0
        %v1186 = vadd.f32 %v958, %v1156
        %v1187 = vadd.f32 %v959, %v1159
        %v1188 = vadd.f32 %v960, %v1164
        %v1189 = vadd.f32 %v961, %v1167
        %v1190 = vadd.f32 %v962, %v1172
        %v1191 = vadd.f32 %v963, %v1175
        %v1192 = vadd.f32 %v964, %v1180
        %v1193 = vadd.f32 %v965, %v1183
        %s1194 = scalar_lea.vmem [#allocation7], 128
        %v1195 = vld [vmem:[%s1194] sm:$0xf]
        %v1196 = vld [vmem:[%s1194 + $0x4] sm:$0xf]
        %v1197 = vld [vmem:[%s1194 + $0x8] sm:$0xf]
        %v1198 = vld [vmem:[%s1194 + $0xc] sm:$0xf]
        %v1199 = vld [vmem:[%s1194 + $0x10] sm:$0xf]
        %v1200 = vld [vmem:[%s1194 + $0x14] sm:$0xf]
        %v1201 = vld [vmem:[%s1194 + $0x18] sm:$0xf]
        %v1202 = vld [vmem:[%s1194 + $0x1c] sm:$0xf]
        %v1211 = vunpack.c.l.b16 %v1195
        %v1212 = vunpack.c.l.b16 %v1196
        %v1213 = vunpack.c.l.b16 %v1197
        %v1214 = vunpack.c.l.b16 %v1198
        %v1215 = vunpack.c.l.b16 %v1199
        %v1216 = vunpack.c.l.b16 %v1200
        %v1217 = vunpack.c.l.b16 %v1201
        %v1218 = vunpack.c.l.b16 %v1202
        %v1219 = vpack.c.b16 %v1212, %v1211
        %v1220 = vpack.c.b16 %v1214, %v1213
        %v1221 = vpack.c.b16 %v1216, %v1215
        %v1222 = vpack.c.b16 %v1218, %v1217
        %v1228 = vsel %vm327, %v295, 0
        %v1231 = vsel %vm327, %v296, 0
        %v1234 = vsel %vm327, %v297, 0
        %v1237 = vsel %vm327, %v298, 0
        %1239 = vmatprep.subr.bf16.mxu0 0
        %1240 = vmatpush1.bf16.msra.mxu0 0
        %1241 = vmatprep.subr.bf16.mxu0 0
        %1242 = vmatpush1.bf16.msra.mxu0 0
        %1243 = vmatprep.subr.bf16.mxu0 0
        %1244 = vmatpush1.bf16.msra.mxu0 0
        %1245 = vmatprep.subr.bf16.mxu0 0
        %1246 = vmatpush1.bf16.msra.mxu0 0
        %1247 = vmatprep.subr.bf16.mxu0 0
        %1248 = vmatpush1.bf16.msra.mxu0 %v1222
        %1249 = vmatprep.subr.bf16.mxu0 0
        %1250 = vmatpush1.bf16.msra.mxu0 %v1221
        %1251 = vmatprep.subr.bf16.mxu0 0
        %1252 = vmatpush1.bf16.msra.mxu0 %v1220
        %1253 = vmatprep.subr.bf16.mxu0 0
        %1254 = vmatpush1.bf16.msra.mxu0 %v1219
        %1255 = vmatprep.subr.bf16.mxu0 0
        %1256 = vmatpush2.bf16.msra.mxu0 0
        %1257 = vmatprep.subr.bf16.mxu0 0
        %1258 = vmatpush2.bf16.msra.mxu0 0
        %1259 = vmatprep.subr.bf16.mxu0 0
        %1260 = vmatpush2.bf16.msra.mxu0 0
        %1261 = vmatprep.subr.bf16.mxu0 0
        %1262 = vmatpush2.bf16.msra.mxu0 0
        %1263 = vmatprep.subr.bf16.mxu0 0
        %1264 = vmatpush2.bf16.msra.mxu0 0
        %1265 = vmatprep.subr.bf16.mxu0 0
        %1266 = vmatpush2.bf16.msra.mxu0 0
        %1267 = vmatprep.subr.bf16.mxu0 0
        %1268 = vmatpush2.bf16.msra.mxu0 0
        %1269 = vmatprep.subr.bf16.mxu0 0
        %1270 = vmatpush2.bf16.msra.mxu0 0
        %1271 = vmatprep.mubr.bf16.mxu0 0
        %1272 = vmatmul.mubr.bf16.gmra.mxu0 %v1228
        %v1273 = vpop.f32.mrf.mxu0
        %v1274 = vadd.f32 0.0, %v1273
        %v1275 = vpop.f32.mrf.mxu0
        %v1276 = vpop.f32.mrf.mxu0
        %v1277 = vadd.f32 0.0, %v1276
        %v1278 = vpop.f32.mrf.mxu0
        %1279 = vmatprep.mubr.bf16.mxu0 0
        %1280 = vmatmul.mubr.bf16.gmra.mxu0 %v1231
        %v1281 = vpop.f32.mrf.mxu0
        %v1282 = vadd.f32 0.0, %v1281
        %v1283 = vpop.f32.mrf.mxu0
        %v1284 = vpop.f32.mrf.mxu0
        %v1285 = vadd.f32 0.0, %v1284
        %v1286 = vpop.f32.mrf.mxu0
        %1287 = vmatprep.mubr.bf16.mxu0 0
        %1288 = vmatmul.mubr.bf16.gmra.mxu0 %v1234
        %v1289 = vpop.f32.mrf.mxu0
        %v1290 = vadd.f32 0.0, %v1289
        %v1291 = vpop.f32.mrf.mxu0
        %v1292 = vpop.f32.mrf.mxu0
        %v1293 = vadd.f32 0.0, %v1292
        %v1294 = vpop.f32.mrf.mxu0
        %1295 = vmatprep.mubr.bf16.mxu0 0
        %1296 = vmatmul.mubr.bf16.gmra.mxu0 %v1237
        %v1297 = vpop.f32.mrf.mxu0
        %v1298 = vadd.f32 0.0, %v1297
        %v1299 = vpop.f32.mrf.mxu0
        %v1300 = vpop.f32.mrf.mxu0
        %v1301 = vadd.f32 0.0, %v1300
        %v1302 = vpop.f32.mrf.mxu0
        %1303 = vdwg.mxu0
        %v1304 = vadd.f32 %v1186, %v1274
        %v1305 = vadd.f32 %v1187, %v1277
        %v1306 = vadd.f32 %v1188, %v1282
        %v1307 = vadd.f32 %v1189, %v1285
        %v1308 = vadd.f32 %v1190, %v1290
        %v1309 = vadd.f32 %v1191, %v1293
        %v1310 = vadd.f32 %v1192, %v1298
        %v1311 = vadd.f32 %v1193, %v1301
        %s1312 = scalar_lea.vmem [#allocation5], 160
        %v1313 = vld [vmem:[%s1312] sm:$0xf]
        %v1314 = vld [vmem:[%s1312 + $0x4] sm:$0xf]
        %v1315 = vld [vmem:[%s1312 + $0x8] sm:$0xf]
        %v1316 = vld [vmem:[%s1312 + $0xc] sm:$0xf]
        %v1317 = vld [vmem:[%s1312 + $0x10] sm:$0xf]
        %v1318 = vld [vmem:[%s1312 + $0x14] sm:$0xf]
        %v1319 = vld [vmem:[%s1312 + $0x18] sm:$0xf]
        %v1320 = vld [vmem:[%s1312 + $0x1c] sm:$0xf]
        %v1329 = vunpack.c.l.b16 %v1313
        %v1330 = vunpack.c.l.b16 %v1314
        %v1331 = vunpack.c.l.b16 %v1315
        %v1332 = vunpack.c.l.b16 %v1316
        %v1333 = vunpack.c.l.b16 %v1317
        %v1334 = vunpack.c.l.b16 %v1318
        %v1335 = vunpack.c.l.b16 %v1319
        %v1336 = vunpack.c.l.b16 %v1320
        %v1337 = vpack.c.b16 %v1330, %v1329
        %v1338 = vpack.c.b16 %v1332, %v1331
        %v1339 = vpack.c.b16 %v1334, %v1333
        %v1340 = vpack.c.b16 %v1336, %v1335
        %v1342 = vsel %vm327, %v1337, 0
        %v1345 = vsel %vm327, %v1338, 0
        %v1348 = vsel %vm327, %v1339, 0
        %v1351 = vsel %vm327, %v1340, 0
        %1353 = vmatprep.subr.bf16.mxu0 0
        %1354 = vmatpush1.bf16.msra.mxu0 0
        %1355 = vmatprep.subr.bf16.mxu0 0
        %1356 = vmatpush1.bf16.msra.mxu0 0
        %1357 = vmatprep.subr.bf16.mxu0 0
        %1358 = vmatpush1.bf16.msra.mxu0 0
        %1359 = vmatprep.subr.bf16.mxu0 0
        %1360 = vmatpush1.bf16.msra.mxu0 0
        %1361 = vmatprep.subr.bf16.mxu0 0
        %1362 = vmatpush1.bf16.msra.mxu0 %v298
        %1363 = vmatprep.subr.bf16.mxu0 0
        %1364 = vmatpush1.bf16.msra.mxu0 %v297
        %1365 = vmatprep.subr.bf16.mxu0 0
        %1366 = vmatpush1.bf16.msra.mxu0 %v296
        %1367 = vmatprep.subr.bf16.mxu0 0
        %1368 = vmatpush1.bf16.msra.mxu0 %v295
        %1369 = vmatprep.subr.bf16.mxu0 0
        %1370 = vmatpush2.bf16.msra.mxu0 0
        %1371 = vmatprep.subr.bf16.mxu0 0
        %1372 = vmatpush2.bf16.msra.mxu0 0
        %1373 = vmatprep.subr.bf16.mxu0 0
        %1374 = vmatpush2.bf16.msra.mxu0 0
        %1375 = vmatprep.subr.bf16.mxu0 0
        %1376 = vmatpush2.bf16.msra.mxu0 0
        %1377 = vmatprep.subr.bf16.mxu0 0
        %1378 = vmatpush2.bf16.msra.mxu0 0
        %1379 = vmatprep.subr.bf16.mxu0 0
        %1380 = vmatpush2.bf16.msra.mxu0 0
        %1381 = vmatprep.subr.bf16.mxu0 0
        %1382 = vmatpush2.bf16.msra.mxu0 0
        %1383 = vmatprep.subr.bf16.mxu0 0
        %1384 = vmatpush2.bf16.msra.mxu0 0
        %1385 = vmatprep.mubr.bf16.mxu0 0
        %1386 = vmatmul.mubr.bf16.gmra.mxu0 %v1342
        %v1387 = vpop.f32.mrf.mxu0
        %v1388 = vadd.f32 0.0, %v1387
        %v1389 = vpop.f32.mrf.mxu0
        %v1390 = vpop.f32.mrf.mxu0
        %v1391 = vadd.f32 0.0, %v1390
        %v1392 = vpop.f32.mrf.mxu0
        %1393 = vmatprep.mubr.bf16.mxu0 0
        %1394 = vmatmul.mubr.bf16.gmra.mxu0 %v1345
        %v1395 = vpop.f32.mrf.mxu0
        %v1396 = vadd.f32 0.0, %v1395
        %v1397 = vpop.f32.mrf.mxu0
        %v1398 = vpop.f32.mrf.mxu0
        %v1399 = vadd.f32 0.0, %v1398
        %v1400 = vpop.f32.mrf.mxu0
        %1401 = vmatprep.mubr.bf16.mxu0 0
        %1402 = vmatmul.mubr.bf16.gmra.mxu0 %v1348
        %v1403 = vpop.f32.mrf.mxu0
        %v1404 = vadd.f32 0.0, %v1403
        %v1405 = vpop.f32.mrf.mxu0
        %v1406 = vpop.f32.mrf.mxu0
        %v1407 = vadd.f32 0.0, %v1406
        %v1408 = vpop.f32.mrf.mxu0
        %1409 = vmatprep.mubr.bf16.mxu0 0
        %1410 = vmatmul.mubr.bf16.gmra.mxu0 %v1351
        %v1411 = vpop.f32.mrf.mxu0
        %v1412 = vadd.f32 0.0, %v1411
        %v1413 = vpop.f32.mrf.mxu0
        %v1414 = vpop.f32.mrf.mxu0
        %v1415 = vadd.f32 0.0, %v1414
        %v1416 = vpop.f32.mrf.mxu0
        %1417 = vdwg.mxu0
        %v1418 = vpack.c.bf16 %v1391, %v1388
        %v1419 = vpack.c.bf16 %v1399, %v1396
        %v1420 = vpack.c.bf16 %v1407, %v1404
        %v1421 = vpack.c.bf16 %v1415, %v1412
        %s1422 = scalar_lea.vmem [#allocation7], 160
        %v1423 = vld [vmem:[%s1422] sm:$0xf]
        %v1424 = vld [vmem:[%s1422 + $0x4] sm:$0xf]
        %v1425 = vld [vmem:[%s1422 + $0x8] sm:$0xf]
        %v1426 = vld [vmem:[%s1422 + $0xc] sm:$0xf]
        %v1427 = vld [vmem:[%s1422 + $0x10] sm:$0xf]
        %v1428 = vld [vmem:[%s1422 + $0x14] sm:$0xf]
        %v1429 = vld [vmem:[%s1422 + $0x18] sm:$0xf]
        %v1430 = vld [vmem:[%s1422 + $0x1c] sm:$0xf]
        %v1439 = vunpack.c.l.b16 %v1423
        %v1440 = vunpack.c.l.b16 %v1424
        %v1441 = vunpack.c.l.b16 %v1425
        %v1442 = vunpack.c.l.b16 %v1426
        %v1443 = vunpack.c.l.b16 %v1427
        %v1444 = vunpack.c.l.b16 %v1428
        %v1445 = vunpack.c.l.b16 %v1429
        %v1446 = vunpack.c.l.b16 %v1430
        %v1447 = vpack.c.b16 %v1440, %v1439
        %v1448 = vpack.c.b16 %v1442, %v1441
        %v1449 = vpack.c.b16 %v1444, %v1443
        %v1450 = vpack.c.b16 %v1446, %v1445
        %v1456 = vsel %vm327, %v1418, 0
        %v1459 = vsel %vm327, %v1419, 0
        %v1462 = vsel %vm327, %v1420, 0
        %v1465 = vsel %vm327, %v1421, 0
        %1467 = vmatprep.subr.bf16.mxu0 0
        %1468 = vmatpush1.bf16.msra.mxu0 0
        %1469 = vmatprep.subr.bf16.mxu0 0
        %1470 = vmatpush1.bf16.msra.mxu0 0
        %1471 = vmatprep.subr.bf16.mxu0 0
        %1472 = vmatpush1.bf16.msra.mxu0 0
        %1473 = vmatprep.subr.bf16.mxu0 0
        %1474 = vmatpush1.bf16.msra.mxu0 0
        %1475 = vmatprep.subr.bf16.mxu0 0
        %1476 = vmatpush1.bf16.msra.mxu0 %v1450
        %1477 = vmatprep.subr.bf16.mxu0 0
        %1478 = vmatpush1.bf16.msra.mxu0 %v1449
        %1479 = vmatprep.subr.bf16.mxu0 0
        %1480 = vmatpush1.bf16.msra.mxu0 %v1448
        %1481 = vmatprep.subr.bf16.mxu0 0
        %1482 = vmatpush1.bf16.msra.mxu0 %v1447
        %1483 = vmatprep.subr.bf16.mxu0 0
        %1484 = vmatpush2.bf16.msra.mxu0 0
        %1485 = vmatprep.subr.bf16.mxu0 0
        %1486 = vmatpush2.bf16.msra.mxu0 0
        %1487 = vmatprep.subr.bf16.mxu0 0
        %1488 = vmatpush2.bf16.msra.mxu0 0
        %1489 = vmatprep.subr.bf16.mxu0 0
        %1490 = vmatpush2.bf16.msra.mxu0 0
        %1491 = vmatprep.subr.bf16.mxu0 0
        %1492 = vmatpush2.bf16.msra.mxu0 0
        %1493 = vmatprep.subr.bf16.mxu0 0
        %1494 = vmatpush2.bf16.msra.mxu0 0
        %1495 = vmatprep.subr.bf16.mxu0 0
        %1496 = vmatpush2.bf16.msra.mxu0 0
        %1497 = vmatprep.subr.bf16.mxu0 0
        %1498 = vmatpush2.bf16.msra.mxu0 0
        %1499 = vmatprep.mubr.bf16.mxu0 0
        %1500 = vmatmul.mubr.bf16.gmra.mxu0 %v1456
        %v1501 = vpop.f32.mrf.mxu0
        %v1502 = vadd.f32 0.0, %v1501
        %v1503 = vpop.f32.mrf.mxu0
        %v1504 = vpop.f32.mrf.mxu0
        %v1505 = vadd.f32 0.0, %v1504
        %v1506 = vpop.f32.mrf.mxu0
        %1507 = vmatprep.mubr.bf16.mxu0 0
        %1508 = vmatmul.mubr.bf16.gmra.mxu0 %v1459
        %v1509 = vpop.f32.mrf.mxu0
        %v1510 = vadd.f32 0.0, %v1509
        %v1511 = vpop.f32.mrf.mxu0
        %v1512 = vpop.f32.mrf.mxu0
        %v1513 = vadd.f32 0.0, %v1512
        %v1514 = vpop.f32.mrf.mxu0
        %1515 = vmatprep.mubr.bf16.mxu0 0
        %1516 = vmatmul.mubr.bf16.gmra.mxu0 %v1462
        %v1517 = vpop.f32.mrf.mxu0
        %v1518 = vadd.f32 0.0, %v1517
        %v1519 = vpop.f32.mrf.mxu0
        %v1520 = vpop.f32.mrf.mxu0
        %v1521 = vadd.f32 0.0, %v1520
        %v1522 = vpop.f32.mrf.mxu0
        %1523 = vmatprep.mubr.bf16.mxu0 0
        %1524 = vmatmul.mubr.bf16.gmra.mxu0 %v1465
        %v1525 = vpop.f32.mrf.mxu0
        %v1526 = vadd.f32 0.0, %v1525
        %v1527 = vpop.f32.mrf.mxu0
        %v1528 = vpop.f32.mrf.mxu0
        %v1529 = vadd.f32 0.0, %v1528
        %v1530 = vpop.f32.mrf.mxu0
        %1531 = vdwg.mxu0
        %v1532 = vadd.f32 %v1304, %v1502
        %v1533 = vadd.f32 %v1305, %v1505
        %v1534 = vadd.f32 %v1306, %v1510
        %v1535 = vadd.f32 %v1307, %v1513
        %v1536 = vadd.f32 %v1308, %v1518
        %v1537 = vadd.f32 %v1309, %v1521
        %v1538 = vadd.f32 %v1310, %v1526
        %v1539 = vadd.f32 %v1311, %v1529
        %s1540 = scalar_lea.vmem [#allocation5], 192
        %v1541 = vld [vmem:[%s1540] sm:$0xf]
        %v1542 = vld [vmem:[%s1540 + $0x4] sm:$0xf]
        %v1543 = vld [vmem:[%s1540 + $0x8] sm:$0xf]
        %v1544 = vld [vmem:[%s1540 + $0xc] sm:$0xf]
        %v1545 = vld [vmem:[%s1540 + $0x10] sm:$0xf]
        %v1546 = vld [vmem:[%s1540 + $0x14] sm:$0xf]
        %v1547 = vld [vmem:[%s1540 + $0x18] sm:$0xf]
        %v1548 = vld [vmem:[%s1540 + $0x1c] sm:$0xf]
        %v1557 = vunpack.c.l.b16 %v1541
        %v1558 = vunpack.c.l.b16 %v1542
        %v1559 = vunpack.c.l.b16 %v1543
        %v1560 = vunpack.c.l.b16 %v1544
        %v1561 = vunpack.c.l.b16 %v1545
        %v1562 = vunpack.c.l.b16 %v1546
        %v1563 = vunpack.c.l.b16 %v1547
        %v1564 = vunpack.c.l.b16 %v1548
        %v1565 = vpack.c.b16 %v1558, %v1557
        %v1566 = vpack.c.b16 %v1560, %v1559
        %v1567 = vpack.c.b16 %v1562, %v1561
        %v1568 = vpack.c.b16 %v1564, %v1563
        %v1570 = vsel %vm327, %v1565, 0
        %v1573 = vsel %vm327, %v1566, 0
        %v1576 = vsel %vm327, %v1567, 0
        %v1579 = vsel %vm327, %v1568, 0
        %1581 = vmatprep.subr.bf16.mxu0 0
        %1582 = vmatpush1.bf16.msra.mxu0 0
        %1583 = vmatprep.subr.bf16.mxu0 0
        %1584 = vmatpush1.bf16.msra.mxu0 0
        %1585 = vmatprep.subr.bf16.mxu0 0
        %1586 = vmatpush1.bf16.msra.mxu0 0
        %1587 = vmatprep.subr.bf16.mxu0 0
        %1588 = vmatpush1.bf16.msra.mxu0 0
        %1589 = vmatprep.subr.bf16.mxu0 0
        %1590 = vmatpush1.bf16.msra.mxu0 %v298
        %1591 = vmatprep.subr.bf16.mxu0 0
        %1592 = vmatpush1.bf16.msra.mxu0 %v297
        %1593 = vmatprep.subr.bf16.mxu0 0
        %1594 = vmatpush1.bf16.msra.mxu0 %v296
        %1595 = vmatprep.subr.bf16.mxu0 0
        %1596 = vmatpush1.bf16.msra.mxu0 %v295
        %1597 = vmatprep.subr.bf16.mxu0 0
        %1598 = vmatpush2.bf16.msra.mxu0 0
        %1599 = vmatprep.subr.bf16.mxu0 0
        %1600 = vmatpush2.bf16.msra.mxu0 0
        %1601 = vmatprep.subr.bf16.mxu0 0
        %1602 = vmatpush2.bf16.msra.mxu0 0
        %1603 = vmatprep.subr.bf16.mxu0 0
        %1604 = vmatpush2.bf16.msra.mxu0 0
        %1605 = vmatprep.subr.bf16.mxu0 0
        %1606 = vmatpush2.bf16.msra.mxu0 0
        %1607 = vmatprep.subr.bf16.mxu0 0
        %1608 = vmatpush2.bf16.msra.mxu0 0
        %1609 = vmatprep.subr.bf16.mxu0 0
        %1610 = vmatpush2.bf16.msra.mxu0 0
        %1611 = vmatprep.subr.bf16.mxu0 0
        %1612 = vmatpush2.bf16.msra.mxu0 0
        %1613 = vmatprep.mubr.bf16.mxu0 0
        %1614 = vmatmul.mubr.bf16.gmra.mxu0 %v1570
        %v1615 = vpop.f32.mrf.mxu0
        %v1616 = vadd.f32 0.0, %v1615
        %v1617 = vpop.f32.mrf.mxu0
        %v1618 = vpop.f32.mrf.mxu0
        %v1619 = vadd.f32 0.0, %v1618
        %v1620 = vpop.f32.mrf.mxu0
        %1621 = vmatprep.mubr.bf16.mxu0 0
        %1622 = vmatmul.mubr.bf16.gmra.mxu0 %v1573
        %v1623 = vpop.f32.mrf.mxu0
        %v1624 = vadd.f32 0.0, %v1623
        %v1625 = vpop.f32.mrf.mxu0
        %v1626 = vpop.f32.mrf.mxu0
        %v1627 = vadd.f32 0.0, %v1626
        %v1628 = vpop.f32.mrf.mxu0
        %1629 = vmatprep.mubr.bf16.mxu0 0
        %1630 = vmatmul.mubr.bf16.gmra.mxu0 %v1576
        %v1631 = vpop.f32.mrf.mxu0
        %v1632 = vadd.f32 0.0, %v1631
        %v1633 = vpop.f32.mrf.mxu0
        %v1634 = vpop.f32.mrf.mxu0
        %v1635 = vadd.f32 0.0, %v1634
        %v1636 = vpop.f32.mrf.mxu0
        %1637 = vmatprep.mubr.bf16.mxu0 0
        %1638 = vmatmul.mubr.bf16.gmra.mxu0 %v1579
        %v1639 = vpop.f32.mrf.mxu0
        %v1640 = vadd.f32 0.0, %v1639
        %v1641 = vpop.f32.mrf.mxu0
        %v1642 = vpop.f32.mrf.mxu0
        %v1643 = vadd.f32 0.0, %v1642
        %v1644 = vpop.f32.mrf.mxu0
        %1645 = vdwg.mxu0
        %v1646 = vpack.c.bf16 %v1619, %v1616
        %v1647 = vpack.c.bf16 %v1627, %v1624
        %v1648 = vpack.c.bf16 %v1635, %v1632
        %v1649 = vpack.c.bf16 %v1643, %v1640
        %s1650 = scalar_lea.vmem [#allocation7], 192
        %v1651 = vld [vmem:[%s1650] sm:$0xf]
        %v1652 = vld [vmem:[%s1650 + $0x4] sm:$0xf]
        %v1653 = vld [vmem:[%s1650 + $0x8] sm:$0xf]
        %v1654 = vld [vmem:[%s1650 + $0xc] sm:$0xf]
        %v1655 = vld [vmem:[%s1650 + $0x10] sm:$0xf]
        %v1656 = vld [vmem:[%s1650 + $0x14] sm:$0xf]
        %v1657 = vld [vmem:[%s1650 + $0x18] sm:$0xf]
        %v1658 = vld [vmem:[%s1650 + $0x1c] sm:$0xf]
        %v1667 = vunpack.c.l.b16 %v1651
        %v1668 = vunpack.c.l.b16 %v1652
        %v1669 = vunpack.c.l.b16 %v1653
        %v1670 = vunpack.c.l.b16 %v1654
        %v1671 = vunpack.c.l.b16 %v1655
        %v1672 = vunpack.c.l.b16 %v1656
        %v1673 = vunpack.c.l.b16 %v1657
        %v1674 = vunpack.c.l.b16 %v1658
        %v1675 = vpack.c.b16 %v1668, %v1667
        %v1676 = vpack.c.b16 %v1670, %v1669
        %v1677 = vpack.c.b16 %v1672, %v1671
        %v1678 = vpack.c.b16 %v1674, %v1673
        %v1684 = vsel %vm327, %v1646, 0
        %v1687 = vsel %vm327, %v1647, 0
        %v1690 = vsel %vm327, %v1648, 0
        %v1693 = vsel %vm327, %v1649, 0
        %1695 = vmatprep.subr.bf16.mxu0 0
        %1696 = vmatpush1.bf16.msra.mxu0 0
        %1697 = vmatprep.subr.bf16.mxu0 0
        %1698 = vmatpush1.bf16.msra.mxu0 0
        %1699 = vmatprep.subr.bf16.mxu0 0
        %1700 = vmatpush1.bf16.msra.mxu0 0
        %1701 = vmatprep.subr.bf16.mxu0 0
        %1702 = vmatpush1.bf16.msra.mxu0 0
        %1703 = vmatprep.subr.bf16.mxu0 0
        %1704 = vmatpush1.bf16.msra.mxu0 %v1678
        %1705 = vmatprep.subr.bf16.mxu0 0
        %1706 = vmatpush1.bf16.msra.mxu0 %v1677
        %1707 = vmatprep.subr.bf16.mxu0 0
        %1708 = vmatpush1.bf16.msra.mxu0 %v1676
        %1709 = vmatprep.subr.bf16.mxu0 0
        %1710 = vmatpush1.bf16.msra.mxu0 %v1675
        %1711 = vmatprep.subr.bf16.mxu0 0
        %1712 = vmatpush2.bf16.msra.mxu0 0
        %1713 = vmatprep.subr.bf16.mxu0 0
        %1714 = vmatpush2.bf16.msra.mxu0 0
        %1715 = vmatprep.subr.bf16.mxu0 0
        %1716 = vmatpush2.bf16.msra.mxu0 0
        %1717 = vmatprep.subr.bf16.mxu0 0
        %1718 = vmatpush2.bf16.msra.mxu0 0
        %1719 = vmatprep.subr.bf16.mxu0 0
        %1720 = vmatpush2.bf16.msra.mxu0 0
        %1721 = vmatprep.subr.bf16.mxu0 0
        %1722 = vmatpush2.bf16.msra.mxu0 0
        %1723 = vmatprep.subr.bf16.mxu0 0
        %1724 = vmatpush2.bf16.msra.mxu0 0
        %1725 = vmatprep.subr.bf16.mxu0 0
        %1726 = vmatpush2.bf16.msra.mxu0 0
        %1727 = vmatprep.mubr.bf16.mxu0 0
        %1728 = vmatmul.mubr.bf16.gmra.mxu0 %v1684
        %v1729 = vpop.f32.mrf.mxu0
        %v1730 = vadd.f32 0.0, %v1729
        %v1731 = vpop.f32.mrf.mxu0
        %v1732 = vpop.f32.mrf.mxu0
        %v1733 = vadd.f32 0.0, %v1732
        %v1734 = vpop.f32.mrf.mxu0
        %1735 = vmatprep.mubr.bf16.mxu0 0
        %1736 = vmatmul.mubr.bf16.gmra.mxu0 %v1687
        %v1737 = vpop.f32.mrf.mxu0
        %v1738 = vadd.f32 0.0, %v1737
        %v1739 = vpop.f32.mrf.mxu0
        %v1740 = vpop.f32.mrf.mxu0
        %v1741 = vadd.f32 0.0, %v1740
        %v1742 = vpop.f32.mrf.mxu0
        %1743 = vmatprep.mubr.bf16.mxu0 0
        %1744 = vmatmul.mubr.bf16.gmra.mxu0 %v1690
        %v1745 = vpop.f32.mrf.mxu0
        %v1746 = vadd.f32 0.0, %v1745
        %v1747 = vpop.f32.mrf.mxu0
        %v1748 = vpop.f32.mrf.mxu0
        %v1749 = vadd.f32 0.0, %v1748
        %v1750 = vpop.f32.mrf.mxu0
        %1751 = vmatprep.mubr.bf16.mxu0 0
        %1752 = vmatmul.mubr.bf16.gmra.mxu0 %v1693
        %v1753 = vpop.f32.mrf.mxu0
        %v1754 = vadd.f32 0.0, %v1753
        %v1755 = vpop.f32.mrf.mxu0
        %v1756 = vpop.f32.mrf.mxu0
        %v1757 = vadd.f32 0.0, %v1756
        %v1758 = vpop.f32.mrf.mxu0
        %1759 = vdwg.mxu0
        %v1760 = vadd.f32 %v1532, %v1730
        %v1761 = vadd.f32 %v1533, %v1733
        %v1762 = vadd.f32 %v1534, %v1738
        %v1763 = vadd.f32 %v1535, %v1741
        %v1764 = vadd.f32 %v1536, %v1746
        %v1765 = vadd.f32 %v1537, %v1749
        %v1766 = vadd.f32 %v1538, %v1754
        %v1767 = vadd.f32 %v1539, %v1757
        %s1768 = scalar_lea.vmem [#allocation5], 224
        %v1769 = vld [vmem:[%s1768] sm:$0xf]
        %v1770 = vld [vmem:[%s1768 + $0x4] sm:$0xf]
        %v1771 = vld [vmem:[%s1768 + $0x8] sm:$0xf]
        %v1772 = vld [vmem:[%s1768 + $0xc] sm:$0xf]
        %v1773 = vld [vmem:[%s1768 + $0x10] sm:$0xf]
        %v1774 = vld [vmem:[%s1768 + $0x14] sm:$0xf]
        %v1775 = vld [vmem:[%s1768 + $0x18] sm:$0xf]
        %v1776 = vld [vmem:[%s1768 + $0x1c] sm:$0xf]
        %v1785 = vunpack.c.l.b16 %v1769
        %v1786 = vunpack.c.l.b16 %v1770
        %v1787 = vunpack.c.l.b16 %v1771
        %v1788 = vunpack.c.l.b16 %v1772
        %v1789 = vunpack.c.l.b16 %v1773
        %v1790 = vunpack.c.l.b16 %v1774
        %v1791 = vunpack.c.l.b16 %v1775
        %v1792 = vunpack.c.l.b16 %v1776
        %v1793 = vpack.c.b16 %v1786, %v1785
        %v1794 = vpack.c.b16 %v1788, %v1787
        %v1795 = vpack.c.b16 %v1790, %v1789
        %v1796 = vpack.c.b16 %v1792, %v1791
        %v1798 = vsel %vm327, %v1793, 0
        %v1801 = vsel %vm327, %v1794, 0
        %v1804 = vsel %vm327, %v1795, 0
        %v1807 = vsel %vm327, %v1796, 0
        %1809 = vmatprep.subr.bf16.mxu0 0
        %1810 = vmatpush1.bf16.msra.mxu0 0
        %1811 = vmatprep.subr.bf16.mxu0 0
        %1812 = vmatpush1.bf16.msra.mxu0 0
        %1813 = vmatprep.subr.bf16.mxu0 0
        %1814 = vmatpush1.bf16.msra.mxu0 0
        %1815 = vmatprep.subr.bf16.mxu0 0
        %1816 = vmatpush1.bf16.msra.mxu0 0
        %1817 = vmatprep.subr.bf16.mxu0 0
        %1818 = vmatpush1.bf16.msra.mxu0 %v298
        %1819 = vmatprep.subr.bf16.mxu0 0
        %1820 = vmatpush1.bf16.msra.mxu0 %v297
        %1821 = vmatprep.subr.bf16.mxu0 0
        %1822 = vmatpush1.bf16.msra.mxu0 %v296
        %1823 = vmatprep.subr.bf16.mxu0 0
        %1824 = vmatpush1.bf16.msra.mxu0 %v295
        %1825 = vmatprep.subr.bf16.mxu0 0
        %1826 = vmatpush2.bf16.msra.mxu0 0
        %1827 = vmatprep.subr.bf16.mxu0 0
        %1828 = vmatpush2.bf16.msra.mxu0 0
        %1829 = vmatprep.subr.bf16.mxu0 0
        %1830 = vmatpush2.bf16.msra.mxu0 0
        %1831 = vmatprep.subr.bf16.mxu0 0
        %1832 = vmatpush2.bf16.msra.mxu0 0
        %1833 = vmatprep.subr.bf16.mxu0 0
        %1834 = vmatpush2.bf16.msra.mxu0 0
        %1835 = vmatprep.subr.bf16.mxu0 0
        %1836 = vmatpush2.bf16.msra.mxu0 0
        %1837 = vmatprep.subr.bf16.mxu0 0
        %1838 = vmatpush2.bf16.msra.mxu0 0
        %1839 = vmatprep.subr.bf16.mxu0 0
        %1840 = vmatpush2.bf16.msra.mxu0 0
        %1841 = vmatprep.mubr.bf16.mxu0 0
        %1842 = vmatmul.mubr.bf16.gmra.mxu0 %v1798
        %v1843 = vpop.f32.mrf.mxu0
        %v1844 = vadd.f32 0.0, %v1843
        %v1845 = vpop.f32.mrf.mxu0
        %v1846 = vpop.f32.mrf.mxu0
        %v1847 = vadd.f32 0.0, %v1846
        %v1848 = vpop.f32.mrf.mxu0
        %1849 = vmatprep.mubr.bf16.mxu0 0
        %1850 = vmatmul.mubr.bf16.gmra.mxu0 %v1801
        %v1851 = vpop.f32.mrf.mxu0
        %v1852 = vadd.f32 0.0, %v1851
        %v1853 = vpop.f32.mrf.mxu0
        %v1854 = vpop.f32.mrf.mxu0
        %v1855 = vadd.f32 0.0, %v1854
        %v1856 = vpop.f32.mrf.mxu0
        %1857 = vmatprep.mubr.bf16.mxu0 0
        %1858 = vmatmul.mubr.bf16.gmra.mxu0 %v1804
        %v1859 = vpop.f32.mrf.mxu0
        %v1860 = vadd.f32 0.0, %v1859
        %v1861 = vpop.f32.mrf.mxu0
        %v1862 = vpop.f32.mrf.mxu0
        %v1863 = vadd.f32 0.0, %v1862
        %v1864 = vpop.f32.mrf.mxu0
        %1865 = vmatprep.mubr.bf16.mxu0 0
        %1866 = vmatmul.mubr.bf16.gmra.mxu0 %v1807
        %v1867 = vpop.f32.mrf.mxu0
        %v1868 = vadd.f32 0.0, %v1867
        %v1869 = vpop.f32.mrf.mxu0
        %v1870 = vpop.f32.mrf.mxu0
        %v1871 = vadd.f32 0.0, %v1870
        %v1872 = vpop.f32.mrf.mxu0
        %1873 = vdwg.mxu0
        %v1874 = vpack.c.bf16 %v1847, %v1844
        %v1875 = vpack.c.bf16 %v1855, %v1852
        %v1876 = vpack.c.bf16 %v1863, %v1860
        %v1877 = vpack.c.bf16 %v1871, %v1868
        %s1878 = scalar_lea.vmem [#allocation7], 224
        %v1879 = vld [vmem:[%s1878] sm:$0xf]
        %v1880 = vld [vmem:[%s1878 + $0x4] sm:$0xf]
        %v1881 = vld [vmem:[%s1878 + $0x8] sm:$0xf]
        %v1882 = vld [vmem:[%s1878 + $0xc] sm:$0xf]
        %v1883 = vld [vmem:[%s1878 + $0x10] sm:$0xf]
        %v1884 = vld [vmem:[%s1878 + $0x14] sm:$0xf]
        %v1885 = vld [vmem:[%s1878 + $0x18] sm:$0xf]
        %v1886 = vld [vmem:[%s1878 + $0x1c] sm:$0xf]
        %v1895 = vunpack.c.l.b16 %v1879
        %v1896 = vunpack.c.l.b16 %v1880
        %v1897 = vunpack.c.l.b16 %v1881
        %v1898 = vunpack.c.l.b16 %v1882
        %v1899 = vunpack.c.l.b16 %v1883
        %v1900 = vunpack.c.l.b16 %v1884
        %v1901 = vunpack.c.l.b16 %v1885
        %v1902 = vunpack.c.l.b16 %v1886
        %v1903 = vpack.c.b16 %v1896, %v1895
        %v1904 = vpack.c.b16 %v1898, %v1897
        %v1905 = vpack.c.b16 %v1900, %v1899
        %v1906 = vpack.c.b16 %v1902, %v1901
        %v1912 = vsel %vm327, %v1874, 0
        %v1915 = vsel %vm327, %v1875, 0
        %v1918 = vsel %vm327, %v1876, 0
        %v1921 = vsel %vm327, %v1877, 0
        %1923 = vmatprep.subr.bf16.mxu0 0
        %1924 = vmatpush1.bf16.msra.mxu0 0
        %1925 = vmatprep.subr.bf16.mxu0 0
        %1926 = vmatpush1.bf16.msra.mxu0 0
        %1927 = vmatprep.subr.bf16.mxu0 0
        %1928 = vmatpush1.bf16.msra.mxu0 0
        %1929 = vmatprep.subr.bf16.mxu0 0
        %1930 = vmatpush1.bf16.msra.mxu0 0
        %1931 = vmatprep.subr.bf16.mxu0 0
        %1932 = vmatpush1.bf16.msra.mxu0 %v1906
        %1933 = vmatprep.subr.bf16.mxu0 0
        %1934 = vmatpush1.bf16.msra.mxu0 %v1905
        %1935 = vmatprep.subr.bf16.mxu0 0
        %1936 = vmatpush1.bf16.msra.mxu0 %v1904
        %1937 = vmatprep.subr.bf16.mxu0 0
        %1938 = vmatpush1.bf16.msra.mxu0 %v1903
        %1939 = vmatprep.subr.bf16.mxu0 0
        %1940 = vmatpush2.bf16.msra.mxu0 0
        %1941 = vmatprep.subr.bf16.mxu0 0
        %1942 = vmatpush2.bf16.msra.mxu0 0
        %1943 = vmatprep.subr.bf16.mxu0 0
        %1944 = vmatpush2.bf16.msra.mxu0 0
        %1945 = vmatprep.subr.bf16.mxu0 0
        %1946 = vmatpush2.bf16.msra.mxu0 0
        %1947 = vmatprep.subr.bf16.mxu0 0
        %1948 = vmatpush2.bf16.msra.mxu0 0
        %1949 = vmatprep.subr.bf16.mxu0 0
        %1950 = vmatpush2.bf16.msra.mxu0 0
        %1951 = vmatprep.subr.bf16.mxu0 0
        %1952 = vmatpush2.bf16.msra.mxu0 0
        %1953 = vmatprep.subr.bf16.mxu0 0
        %1954 = vmatpush2.bf16.msra.mxu0 0
        %1955 = vmatprep.mubr.bf16.mxu0 0
        %1956 = vmatmul.mubr.bf16.gmra.mxu0 %v1912
        %v1957 = vpop.f32.mrf.mxu0
        %v1958 = vadd.f32 0.0, %v1957
        %v1959 = vpop.f32.mrf.mxu0
        %v1960 = vpop.f32.mrf.mxu0
        %v1961 = vadd.f32 0.0, %v1960
        %v1962 = vpop.f32.mrf.mxu0
        %1963 = vmatprep.mubr.bf16.mxu0 0
        %1964 = vmatmul.mubr.bf16.gmra.mxu0 %v1915
        %v1965 = vpop.f32.mrf.mxu0
        %v1966 = vadd.f32 0.0, %v1965
        %v1967 = vpop.f32.mrf.mxu0
        %v1968 = vpop.f32.mrf.mxu0
        %v1969 = vadd.f32 0.0, %v1968
        %v1970 = vpop.f32.mrf.mxu0
        %1971 = vmatprep.mubr.bf16.mxu0 0
        %1972 = vmatmul.mubr.bf16.gmra.mxu0 %v1918
        %v1973 = vpop.f32.mrf.mxu0
        %v1974 = vadd.f32 0.0, %v1973
        %v1975 = vpop.f32.mrf.mxu0
        %v1976 = vpop.f32.mrf.mxu0
        %v1977 = vadd.f32 0.0, %v1976
        %v1978 = vpop.f32.mrf.mxu0
        %1979 = vmatprep.mubr.bf16.mxu0 0
        %1980 = vmatmul.mubr.bf16.gmra.mxu0 %v1921
        %v1981 = vpop.f32.mrf.mxu0
        %v1982 = vadd.f32 0.0, %v1981
        %v1983 = vpop.f32.mrf.mxu0
        %v1984 = vpop.f32.mrf.mxu0
        %v1985 = vadd.f32 0.0, %v1984
        %v1986 = vpop.f32.mrf.mxu0
        %1987 = vdwg.mxu0
        %v1988 = vadd.f32 %v1760, %v1958
        %v1989 = vadd.f32 %v1761, %v1961
        %v1990 = vadd.f32 %v1762, %v1966
        %v1991 = vadd.f32 %v1763, %v1969
        %v1992 = vadd.f32 %v1764, %v1974
        %v1993 = vadd.f32 %v1765, %v1977
        %v1994 = vadd.f32 %v1766, %v1982
        %v1995 = vadd.f32 %v1767, %v1985
        %s1996 = scalar_lea.vmem [#allocation5], 256
        %v1997 = vld [vmem:[%s1996] sm:$0xf]
        %v1998 = vld [vmem:[%s1996 + $0x4] sm:$0xf]
        %v1999 = vld [vmem:[%s1996 + $0x8] sm:$0xf]
        %v2000 = vld [vmem:[%s1996 + $0xc] sm:$0xf]
        %v2001 = vld [vmem:[%s1996 + $0x10] sm:$0xf]
        %v2002 = vld [vmem:[%s1996 + $0x14] sm:$0xf]
        %v2003 = vld [vmem:[%s1996 + $0x18] sm:$0xf]
        %v2004 = vld [vmem:[%s1996 + $0x1c] sm:$0xf]
        %v2013 = vunpack.c.l.b16 %v1997
        %v2014 = vunpack.c.l.b16 %v1998
        %v2015 = vunpack.c.l.b16 %v1999
        %v2016 = vunpack.c.l.b16 %v2000
        %v2017 = vunpack.c.l.b16 %v2001
        %v2018 = vunpack.c.l.b16 %v2002
        %v2019 = vunpack.c.l.b16 %v2003
        %v2020 = vunpack.c.l.b16 %v2004
        %v2021 = vpack.c.b16 %v2014, %v2013
        %v2022 = vpack.c.b16 %v2016, %v2015
        %v2023 = vpack.c.b16 %v2018, %v2017
        %v2024 = vpack.c.b16 %v2020, %v2019
        %v2026 = vsel %vm327, %v2021, 0
        %v2029 = vsel %vm327, %v2022, 0
        %v2032 = vsel %vm327, %v2023, 0
        %v2035 = vsel %vm327, %v2024, 0
        %2037 = vmatprep.subr.bf16.mxu0 0
        %2038 = vmatpush1.bf16.msra.mxu0 0
        %2039 = vmatprep.subr.bf16.mxu0 0
        %2040 = vmatpush1.bf16.msra.mxu0 0
        %2041 = vmatprep.subr.bf16.mxu0 0
        %2042 = vmatpush1.bf16.msra.mxu0 0
        %2043 = vmatprep.subr.bf16.mxu0 0
        %2044 = vmatpush1.bf16.msra.mxu0 0
        %2045 = vmatprep.subr.bf16.mxu0 0
        %2046 = vmatpush1.bf16.msra.mxu0 %v298
        %2047 = vmatprep.subr.bf16.mxu0 0
        %2048 = vmatpush1.bf16.msra.mxu0 %v297
        %2049 = vmatprep.subr.bf16.mxu0 0
        %2050 = vmatpush1.bf16.msra.mxu0 %v296
        %2051 = vmatprep.subr.bf16.mxu0 0
        %2052 = vmatpush1.bf16.msra.mxu0 %v295
        %2053 = vmatprep.subr.bf16.mxu0 0
        %2054 = vmatpush2.bf16.msra.mxu0 0
        %2055 = vmatprep.subr.bf16.mxu0 0
        %2056 = vmatpush2.bf16.msra.mxu0 0
        %2057 = vmatprep.subr.bf16.mxu0 0
        %2058 = vmatpush2.bf16.msra.mxu0 0
        %2059 = vmatprep.subr.bf16.mxu0 0
        %2060 = vmatpush2.bf16.msra.mxu0 0
        %2061 = vmatprep.subr.bf16.mxu0 0
        %2062 = vmatpush2.bf16.msra.mxu0 0
        %2063 = vmatprep.subr.bf16.mxu0 0
        %2064 = vmatpush2.bf16.msra.mxu0 0
        %2065 = vmatprep.subr.bf16.mxu0 0
        %2066 = vmatpush2.bf16.msra.mxu0 0
        %2067 = vmatprep.subr.bf16.mxu0 0
        %2068 = vmatpush2.bf16.msra.mxu0 0
        %2069 = vmatprep.mubr.bf16.mxu0 0
        %2070 = vmatmul.mubr.bf16.gmra.mxu0 %v2026
        %v2071 = vpop.f32.mrf.mxu0
        %v2072 = vadd.f32 0.0, %v2071
        %v2073 = vpop.f32.mrf.mxu0
        %v2074 = vpop.f32.mrf.mxu0
        %v2075 = vadd.f32 0.0, %v2074
        %v2076 = vpop.f32.mrf.mxu0
        %2077 = vmatprep.mubr.bf16.mxu0 0
        %2078 = vmatmul.mubr.bf16.gmra.mxu0 %v2029
        %v2079 = vpop.f32.mrf.mxu0
        %v2080 = vadd.f32 0.0, %v2079
        %v2081 = vpop.f32.mrf.mxu0
        %v2082 = vpop.f32.mrf.mxu0
        %v2083 = vadd.f32 0.0, %v2082
        %v2084 = vpop.f32.mrf.mxu0
        %2085 = vmatprep.mubr.bf16.mxu0 0
        %2086 = vmatmul.mubr.bf16.gmra.mxu0 %v2032
        %v2087 = vpop.f32.mrf.mxu0
        %v2088 = vadd.f32 0.0, %v2087
        %v2089 = vpop.f32.mrf.mxu0
        %v2090 = vpop.f32.mrf.mxu0
        %v2091 = vadd.f32 0.0, %v2090
        %v2092 = vpop.f32.mrf.mxu0
        %2093 = vmatprep.mubr.bf16.mxu0 0
        %2094 = vmatmul.mubr.bf16.gmra.mxu0 %v2035
        %v2095 = vpop.f32.mrf.mxu0
        %v2096 = vadd.f32 0.0, %v2095
        %v2097 = vpop.f32.mrf.mxu0
        %v2098 = vpop.f32.mrf.mxu0
        %v2099 = vadd.f32 0.0, %v2098
        %v2100 = vpop.f32.mrf.mxu0
        %2101 = vdwg.mxu0
        %v2102 = vpack.c.bf16 %v2075, %v2072
        %v2103 = vpack.c.bf16 %v2083, %v2080
        %v2104 = vpack.c.bf16 %v2091, %v2088
        %v2105 = vpack.c.bf16 %v2099, %v2096
        %s2106 = scalar_lea.vmem [#allocation7], 256
        %v2107 = vld [vmem:[%s2106] sm:$0xf]
        %v2108 = vld [vmem:[%s2106 + $0x4] sm:$0xf]
        %v2109 = vld [vmem:[%s2106 + $0x8] sm:$0xf]
        %v2110 = vld [vmem:[%s2106 + $0xc] sm:$0xf]
        %v2111 = vld [vmem:[%s2106 + $0x10] sm:$0xf]
        %v2112 = vld [vmem:[%s2106 + $0x14] sm:$0xf]
        %v2113 = vld [vmem:[%s2106 + $0x18] sm:$0xf]
        %v2114 = vld [vmem:[%s2106 + $0x1c] sm:$0xf]
        %v2123 = vunpack.c.l.b16 %v2107
        %v2124 = vunpack.c.l.b16 %v2108
        %v2125 = vunpack.c.l.b16 %v2109
        %v2126 = vunpack.c.l.b16 %v2110
        %v2127 = vunpack.c.l.b16 %v2111
        %v2128 = vunpack.c.l.b16 %v2112
        %v2129 = vunpack.c.l.b16 %v2113
        %v2130 = vunpack.c.l.b16 %v2114
        %v2131 = vpack.c.b16 %v2124, %v2123
        %v2132 = vpack.c.b16 %v2126, %v2125
        %v2133 = vpack.c.b16 %v2128, %v2127
        %v2134 = vpack.c.b16 %v2130, %v2129
        %v2140 = vsel %vm327, %v2102, 0
        %v2143 = vsel %vm327, %v2103, 0
        %v2146 = vsel %vm327, %v2104, 0
        %v2149 = vsel %vm327, %v2105, 0
        %2151 = vmatprep.subr.bf16.mxu0 0
        %2152 = vmatpush1.bf16.msra.mxu0 0
        %2153 = vmatprep.subr.bf16.mxu0 0
        %2154 = vmatpush1.bf16.msra.mxu0 0
        %2155 = vmatprep.subr.bf16.mxu0 0
        %2156 = vmatpush1.bf16.msra.mxu0 0
        %2157 = vmatprep.subr.bf16.mxu0 0
        %2158 = vmatpush1.bf16.msra.mxu0 0
        %2159 = vmatprep.subr.bf16.mxu0 0
        %2160 = vmatpush1.bf16.msra.mxu0 %v2134
        %2161 = vmatprep.subr.bf16.mxu0 0
        %2162 = vmatpush1.bf16.msra.mxu0 %v2133
        %2163 = vmatprep.subr.bf16.mxu0 0
        %2164 = vmatpush1.bf16.msra.mxu0 %v2132
        %2165 = vmatprep.subr.bf16.mxu0 0
        %2166 = vmatpush1.bf16.msra.mxu0 %v2131
        %2167 = vmatprep.subr.bf16.mxu0 0
        %2168 = vmatpush2.bf16.msra.mxu0 0
        %2169 = vmatprep.subr.bf16.mxu0 0
        %2170 = vmatpush2.bf16.msra.mxu0 0
        %2171 = vmatprep.subr.bf16.mxu0 0
        %2172 = vmatpush2.bf16.msra.mxu0 0
        %2173 = vmatprep.subr.bf16.mxu0 0
        %2174 = vmatpush2.bf16.msra.mxu0 0
        %2175 = vmatprep.subr.bf16.mxu0 0
        %2176 = vmatpush2.bf16.msra.mxu0 0
        %2177 = vmatprep.subr.bf16.mxu0 0
        %2178 = vmatpush2.bf16.msra.mxu0 0
        %2179 = vmatprep.subr.bf16.mxu0 0
        %2180 = vmatpush2.bf16.msra.mxu0 0
        %2181 = vmatprep.subr.bf16.mxu0 0
        %2182 = vmatpush2.bf16.msra.mxu0 0
        %2183 = vmatprep.mubr.bf16.mxu0 0
        %2184 = vmatmul.mubr.bf16.gmra.mxu0 %v2140
        %v2185 = vpop.f32.mrf.mxu0
        %v2186 = vadd.f32 0.0, %v2185
        %v2187 = vpop.f32.mrf.mxu0
        %v2188 = vpop.f32.mrf.mxu0
        %v2189 = vadd.f32 0.0, %v2188
        %v2190 = vpop.f32.mrf.mxu0
        %2191 = vmatprep.mubr.bf16.mxu0 0
        %2192 = vmatmul.mubr.bf16.gmra.mxu0 %v2143
        %v2193 = vpop.f32.mrf.mxu0
        %v2194 = vadd.f32 0.0, %v2193
        %v2195 = vpop.f32.mrf.mxu0
        %v2196 = vpop.f32.mrf.mxu0
        %v2197 = vadd.f32 0.0, %v2196
        %v2198 = vpop.f32.mrf.mxu0
        %2199 = vmatprep.mubr.bf16.mxu0 0
        %2200 = vmatmul.mubr.bf16.gmra.mxu0 %v2146
        %v2201 = vpop.f32.mrf.mxu0
        %v2202 = vadd.f32 0.0, %v2201
        %v2203 = vpop.f32.mrf.mxu0
        %v2204 = vpop.f32.mrf.mxu0
        %v2205 = vadd.f32 0.0, %v2204
        %v2206 = vpop.f32.mrf.mxu0
        %2207 = vmatprep.mubr.bf16.mxu0 0
        %2208 = vmatmul.mubr.bf16.gmra.mxu0 %v2149
        %v2209 = vpop.f32.mrf.mxu0
        %v2210 = vadd.f32 0.0, %v2209
        %v2211 = vpop.f32.mrf.mxu0
        %v2212 = vpop.f32.mrf.mxu0
        %v2213 = vadd.f32 0.0, %v2212
        %v2214 = vpop.f32.mrf.mxu0
        %2215 = vdwg.mxu0
        %v2216 = vadd.f32 %v1988, %v2186
        %v2217 = vadd.f32 %v1989, %v2189
        %v2218 = vadd.f32 %v1990, %v2194
        %v2219 = vadd.f32 %v1991, %v2197
        %v2220 = vadd.f32 %v1992, %v2202
        %v2221 = vadd.f32 %v1993, %v2205
        %v2222 = vadd.f32 %v1994, %v2210
        %v2223 = vadd.f32 %v1995, %v2213
        %v2224 = vmax.f32 %v2216, 0.0
        %v2225 = vmax.f32 %v2217, 0.0
        %v2226 = vmax.f32 %v2218, 0.0
        %v2227 = vmax.f32 %v2219, 0.0
        %v2228 = vmax.f32 %v2220, 0.0
        %v2229 = vmax.f32 %v2221, 0.0
        %v2230 = vmax.f32 %v2222, 0.0
        %v2231 = vmax.f32 %v2223, 0.0
        %v2232 = vpack.c.bf16 %v2225, %v2224
        %v2233 = vpack.c.bf16 %v2227, %v2226
        %v2234 = vpack.c.bf16 %v2229, %v2228
        %v2235 = vpack.c.bf16 %v2231, %v2230
        %2236 = vmatprep.subr.bf16.mxu0 0
        %2237 = vmatpush1.bf16.msra.mxu0 0
        %2238 = vmatprep.subr.bf16.mxu0 0
        %2239 = vmatpush1.bf16.msra.mxu0 0
        %2240 = vmatprep.subr.bf16.mxu0 0
        %2241 = vmatpush1.bf16.msra.mxu0 0
        %2242 = vmatprep.subr.bf16.mxu0 0
        %2243 = vmatpush1.bf16.msra.mxu0 0
        %2244 = vmatprep.subr.bf16.mxu0 0
        %2245 = vmatpush1.bf16.msra.mxu0 %v2235
        %2246 = vmatprep.subr.bf16.mxu0 0
        %2247 = vmatpush1.bf16.msra.mxu0 %v2234
        %2248 = vmatprep.subr.bf16.mxu0 0
        %2249 = vmatpush1.bf16.msra.mxu0 %v2233
        %2250 = vmatprep.subr.bf16.mxu0 0
        %2251 = vmatpush1.bf16.msra.mxu0 %v2232
        %2252 = vmatprep.subr.bf16.mxu0 0
        %2253 = vmatpush2.bf16.msra.mxu0 0
        %2254 = vmatprep.subr.bf16.mxu0 0
        %2255 = vmatpush2.bf16.msra.mxu0 0
        %2256 = vmatprep.subr.bf16.mxu0 0
        %2257 = vmatpush2.bf16.msra.mxu0 0
        %2258 = vmatprep.subr.bf16.mxu0 0
        %2259 = vmatpush2.bf16.msra.mxu0 0
        %2260 = vmatprep.subr.bf16.mxu0 0
        %2261 = vmatpush2.bf16.msra.mxu0 0
        %2262 = vmatprep.subr.bf16.mxu0 0
        %2263 = vmatpush2.bf16.msra.mxu0 0
        %2264 = vmatprep.subr.bf16.mxu0 0
        %2265 = vmatpush2.bf16.msra.mxu0 0
        %2266 = vmatprep.subr.bf16.mxu0 0
        %2267 = vmatpush2.bf16.msra.mxu0 0
        %2268 = vmatprep.mubr.bf16.mxu0 0
        %2269 = vmatmul.mubr.bf16.gmra.mxu0 %v329
        %v2270 = vpop.f32.mrf.mxu0
        %v2271 = vadd.f32 0.0, %v2270
        %v2272 = vpop.f32.mrf.mxu0
        %v2273 = vpop.f32.mrf.mxu0
        %v2274 = vadd.f32 0.0, %v2273
        %v2275 = vpop.f32.mrf.mxu0
        %2276 = vmatprep.mubr.bf16.mxu0 0
        %2277 = vmatmul.mubr.bf16.gmra.mxu0 %v332
        %v2278 = vpop.f32.mrf.mxu0
        %v2279 = vadd.f32 0.0, %v2278
        %v2280 = vpop.f32.mrf.mxu0
        %v2281 = vpop.f32.mrf.mxu0
        %v2282 = vadd.f32 0.0, %v2281
        %v2283 = vpop.f32.mrf.mxu0
        %2284 = vmatprep.mubr.bf16.mxu0 0
        %2285 = vmatmul.mubr.bf16.gmra.mxu0 %v335
        %v2286 = vpop.f32.mrf.mxu0
        %v2287 = vadd.f32 0.0, %v2286
        %v2288 = vpop.f32.mrf.mxu0
        %v2289 = vpop.f32.mrf.mxu0
        %v2290 = vadd.f32 0.0, %v2289
        %v2291 = vpop.f32.mrf.mxu0
        %2292 = vmatprep.mubr.bf16.mxu0 0
        %2293 = vmatmul.mubr.bf16.gmra.mxu0 %v338
        %v2294 = vpop.f32.mrf.mxu0
        %v2295 = vadd.f32 0.0, %v2294
        %v2296 = vpop.f32.mrf.mxu0
        %v2297 = vpop.f32.mrf.mxu0
        %v2298 = vadd.f32 0.0, %v2297
        %v2299 = vpop.f32.mrf.mxu0
        %2300 = vdwg.mxu0
        %v2301 = vpack.c.bf16 %v2274, %v2271
        %v2302 = vpack.c.bf16 %v2282, %v2279
        %v2303 = vpack.c.bf16 %v2290, %v2287
        %v2304 = vpack.c.bf16 %v2298, %v2295
        %s2305 = scalar_lea.vmem [#allocation7], 288
        %v2306 = vld [vmem:[%s2305] sm:$0xf]
        %v2307 = vld [vmem:[%s2305 + $0x4] sm:$0xf]
        %v2308 = vld [vmem:[%s2305 + $0x8] sm:$0xf]
        %v2309 = vld [vmem:[%s2305 + $0xc] sm:$0xf]
        %v2310 = vld [vmem:[%s2305 + $0x10] sm:$0xf]
        %v2311 = vld [vmem:[%s2305 + $0x14] sm:$0xf]
        %v2312 = vld [vmem:[%s2305 + $0x18] sm:$0xf]
        %v2313 = vld [vmem:[%s2305 + $0x1c] sm:$0xf]
        %2314 = vmatprep.subr.bf16.mxu0 0
        %2315 = vmatpush1.bf16.msra.mxu0 0
        %2316 = vmatprep.subr.bf16.mxu0 0
        %2317 = vmatpush1.bf16.msra.mxu0 0
        %2318 = vmatprep.subr.bf16.mxu0 0
        %2319 = vmatpush1.bf16.msra.mxu0 0
        %2320 = vmatprep.subr.bf16.mxu0 0
        %2321 = vmatpush1.bf16.msra.mxu0 0
        %2322 = vmatprep.subr.bf16.mxu0 0
        %2323 = vmatpush1.bf16.msra.mxu0 %v2235
        %2324 = vmatprep.subr.bf16.mxu0 0
        %2325 = vmatpush1.bf16.msra.mxu0 %v2234
        %2326 = vmatprep.subr.bf16.mxu0 0
        %2327 = vmatpush1.bf16.msra.mxu0 %v2233
        %2328 = vmatprep.subr.bf16.mxu0 0
        %2329 = vmatpush1.bf16.msra.mxu0 %v2232
        %2330 = vmatprep.subr.bf16.mxu0 0
        %2331 = vmatpush2.bf16.msra.mxu0 0
        %2332 = vmatprep.subr.bf16.mxu0 0
        %2333 = vmatpush2.bf16.msra.mxu0 0
        %2334 = vmatprep.subr.bf16.mxu0 0
        %2335 = vmatpush2.bf16.msra.mxu0 0
        %2336 = vmatprep.subr.bf16.mxu0 0
        %2337 = vmatpush2.bf16.msra.mxu0 0
        %2338 = vmatprep.subr.bf16.mxu0 0
        %2339 = vmatpush2.bf16.msra.mxu0 0
        %2340 = vmatprep.subr.bf16.mxu0 0
        %2341 = vmatpush2.bf16.msra.mxu0 0
        %2342 = vmatprep.subr.bf16.mxu0 0
        %2343 = vmatpush2.bf16.msra.mxu0 0
        %2344 = vmatprep.subr.bf16.mxu0 0
        %2345 = vmatpush2.bf16.msra.mxu0 0
        %2346 = vmatprep.mubr.bf16.mxu0 0
        %2347 = vmatmul.mubr.bf16.gmra.mxu0 %v447
        %v2348 = vpop.f32.mrf.mxu0
        %v2349 = vadd.f32 0.0, %v2348
        %v2350 = vpop.f32.mrf.mxu0
        %v2351 = vpop.f32.mrf.mxu0
        %v2352 = vadd.f32 0.0, %v2351
        %v2353 = vpop.f32.mrf.mxu0
        %2354 = vmatprep.mubr.bf16.mxu0 0
        %2355 = vmatmul.mubr.bf16.gmra.mxu0 %v450
        %v2356 = vpop.f32.mrf.mxu0
        %v2357 = vadd.f32 0.0, %v2356
        %v2358 = vpop.f32.mrf.mxu0
        %v2359 = vpop.f32.mrf.mxu0
        %v2360 = vadd.f32 0.0, %v2359
        %v2361 = vpop.f32.mrf.mxu0
        %2362 = vmatprep.mubr.bf16.mxu0 0
        %2363 = vmatmul.mubr.bf16.gmra.mxu0 %v453
        %v2364 = vpop.f32.mrf.mxu0
        %v2365 = vadd.f32 0.0, %v2364
        %v2366 = vpop.f32.mrf.mxu0
        %v2367 = vpop.f32.mrf.mxu0
        %v2368 = vadd.f32 0.0, %v2367
        %v2369 = vpop.f32.mrf.mxu0
        %2370 = vmatprep.mubr.bf16.mxu0 0
        %2371 = vmatmul.mubr.bf16.gmra.mxu0 %v456
        %v2372 = vpop.f32.mrf.mxu0
        %v2373 = vadd.f32 0.0, %v2372
        %v2374 = vpop.f32.mrf.mxu0
        %v2375 = vpop.f32.mrf.mxu0
        %v2376 = vadd.f32 0.0, %v2375
        %v2377 = vpop.f32.mrf.mxu0
        %2378 = vdwg.mxu0
        %v2379 = vpack.c.bf16 %v2352, %v2349
        %v2380 = vpack.c.bf16 %v2360, %v2357
        %v2381 = vpack.c.bf16 %v2368, %v2365
        %v2382 = vpack.c.bf16 %v2376, %v2373
        %s2383 = scalar_lea.vmem [#allocation7], 320
        %v2384 = vld [vmem:[%s2383] sm:$0xf]
        %v2385 = vld [vmem:[%s2383 + $0x4] sm:$0xf]
        %v2386 = vld [vmem:[%s2383 + $0x8] sm:$0xf]
        %v2387 = vld [vmem:[%s2383 + $0xc] sm:$0xf]
        %v2388 = vld [vmem:[%s2383 + $0x10] sm:$0xf]
        %v2389 = vld [vmem:[%s2383 + $0x14] sm:$0xf]
        %v2390 = vld [vmem:[%s2383 + $0x18] sm:$0xf]
        %v2391 = vld [vmem:[%s2383 + $0x1c] sm:$0xf]
        %v2400 = vunpack.c.l.b16 %v2384
        %v2401 = vunpack.c.l.b16 %v2385
        %v2402 = vunpack.c.l.b16 %v2386
        %v2403 = vunpack.c.l.b16 %v2387
        %v2404 = vunpack.c.l.b16 %v2388
        %v2405 = vunpack.c.l.b16 %v2389
        %v2406 = vunpack.c.l.b16 %v2390
        %v2407 = vunpack.c.l.b16 %v2391
        %v2408 = vpack.c.b16 %v2401, %v2400
        %v2409 = vpack.c.b16 %v2403, %v2402
        %v2410 = vpack.c.b16 %v2405, %v2404
        %v2411 = vpack.c.b16 %v2407, %v2406
        %v2417 = vsel %vm327, %v2379, 0
        %v2420 = vsel %vm327, %v2380, 0
        %v2423 = vsel %vm327, %v2381, 0
        %v2426 = vsel %vm327, %v2382, 0
        %2428 = vmatprep.subr.bf16.mxu0 0
        %2429 = vmatpush1.bf16.msra.mxu0 0
        %2430 = vmatprep.subr.bf16.mxu0 0
        %2431 = vmatpush1.bf16.msra.mxu0 0
        %2432 = vmatprep.subr.bf16.mxu0 0
        %2433 = vmatpush1.bf16.msra.mxu0 0
        %2434 = vmatprep.subr.bf16.mxu0 0
        %2435 = vmatpush1.bf16.msra.mxu0 0
        %2436 = vmatprep.subr.bf16.mxu0 0
        %2437 = vmatpush1.bf16.msra.mxu0 %v2411
        %2438 = vmatprep.subr.bf16.mxu0 0
        %2439 = vmatpush1.bf16.msra.mxu0 %v2410
        %2440 = vmatprep.subr.bf16.mxu0 0
        %2441 = vmatpush1.bf16.msra.mxu0 %v2409
        %2442 = vmatprep.subr.bf16.mxu0 0
        %2443 = vmatpush1.bf16.msra.mxu0 %v2408
        %2444 = vmatprep.subr.bf16.mxu0 0
        %2445 = vmatpush2.bf16.msra.mxu0 0
        %2446 = vmatprep.subr.bf16.mxu0 0
        %2447 = vmatpush2.bf16.msra.mxu0 0
        %2448 = vmatprep.subr.bf16.mxu0 0
        %2449 = vmatpush2.bf16.msra.mxu0 0
        %2450 = vmatprep.subr.bf16.mxu0 0
        %2451 = vmatpush2.bf16.msra.mxu0 0
        %2452 = vmatprep.subr.bf16.mxu0 0
        %2453 = vmatpush2.bf16.msra.mxu0 0
        %2454 = vmatprep.subr.bf16.mxu0 0
        %2455 = vmatpush2.bf16.msra.mxu0 0
        %2456 = vmatprep.subr.bf16.mxu0 0
        %2457 = vmatpush2.bf16.msra.mxu0 0
        %2458 = vmatprep.subr.bf16.mxu0 0
        %2459 = vmatpush2.bf16.msra.mxu0 0
        %2460 = vmatprep.mubr.bf16.mxu0 0
        %2461 = vmatmul.mubr.bf16.gmra.mxu0 %v2417
        %v2462 = vpop.f32.mrf.mxu0
        %v2463 = vadd.f32 0.0, %v2462
        %v2464 = vpop.f32.mrf.mxu0
        %v2465 = vpop.f32.mrf.mxu0
        %v2466 = vadd.f32 0.0, %v2465
        %v2467 = vpop.f32.mrf.mxu0
        %2468 = vmatprep.mubr.bf16.mxu0 0
        %2469 = vmatmul.mubr.bf16.gmra.mxu0 %v2420
        %v2470 = vpop.f32.mrf.mxu0
        %v2471 = vadd.f32 0.0, %v2470
        %v2472 = vpop.f32.mrf.mxu0
        %v2473 = vpop.f32.mrf.mxu0
        %v2474 = vadd.f32 0.0, %v2473
        %v2475 = vpop.f32.mrf.mxu0
        %2476 = vmatprep.mubr.bf16.mxu0 0
        %2477 = vmatmul.mubr.bf16.gmra.mxu0 %v2423
        %v2478 = vpop.f32.mrf.mxu0
        %v2479 = vadd.f32 0.0, %v2478
        %v2480 = vpop.f32.mrf.mxu0
        %v2481 = vpop.f32.mrf.mxu0
        %v2482 = vadd.f32 0.0, %v2481
        %v2483 = vpop.f32.mrf.mxu0
        %2484 = vmatprep.mubr.bf16.mxu0 0
        %2485 = vmatmul.mubr.bf16.gmra.mxu0 %v2426
        %v2486 = vpop.f32.mrf.mxu0
        %v2487 = vadd.f32 0.0, %v2486
        %v2488 = vpop.f32.mrf.mxu0
        %v2489 = vpop.f32.mrf.mxu0
        %v2490 = vadd.f32 0.0, %v2489
        %v2491 = vpop.f32.mrf.mxu0
        %2492 = vdwg.mxu0
        %v2501 = vunpack.c.l.b16 %v2306
        %v2502 = vunpack.c.l.b16 %v2307
        %v2503 = vunpack.c.l.b16 %v2308
        %v2504 = vunpack.c.l.b16 %v2309
        %v2505 = vunpack.c.l.b16 %v2310
        %v2506 = vunpack.c.l.b16 %v2311
        %v2507 = vunpack.c.l.b16 %v2312
        %v2508 = vunpack.c.l.b16 %v2313
        %v2509 = vpack.c.b16 %v2502, %v2501
        %v2510 = vpack.c.b16 %v2504, %v2503
        %v2511 = vpack.c.b16 %v2506, %v2505
        %v2512 = vpack.c.b16 %v2508, %v2507
        %v2518 = vsel %vm327, %v2301, 0
        %v2521 = vsel %vm327, %v2302, 0
        %v2524 = vsel %vm327, %v2303, 0
        %v2527 = vsel %vm327, %v2304, 0
        %2529 = vmatprep.subr.bf16.mxu0 0
        %2530 = vmatpush1.bf16.msra.mxu0 0
        %2531 = vmatprep.subr.bf16.mxu0 0
        %2532 = vmatpush1.bf16.msra.mxu0 0
        %2533 = vmatprep.subr.bf16.mxu0 0
        %2534 = vmatpush1.bf16.msra.mxu0 0
        %2535 = vmatprep.subr.bf16.mxu0 0
        %2536 = vmatpush1.bf16.msra.mxu0 0
        %2537 = vmatprep.subr.bf16.mxu0 0
        %2538 = vmatpush1.bf16.msra.mxu0 %v2512
        %2539 = vmatprep.subr.bf16.mxu0 0
        %2540 = vmatpush1.bf16.msra.mxu0 %v2511
        %2541 = vmatprep.subr.bf16.mxu0 0
        %2542 = vmatpush1.bf16.msra.mxu0 %v2510
        %2543 = vmatprep.subr.bf16.mxu0 0
        %2544 = vmatpush1.bf16.msra.mxu0 %v2509
        %2545 = vmatprep.subr.bf16.mxu0 0
        %2546 = vmatpush2.bf16.msra.mxu0 0
        %2547 = vmatprep.subr.bf16.mxu0 0
        %2548 = vmatpush2.bf16.msra.mxu0 0
        %2549 = vmatprep.subr.bf16.mxu0 0
        %2550 = vmatpush2.bf16.msra.mxu0 0
        %2551 = vmatprep.subr.bf16.mxu0 0
        %2552 = vmatpush2.bf16.msra.mxu0 0
        %2553 = vmatprep.subr.bf16.mxu0 0
        %2554 = vmatpush2.bf16.msra.mxu0 0
        %2555 = vmatprep.subr.bf16.mxu0 0
        %2556 = vmatpush2.bf16.msra.mxu0 0
        %2557 = vmatprep.subr.bf16.mxu0 0
        %2558 = vmatpush2.bf16.msra.mxu0 0
        %2559 = vmatprep.subr.bf16.mxu0 0
        %2560 = vmatpush2.bf16.msra.mxu0 0
        %2561 = vmatprep.mubr.bf16.mxu0 0
        %2562 = vmatmul.mubr.bf16.gmra.mxu0 %v2518
        %v2563 = vpop.f32.mrf.mxu0
        %v2564 = vadd.f32 %v2463, %v2563
        %v2565 = vpop.f32.mrf.mxu0
        %v2566 = vpop.f32.mrf.mxu0
        %v2567 = vadd.f32 %v2466, %v2566
        %v2568 = vpop.f32.mrf.mxu0
        %2569 = vmatprep.mubr.bf16.mxu0 0
        %2570 = vmatmul.mubr.bf16.gmra.mxu0 %v2521
        %v2571 = vpop.f32.mrf.mxu0
        %v2572 = vadd.f32 %v2471, %v2571
        %v2573 = vpop.f32.mrf.mxu0
        %v2574 = vpop.f32.mrf.mxu0
        %v2575 = vadd.f32 %v2474, %v2574
        %v2576 = vpop.f32.mrf.mxu0
        %2577 = vmatprep.mubr.bf16.mxu0 0
        %2578 = vmatmul.mubr.bf16.gmra.mxu0 %v2524
        %v2579 = vpop.f32.mrf.mxu0
        %v2580 = vadd.f32 %v2479, %v2579
        %v2581 = vpop.f32.mrf.mxu0
        %v2582 = vpop.f32.mrf.mxu0
        %v2583 = vadd.f32 %v2482, %v2582
        %v2584 = vpop.f32.mrf.mxu0
        %2585 = vmatprep.mubr.bf16.mxu0 0
        %2586 = vmatmul.mubr.bf16.gmra.mxu0 %v2527
        %v2587 = vpop.f32.mrf.mxu0
        %v2588 = vadd.f32 %v2487, %v2587
        %v2589 = vpop.f32.mrf.mxu0
        %v2590 = vpop.f32.mrf.mxu0
        %v2591 = vadd.f32 %v2490, %v2590
        %v2592 = vpop.f32.mrf.mxu0
        %2593 = vdwg.mxu0
        %2594 = vmatprep.subr.bf16.mxu0 0
        %2595 = vmatpush1.bf16.msra.mxu0 0
        %2596 = vmatprep.subr.bf16.mxu0 0
        %2597 = vmatpush1.bf16.msra.mxu0 0
        %2598 = vmatprep.subr.bf16.mxu0 0
        %2599 = vmatpush1.bf16.msra.mxu0 0
        %2600 = vmatprep.subr.bf16.mxu0 0
        %2601 = vmatpush1.bf16.msra.mxu0 0
        %2602 = vmatprep.subr.bf16.mxu0 0
        %2603 = vmatpush1.bf16.msra.mxu0 %v2235
        %2604 = vmatprep.subr.bf16.mxu0 0
        %2605 = vmatpush1.bf16.msra.mxu0 %v2234
        %2606 = vmatprep.subr.bf16.mxu0 0
        %2607 = vmatpush1.bf16.msra.mxu0 %v2233
        %2608 = vmatprep.subr.bf16.mxu0 0
        %2609 = vmatpush1.bf16.msra.mxu0 %v2232
        %2610 = vmatprep.subr.bf16.mxu0 0
        %2611 = vmatpush2.bf16.msra.mxu0 0
        %2612 = vmatprep.subr.bf16.mxu0 0
        %2613 = vmatpush2.bf16.msra.mxu0 0
        %2614 = vmatprep.subr.bf16.mxu0 0
        %2615 = vmatpush2.bf16.msra.mxu0 0
        %2616 = vmatprep.subr.bf16.mxu0 0
        %2617 = vmatpush2.bf16.msra.mxu0 0
        %2618 = vmatprep.subr.bf16.mxu0 0
        %2619 = vmatpush2.bf16.msra.mxu0 0
        %2620 = vmatprep.subr.bf16.mxu0 0
        %2621 = vmatpush2.bf16.msra.mxu0 0
        %2622 = vmatprep.subr.bf16.mxu0 0
        %2623 = vmatpush2.bf16.msra.mxu0 0
        %2624 = vmatprep.subr.bf16.mxu0 0
        %2625 = vmatpush2.bf16.msra.mxu0 0
        %2626 = vmatprep.mubr.bf16.mxu0 0
        %2627 = vmatmul.mubr.bf16.gmra.mxu0 %v768
        %v2628 = vpop.f32.mrf.mxu0
        %v2629 = vadd.f32 0.0, %v2628
        %v2630 = vpop.f32.mrf.mxu0
        %v2631 = vpop.f32.mrf.mxu0
        %v2632 = vadd.f32 0.0, %v2631
        %v2633 = vpop.f32.mrf.mxu0
        %2634 = vmatprep.mubr.bf16.mxu0 0
        %2635 = vmatmul.mubr.bf16.gmra.mxu0 %v771
        %v2636 = vpop.f32.mrf.mxu0
        %v2637 = vadd.f32 0.0, %v2636
        %v2638 = vpop.f32.mrf.mxu0
        %v2639 = vpop.f32.mrf.mxu0
        %v2640 = vadd.f32 0.0, %v2639
        %v2641 = vpop.f32.mrf.mxu0
        %2642 = vmatprep.mubr.bf16.mxu0 0
        %2643 = vmatmul.mubr.bf16.gmra.mxu0 %v774
        %v2644 = vpop.f32.mrf.mxu0
        %v2645 = vadd.f32 0.0, %v2644
        %v2646 = vpop.f32.mrf.mxu0
        %v2647 = vpop.f32.mrf.mxu0
        %v2648 = vadd.f32 0.0, %v2647
        %v2649 = vpop.f32.mrf.mxu0
        %2650 = vmatprep.mubr.bf16.mxu0 0
        %2651 = vmatmul.mubr.bf16.gmra.mxu0 %v777
        %v2652 = vpop.f32.mrf.mxu0
        %v2653 = vadd.f32 0.0, %v2652
        %v2654 = vpop.f32.mrf.mxu0
        %v2655 = vpop.f32.mrf.mxu0
        %v2656 = vadd.f32 0.0, %v2655
        %v2657 = vpop.f32.mrf.mxu0
        %2658 = vdwg.mxu0
        %v2659 = vpack.c.bf16 %v2632, %v2629
        %v2660 = vpack.c.bf16 %v2640, %v2637
        %v2661 = vpack.c.bf16 %v2648, %v2645
        %v2662 = vpack.c.bf16 %v2656, %v2653
        %s2663 = scalar_lea.vmem [#allocation7], 352
        %v2664 = vld [vmem:[%s2663] sm:$0xf]
        %v2665 = vld [vmem:[%s2663 + $0x4] sm:$0xf]
        %v2666 = vld [vmem:[%s2663 + $0x8] sm:$0xf]
        %v2667 = vld [vmem:[%s2663 + $0xc] sm:$0xf]
        %v2668 = vld [vmem:[%s2663 + $0x10] sm:$0xf]
        %v2669 = vld [vmem:[%s2663 + $0x14] sm:$0xf]
        %v2670 = vld [vmem:[%s2663 + $0x18] sm:$0xf]
        %v2671 = vld [vmem:[%s2663 + $0x1c] sm:$0xf]
        %v2680 = vunpack.c.l.b16 %v2664
        %v2681 = vunpack.c.l.b16 %v2665
        %v2682 = vunpack.c.l.b16 %v2666
        %v2683 = vunpack.c.l.b16 %v2667
        %v2684 = vunpack.c.l.b16 %v2668
        %v2685 = vunpack.c.l.b16 %v2669
        %v2686 = vunpack.c.l.b16 %v2670
        %v2687 = vunpack.c.l.b16 %v2671
        %v2688 = vpack.c.b16 %v2681, %v2680
        %v2689 = vpack.c.b16 %v2683, %v2682
        %v2690 = vpack.c.b16 %v2685, %v2684
        %v2691 = vpack.c.b16 %v2687, %v2686
        %v2697 = vsel %vm327, %v2659, 0
        %v2700 = vsel %vm327, %v2660, 0
        %v2703 = vsel %vm327, %v2661, 0
        %v2706 = vsel %vm327, %v2662, 0
        %2708 = vmatprep.subr.bf16.mxu0 0
        %2709 = vmatpush1.bf16.msra.mxu0 0
        %2710 = vmatprep.subr.bf16.mxu0 0
        %2711 = vmatpush1.bf16.msra.mxu0 0
        %2712 = vmatprep.subr.bf16.mxu0 0
        %2713 = vmatpush1.bf16.msra.mxu0 0
        %2714 = vmatprep.subr.bf16.mxu0 0
        %2715 = vmatpush1.bf16.msra.mxu0 0
        %2716 = vmatprep.subr.bf16.mxu0 0
        %2717 = vmatpush1.bf16.msra.mxu0 %v2691
        %2718 = vmatprep.subr.bf16.mxu0 0
        %2719 = vmatpush1.bf16.msra.mxu0 %v2690
        %2720 = vmatprep.subr.bf16.mxu0 0
        %2721 = vmatpush1.bf16.msra.mxu0 %v2689
        %2722 = vmatprep.subr.bf16.mxu0 0
        %2723 = vmatpush1.bf16.msra.mxu0 %v2688
        %2724 = vmatprep.subr.bf16.mxu0 0
        %2725 = vmatpush2.bf16.msra.mxu0 0
        %2726 = vmatprep.subr.bf16.mxu0 0
        %2727 = vmatpush2.bf16.msra.mxu0 0
        %2728 = vmatprep.subr.bf16.mxu0 0
        %2729 = vmatpush2.bf16.msra.mxu0 0
        %2730 = vmatprep.subr.bf16.mxu0 0
        %2731 = vmatpush2.bf16.msra.mxu0 0
        %2732 = vmatprep.subr.bf16.mxu0 0
        %2733 = vmatpush2.bf16.msra.mxu0 0
        %2734 = vmatprep.subr.bf16.mxu0 0
        %2735 = vmatpush2.bf16.msra.mxu0 0
        %2736 = vmatprep.subr.bf16.mxu0 0
        %2737 = vmatpush2.bf16.msra.mxu0 0
        %2738 = vmatprep.subr.bf16.mxu0 0
        %2739 = vmatpush2.bf16.msra.mxu0 0
        %2740 = vmatprep.mubr.bf16.mxu0 0
        %2741 = vmatmul.mubr.bf16.gmra.mxu0 %v2697
        %v2742 = vpop.f32.mrf.mxu0
        %v2743 = vadd.f32 0.0, %v2742
        %v2744 = vpop.f32.mrf.mxu0
        %v2745 = vpop.f32.mrf.mxu0
        %v2746 = vadd.f32 0.0, %v2745
        %v2747 = vpop.f32.mrf.mxu0
        %2748 = vmatprep.mubr.bf16.mxu0 0
        %2749 = vmatmul.mubr.bf16.gmra.mxu0 %v2700
        %v2750 = vpop.f32.mrf.mxu0
        %v2751 = vadd.f32 0.0, %v2750
        %v2752 = vpop.f32.mrf.mxu0
        %v2753 = vpop.f32.mrf.mxu0
        %v2754 = vadd.f32 0.0, %v2753
        %v2755 = vpop.f32.mrf.mxu0
        %2756 = vmatprep.mubr.bf16.mxu0 0
        %2757 = vmatmul.mubr.bf16.gmra.mxu0 %v2703
        %v2758 = vpop.f32.mrf.mxu0
        %v2759 = vadd.f32 0.0, %v2758
        %v2760 = vpop.f32.mrf.mxu0
        %v2761 = vpop.f32.mrf.mxu0
        %v2762 = vadd.f32 0.0, %v2761
        %v2763 = vpop.f32.mrf.mxu0
        %2764 = vmatprep.mubr.bf16.mxu0 0
        %2765 = vmatmul.mubr.bf16.gmra.mxu0 %v2706
        %v2766 = vpop.f32.mrf.mxu0
        %v2767 = vadd.f32 0.0, %v2766
        %v2768 = vpop.f32.mrf.mxu0
        %v2769 = vpop.f32.mrf.mxu0
        %v2770 = vadd.f32 0.0, %v2769
        %v2771 = vpop.f32.mrf.mxu0
        %2772 = vdwg.mxu0
        %v2773 = vadd.f32 %v2564, %v2743
        %v2774 = vadd.f32 %v2567, %v2746
        %v2775 = vadd.f32 %v2572, %v2751
        %v2776 = vadd.f32 %v2575, %v2754
        %v2777 = vadd.f32 %v2580, %v2759
        %v2778 = vadd.f32 %v2583, %v2762
        %v2779 = vadd.f32 %v2588, %v2767
        %v2780 = vadd.f32 %v2591, %v2770
        %2781 = vmatprep.subr.bf16.mxu0 0
        %2782 = vmatpush1.bf16.msra.mxu0 0
        %2783 = vmatprep.subr.bf16.mxu0 0
        %2784 = vmatpush1.bf16.msra.mxu0 0
        %2785 = vmatprep.subr.bf16.mxu0 0
        %2786 = vmatpush1.bf16.msra.mxu0 0
        %2787 = vmatprep.subr.bf16.mxu0 0
        %2788 = vmatpush1.bf16.msra.mxu0 0
        %2789 = vmatprep.subr.bf16.mxu0 0
        %2790 = vmatpush1.bf16.msra.mxu0 %v2235
        %2791 = vmatprep.subr.bf16.mxu0 0
        %2792 = vmatpush1.bf16.msra.mxu0 %v2234
        %2793 = vmatprep.subr.bf16.mxu0 0
        %2794 = vmatpush1.bf16.msra.mxu0 %v2233
        %2795 = vmatprep.subr.bf16.mxu0 0
        %2796 = vmatpush1.bf16.msra.mxu0 %v2232
        %2797 = vmatprep.subr.bf16.mxu0 0
        %2798 = vmatpush2.bf16.msra.mxu0 0
        %2799 = vmatprep.subr.bf16.mxu0 0
        %2800 = vmatpush2.bf16.msra.mxu0 0
        %2801 = vmatprep.subr.bf16.mxu0 0
        %2802 = vmatpush2.bf16.msra.mxu0 0
        %2803 = vmatprep.subr.bf16.mxu0 0
        %2804 = vmatpush2.bf16.msra.mxu0 0
        %2805 = vmatprep.subr.bf16.mxu0 0
        %2806 = vmatpush2.bf16.msra.mxu0 0
        %2807 = vmatprep.subr.bf16.mxu0 0
        %2808 = vmatpush2.bf16.msra.mxu0 0
        %2809 = vmatprep.subr.bf16.mxu0 0
        %2810 = vmatpush2.bf16.msra.mxu0 0
        %2811 = vmatprep.subr.bf16.mxu0 0
        %2812 = vmatpush2.bf16.msra.mxu0 0
        %2813 = vmatprep.mubr.bf16.mxu0 0
        %2814 = vmatmul.mubr.bf16.gmra.mxu0 %v996
        %v2815 = vpop.f32.mrf.mxu0
        %v2816 = vadd.f32 0.0, %v2815
        %v2817 = vpop.f32.mrf.mxu0
        %v2818 = vpop.f32.mrf.mxu0
        %v2819 = vadd.f32 0.0, %v2818
        %v2820 = vpop.f32.mrf.mxu0
        %2821 = vmatprep.mubr.bf16.mxu0 0
        %2822 = vmatmul.mubr.bf16.gmra.mxu0 %v999
        %v2823 = vpop.f32.mrf.mxu0
        %v2824 = vadd.f32 0.0, %v2823
        %v2825 = vpop.f32.mrf.mxu0
        %v2826 = vpop.f32.mrf.mxu0
        %v2827 = vadd.f32 0.0, %v2826
        %v2828 = vpop.f32.mrf.mxu0
        %2829 = vmatprep.mubr.bf16.mxu0 0
        %2830 = vmatmul.mubr.bf16.gmra.mxu0 %v1002
        %v2831 = vpop.f32.mrf.mxu0
        %v2832 = vadd.f32 0.0, %v2831
        %v2833 = vpop.f32.mrf.mxu0
        %v2834 = vpop.f32.mrf.mxu0
        %v2835 = vadd.f32 0.0, %v2834
        %v2836 = vpop.f32.mrf.mxu0
        %2837 = vmatprep.mubr.bf16.mxu0 0
        %2838 = vmatmul.mubr.bf16.gmra.mxu0 %v1005
        %v2839 = vpop.f32.mrf.mxu0
        %v2840 = vadd.f32 0.0, %v2839
        %v2841 = vpop.f32.mrf.mxu0
        %v2842 = vpop.f32.mrf.mxu0
        %v2843 = vadd.f32 0.0, %v2842
        %v2844 = vpop.f32.mrf.mxu0
        %2845 = vdwg.mxu0
        %v2846 = vpack.c.bf16 %v2819, %v2816
        %v2847 = vpack.c.bf16 %v2827, %v2824
        %v2848 = vpack.c.bf16 %v2835, %v2832
        %v2849 = vpack.c.bf16 %v2843, %v2840
        %s2850 = scalar_lea.vmem [#allocation7], 384
        %v2851 = vld [vmem:[%s2850] sm:$0xf]
        %v2852 = vld [vmem:[%s2850 + $0x4] sm:$0xf]
        %v2853 = vld [vmem:[%s2850 + $0x8] sm:$0xf]
        %v2854 = vld [vmem:[%s2850 + $0xc] sm:$0xf]
        %v2855 = vld [vmem:[%s2850 + $0x10] sm:$0xf]
        %v2856 = vld [vmem:[%s2850 + $0x14] sm:$0xf]
        %v2857 = vld [vmem:[%s2850 + $0x18] sm:$0xf]
        %v2858 = vld [vmem:[%s2850 + $0x1c] sm:$0xf]
        %v2867 = vunpack.c.l.b16 %v2851
        %v2868 = vunpack.c.l.b16 %v2852
        %v2869 = vunpack.c.l.b16 %v2853
        %v2870 = vunpack.c.l.b16 %v2854
        %v2871 = vunpack.c.l.b16 %v2855
        %v2872 = vunpack.c.l.b16 %v2856
        %v2873 = vunpack.c.l.b16 %v2857
        %v2874 = vunpack.c.l.b16 %v2858
        %v2875 = vpack.c.b16 %v2868, %v2867
        %v2876 = vpack.c.b16 %v2870, %v2869
        %v2877 = vpack.c.b16 %v2872, %v2871
        %v2878 = vpack.c.b16 %v2874, %v2873
        %v2884 = vsel %vm327, %v2846, 0
        %v2887 = vsel %vm327, %v2847, 0
        %v2890 = vsel %vm327, %v2848, 0
        %v2893 = vsel %vm327, %v2849, 0
        %2895 = vmatprep.subr.bf16.mxu0 0
        %2896 = vmatpush1.bf16.msra.mxu0 0
        %2897 = vmatprep.subr.bf16.mxu0 0
        %2898 = vmatpush1.bf16.msra.mxu0 0
        %2899 = vmatprep.subr.bf16.mxu0 0
        %2900 = vmatpush1.bf16.msra.mxu0 0
        %2901 = vmatprep.subr.bf16.mxu0 0
        %2902 = vmatpush1.bf16.msra.mxu0 0
        %2903 = vmatprep.subr.bf16.mxu0 0
        %2904 = vmatpush1.bf16.msra.mxu0 %v2878
        %2905 = vmatprep.subr.bf16.mxu0 0
        %2906 = vmatpush1.bf16.msra.mxu0 %v2877
        %2907 = vmatprep.subr.bf16.mxu0 0
        %2908 = vmatpush1.bf16.msra.mxu0 %v2876
        %2909 = vmatprep.subr.bf16.mxu0 0
        %2910 = vmatpush1.bf16.msra.mxu0 %v2875
        %2911 = vmatprep.subr.bf16.mxu0 0
        %2912 = vmatpush2.bf16.msra.mxu0 0
        %2913 = vmatprep.subr.bf16.mxu0 0
        %2914 = vmatpush2.bf16.msra.mxu0 0
        %2915 = vmatprep.subr.bf16.mxu0 0
        %2916 = vmatpush2.bf16.msra.mxu0 0
        %2917 = vmatprep.subr.bf16.mxu0 0
        %2918 = vmatpush2.bf16.msra.mxu0 0
        %2919 = vmatprep.subr.bf16.mxu0 0
        %2920 = vmatpush2.bf16.msra.mxu0 0
        %2921 = vmatprep.subr.bf16.mxu0 0
        %2922 = vmatpush2.bf16.msra.mxu0 0
        %2923 = vmatprep.subr.bf16.mxu0 0
        %2924 = vmatpush2.bf16.msra.mxu0 0
        %2925 = vmatprep.subr.bf16.mxu0 0
        %2926 = vmatpush2.bf16.msra.mxu0 0
        %2927 = vmatprep.mubr.bf16.mxu0 0
        %2928 = vmatmul.mubr.bf16.gmra.mxu0 %v2884
        %v2929 = vpop.f32.mrf.mxu0
        %v2930 = vadd.f32 0.0, %v2929
        %v2931 = vpop.f32.mrf.mxu0
        %v2932 = vpop.f32.mrf.mxu0
        %v2933 = vadd.f32 0.0, %v2932
        %v2934 = vpop.f32.mrf.mxu0
        %2935 = vmatprep.mubr.bf16.mxu0 0
        %2936 = vmatmul.mubr.bf16.gmra.mxu0 %v2887
        %v2937 = vpop.f32.mrf.mxu0
        %v2938 = vadd.f32 0.0, %v2937
        %v2939 = vpop.f32.mrf.mxu0
        %v2940 = vpop.f32.mrf.mxu0
        %v2941 = vadd.f32 0.0, %v2940
        %v2942 = vpop.f32.mrf.mxu0
        %2943 = vmatprep.mubr.bf16.mxu0 0
        %2944 = vmatmul.mubr.bf16.gmra.mxu0 %v2890
        %v2945 = vpop.f32.mrf.mxu0
        %v2946 = vadd.f32 0.0, %v2945
        %v2947 = vpop.f32.mrf.mxu0
        %v2948 = vpop.f32.mrf.mxu0
        %v2949 = vadd.f32 0.0, %v2948
        %v2950 = vpop.f32.mrf.mxu0
        %2951 = vmatprep.mubr.bf16.mxu0 0
        %2952 = vmatmul.mubr.bf16.gmra.mxu0 %v2893
        %v2953 = vpop.f32.mrf.mxu0
        %v2954 = vadd.f32 0.0, %v2953
        %v2955 = vpop.f32.mrf.mxu0
        %v2956 = vpop.f32.mrf.mxu0
        %v2957 = vadd.f32 0.0, %v2956
        %v2958 = vpop.f32.mrf.mxu0
        %2959 = vdwg.mxu0
        %v2960 = vadd.f32 %v2773, %v2930
        %v2961 = vadd.f32 %v2774, %v2933
        %v2962 = vadd.f32 %v2775, %v2938
        %v2963 = vadd.f32 %v2776, %v2941
        %v2964 = vadd.f32 %v2777, %v2946
        %v2965 = vadd.f32 %v2778, %v2949
        %v2966 = vadd.f32 %v2779, %v2954
        %v2967 = vadd.f32 %v2780, %v2957
        %s2968 = scalar_lea.vmem [#allocation7], 416
        %v2969 = vld [vmem:[%s2968] sm:$0xf]
        %v2970 = vld [vmem:[%s2968 + $0x4] sm:$0xf]
        %v2971 = vld [vmem:[%s2968 + $0x8] sm:$0xf]
        %v2972 = vld [vmem:[%s2968 + $0xc] sm:$0xf]
        %v2973 = vld [vmem:[%s2968 + $0x10] sm:$0xf]
        %v2974 = vld [vmem:[%s2968 + $0x14] sm:$0xf]
        %v2975 = vld [vmem:[%s2968 + $0x18] sm:$0xf]
        %v2976 = vld [vmem:[%s2968 + $0x1c] sm:$0xf]
        %v2985 = vunpack.c.l.b16 %v2969
        %v2986 = vunpack.c.l.b16 %v2970
        %v2987 = vunpack.c.l.b16 %v2971
        %v2988 = vunpack.c.l.b16 %v2972
        %v2989 = vunpack.c.l.b16 %v2973
        %v2990 = vunpack.c.l.b16 %v2974
        %v2991 = vunpack.c.l.b16 %v2975
        %v2992 = vunpack.c.l.b16 %v2976
        %v2993 = vpack.c.b16 %v2986, %v2985
        %v2994 = vpack.c.b16 %v2988, %v2987
        %v2995 = vpack.c.b16 %v2990, %v2989
        %v2996 = vpack.c.b16 %v2992, %v2991
        %v3002 = vsel %vm327, %v2232, 0
        %v3005 = vsel %vm327, %v2233, 0
        %v3008 = vsel %vm327, %v2234, 0
        %v3011 = vsel %vm327, %v2235, 0
        %3013 = vmatprep.subr.bf16.mxu0 0
        %3014 = vmatpush1.bf16.msra.mxu0 0
        %3015 = vmatprep.subr.bf16.mxu0 0
        %3016 = vmatpush1.bf16.msra.mxu0 0
        %3017 = vmatprep.subr.bf16.mxu0 0
        %3018 = vmatpush1.bf16.msra.mxu0 0
        %3019 = vmatprep.subr.bf16.mxu0 0
        %3020 = vmatpush1.bf16.msra.mxu0 0
        %3021 = vmatprep.subr.bf16.mxu0 0
        %3022 = vmatpush1.bf16.msra.mxu0 %v2996
        %3023 = vmatprep.subr.bf16.mxu0 0
        %3024 = vmatpush1.bf16.msra.mxu0 %v2995
        %3025 = vmatprep.subr.bf16.mxu0 0
        %3026 = vmatpush1.bf16.msra.mxu0 %v2994
        %3027 = vmatprep.subr.bf16.mxu0 0
        %3028 = vmatpush1.bf16.msra.mxu0 %v2993
        %3029 = vmatprep.subr.bf16.mxu0 0
        %3030 = vmatpush2.bf16.msra.mxu0 0
        %3031 = vmatprep.subr.bf16.mxu0 0
        %3032 = vmatpush2.bf16.msra.mxu0 0
        %3033 = vmatprep.subr.bf16.mxu0 0
        %3034 = vmatpush2.bf16.msra.mxu0 0
        %3035 = vmatprep.subr.bf16.mxu0 0
        %3036 = vmatpush2.bf16.msra.mxu0 0
        %3037 = vmatprep.subr.bf16.mxu0 0
        %3038 = vmatpush2.bf16.msra.mxu0 0
        %3039 = vmatprep.subr.bf16.mxu0 0
        %3040 = vmatpush2.bf16.msra.mxu0 0
        %3041 = vmatprep.subr.bf16.mxu0 0
        %3042 = vmatpush2.bf16.msra.mxu0 0
        %3043 = vmatprep.subr.bf16.mxu0 0
        %3044 = vmatpush2.bf16.msra.mxu0 0
        %3045 = vmatprep.mubr.bf16.mxu0 0
        %3046 = vmatmul.mubr.bf16.gmra.mxu0 %v3002
        %v3047 = vpop.f32.mrf.mxu0
        %v3048 = vadd.f32 0.0, %v3047
        %v3049 = vpop.f32.mrf.mxu0
        %v3050 = vpop.f32.mrf.mxu0
        %v3051 = vadd.f32 0.0, %v3050
        %v3052 = vpop.f32.mrf.mxu0
        %3053 = vmatprep.mubr.bf16.mxu0 0
        %3054 = vmatmul.mubr.bf16.gmra.mxu0 %v3005
        %v3055 = vpop.f32.mrf.mxu0
        %v3056 = vadd.f32 0.0, %v3055
        %v3057 = vpop.f32.mrf.mxu0
        %v3058 = vpop.f32.mrf.mxu0
        %v3059 = vadd.f32 0.0, %v3058
        %v3060 = vpop.f32.mrf.mxu0
        %3061 = vmatprep.mubr.bf16.mxu0 0
        %3062 = vmatmul.mubr.bf16.gmra.mxu0 %v3008
        %v3063 = vpop.f32.mrf.mxu0
        %v3064 = vadd.f32 0.0, %v3063
        %v3065 = vpop.f32.mrf.mxu0
        %v3066 = vpop.f32.mrf.mxu0
        %v3067 = vadd.f32 0.0, %v3066
        %v3068 = vpop.f32.mrf.mxu0
        %3069 = vmatprep.mubr.bf16.mxu0 0
        %3070 = vmatmul.mubr.bf16.gmra.mxu0 %v3011
        %v3071 = vpop.f32.mrf.mxu0
        %v3072 = vadd.f32 0.0, %v3071
        %v3073 = vpop.f32.mrf.mxu0
        %v3074 = vpop.f32.mrf.mxu0
        %v3075 = vadd.f32 0.0, %v3074
        %v3076 = vpop.f32.mrf.mxu0
        %3077 = vdwg.mxu0
        %v3078 = vadd.f32 %v2960, %v3048
        %v3079 = vadd.f32 %v2961, %v3051
        %v3080 = vadd.f32 %v2962, %v3056
        %v3081 = vadd.f32 %v2963, %v3059
        %v3082 = vadd.f32 %v2964, %v3064
        %v3083 = vadd.f32 %v2965, %v3067
        %v3084 = vadd.f32 %v2966, %v3072
        %v3085 = vadd.f32 %v2967, %v3075
        %3086 = vmatprep.subr.bf16.mxu0 0
        %3087 = vmatpush1.bf16.msra.mxu0 0
        %3088 = vmatprep.subr.bf16.mxu0 0
        %3089 = vmatpush1.bf16.msra.mxu0 0
        %3090 = vmatprep.subr.bf16.mxu0 0
        %3091 = vmatpush1.bf16.msra.mxu0 0
        %3092 = vmatprep.subr.bf16.mxu0 0
        %3093 = vmatpush1.bf16.msra.mxu0 0
        %3094 = vmatprep.subr.bf16.mxu0 0
        %3095 = vmatpush1.bf16.msra.mxu0 %v2235
        %3096 = vmatprep.subr.bf16.mxu0 0
        %3097 = vmatpush1.bf16.msra.mxu0 %v2234
        %3098 = vmatprep.subr.bf16.mxu0 0
        %3099 = vmatpush1.bf16.msra.mxu0 %v2233
        %3100 = vmatprep.subr.bf16.mxu0 0
        %3101 = vmatpush1.bf16.msra.mxu0 %v2232
        %3102 = vmatprep.subr.bf16.mxu0 0
        %3103 = vmatpush2.bf16.msra.mxu0 0
        %3104 = vmatprep.subr.bf16.mxu0 0
        %3105 = vmatpush2.bf16.msra.mxu0 0
        %3106 = vmatprep.subr.bf16.mxu0 0
        %3107 = vmatpush2.bf16.msra.mxu0 0
        %3108 = vmatprep.subr.bf16.mxu0 0
        %3109 = vmatpush2.bf16.msra.mxu0 0
        %3110 = vmatprep.subr.bf16.mxu0 0
        %3111 = vmatpush2.bf16.msra.mxu0 0
        %3112 = vmatprep.subr.bf16.mxu0 0
        %3113 = vmatpush2.bf16.msra.mxu0 0
        %3114 = vmatprep.subr.bf16.mxu0 0
        %3115 = vmatpush2.bf16.msra.mxu0 0
        %3116 = vmatprep.subr.bf16.mxu0 0
        %3117 = vmatpush2.bf16.msra.mxu0 0
        %3118 = vmatprep.mubr.bf16.mxu0 0
        %3119 = vmatmul.mubr.bf16.gmra.mxu0 %v1342
        %v3120 = vpop.f32.mrf.mxu0
        %v3121 = vadd.f32 0.0, %v3120
        %v3122 = vpop.f32.mrf.mxu0
        %v3123 = vpop.f32.mrf.mxu0
        %v3124 = vadd.f32 0.0, %v3123
        %v3125 = vpop.f32.mrf.mxu0
        %3126 = vmatprep.mubr.bf16.mxu0 0
        %3127 = vmatmul.mubr.bf16.gmra.mxu0 %v1345
        %v3128 = vpop.f32.mrf.mxu0
        %v3129 = vadd.f32 0.0, %v3128
        %v3130 = vpop.f32.mrf.mxu0
        %v3131 = vpop.f32.mrf.mxu0
        %v3132 = vadd.f32 0.0, %v3131
        %v3133 = vpop.f32.mrf.mxu0
        %3134 = vmatprep.mubr.bf16.mxu0 0
        %3135 = vmatmul.mubr.bf16.gmra.mxu0 %v1348
        %v3136 = vpop.f32.mrf.mxu0
        %v3137 = vadd.f32 0.0, %v3136
        %v3138 = vpop.f32.mrf.mxu0
        %v3139 = vpop.f32.mrf.mxu0
        %v3140 = vadd.f32 0.0, %v3139
        %v3141 = vpop.f32.mrf.mxu0
        %3142 = vmatprep.mubr.bf16.mxu0 0
        %3143 = vmatmul.mubr.bf16.gmra.mxu0 %v1351
        %v3144 = vpop.f32.mrf.mxu0
        %v3145 = vadd.f32 0.0, %v3144
        %v3146 = vpop.f32.mrf.mxu0
        %v3147 = vpop.f32.mrf.mxu0
        %v3148 = vadd.f32 0.0, %v3147
        %v3149 = vpop.f32.mrf.mxu0
        %3150 = vdwg.mxu0
        %v3151 = vpack.c.bf16 %v3124, %v3121
        %v3152 = vpack.c.bf16 %v3132, %v3129
        %v3153 = vpack.c.bf16 %v3140, %v3137
        %v3154 = vpack.c.bf16 %v3148, %v3145
        %s3155 = scalar_lea.vmem [#allocation7], 448
        %v3156 = vld [vmem:[%s3155] sm:$0xf]
        %v3157 = vld [vmem:[%s3155 + $0x4] sm:$0xf]
        %v3158 = vld [vmem:[%s3155 + $0x8] sm:$0xf]
        %v3159 = vld [vmem:[%s3155 + $0xc] sm:$0xf]
        %v3160 = vld [vmem:[%s3155 + $0x10] sm:$0xf]
        %v3161 = vld [vmem:[%s3155 + $0x14] sm:$0xf]
        %v3162 = vld [vmem:[%s3155 + $0x18] sm:$0xf]
        %v3163 = vld [vmem:[%s3155 + $0x1c] sm:$0xf]
        %v3172 = vunpack.c.l.b16 %v3156
        %v3173 = vunpack.c.l.b16 %v3157
        %v3174 = vunpack.c.l.b16 %v3158
        %v3175 = vunpack.c.l.b16 %v3159
        %v3176 = vunpack.c.l.b16 %v3160
        %v3177 = vunpack.c.l.b16 %v3161
        %v3178 = vunpack.c.l.b16 %v3162
        %v3179 = vunpack.c.l.b16 %v3163
        %v3180 = vpack.c.b16 %v3173, %v3172
        %v3181 = vpack.c.b16 %v3175, %v3174
        %v3182 = vpack.c.b16 %v3177, %v3176
        %v3183 = vpack.c.b16 %v3179, %v3178
        %v3189 = vsel %vm327, %v3151, 0
        %v3192 = vsel %vm327, %v3152, 0
        %v3195 = vsel %vm327, %v3153, 0
        %v3198 = vsel %vm327, %v3154, 0
        %3200 = vmatprep.subr.bf16.mxu0 0
        %3201 = vmatpush1.bf16.msra.mxu0 0
        %3202 = vmatprep.subr.bf16.mxu0 0
        %3203 = vmatpush1.bf16.msra.mxu0 0
        %3204 = vmatprep.subr.bf16.mxu0 0
        %3205 = vmatpush1.bf16.msra.mxu0 0
        %3206 = vmatprep.subr.bf16.mxu0 0
        %3207 = vmatpush1.bf16.msra.mxu0 0
        %3208 = vmatprep.subr.bf16.mxu0 0
        %3209 = vmatpush1.bf16.msra.mxu0 %v3183
        %3210 = vmatprep.subr.bf16.mxu0 0
        %3211 = vmatpush1.bf16.msra.mxu0 %v3182
        %3212 = vmatprep.subr.bf16.mxu0 0
        %3213 = vmatpush1.bf16.msra.mxu0 %v3181
        %3214 = vmatprep.subr.bf16.mxu0 0
        %3215 = vmatpush1.bf16.msra.mxu0 %v3180
        %3216 = vmatprep.subr.bf16.mxu0 0
        %3217 = vmatpush2.bf16.msra.mxu0 0
        %3218 = vmatprep.subr.bf16.mxu0 0
        %3219 = vmatpush2.bf16.msra.mxu0 0
        %3220 = vmatprep.subr.bf16.mxu0 0
        %3221 = vmatpush2.bf16.msra.mxu0 0
        %3222 = vmatprep.subr.bf16.mxu0 0
        %3223 = vmatpush2.bf16.msra.mxu0 0
        %3224 = vmatprep.subr.bf16.mxu0 0
        %3225 = vmatpush2.bf16.msra.mxu0 0
        %3226 = vmatprep.subr.bf16.mxu0 0
        %3227 = vmatpush2.bf16.msra.mxu0 0
        %3228 = vmatprep.subr.bf16.mxu0 0
        %3229 = vmatpush2.bf16.msra.mxu0 0
        %3230 = vmatprep.subr.bf16.mxu0 0
        %3231 = vmatpush2.bf16.msra.mxu0 0
        %3232 = vmatprep.mubr.bf16.mxu0 0
        %3233 = vmatmul.mubr.bf16.gmra.mxu0 %v3189
        %v3234 = vpop.f32.mrf.mxu0
        %v3235 = vadd.f32 0.0, %v3234
        %v3236 = vpop.f32.mrf.mxu0
        %v3237 = vpop.f32.mrf.mxu0
        %v3238 = vadd.f32 0.0, %v3237
        %v3239 = vpop.f32.mrf.mxu0
        %3240 = vmatprep.mubr.bf16.mxu0 0
        %3241 = vmatmul.mubr.bf16.gmra.mxu0 %v3192
        %v3242 = vpop.f32.mrf.mxu0
        %v3243 = vadd.f32 0.0, %v3242
        %v3244 = vpop.f32.mrf.mxu0
        %v3245 = vpop.f32.mrf.mxu0
        %v3246 = vadd.f32 0.0, %v3245
        %v3247 = vpop.f32.mrf.mxu0
        %3248 = vmatprep.mubr.bf16.mxu0 0
        %3249 = vmatmul.mubr.bf16.gmra.mxu0 %v3195
        %v3250 = vpop.f32.mrf.mxu0
        %v3251 = vadd.f32 0.0, %v3250
        %v3252 = vpop.f32.mrf.mxu0
        %v3253 = vpop.f32.mrf.mxu0
        %v3254 = vadd.f32 0.0, %v3253
        %v3255 = vpop.f32.mrf.mxu0
        %3256 = vmatprep.mubr.bf16.mxu0 0
        %3257 = vmatmul.mubr.bf16.gmra.mxu0 %v3198
        %v3258 = vpop.f32.mrf.mxu0
        %v3259 = vadd.f32 0.0, %v3258
        %v3260 = vpop.f32.mrf.mxu0
        %v3261 = vpop.f32.mrf.mxu0
        %v3262 = vadd.f32 0.0, %v3261
        %v3263 = vpop.f32.mrf.mxu0
        %3264 = vdwg.mxu0
        %v3265 = vadd.f32 %v3078, %v3235
        %v3266 = vadd.f32 %v3079, %v3238
        %v3267 = vadd.f32 %v3080, %v3243
        %v3268 = vadd.f32 %v3081, %v3246
        %v3269 = vadd.f32 %v3082, %v3251
        %v3270 = vadd.f32 %v3083, %v3254
        %v3271 = vadd.f32 %v3084, %v3259
        %v3272 = vadd.f32 %v3085, %v3262
        %3273 = vmatprep.subr.bf16.mxu0 0
        %3274 = vmatpush1.bf16.msra.mxu0 0
        %3275 = vmatprep.subr.bf16.mxu0 0
        %3276 = vmatpush1.bf16.msra.mxu0 0
        %3277 = vmatprep.subr.bf16.mxu0 0
        %3278 = vmatpush1.bf16.msra.mxu0 0
        %3279 = vmatprep.subr.bf16.mxu0 0
        %3280 = vmatpush1.bf16.msra.mxu0 0
        %3281 = vmatprep.subr.bf16.mxu0 0
        %3282 = vmatpush1.bf16.msra.mxu0 %v2235
        %3283 = vmatprep.subr.bf16.mxu0 0
        %3284 = vmatpush1.bf16.msra.mxu0 %v2234
        %3285 = vmatprep.subr.bf16.mxu0 0
        %3286 = vmatpush1.bf16.msra.mxu0 %v2233
        %3287 = vmatprep.subr.bf16.mxu0 0
        %3288 = vmatpush1.bf16.msra.mxu0 %v2232
        %3289 = vmatprep.subr.bf16.mxu0 0
        %3290 = vmatpush2.bf16.msra.mxu0 0
        %3291 = vmatprep.subr.bf16.mxu0 0
        %3292 = vmatpush2.bf16.msra.mxu0 0
        %3293 = vmatprep.subr.bf16.mxu0 0
        %3294 = vmatpush2.bf16.msra.mxu0 0
        %3295 = vmatprep.subr.bf16.mxu0 0
        %3296 = vmatpush2.bf16.msra.mxu0 0
        %3297 = vmatprep.subr.bf16.mxu0 0
        %3298 = vmatpush2.bf16.msra.mxu0 0
        %3299 = vmatprep.subr.bf16.mxu0 0
        %3300 = vmatpush2.bf16.msra.mxu0 0
        %3301 = vmatprep.subr.bf16.mxu0 0
        %3302 = vmatpush2.bf16.msra.mxu0 0
        %3303 = vmatprep.subr.bf16.mxu0 0
        %3304 = vmatpush2.bf16.msra.mxu0 0
        %3305 = vmatprep.mubr.bf16.mxu0 0
        %3306 = vmatmul.mubr.bf16.gmra.mxu0 %v1570
        %v3307 = vpop.f32.mrf.mxu0
        %v3308 = vadd.f32 0.0, %v3307
        %v3309 = vpop.f32.mrf.mxu0
        %v3310 = vpop.f32.mrf.mxu0
        %v3311 = vadd.f32 0.0, %v3310
        %v3312 = vpop.f32.mrf.mxu0
        %3313 = vmatprep.mubr.bf16.mxu0 0
        %3314 = vmatmul.mubr.bf16.gmra.mxu0 %v1573
        %v3315 = vpop.f32.mrf.mxu0
        %v3316 = vadd.f32 0.0, %v3315
        %v3317 = vpop.f32.mrf.mxu0
        %v3318 = vpop.f32.mrf.mxu0
        %v3319 = vadd.f32 0.0, %v3318
        %v3320 = vpop.f32.mrf.mxu0
        %3321 = vmatprep.mubr.bf16.mxu0 0
        %3322 = vmatmul.mubr.bf16.gmra.mxu0 %v1576
        %v3323 = vpop.f32.mrf.mxu0
        %v3324 = vadd.f32 0.0, %v3323
        %v3325 = vpop.f32.mrf.mxu0
        %v3326 = vpop.f32.mrf.mxu0
        %v3327 = vadd.f32 0.0, %v3326
        %v3328 = vpop.f32.mrf.mxu0
        %3329 = vmatprep.mubr.bf16.mxu0 0
        %3330 = vmatmul.mubr.bf16.gmra.mxu0 %v1579
        %v3331 = vpop.f32.mrf.mxu0
        %v3332 = vadd.f32 0.0, %v3331
        %v3333 = vpop.f32.mrf.mxu0
        %v3334 = vpop.f32.mrf.mxu0
        %v3335 = vadd.f32 0.0, %v3334
        %v3336 = vpop.f32.mrf.mxu0
        %3337 = vdwg.mxu0
        %v3338 = vpack.c.bf16 %v3311, %v3308
        %v3339 = vpack.c.bf16 %v3319, %v3316
        %v3340 = vpack.c.bf16 %v3327, %v3324
        %v3341 = vpack.c.bf16 %v3335, %v3332
        %s3342 = scalar_lea.vmem [#allocation7], 480
        %v3343 = vld [vmem:[%s3342] sm:$0xf]
        %v3344 = vld [vmem:[%s3342 + $0x4] sm:$0xf]
        %v3345 = vld [vmem:[%s3342 + $0x8] sm:$0xf]
        %v3346 = vld [vmem:[%s3342 + $0xc] sm:$0xf]
        %v3347 = vld [vmem:[%s3342 + $0x10] sm:$0xf]
        %v3348 = vld [vmem:[%s3342 + $0x14] sm:$0xf]
        %v3349 = vld [vmem:[%s3342 + $0x18] sm:$0xf]
        %v3350 = vld [vmem:[%s3342 + $0x1c] sm:$0xf]
        %v3359 = vunpack.c.l.b16 %v3343
        %v3360 = vunpack.c.l.b16 %v3344
        %v3361 = vunpack.c.l.b16 %v3345
        %v3362 = vunpack.c.l.b16 %v3346
        %v3363 = vunpack.c.l.b16 %v3347
        %v3364 = vunpack.c.l.b16 %v3348
        %v3365 = vunpack.c.l.b16 %v3349
        %v3366 = vunpack.c.l.b16 %v3350
        %v3367 = vpack.c.b16 %v3360, %v3359
        %v3368 = vpack.c.b16 %v3362, %v3361
        %v3369 = vpack.c.b16 %v3364, %v3363
        %v3370 = vpack.c.b16 %v3366, %v3365
        %v3376 = vsel %vm327, %v3338, 0
        %v3379 = vsel %vm327, %v3339, 0
        %v3382 = vsel %vm327, %v3340, 0
        %v3385 = vsel %vm327, %v3341, 0
        %3387 = vmatprep.subr.bf16.mxu0 0
        %3388 = vmatpush1.bf16.msra.mxu0 0
        %3389 = vmatprep.subr.bf16.mxu0 0
        %3390 = vmatpush1.bf16.msra.mxu0 0
        %3391 = vmatprep.subr.bf16.mxu0 0
        %3392 = vmatpush1.bf16.msra.mxu0 0
        %3393 = vmatprep.subr.bf16.mxu0 0
        %3394 = vmatpush1.bf16.msra.mxu0 0
        %3395 = vmatprep.subr.bf16.mxu0 0
        %3396 = vmatpush1.bf16.msra.mxu0 %v3370
        %3397 = vmatprep.subr.bf16.mxu0 0
        %3398 = vmatpush1.bf16.msra.mxu0 %v3369
        %3399 = vmatprep.subr.bf16.mxu0 0
        %3400 = vmatpush1.bf16.msra.mxu0 %v3368
        %3401 = vmatprep.subr.bf16.mxu0 0
        %3402 = vmatpush1.bf16.msra.mxu0 %v3367
        %3403 = vmatprep.subr.bf16.mxu0 0
        %3404 = vmatpush2.bf16.msra.mxu0 0
        %3405 = vmatprep.subr.bf16.mxu0 0
        %3406 = vmatpush2.bf16.msra.mxu0 0
        %3407 = vmatprep.subr.bf16.mxu0 0
        %3408 = vmatpush2.bf16.msra.mxu0 0
        %3409 = vmatprep.subr.bf16.mxu0 0
        %3410 = vmatpush2.bf16.msra.mxu0 0
        %3411 = vmatprep.subr.bf16.mxu0 0
        %3412 = vmatpush2.bf16.msra.mxu0 0
        %3413 = vmatprep.subr.bf16.mxu0 0
        %3414 = vmatpush2.bf16.msra.mxu0 0
        %3415 = vmatprep.subr.bf16.mxu0 0
        %3416 = vmatpush2.bf16.msra.mxu0 0
        %3417 = vmatprep.subr.bf16.mxu0 0
        %3418 = vmatpush2.bf16.msra.mxu0 0
        %3419 = vmatprep.mubr.bf16.mxu0 0
        %3420 = vmatmul.mubr.bf16.gmra.mxu0 %v3376
        %v3421 = vpop.f32.mrf.mxu0
        %v3422 = vadd.f32 0.0, %v3421
        %v3423 = vpop.f32.mrf.mxu0
        %v3424 = vpop.f32.mrf.mxu0
        %v3425 = vadd.f32 0.0, %v3424
        %v3426 = vpop.f32.mrf.mxu0
        %3427 = vmatprep.mubr.bf16.mxu0 0
        %3428 = vmatmul.mubr.bf16.gmra.mxu0 %v3379
        %v3429 = vpop.f32.mrf.mxu0
        %v3430 = vadd.f32 0.0, %v3429
        %v3431 = vpop.f32.mrf.mxu0
        %v3432 = vpop.f32.mrf.mxu0
        %v3433 = vadd.f32 0.0, %v3432
        %v3434 = vpop.f32.mrf.mxu0
        %3435 = vmatprep.mubr.bf16.mxu0 0
        %3436 = vmatmul.mubr.bf16.gmra.mxu0 %v3382
        %v3437 = vpop.f32.mrf.mxu0
        %v3438 = vadd.f32 0.0, %v3437
        %v3439 = vpop.f32.mrf.mxu0
        %v3440 = vpop.f32.mrf.mxu0
        %v3441 = vadd.f32 0.0, %v3440
        %v3442 = vpop.f32.mrf.mxu0
        %3443 = vmatprep.mubr.bf16.mxu0 0
        %3444 = vmatmul.mubr.bf16.gmra.mxu0 %v3385
        %v3445 = vpop.f32.mrf.mxu0
        %v3446 = vadd.f32 0.0, %v3445
        %v3447 = vpop.f32.mrf.mxu0
        %v3448 = vpop.f32.mrf.mxu0
        %v3449 = vadd.f32 0.0, %v3448
        %v3450 = vpop.f32.mrf.mxu0
        %3451 = vdwg.mxu0
        %v3452 = vadd.f32 %v3265, %v3422
        %v3453 = vadd.f32 %v3266, %v3425
        %v3454 = vadd.f32 %v3267, %v3430
        %v3455 = vadd.f32 %v3268, %v3433
        %v3456 = vadd.f32 %v3269, %v3438
        %v3457 = vadd.f32 %v3270, %v3441
        %v3458 = vadd.f32 %v3271, %v3446
        %v3459 = vadd.f32 %v3272, %v3449
        %3460 = vmatprep.subr.bf16.mxu0 0
        %3461 = vmatpush1.bf16.msra.mxu0 0
        %3462 = vmatprep.subr.bf16.mxu0 0
        %3463 = vmatpush1.bf16.msra.mxu0 0
        %3464 = vmatprep.subr.bf16.mxu0 0
        %3465 = vmatpush1.bf16.msra.mxu0 0
        %3466 = vmatprep.subr.bf16.mxu0 0
        %3467 = vmatpush1.bf16.msra.mxu0 0
        %3468 = vmatprep.subr.bf16.mxu0 0
        %3469 = vmatpush1.bf16.msra.mxu0 %v2235
        %3470 = vmatprep.subr.bf16.mxu0 0
        %3471 = vmatpush1.bf16.msra.mxu0 %v2234
        %3472 = vmatprep.subr.bf16.mxu0 0
        %3473 = vmatpush1.bf16.msra.mxu0 %v2233
        %3474 = vmatprep.subr.bf16.mxu0 0
        %3475 = vmatpush1.bf16.msra.mxu0 %v2232
        %3476 = vmatprep.subr.bf16.mxu0 0
        %3477 = vmatpush2.bf16.msra.mxu0 0
        %3478 = vmatprep.subr.bf16.mxu0 0
        %3479 = vmatpush2.bf16.msra.mxu0 0
        %3480 = vmatprep.subr.bf16.mxu0 0
        %3481 = vmatpush2.bf16.msra.mxu0 0
        %3482 = vmatprep.subr.bf16.mxu0 0
        %3483 = vmatpush2.bf16.msra.mxu0 0
        %3484 = vmatprep.subr.bf16.mxu0 0
        %3485 = vmatpush2.bf16.msra.mxu0 0
        %3486 = vmatprep.subr.bf16.mxu0 0
        %3487 = vmatpush2.bf16.msra.mxu0 0
        %3488 = vmatprep.subr.bf16.mxu0 0
        %3489 = vmatpush2.bf16.msra.mxu0 0
        %3490 = vmatprep.subr.bf16.mxu0 0
        %3491 = vmatpush2.bf16.msra.mxu0 0
        %3492 = vmatprep.mubr.bf16.mxu0 0
        %3493 = vmatmul.mubr.bf16.gmra.mxu0 %v1798
        %v3494 = vpop.f32.mrf.mxu0
        %v3495 = vadd.f32 0.0, %v3494
        %v3496 = vpop.f32.mrf.mxu0
        %v3497 = vpop.f32.mrf.mxu0
        %v3498 = vadd.f32 0.0, %v3497
        %v3499 = vpop.f32.mrf.mxu0
        %3500 = vmatprep.mubr.bf16.mxu0 0
        %3501 = vmatmul.mubr.bf16.gmra.mxu0 %v1801
        %v3502 = vpop.f32.mrf.mxu0
        %v3503 = vadd.f32 0.0, %v3502
        %v3504 = vpop.f32.mrf.mxu0
        %v3505 = vpop.f32.mrf.mxu0
        %v3506 = vadd.f32 0.0, %v3505
        %v3507 = vpop.f32.mrf.mxu0
        %3508 = vmatprep.mubr.bf16.mxu0 0
        %3509 = vmatmul.mubr.bf16.gmra.mxu0 %v1804
        %v3510 = vpop.f32.mrf.mxu0
        %v3511 = vadd.f32 0.0, %v3510
        %v3512 = vpop.f32.mrf.mxu0
        %v3513 = vpop.f32.mrf.mxu0
        %v3514 = vadd.f32 0.0, %v3513
        %v3515 = vpop.f32.mrf.mxu0
        %3516 = vmatprep.mubr.bf16.mxu0 0
        %3517 = vmatmul.mubr.bf16.gmra.mxu0 %v1807
        %v3518 = vpop.f32.mrf.mxu0
        %v3519 = vadd.f32 0.0, %v3518
        %v3520 = vpop.f32.mrf.mxu0
        %v3521 = vpop.f32.mrf.mxu0
        %v3522 = vadd.f32 0.0, %v3521
        %v3523 = vpop.f32.mrf.mxu0
        %3524 = vdwg.mxu0
        %v3525 = vpack.c.bf16 %v3498, %v3495
        %v3526 = vpack.c.bf16 %v3506, %v3503
        %v3527 = vpack.c.bf16 %v3514, %v3511
        %v3528 = vpack.c.bf16 %v3522, %v3519
        %s3529 = scalar_lea.vmem [#allocation7], 512
        %v3530 = vld [vmem:[%s3529] sm:$0xf]
        %v3531 = vld [vmem:[%s3529 + $0x4] sm:$0xf]
        %v3532 = vld [vmem:[%s3529 + $0x8] sm:$0xf]
        %v3533 = vld [vmem:[%s3529 + $0xc] sm:$0xf]
        %v3534 = vld [vmem:[%s3529 + $0x10] sm:$0xf]
        %v3535 = vld [vmem:[%s3529 + $0x14] sm:$0xf]
        %v3536 = vld [vmem:[%s3529 + $0x18] sm:$0xf]
        %v3537 = vld [vmem:[%s3529 + $0x1c] sm:$0xf]
        %v3546 = vunpack.c.l.b16 %v3530
        %v3547 = vunpack.c.l.b16 %v3531
        %v3548 = vunpack.c.l.b16 %v3532
        %v3549 = vunpack.c.l.b16 %v3533
        %v3550 = vunpack.c.l.b16 %v3534
        %v3551 = vunpack.c.l.b16 %v3535
        %v3552 = vunpack.c.l.b16 %v3536
        %v3553 = vunpack.c.l.b16 %v3537
        %v3554 = vpack.c.b16 %v3547, %v3546
        %v3555 = vpack.c.b16 %v3549, %v3548
        %v3556 = vpack.c.b16 %v3551, %v3550
        %v3557 = vpack.c.b16 %v3553, %v3552
        %v3563 = vsel %vm327, %v3525, 0
        %v3566 = vsel %vm327, %v3526, 0
        %v3569 = vsel %vm327, %v3527, 0
        %v3572 = vsel %vm327, %v3528, 0
        %3574 = vmatprep.subr.bf16.mxu0 0
        %3575 = vmatpush1.bf16.msra.mxu0 0
        %3576 = vmatprep.subr.bf16.mxu0 0
        %3577 = vmatpush1.bf16.msra.mxu0 0
        %3578 = vmatprep.subr.bf16.mxu0 0
        %3579 = vmatpush1.bf16.msra.mxu0 0
        %3580 = vmatprep.subr.bf16.mxu0 0
        %3581 = vmatpush1.bf16.msra.mxu0 0
        %3582 = vmatprep.subr.bf16.mxu0 0
        %3583 = vmatpush1.bf16.msra.mxu0 %v3557
        %3584 = vmatprep.subr.bf16.mxu0 0
        %3585 = vmatpush1.bf16.msra.mxu0 %v3556
        %3586 = vmatprep.subr.bf16.mxu0 0
        %3587 = vmatpush1.bf16.msra.mxu0 %v3555
        %3588 = vmatprep.subr.bf16.mxu0 0
        %3589 = vmatpush1.bf16.msra.mxu0 %v3554
        %3590 = vmatprep.subr.bf16.mxu0 0
        %3591 = vmatpush2.bf16.msra.mxu0 0
        %3592 = vmatprep.subr.bf16.mxu0 0
        %3593 = vmatpush2.bf16.msra.mxu0 0
        %3594 = vmatprep.subr.bf16.mxu0 0
        %3595 = vmatpush2.bf16.msra.mxu0 0
        %3596 = vmatprep.subr.bf16.mxu0 0
        %3597 = vmatpush2.bf16.msra.mxu0 0
        %3598 = vmatprep.subr.bf16.mxu0 0
        %3599 = vmatpush2.bf16.msra.mxu0 0
        %3600 = vmatprep.subr.bf16.mxu0 0
        %3601 = vmatpush2.bf16.msra.mxu0 0
        %3602 = vmatprep.subr.bf16.mxu0 0
        %3603 = vmatpush2.bf16.msra.mxu0 0
        %3604 = vmatprep.subr.bf16.mxu0 0
        %3605 = vmatpush2.bf16.msra.mxu0 0
        %3606 = vmatprep.mubr.bf16.mxu0 0
        %3607 = vmatmul.mubr.bf16.gmra.mxu0 %v3563
        %v3608 = vpop.f32.mrf.mxu0
        %v3609 = vadd.f32 0.0, %v3608
        %v3610 = vpop.f32.mrf.mxu0
        %v3611 = vpop.f32.mrf.mxu0
        %v3612 = vadd.f32 0.0, %v3611
        %v3613 = vpop.f32.mrf.mxu0
        %3614 = vmatprep.mubr.bf16.mxu0 0
        %3615 = vmatmul.mubr.bf16.gmra.mxu0 %v3566
        %v3616 = vpop.f32.mrf.mxu0
        %v3617 = vadd.f32 0.0, %v3616
        %v3618 = vpop.f32.mrf.mxu0
        %v3619 = vpop.f32.mrf.mxu0
        %v3620 = vadd.f32 0.0, %v3619
        %v3621 = vpop.f32.mrf.mxu0
        %3622 = vmatprep.mubr.bf16.mxu0 0
        %3623 = vmatmul.mubr.bf16.gmra.mxu0 %v3569
        %v3624 = vpop.f32.mrf.mxu0
        %v3625 = vadd.f32 0.0, %v3624
        %v3626 = vpop.f32.mrf.mxu0
        %v3627 = vpop.f32.mrf.mxu0
        %v3628 = vadd.f32 0.0, %v3627
        %v3629 = vpop.f32.mrf.mxu0
        %3630 = vmatprep.mubr.bf16.mxu0 0
        %3631 = vmatmul.mubr.bf16.gmra.mxu0 %v3572
        %v3632 = vpop.f32.mrf.mxu0
        %v3633 = vadd.f32 0.0, %v3632
        %v3634 = vpop.f32.mrf.mxu0
        %v3635 = vpop.f32.mrf.mxu0
        %v3636 = vadd.f32 0.0, %v3635
        %v3637 = vpop.f32.mrf.mxu0
        %3638 = vdwg.mxu0
        %v3639 = vadd.f32 %v3452, %v3609
        %v3640 = vadd.f32 %v3453, %v3612
        %v3641 = vadd.f32 %v3454, %v3617
        %v3642 = vadd.f32 %v3455, %v3620
        %v3643 = vadd.f32 %v3456, %v3625
        %v3644 = vadd.f32 %v3457, %v3628
        %v3645 = vadd.f32 %v3458, %v3633
        %v3646 = vadd.f32 %v3459, %v3636
        %3647 = vmatprep.subr.bf16.mxu0 0
        %3648 = vmatpush1.bf16.msra.mxu0 0
        %3649 = vmatprep.subr.bf16.mxu0 0
        %3650 = vmatpush1.bf16.msra.mxu0 0
        %3651 = vmatprep.subr.bf16.mxu0 0
        %3652 = vmatpush1.bf16.msra.mxu0 0
        %3653 = vmatprep.subr.bf16.mxu0 0
        %3654 = vmatpush1.bf16.msra.mxu0 0
        %3655 = vmatprep.subr.bf16.mxu0 0
        %3656 = vmatpush1.bf16.msra.mxu0 %v2235
        %3657 = vmatprep.subr.bf16.mxu0 0
        %3658 = vmatpush1.bf16.msra.mxu0 %v2234
        %3659 = vmatprep.subr.bf16.mxu0 0
        %3660 = vmatpush1.bf16.msra.mxu0 %v2233
        %3661 = vmatprep.subr.bf16.mxu0 0
        %3662 = vmatpush1.bf16.msra.mxu0 %v2232
        %3663 = vmatprep.subr.bf16.mxu0 0
        %3664 = vmatpush2.bf16.msra.mxu0 0
        %3665 = vmatprep.subr.bf16.mxu0 0
        %3666 = vmatpush2.bf16.msra.mxu0 0
        %3667 = vmatprep.subr.bf16.mxu0 0
        %3668 = vmatpush2.bf16.msra.mxu0 0
        %3669 = vmatprep.subr.bf16.mxu0 0
        %3670 = vmatpush2.bf16.msra.mxu0 0
        %3671 = vmatprep.subr.bf16.mxu0 0
        %3672 = vmatpush2.bf16.msra.mxu0 0
        %3673 = vmatprep.subr.bf16.mxu0 0
        %3674 = vmatpush2.bf16.msra.mxu0 0
        %3675 = vmatprep.subr.bf16.mxu0 0
        %3676 = vmatpush2.bf16.msra.mxu0 0
        %3677 = vmatprep.subr.bf16.mxu0 0
        %3678 = vmatpush2.bf16.msra.mxu0 0
        %3679 = vmatprep.mubr.bf16.mxu0 0
        %3680 = vmatmul.mubr.bf16.gmra.mxu0 %v2026
        %v3681 = vpop.f32.mrf.mxu0
        %v3682 = vadd.f32 0.0, %v3681
        %v3683 = vpop.f32.mrf.mxu0
        %v3684 = vpop.f32.mrf.mxu0
        %v3685 = vadd.f32 0.0, %v3684
        %v3686 = vpop.f32.mrf.mxu0
        %3687 = vmatprep.mubr.bf16.mxu0 0
        %3688 = vmatmul.mubr.bf16.gmra.mxu0 %v2029
        %v3689 = vpop.f32.mrf.mxu0
        %v3690 = vadd.f32 0.0, %v3689
        %v3691 = vpop.f32.mrf.mxu0
        %v3692 = vpop.f32.mrf.mxu0
        %v3693 = vadd.f32 0.0, %v3692
        %v3694 = vpop.f32.mrf.mxu0
        %3695 = vmatprep.mubr.bf16.mxu0 0
        %3696 = vmatmul.mubr.bf16.gmra.mxu0 %v2032
        %v3697 = vpop.f32.mrf.mxu0
        %v3698 = vadd.f32 0.0, %v3697
        %v3699 = vpop.f32.mrf.mxu0
        %v3700 = vpop.f32.mrf.mxu0
        %v3701 = vadd.f32 0.0, %v3700
        %v3702 = vpop.f32.mrf.mxu0
        %3703 = vmatprep.mubr.bf16.mxu0 0
        %3704 = vmatmul.mubr.bf16.gmra.mxu0 %v2035
        %v3705 = vpop.f32.mrf.mxu0
        %v3706 = vadd.f32 0.0, %v3705
        %v3707 = vpop.f32.mrf.mxu0
        %v3708 = vpop.f32.mrf.mxu0
        %v3709 = vadd.f32 0.0, %v3708
        %v3710 = vpop.f32.mrf.mxu0
        %3711 = vdwg.mxu0
        %v3712 = vpack.c.bf16 %v3685, %v3682
        %v3713 = vpack.c.bf16 %v3693, %v3690
        %v3714 = vpack.c.bf16 %v3701, %v3698
        %v3715 = vpack.c.bf16 %v3709, %v3706
        %s3716 = scalar_lea.vmem [#allocation7], 544
        %v3717 = vld [vmem:[%s3716] sm:$0xf]
        %v3718 = vld [vmem:[%s3716 + $0x4] sm:$0xf]
        %v3719 = vld [vmem:[%s3716 + $0x8] sm:$0xf]
        %v3720 = vld [vmem:[%s3716 + $0xc] sm:$0xf]
        %v3721 = vld [vmem:[%s3716 + $0x10] sm:$0xf]
        %v3722 = vld [vmem:[%s3716 + $0x14] sm:$0xf]
        %v3723 = vld [vmem:[%s3716 + $0x18] sm:$0xf]
        %v3724 = vld [vmem:[%s3716 + $0x1c] sm:$0xf]
        %v3733 = vunpack.c.l.b16 %v3717
        %v3734 = vunpack.c.l.b16 %v3718
        %v3735 = vunpack.c.l.b16 %v3719
        %v3736 = vunpack.c.l.b16 %v3720
        %v3737 = vunpack.c.l.b16 %v3721
        %v3738 = vunpack.c.l.b16 %v3722
        %v3739 = vunpack.c.l.b16 %v3723
        %v3740 = vunpack.c.l.b16 %v3724
        %v3741 = vpack.c.b16 %v3734, %v3733
        %v3742 = vpack.c.b16 %v3736, %v3735
        %v3743 = vpack.c.b16 %v3738, %v3737
        %v3744 = vpack.c.b16 %v3740, %v3739
        %v3750 = vsel %vm327, %v3712, 0
        %v3753 = vsel %vm327, %v3713, 0
        %v3756 = vsel %vm327, %v3714, 0
        %v3759 = vsel %vm327, %v3715, 0
        %3761 = vmatprep.subr.bf16.mxu0 0
        %3762 = vmatpush1.bf16.msra.mxu0 0
        %3763 = vmatprep.subr.bf16.mxu0 0
        %3764 = vmatpush1.bf16.msra.mxu0 0
        %3765 = vmatprep.subr.bf16.mxu0 0
        %3766 = vmatpush1.bf16.msra.mxu0 0
        %3767 = vmatprep.subr.bf16.mxu0 0
        %3768 = vmatpush1.bf16.msra.mxu0 0
        %3769 = vmatprep.subr.bf16.mxu0 0
        %3770 = vmatpush1.bf16.msra.mxu0 %v3744
        %3771 = vmatprep.subr.bf16.mxu0 0
        %3772 = vmatpush1.bf16.msra.mxu0 %v3743
        %3773 = vmatprep.subr.bf16.mxu0 0
        %3774 = vmatpush1.bf16.msra.mxu0 %v3742
        %3775 = vmatprep.subr.bf16.mxu0 0
        %3776 = vmatpush1.bf16.msra.mxu0 %v3741
        %3777 = vmatprep.subr.bf16.mxu0 0
        %3778 = vmatpush2.bf16.msra.mxu0 0
        %3779 = vmatprep.subr.bf16.mxu0 0
        %3780 = vmatpush2.bf16.msra.mxu0 0
        %3781 = vmatprep.subr.bf16.mxu0 0
        %3782 = vmatpush2.bf16.msra.mxu0 0
        %3783 = vmatprep.subr.bf16.mxu0 0
        %3784 = vmatpush2.bf16.msra.mxu0 0
        %3785 = vmatprep.subr.bf16.mxu0 0
        %3786 = vmatpush2.bf16.msra.mxu0 0
        %3787 = vmatprep.subr.bf16.mxu0 0
        %3788 = vmatpush2.bf16.msra.mxu0 0
        %3789 = vmatprep.subr.bf16.mxu0 0
        %3790 = vmatpush2.bf16.msra.mxu0 0
        %3791 = vmatprep.subr.bf16.mxu0 0
        %3792 = vmatpush2.bf16.msra.mxu0 0
        %3793 = vmatprep.mubr.bf16.mxu0 0
        %3794 = vmatmul.mubr.bf16.gmra.mxu0 %v3750
        %v3795 = vpop.f32.mrf.mxu0
        %v3796 = vadd.f32 0.0, %v3795
        %v3797 = vpop.f32.mrf.mxu0
        %v3798 = vpop.f32.mrf.mxu0
        %v3799 = vadd.f32 0.0, %v3798
        %v3800 = vpop.f32.mrf.mxu0
        %3801 = vmatprep.mubr.bf16.mxu0 0
        %3802 = vmatmul.mubr.bf16.gmra.mxu0 %v3753
        %v3803 = vpop.f32.mrf.mxu0
        %v3804 = vadd.f32 0.0, %v3803
        %v3805 = vpop.f32.mrf.mxu0
        %v3806 = vpop.f32.mrf.mxu0
        %v3807 = vadd.f32 0.0, %v3806
        %v3808 = vpop.f32.mrf.mxu0
        %3809 = vmatprep.mubr.bf16.mxu0 0
        %3810 = vmatmul.mubr.bf16.gmra.mxu0 %v3756
        %v3811 = vpop.f32.mrf.mxu0
        %v3812 = vadd.f32 0.0, %v3811
        %v3813 = vpop.f32.mrf.mxu0
        %v3814 = vpop.f32.mrf.mxu0
        %v3815 = vadd.f32 0.0, %v3814
        %v3816 = vpop.f32.mrf.mxu0
        %3817 = vmatprep.mubr.bf16.mxu0 0
        %3818 = vmatmul.mubr.bf16.gmra.mxu0 %v3759
        %v3819 = vpop.f32.mrf.mxu0
        %v3820 = vadd.f32 0.0, %v3819
        %v3821 = vpop.f32.mrf.mxu0
        %v3822 = vpop.f32.mrf.mxu0
        %v3823 = vadd.f32 0.0, %v3822
        %v3824 = vpop.f32.mrf.mxu0
        %3825 = vdwg.mxu0
        %v3826 = vadd.f32 %v3639, %v3796
        %v3827 = vadd.f32 %v3640, %v3799
        %v3828 = vadd.f32 %v3641, %v3804
        %v3829 = vadd.f32 %v3642, %v3807
        %v3830 = vadd.f32 %v3643, %v3812
        %v3831 = vadd.f32 %v3644, %v3815
        %v3832 = vadd.f32 %v3645, %v3820
        %v3833 = vadd.f32 %v3646, %v3823
        %v3834 = vmax.f32 %v3826, 0.0
        %v3835 = vmax.f32 %v3827, 0.0
        %v3836 = vmax.f32 %v3828, 0.0
        %v3837 = vmax.f32 %v3829, 0.0
        %v3838 = vmax.f32 %v3830, 0.0
        %v3839 = vmax.f32 %v3831, 0.0
        %v3840 = vmax.f32 %v3832, 0.0
        %v3841 = vmax.f32 %v3833, 0.0
        %v3842 = vadd.f32 %v3834, %v287
        %v3843 = vadd.f32 %v3835, %v288
        %v3844 = vadd.f32 %v3836, %v289
        %v3845 = vadd.f32 %v3837, %v290
        %v3846 = vadd.f32 %v3838, %v291
        %v3847 = vadd.f32 %v3839, %v292
        %v3848 = vadd.f32 %v3840, %v293
        %v3849 = vadd.f32 %v3841, %v294
        %v3850 = vpack.c.bf16 %v3843, %v3842
        %v3851 = vpack.c.bf16 %v3845, %v3844
        %v3852 = vpack.c.bf16 %v3847, %v3846
        %v3853 = vpack.c.bf16 %v3849, %v3848
        %3854 = vmatprep.subr.bf16.mxu0 0
        %3855 = vmatpush1.bf16.msra.mxu0 0
        %3856 = vmatprep.subr.bf16.mxu0 0
        %3857 = vmatpush1.bf16.msra.mxu0 0
        %3858 = vmatprep.subr.bf16.mxu0 0
        %3859 = vmatpush1.bf16.msra.mxu0 0
        %3860 = vmatprep.subr.bf16.mxu0 0
        %3861 = vmatpush1.bf16.msra.mxu0 0
        %3862 = vmatprep.subr.bf16.mxu0 0
        %3863 = vmatpush1.bf16.msra.mxu0 %v3853
        %3864 = vmatprep.subr.bf16.mxu0 0
        %3865 = vmatpush1.bf16.msra.mxu0 %v3852
        %3866 = vmatprep.subr.bf16.mxu0 0
        %3867 = vmatpush1.bf16.msra.mxu0 %v3851
        %3868 = vmatprep.subr.bf16.mxu0 0
        %3869 = vmatpush1.bf16.msra.mxu0 %v3850
        %3870 = vmatprep.subr.bf16.mxu0 0
        %3871 = vmatpush2.bf16.msra.mxu0 0
        %3872 = vmatprep.subr.bf16.mxu0 0
        %3873 = vmatpush2.bf16.msra.mxu0 0
        %3874 = vmatprep.subr.bf16.mxu0 0
        %3875 = vmatpush2.bf16.msra.mxu0 0
        %3876 = vmatprep.subr.bf16.mxu0 0
        %3877 = vmatpush2.bf16.msra.mxu0 0
        %3878 = vmatprep.subr.bf16.mxu0 0
        %3879 = vmatpush2.bf16.msra.mxu0 0
        %3880 = vmatprep.subr.bf16.mxu0 0
        %3881 = vmatpush2.bf16.msra.mxu0 0
        %3882 = vmatprep.subr.bf16.mxu0 0
        %3883 = vmatpush2.bf16.msra.mxu0 0
        %3884 = vmatprep.subr.bf16.mxu0 0
        %3885 = vmatpush2.bf16.msra.mxu0 0
        %3886 = vmatprep.mubr.bf16.mxu0 0
        %3887 = vmatmul.mubr.bf16.gmra.mxu0 %v329
        %v3888 = vpop.f32.mrf.mxu0
        %v3889 = vadd.f32 0.0, %v3888
        %v3890 = vpop.f32.mrf.mxu0
        %v3891 = vpop.f32.mrf.mxu0
        %v3892 = vadd.f32 0.0, %v3891
        %v3893 = vpop.f32.mrf.mxu0
        %3894 = vmatprep.mubr.bf16.mxu0 0
        %3895 = vmatmul.mubr.bf16.gmra.mxu0 %v332
        %v3896 = vpop.f32.mrf.mxu0
        %v3897 = vadd.f32 0.0, %v3896
        %v3898 = vpop.f32.mrf.mxu0
        %v3899 = vpop.f32.mrf.mxu0
        %v3900 = vadd.f32 0.0, %v3899
        %v3901 = vpop.f32.mrf.mxu0
        %3902 = vmatprep.mubr.bf16.mxu0 0
        %3903 = vmatmul.mubr.bf16.gmra.mxu0 %v335
        %v3904 = vpop.f32.mrf.mxu0
        %v3905 = vadd.f32 0.0, %v3904
        %v3906 = vpop.f32.mrf.mxu0
        %v3907 = vpop.f32.mrf.mxu0
        %v3908 = vadd.f32 0.0, %v3907
        %v3909 = vpop.f32.mrf.mxu0
        %3910 = vmatprep.mubr.bf16.mxu0 0
        %3911 = vmatmul.mubr.bf16.gmra.mxu0 %v338
        %v3912 = vpop.f32.mrf.mxu0
        %v3913 = vadd.f32 0.0, %v3912
        %v3914 = vpop.f32.mrf.mxu0
        %v3915 = vpop.f32.mrf.mxu0
        %v3916 = vadd.f32 0.0, %v3915
        %v3917 = vpop.f32.mrf.mxu0
        %3918 = vdwg.mxu0
        %v3919 = vpack.c.bf16 %v3892, %v3889
        %v3920 = vpack.c.bf16 %v3900, %v3897
        %v3921 = vpack.c.bf16 %v3908, %v3905
        %v3922 = vpack.c.bf16 %v3916, %v3913
        %s3923 = scalar_lea.vmem [#allocation7], 576
        %v3924 = vld [vmem:[%s3923] sm:$0xf]
        %v3925 = vld [vmem:[%s3923 + $0x4] sm:$0xf]
        %v3926 = vld [vmem:[%s3923 + $0x8] sm:$0xf]
        %v3927 = vld [vmem:[%s3923 + $0xc] sm:$0xf]
        %v3928 = vld [vmem:[%s3923 + $0x10] sm:$0xf]
        %v3929 = vld [vmem:[%s3923 + $0x14] sm:$0xf]
        %v3930 = vld [vmem:[%s3923 + $0x18] sm:$0xf]
        %v3931 = vld [vmem:[%s3923 + $0x1c] sm:$0xf]
        %3932 = vmatprep.subr.bf16.mxu0 0
        %3933 = vmatpush1.bf16.msra.mxu0 0
        %3934 = vmatprep.subr.bf16.mxu0 0
        %3935 = vmatpush1.bf16.msra.mxu0 0
        %3936 = vmatprep.subr.bf16.mxu0 0
        %3937 = vmatpush1.bf16.msra.mxu0 0
        %3938 = vmatprep.subr.bf16.mxu0 0
        %3939 = vmatpush1.bf16.msra.mxu0 0
        %3940 = vmatprep.subr.bf16.mxu0 0
        %3941 = vmatpush1.bf16.msra.mxu0 %v3853
        %3942 = vmatprep.subr.bf16.mxu0 0
        %3943 = vmatpush1.bf16.msra.mxu0 %v3852
        %3944 = vmatprep.subr.bf16.mxu0 0
        %3945 = vmatpush1.bf16.msra.mxu0 %v3851
        %3946 = vmatprep.subr.bf16.mxu0 0
        %3947 = vmatpush1.bf16.msra.mxu0 %v3850
        %3948 = vmatprep.subr.bf16.mxu0 0
        %3949 = vmatpush2.bf16.msra.mxu0 0
        %3950 = vmatprep.subr.bf16.mxu0 0
        %3951 = vmatpush2.bf16.msra.mxu0 0
        %3952 = vmatprep.subr.bf16.mxu0 0
        %3953 = vmatpush2.bf16.msra.mxu0 0
        %3954 = vmatprep.subr.bf16.mxu0 0
        %3955 = vmatpush2.bf16.msra.mxu0 0
        %3956 = vmatprep.subr.bf16.mxu0 0
        %3957 = vmatpush2.bf16.msra.mxu0 0
        %3958 = vmatprep.subr.bf16.mxu0 0
        %3959 = vmatpush2.bf16.msra.mxu0 0
        %3960 = vmatprep.subr.bf16.mxu0 0
        %3961 = vmatpush2.bf16.msra.mxu0 0
        %3962 = vmatprep.subr.bf16.mxu0 0
        %3963 = vmatpush2.bf16.msra.mxu0 0
        %3964 = vmatprep.mubr.bf16.mxu0 0
        %3965 = vmatmul.mubr.bf16.gmra.mxu0 %v447
        %v3966 = vpop.f32.mrf.mxu0
        %v3967 = vadd.f32 0.0, %v3966
        %v3968 = vpop.f32.mrf.mxu0
        %v3969 = vpop.f32.mrf.mxu0
        %v3970 = vadd.f32 0.0, %v3969
        %v3971 = vpop.f32.mrf.mxu0
        %3972 = vmatprep.mubr.bf16.mxu0 0
        %3973 = vmatmul.mubr.bf16.gmra.mxu0 %v450
        %v3974 = vpop.f32.mrf.mxu0
        %v3975 = vadd.f32 0.0, %v3974
        %v3976 = vpop.f32.mrf.mxu0
        %v3977 = vpop.f32.mrf.mxu0
        %v3978 = vadd.f32 0.0, %v3977
        %v3979 = vpop.f32.mrf.mxu0
        %3980 = vmatprep.mubr.bf16.mxu0 0
        %3981 = vmatmul.mubr.bf16.gmra.mxu0 %v453
        %v3982 = vpop.f32.mrf.mxu0
        %v3983 = vadd.f32 0.0, %v3982
        %v3984 = vpop.f32.mrf.mxu0
        %v3985 = vpop.f32.mrf.mxu0
        %v3986 = vadd.f32 0.0, %v3985
        %v3987 = vpop.f32.mrf.mxu0
        %3988 = vmatprep.mubr.bf16.mxu0 0
        %3989 = vmatmul.mubr.bf16.gmra.mxu0 %v456
        %v3990 = vpop.f32.mrf.mxu0
        %v3991 = vadd.f32 0.0, %v3990
        %v3992 = vpop.f32.mrf.mxu0
        %v3993 = vpop.f32.mrf.mxu0
        %v3994 = vadd.f32 0.0, %v3993
        %v3995 = vpop.f32.mrf.mxu0
        %3996 = vdwg.mxu0
        %v3997 = vpack.c.bf16 %v3970, %v3967
        %v3998 = vpack.c.bf16 %v3978, %v3975
        %v3999 = vpack.c.bf16 %v3986, %v3983
        %v4000 = vpack.c.bf16 %v3994, %v3991
        %s4001 = scalar_lea.vmem [#allocation7], 608
        %v4002 = vld [vmem:[%s4001] sm:$0xf]
        %v4003 = vld [vmem:[%s4001 + $0x4] sm:$0xf]
        %v4004 = vld [vmem:[%s4001 + $0x8] sm:$0xf]
        %v4005 = vld [vmem:[%s4001 + $0xc] sm:$0xf]
        %v4006 = vld [vmem:[%s4001 + $0x10] sm:$0xf]
        %v4007 = vld [vmem:[%s4001 + $0x14] sm:$0xf]
        %v4008 = vld [vmem:[%s4001 + $0x18] sm:$0xf]
        %v4009 = vld [vmem:[%s4001 + $0x1c] sm:$0xf]
        %v4018 = vunpack.c.l.b16 %v4002
        %v4019 = vunpack.c.l.b16 %v4003
        %v4020 = vunpack.c.l.b16 %v4004
        %v4021 = vunpack.c.l.b16 %v4005
        %v4022 = vunpack.c.l.b16 %v4006
        %v4023 = vunpack.c.l.b16 %v4007
        %v4024 = vunpack.c.l.b16 %v4008
        %v4025 = vunpack.c.l.b16 %v4009
        %v4026 = vpack.c.b16 %v4019, %v4018
        %v4027 = vpack.c.b16 %v4021, %v4020
        %v4028 = vpack.c.b16 %v4023, %v4022
        %v4029 = vpack.c.b16 %v4025, %v4024
        %v4035 = vsel %vm327, %v3997, 0
        %v4038 = vsel %vm327, %v3998, 0
        %v4041 = vsel %vm327, %v3999, 0
        %v4044 = vsel %vm327, %v4000, 0
        %4046 = vmatprep.subr.bf16.mxu0 0
        %4047 = vmatpush1.bf16.msra.mxu0 0
        %4048 = vmatprep.subr.bf16.mxu0 0
        %4049 = vmatpush1.bf16.msra.mxu0 0
        %4050 = vmatprep.subr.bf16.mxu0 0
        %4051 = vmatpush1.bf16.msra.mxu0 0
        %4052 = vmatprep.subr.bf16.mxu0 0
        %4053 = vmatpush1.bf16.msra.mxu0 0
        %4054 = vmatprep.subr.bf16.mxu0 0
        %4055 = vmatpush1.bf16.msra.mxu0 %v4029
        %4056 = vmatprep.subr.bf16.mxu0 0
        %4057 = vmatpush1.bf16.msra.mxu0 %v4028
        %4058 = vmatprep.subr.bf16.mxu0 0
        %4059 = vmatpush1.bf16.msra.mxu0 %v4027
        %4060 = vmatprep.subr.bf16.mxu0 0
        %4061 = vmatpush1.bf16.msra.mxu0 %v4026
        %4062 = vmatprep.subr.bf16.mxu0 0
        %4063 = vmatpush2.bf16.msra.mxu0 0
        %4064 = vmatprep.subr.bf16.mxu0 0
        %4065 = vmatpush2.bf16.msra.mxu0 0
        %4066 = vmatprep.subr.bf16.mxu0 0
        %4067 = vmatpush2.bf16.msra.mxu0 0
        %4068 = vmatprep.subr.bf16.mxu0 0
        %4069 = vmatpush2.bf16.msra.mxu0 0
        %4070 = vmatprep.subr.bf16.mxu0 0
        %4071 = vmatpush2.bf16.msra.mxu0 0
        %4072 = vmatprep.subr.bf16.mxu0 0
        %4073 = vmatpush2.bf16.msra.mxu0 0
        %4074 = vmatprep.subr.bf16.mxu0 0
        %4075 = vmatpush2.bf16.msra.mxu0 0
        %4076 = vmatprep.subr.bf16.mxu0 0
        %4077 = vmatpush2.bf16.msra.mxu0 0
        %4078 = vmatprep.mubr.bf16.mxu0 0
        %4079 = vmatmul.mubr.bf16.gmra.mxu0 %v4035
        %v4080 = vpop.f32.mrf.mxu0
        %v4081 = vadd.f32 0.0, %v4080
        %v4082 = vpop.f32.mrf.mxu0
        %v4083 = vpop.f32.mrf.mxu0
        %v4084 = vadd.f32 0.0, %v4083
        %v4085 = vpop.f32.mrf.mxu0
        %4086 = vmatprep.mubr.bf16.mxu0 0
        %4087 = vmatmul.mubr.bf16.gmra.mxu0 %v4038
        %v4088 = vpop.f32.mrf.mxu0
        %v4089 = vadd.f32 0.0, %v4088
        %v4090 = vpop.f32.mrf.mxu0
        %v4091 = vpop.f32.mrf.mxu0
        %v4092 = vadd.f32 0.0, %v4091
        %v4093 = vpop.f32.mrf.mxu0
        %4094 = vmatprep.mubr.bf16.mxu0 0
        %4095 = vmatmul.mubr.bf16.gmra.mxu0 %v4041
        %v4096 = vpop.f32.mrf.mxu0
        %v4097 = vadd.f32 0.0, %v4096
        %v4098 = vpop.f32.mrf.mxu0
        %v4099 = vpop.f32.mrf.mxu0
        %v4100 = vadd.f32 0.0, %v4099
        %v4101 = vpop.f32.mrf.mxu0
        %4102 = vmatprep.mubr.bf16.mxu0 0
        %4103 = vmatmul.mubr.bf16.gmra.mxu0 %v4044
        %v4104 = vpop.f32.mrf.mxu0
        %v4105 = vadd.f32 0.0, %v4104
        %v4106 = vpop.f32.mrf.mxu0
        %v4107 = vpop.f32.mrf.mxu0
        %v4108 = vadd.f32 0.0, %v4107
        %v4109 = vpop.f32.mrf.mxu0
        %4110 = vdwg.mxu0
        %v4119 = vunpack.c.l.b16 %v3924
        %v4120 = vunpack.c.l.b16 %v3925
        %v4121 = vunpack.c.l.b16 %v3926
        %v4122 = vunpack.c.l.b16 %v3927
        %v4123 = vunpack.c.l.b16 %v3928
        %v4124 = vunpack.c.l.b16 %v3929
        %v4125 = vunpack.c.l.b16 %v3930
        %v4126 = vunpack.c.l.b16 %v3931
        %v4127 = vpack.c.b16 %v4120, %v4119
        %v4128 = vpack.c.b16 %v4122, %v4121
        %v4129 = vpack.c.b16 %v4124, %v4123
        %v4130 = vpack.c.b16 %v4126, %v4125
        %v4136 = vsel %vm327, %v3919, 0
        %v4139 = vsel %vm327, %v3920, 0
        %v4142 = vsel %vm327, %v3921, 0
        %v4145 = vsel %vm327, %v3922, 0
        %4147 = vmatprep.subr.bf16.mxu0 0
        %4148 = vmatpush1.bf16.msra.mxu0 0
        %4149 = vmatprep.subr.bf16.mxu0 0
        %4150 = vmatpush1.bf16.msra.mxu0 0
        %4151 = vmatprep.subr.bf16.mxu0 0
        %4152 = vmatpush1.bf16.msra.mxu0 0
        %4153 = vmatprep.subr.bf16.mxu0 0
        %4154 = vmatpush1.bf16.msra.mxu0 0
        %4155 = vmatprep.subr.bf16.mxu0 0
        %4156 = vmatpush1.bf16.msra.mxu0 %v4130
        %4157 = vmatprep.subr.bf16.mxu0 0
        %4158 = vmatpush1.bf16.msra.mxu0 %v4129
        %4159 = vmatprep.subr.bf16.mxu0 0
        %4160 = vmatpush1.bf16.msra.mxu0 %v4128
        %4161 = vmatprep.subr.bf16.mxu0 0
        %4162 = vmatpush1.bf16.msra.mxu0 %v4127
        %4163 = vmatprep.subr.bf16.mxu0 0
        %4164 = vmatpush2.bf16.msra.mxu0 0
        %4165 = vmatprep.subr.bf16.mxu0 0
        %4166 = vmatpush2.bf16.msra.mxu0 0
        %4167 = vmatprep.subr.bf16.mxu0 0
        %4168 = vmatpush2.bf16.msra.mxu0 0
        %4169 = vmatprep.subr.bf16.mxu0 0
        %4170 = vmatpush2.bf16.msra.mxu0 0
        %4171 = vmatprep.subr.bf16.mxu0 0
        %4172 = vmatpush2.bf16.msra.mxu0 0
        %4173 = vmatprep.subr.bf16.mxu0 0
        %4174 = vmatpush2.bf16.msra.mxu0 0
        %4175 = vmatprep.subr.bf16.mxu0 0
        %4176 = vmatpush2.bf16.msra.mxu0 0
        %4177 = vmatprep.subr.bf16.mxu0 0
        %4178 = vmatpush2.bf16.msra.mxu0 0
        %4179 = vmatprep.mubr.bf16.mxu0 0
        %4180 = vmatmul.mubr.bf16.gmra.mxu0 %v4136
        %v4181 = vpop.f32.mrf.mxu0
        %v4182 = vadd.f32 %v4081, %v4181
        %v4183 = vpop.f32.mrf.mxu0
        %v4184 = vpop.f32.mrf.mxu0
        %v4185 = vadd.f32 %v4084, %v4184
        %v4186 = vpop.f32.mrf.mxu0
        %4187 = vmatprep.mubr.bf16.mxu0 0
        %4188 = vmatmul.mubr.bf16.gmra.mxu0 %v4139
        %v4189 = vpop.f32.mrf.mxu0
        %v4190 = vadd.f32 %v4089, %v4189
        %v4191 = vpop.f32.mrf.mxu0
        %v4192 = vpop.f32.mrf.mxu0
        %v4193 = vadd.f32 %v4092, %v4192
        %v4194 = vpop.f32.mrf.mxu0
        %4195 = vmatprep.mubr.bf16.mxu0 0
        %4196 = vmatmul.mubr.bf16.gmra.mxu0 %v4142
        %v4197 = vpop.f32.mrf.mxu0
        %v4198 = vadd.f32 %v4097, %v4197
        %v4199 = vpop.f32.mrf.mxu0
        %v4200 = vpop.f32.mrf.mxu0
        %v4201 = vadd.f32 %v4100, %v4200
        %v4202 = vpop.f32.mrf.mxu0
        %4203 = vmatprep.mubr.bf16.mxu0 0
        %4204 = vmatmul.mubr.bf16.gmra.mxu0 %v4145
        %v4205 = vpop.f32.mrf.mxu0
        %v4206 = vadd.f32 %v4105, %v4205
        %v4207 = vpop.f32.mrf.mxu0
        %v4208 = vpop.f32.mrf.mxu0
        %v4209 = vadd.f32 %v4108, %v4208
        %v4210 = vpop.f32.mrf.mxu0
        %4211 = vdwg.mxu0
        %4212 = vmatprep.subr.bf16.mxu0 0
        %4213 = vmatpush1.bf16.msra.mxu0 0
        %4214 = vmatprep.subr.bf16.mxu0 0
        %4215 = vmatpush1.bf16.msra.mxu0 0
        %4216 = vmatprep.subr.bf16.mxu0 0
        %4217 = vmatpush1.bf16.msra.mxu0 0
        %4218 = vmatprep.subr.bf16.mxu0 0
        %4219 = vmatpush1.bf16.msra.mxu0 0
        %4220 = vmatprep.subr.bf16.mxu0 0
        %4221 = vmatpush1.bf16.msra.mxu0 %v3853
        %4222 = vmatprep.subr.bf16.mxu0 0
        %4223 = vmatpush1.bf16.msra.mxu0 %v3852
        %4224 = vmatprep.subr.bf16.mxu0 0
        %4225 = vmatpush1.bf16.msra.mxu0 %v3851
        %4226 = vmatprep.subr.bf16.mxu0 0
        %4227 = vmatpush1.bf16.msra.mxu0 %v3850
        %4228 = vmatprep.subr.bf16.mxu0 0
        %4229 = vmatpush2.bf16.msra.mxu0 0
        %4230 = vmatprep.subr.bf16.mxu0 0
        %4231 = vmatpush2.bf16.msra.mxu0 0
        %4232 = vmatprep.subr.bf16.mxu0 0
        %4233 = vmatpush2.bf16.msra.mxu0 0
        %4234 = vmatprep.subr.bf16.mxu0 0
        %4235 = vmatpush2.bf16.msra.mxu0 0
        %4236 = vmatprep.subr.bf16.mxu0 0
        %4237 = vmatpush2.bf16.msra.mxu0 0
        %4238 = vmatprep.subr.bf16.mxu0 0
        %4239 = vmatpush2.bf16.msra.mxu0 0
        %4240 = vmatprep.subr.bf16.mxu0 0
        %4241 = vmatpush2.bf16.msra.mxu0 0
        %4242 = vmatprep.subr.bf16.mxu0 0
        %4243 = vmatpush2.bf16.msra.mxu0 0
        %4244 = vmatprep.mubr.bf16.mxu0 0
        %4245 = vmatmul.mubr.bf16.gmra.mxu0 %v768
        %v4246 = vpop.f32.mrf.mxu0
        %v4247 = vadd.f32 0.0, %v4246
        %v4248 = vpop.f32.mrf.mxu0
        %v4249 = vpop.f32.mrf.mxu0
        %v4250 = vadd.f32 0.0, %v4249
        %v4251 = vpop.f32.mrf.mxu0
        %4252 = vmatprep.mubr.bf16.mxu0 0
        %4253 = vmatmul.mubr.bf16.gmra.mxu0 %v771
        %v4254 = vpop.f32.mrf.mxu0
        %v4255 = vadd.f32 0.0, %v4254
        %v4256 = vpop.f32.mrf.mxu0
        %v4257 = vpop.f32.mrf.mxu0
        %v4258 = vadd.f32 0.0, %v4257
        %v4259 = vpop.f32.mrf.mxu0
        %4260 = vmatprep.mubr.bf16.mxu0 0
        %4261 = vmatmul.mubr.bf16.gmra.mxu0 %v774
        %v4262 = vpop.f32.mrf.mxu0
        %v4263 = vadd.f32 0.0, %v4262
        %v4264 = vpop.f32.mrf.mxu0
        %v4265 = vpop.f32.mrf.mxu0
        %v4266 = vadd.f32 0.0, %v4265
        %v4267 = vpop.f32.mrf.mxu0
        %4268 = vmatprep.mubr.bf16.mxu0 0
        %4269 = vmatmul.mubr.bf16.gmra.mxu0 %v777
        %v4270 = vpop.f32.mrf.mxu0
        %v4271 = vadd.f32 0.0, %v4270
        %v4272 = vpop.f32.mrf.mxu0
        %v4273 = vpop.f32.mrf.mxu0
        %v4274 = vadd.f32 0.0, %v4273
        %v4275 = vpop.f32.mrf.mxu0
        %4276 = vdwg.mxu0
        %v4277 = vpack.c.bf16 %v4250, %v4247
        %v4278 = vpack.c.bf16 %v4258, %v4255
        %v4279 = vpack.c.bf16 %v4266, %v4263
        %v4280 = vpack.c.bf16 %v4274, %v4271
        %s4281 = scalar_lea.vmem [#allocation7], 640
        %v4282 = vld [vmem:[%s4281] sm:$0xf]
        %v4283 = vld [vmem:[%s4281 + $0x4] sm:$0xf]
        %v4284 = vld [vmem:[%s4281 + $0x8] sm:$0xf]
        %v4285 = vld [vmem:[%s4281 + $0xc] sm:$0xf]
        %v4286 = vld [vmem:[%s4281 + $0x10] sm:$0xf]
        %v4287 = vld [vmem:[%s4281 + $0x14] sm:$0xf]
        %v4288 = vld [vmem:[%s4281 + $0x18] sm:$0xf]
        %v4289 = vld [vmem:[%s4281 + $0x1c] sm:$0xf]
        %v4298 = vunpack.c.l.b16 %v4282
        %v4299 = vunpack.c.l.b16 %v4283
        %v4300 = vunpack.c.l.b16 %v4284
        %v4301 = vunpack.c.l.b16 %v4285
        %v4302 = vunpack.c.l.b16 %v4286
        %v4303 = vunpack.c.l.b16 %v4287
        %v4304 = vunpack.c.l.b16 %v4288
        %v4305 = vunpack.c.l.b16 %v4289
        %v4306 = vpack.c.b16 %v4299, %v4298
        %v4307 = vpack.c.b16 %v4301, %v4300
        %v4308 = vpack.c.b16 %v4303, %v4302
        %v4309 = vpack.c.b16 %v4305, %v4304
        %v4315 = vsel %vm327, %v4277, 0
        %v4318 = vsel %vm327, %v4278, 0
        %v4321 = vsel %vm327, %v4279, 0
        %v4324 = vsel %vm327, %v4280, 0
        %4326 = vmatprep.subr.bf16.mxu0 0
        %4327 = vmatpush1.bf16.msra.mxu0 0
        %4328 = vmatprep.subr.bf16.mxu0 0
        %4329 = vmatpush1.bf16.msra.mxu0 0
        %4330 = vmatprep.subr.bf16.mxu0 0
        %4331 = vmatpush1.bf16.msra.mxu0 0
        %4332 = vmatprep.subr.bf16.mxu0 0
        %4333 = vmatpush1.bf16.msra.mxu0 0
        %4334 = vmatprep.subr.bf16.mxu0 0
        %4335 = vmatpush1.bf16.msra.mxu0 %v4309
        %4336 = vmatprep.subr.bf16.mxu0 0
        %4337 = vmatpush1.bf16.msra.mxu0 %v4308
        %4338 = vmatprep.subr.bf16.mxu0 0
        %4339 = vmatpush1.bf16.msra.mxu0 %v4307
        %4340 = vmatprep.subr.bf16.mxu0 0
        %4341 = vmatpush1.bf16.msra.mxu0 %v4306
        %4342 = vmatprep.subr.bf16.mxu0 0
        %4343 = vmatpush2.bf16.msra.mxu0 0
        %4344 = vmatprep.subr.bf16.mxu0 0
        %4345 = vmatpush2.bf16.msra.mxu0 0
        %4346 = vmatprep.subr.bf16.mxu0 0
        %4347 = vmatpush2.bf16.msra.mxu0 0
        %4348 = vmatprep.subr.bf16.mxu0 0
        %4349 = vmatpush2.bf16.msra.mxu0 0
        %4350 = vmatprep.subr.bf16.mxu0 0
        %4351 = vmatpush2.bf16.msra.mxu0 0
        %4352 = vmatprep.subr.bf16.mxu0 0
        %4353 = vmatpush2.bf16.msra.mxu0 0
        %4354 = vmatprep.subr.bf16.mxu0 0
        %4355 = vmatpush2.bf16.msra.mxu0 0
        %4356 = vmatprep.subr.bf16.mxu0 0
        %4357 = vmatpush2.bf16.msra.mxu0 0
        %4358 = vmatprep.mubr.bf16.mxu0 0
        %4359 = vmatmul.mubr.bf16.gmra.mxu0 %v4315
        %v4360 = vpop.f32.mrf.mxu0
        %v4361 = vadd.f32 0.0, %v4360
        %v4362 = vpop.f32.mrf.mxu0
        %v4363 = vpop.f32.mrf.mxu0
        %v4364 = vadd.f32 0.0, %v4363
        %v4365 = vpop.f32.mrf.mxu0
        %4366 = vmatprep.mubr.bf16.mxu0 0
        %4367 = vmatmul.mubr.bf16.gmra.mxu0 %v4318
        %v4368 = vpop.f32.mrf.mxu0
        %v4369 = vadd.f32 0.0, %v4368
        %v4370 = vpop.f32.mrf.mxu0
        %v4371 = vpop.f32.mrf.mxu0
        %v4372 = vadd.f32 0.0, %v4371
        %v4373 = vpop.f32.mrf.mxu0
        %4374 = vmatprep.mubr.bf16.mxu0 0
        %4375 = vmatmul.mubr.bf16.gmra.mxu0 %v4321
        %v4376 = vpop.f32.mrf.mxu0
        %v4377 = vadd.f32 0.0, %v4376
        %v4378 = vpop.f32.mrf.mxu0
        %v4379 = vpop.f32.mrf.mxu0
        %v4380 = vadd.f32 0.0, %v4379
        %v4381 = vpop.f32.mrf.mxu0
        %4382 = vmatprep.mubr.bf16.mxu0 0
        %4383 = vmatmul.mubr.bf16.gmra.mxu0 %v4324
        %v4384 = vpop.f32.mrf.mxu0
        %v4385 = vadd.f32 0.0, %v4384
        %v4386 = vpop.f32.mrf.mxu0
        %v4387 = vpop.f32.mrf.mxu0
        %v4388 = vadd.f32 0.0, %v4387
        %v4389 = vpop.f32.mrf.mxu0
        %4390 = vdwg.mxu0
        %v4391 = vadd.f32 %v4182, %v4361
        %v4392 = vadd.f32 %v4185, %v4364
        %v4393 = vadd.f32 %v4190, %v4369
        %v4394 = vadd.f32 %v4193, %v4372
        %v4395 = vadd.f32 %v4198, %v4377
        %v4396 = vadd.f32 %v4201, %v4380
        %v4397 = vadd.f32 %v4206, %v4385
        %v4398 = vadd.f32 %v4209, %v4388
        %4399 = vmatprep.subr.bf16.mxu0 0
        %4400 = vmatpush1.bf16.msra.mxu0 0
        %4401 = vmatprep.subr.bf16.mxu0 0
        %4402 = vmatpush1.bf16.msra.mxu0 0
        %4403 = vmatprep.subr.bf16.mxu0 0
        %4404 = vmatpush1.bf16.msra.mxu0 0
        %4405 = vmatprep.subr.bf16.mxu0 0
        %4406 = vmatpush1.bf16.msra.mxu0 0
        %4407 = vmatprep.subr.bf16.mxu0 0
        %4408 = vmatpush1.bf16.msra.mxu0 %v3853
        %4409 = vmatprep.subr.bf16.mxu0 0
        %4410 = vmatpush1.bf16.msra.mxu0 %v3852
        %4411 = vmatprep.subr.bf16.mxu0 0
        %4412 = vmatpush1.bf16.msra.mxu0 %v3851
        %4413 = vmatprep.subr.bf16.mxu0 0
        %4414 = vmatpush1.bf16.msra.mxu0 %v3850
        %4415 = vmatprep.subr.bf16.mxu0 0
        %4416 = vmatpush2.bf16.msra.mxu0 0
        %4417 = vmatprep.subr.bf16.mxu0 0
        %4418 = vmatpush2.bf16.msra.mxu0 0
        %4419 = vmatprep.subr.bf16.mxu0 0
        %4420 = vmatpush2.bf16.msra.mxu0 0
        %4421 = vmatprep.subr.bf16.mxu0 0
        %4422 = vmatpush2.bf16.msra.mxu0 0
        %4423 = vmatprep.subr.bf16.mxu0 0
        %4424 = vmatpush2.bf16.msra.mxu0 0
        %4425 = vmatprep.subr.bf16.mxu0 0
        %4426 = vmatpush2.bf16.msra.mxu0 0
        %4427 = vmatprep.subr.bf16.mxu0 0
        %4428 = vmatpush2.bf16.msra.mxu0 0
        %4429 = vmatprep.subr.bf16.mxu0 0
        %4430 = vmatpush2.bf16.msra.mxu0 0
        %4431 = vmatprep.mubr.bf16.mxu0 0
        %4432 = vmatmul.mubr.bf16.gmra.mxu0 %v996
        %v4433 = vpop.f32.mrf.mxu0
        %v4434 = vadd.f32 0.0, %v4433
        %v4435 = vpop.f32.mrf.mxu0
        %v4436 = vpop.f32.mrf.mxu0
        %v4437 = vadd.f32 0.0, %v4436
        %v4438 = vpop.f32.mrf.mxu0
        %4439 = vmatprep.mubr.bf16.mxu0 0
        %4440 = vmatmul.mubr.bf16.gmra.mxu0 %v999
        %v4441 = vpop.f32.mrf.mxu0
        %v4442 = vadd.f32 0.0, %v4441
        %v4443 = vpop.f32.mrf.mxu0
        %v4444 = vpop.f32.mrf.mxu0
        %v4445 = vadd.f32 0.0, %v4444
        %v4446 = vpop.f32.mrf.mxu0
        %4447 = vmatprep.mubr.bf16.mxu0 0
        %4448 = vmatmul.mubr.bf16.gmra.mxu0 %v1002
        %v4449 = vpop.f32.mrf.mxu0
        %v4450 = vadd.f32 0.0, %v4449
        %v4451 = vpop.f32.mrf.mxu0
        %v4452 = vpop.f32.mrf.mxu0
        %v4453 = vadd.f32 0.0, %v4452
        %v4454 = vpop.f32.mrf.mxu0
        %4455 = vmatprep.mubr.bf16.mxu0 0
        %4456 = vmatmul.mubr.bf16.gmra.mxu0 %v1005
        %v4457 = vpop.f32.mrf.mxu0
        %v4458 = vadd.f32 0.0, %v4457
        %v4459 = vpop.f32.mrf.mxu0
        %v4460 = vpop.f32.mrf.mxu0
        %v4461 = vadd.f32 0.0, %v4460
        %v4462 = vpop.f32.mrf.mxu0
        %4463 = vdwg.mxu0
        %v4464 = vpack.c.bf16 %v4437, %v4434
        %v4465 = vpack.c.bf16 %v4445, %v4442
        %v4466 = vpack.c.bf16 %v4453, %v4450
        %v4467 = vpack.c.bf16 %v4461, %v4458
        %s4468 = scalar_lea.vmem [#allocation7], 672
        %v4469 = vld [vmem:[%s4468] sm:$0xf]
        %v4470 = vld [vmem:[%s4468 + $0x4] sm:$0xf]
        %v4471 = vld [vmem:[%s4468 + $0x8] sm:$0xf]
        %v4472 = vld [vmem:[%s4468 + $0xc] sm:$0xf]
        %v4473 = vld [vmem:[%s4468 + $0x10] sm:$0xf]
        %v4474 = vld [vmem:[%s4468 + $0x14] sm:$0xf]
        %v4475 = vld [vmem:[%s4468 + $0x18] sm:$0xf]
        %v4476 = vld [vmem:[%s4468 + $0x1c] sm:$0xf]
        %v4485 = vunpack.c.l.b16 %v4469
        %v4486 = vunpack.c.l.b16 %v4470
        %v4487 = vunpack.c.l.b16 %v4471
        %v4488 = vunpack.c.l.b16 %v4472
        %v4489 = vunpack.c.l.b16 %v4473
        %v4490 = vunpack.c.l.b16 %v4474
        %v4491 = vunpack.c.l.b16 %v4475
        %v4492 = vunpack.c.l.b16 %v4476
        %v4493 = vpack.c.b16 %v4486, %v4485
        %v4494 = vpack.c.b16 %v4488, %v4487
        %v4495 = vpack.c.b16 %v4490, %v4489
        %v4496 = vpack.c.b16 %v4492, %v4491
        %v4502 = vsel %vm327, %v4464, 0
        %v4505 = vsel %vm327, %v4465, 0
        %v4508 = vsel %vm327, %v4466, 0
        %v4511 = vsel %vm327, %v4467, 0
        %4513 = vmatprep.subr.bf16.mxu0 0
        %4514 = vmatpush1.bf16.msra.mxu0 0
        %4515 = vmatprep.subr.bf16.mxu0 0
        %4516 = vmatpush1.bf16.msra.mxu0 0
        %4517 = vmatprep.subr.bf16.mxu0 0
        %4518 = vmatpush1.bf16.msra.mxu0 0
        %4519 = vmatprep.subr.bf16.mxu0 0
        %4520 = vmatpush1.bf16.msra.mxu0 0
        %4521 = vmatprep.subr.bf16.mxu0 0
        %4522 = vmatpush1.bf16.msra.mxu0 %v4496
        %4523 = vmatprep.subr.bf16.mxu0 0
        %4524 = vmatpush1.bf16.msra.mxu0 %v4495
        %4525 = vmatprep.subr.bf16.mxu0 0
        %4526 = vmatpush1.bf16.msra.mxu0 %v4494
        %4527 = vmatprep.subr.bf16.mxu0 0
        %4528 = vmatpush1.bf16.msra.mxu0 %v4493
        %4529 = vmatprep.subr.bf16.mxu0 0
        %4530 = vmatpush2.bf16.msra.mxu0 0
        %4531 = vmatprep.subr.bf16.mxu0 0
        %4532 = vmatpush2.bf16.msra.mxu0 0
        %4533 = vmatprep.subr.bf16.mxu0 0
        %4534 = vmatpush2.bf16.msra.mxu0 0
        %4535 = vmatprep.subr.bf16.mxu0 0
        %4536 = vmatpush2.bf16.msra.mxu0 0
        %4537 = vmatprep.subr.bf16.mxu0 0
        %4538 = vmatpush2.bf16.msra.mxu0 0
        %4539 = vmatprep.subr.bf16.mxu0 0
        %4540 = vmatpush2.bf16.msra.mxu0 0
        %4541 = vmatprep.subr.bf16.mxu0 0
        %4542 = vmatpush2.bf16.msra.mxu0 0
        %4543 = vmatprep.subr.bf16.mxu0 0
        %4544 = vmatpush2.bf16.msra.mxu0 0
        %4545 = vmatprep.mubr.bf16.mxu0 0
        %4546 = vmatmul.mubr.bf16.gmra.mxu0 %v4502
        %v4547 = vpop.f32.mrf.mxu0
        %v4548 = vadd.f32 0.0, %v4547
        %v4549 = vpop.f32.mrf.mxu0
        %v4550 = vpop.f32.mrf.mxu0
        %v4551 = vadd.f32 0.0, %v4550
        %v4552 = vpop.f32.mrf.mxu0
        %4553 = vmatprep.mubr.bf16.mxu0 0
        %4554 = vmatmul.mubr.bf16.gmra.mxu0 %v4505
        %v4555 = vpop.f32.mrf.mxu0
        %v4556 = vadd.f32 0.0, %v4555
        %v4557 = vpop.f32.mrf.mxu0
        %v4558 = vpop.f32.mrf.mxu0
        %v4559 = vadd.f32 0.0, %v4558
        %v4560 = vpop.f32.mrf.mxu0
        %4561 = vmatprep.mubr.bf16.mxu0 0
        %4562 = vmatmul.mubr.bf16.gmra.mxu0 %v4508
        %v4563 = vpop.f32.mrf.mxu0
        %v4564 = vadd.f32 0.0, %v4563
        %v4565 = vpop.f32.mrf.mxu0
        %v4566 = vpop.f32.mrf.mxu0
        %v4567 = vadd.f32 0.0, %v4566
        %v4568 = vpop.f32.mrf.mxu0
        %4569 = vmatprep.mubr.bf16.mxu0 0
        %4570 = vmatmul.mubr.bf16.gmra.mxu0 %v4511
        %v4571 = vpop.f32.mrf.mxu0
        %v4572 = vadd.f32 0.0, %v4571
        %v4573 = vpop.f32.mrf.mxu0
        %v4574 = vpop.f32.mrf.mxu0
        %v4575 = vadd.f32 0.0, %v4574
        %v4576 = vpop.f32.mrf.mxu0
        %4577 = vdwg.mxu0
        %v4578 = vadd.f32 %v4391, %v4548
        %v4579 = vadd.f32 %v4392, %v4551
        %v4580 = vadd.f32 %v4393, %v4556
        %v4581 = vadd.f32 %v4394, %v4559
        %v4582 = vadd.f32 %v4395, %v4564
        %v4583 = vadd.f32 %v4396, %v4567
        %v4584 = vadd.f32 %v4397, %v4572
        %v4585 = vadd.f32 %v4398, %v4575
        %s4586 = scalar_lea.vmem [#allocation7], 704
        %v4587 = vld [vmem:[%s4586] sm:$0xf]
        %v4588 = vld [vmem:[%s4586 + $0x4] sm:$0xf]
        %v4589 = vld [vmem:[%s4586 + $0x8] sm:$0xf]
        %v4590 = vld [vmem:[%s4586 + $0xc] sm:$0xf]
        %v4591 = vld [vmem:[%s4586 + $0x10] sm:$0xf]
        %v4592 = vld [vmem:[%s4586 + $0x14] sm:$0xf]
        %v4593 = vld [vmem:[%s4586 + $0x18] sm:$0xf]
        %v4594 = vld [vmem:[%s4586 + $0x1c] sm:$0xf]
        %v4603 = vunpack.c.l.b16 %v4587
        %v4604 = vunpack.c.l.b16 %v4588
        %v4605 = vunpack.c.l.b16 %v4589
        %v4606 = vunpack.c.l.b16 %v4590
        %v4607 = vunpack.c.l.b16 %v4591
        %v4608 = vunpack.c.l.b16 %v4592
        %v4609 = vunpack.c.l.b16 %v4593
        %v4610 = vunpack.c.l.b16 %v4594
        %v4611 = vpack.c.b16 %v4604, %v4603
        %v4612 = vpack.c.b16 %v4606, %v4605
        %v4613 = vpack.c.b16 %v4608, %v4607
        %v4614 = vpack.c.b16 %v4610, %v4609
        %v4620 = vsel %vm327, %v3850, 0
        %v4623 = vsel %vm327, %v3851, 0
        %v4626 = vsel %vm327, %v3852, 0
        %v4629 = vsel %vm327, %v3853, 0
        %4631 = vmatprep.subr.bf16.mxu0 0
        %4632 = vmatpush1.bf16.msra.mxu0 0
        %4633 = vmatprep.subr.bf16.mxu0 0
        %4634 = vmatpush1.bf16.msra.mxu0 0
        %4635 = vmatprep.subr.bf16.mxu0 0
        %4636 = vmatpush1.bf16.msra.mxu0 0
        %4637 = vmatprep.subr.bf16.mxu0 0
        %4638 = vmatpush1.bf16.msra.mxu0 0
        %4639 = vmatprep.subr.bf16.mxu0 0
        %4640 = vmatpush1.bf16.msra.mxu0 %v4614
        %4641 = vmatprep.subr.bf16.mxu0 0
        %4642 = vmatpush1.bf16.msra.mxu0 %v4613
        %4643 = vmatprep.subr.bf16.mxu0 0
        %4644 = vmatpush1.bf16.msra.mxu0 %v4612
        %4645 = vmatprep.subr.bf16.mxu0 0
        %4646 = vmatpush1.bf16.msra.mxu0 %v4611
        %4647 = vmatprep.subr.bf16.mxu0 0
        %4648 = vmatpush2.bf16.msra.mxu0 0
        %4649 = vmatprep.subr.bf16.mxu0 0
        %4650 = vmatpush2.bf16.msra.mxu0 0
        %4651 = vmatprep.subr.bf16.mxu0 0
        %4652 = vmatpush2.bf16.msra.mxu0 0
        %4653 = vmatprep.subr.bf16.mxu0 0
        %4654 = vmatpush2.bf16.msra.mxu0 0
        %4655 = vmatprep.subr.bf16.mxu0 0
        %4656 = vmatpush2.bf16.msra.mxu0 0
        %4657 = vmatprep.subr.bf16.mxu0 0
        %4658 = vmatpush2.bf16.msra.mxu0 0
        %4659 = vmatprep.subr.bf16.mxu0 0
        %4660 = vmatpush2.bf16.msra.mxu0 0
        %4661 = vmatprep.subr.bf16.mxu0 0
        %4662 = vmatpush2.bf16.msra.mxu0 0
        %4663 = vmatprep.mubr.bf16.mxu0 0
        %4664 = vmatmul.mubr.bf16.gmra.mxu0 %v4620
        %v4665 = vpop.f32.mrf.mxu0
        %v4666 = vadd.f32 0.0, %v4665
        %v4667 = vpop.f32.mrf.mxu0
        %v4668 = vpop.f32.mrf.mxu0
        %v4669 = vadd.f32 0.0, %v4668
        %v4670 = vpop.f32.mrf.mxu0
        %4671 = vmatprep.mubr.bf16.mxu0 0
        %4672 = vmatmul.mubr.bf16.gmra.mxu0 %v4623
        %v4673 = vpop.f32.mrf.mxu0
        %v4674 = vadd.f32 0.0, %v4673
        %v4675 = vpop.f32.mrf.mxu0
        %v4676 = vpop.f32.mrf.mxu0
        %v4677 = vadd.f32 0.0, %v4676
        %v4678 = vpop.f32.mrf.mxu0
        %4679 = vmatprep.mubr.bf16.mxu0 0
        %4680 = vmatmul.mubr.bf16.gmra.mxu0 %v4626
        %v4681 = vpop.f32.mrf.mxu0
        %v4682 = vadd.f32 0.0, %v4681
        %v4683 = vpop.f32.mrf.mxu0
        %v4684 = vpop.f32.mrf.mxu0
        %v4685 = vadd.f32 0.0, %v4684
        %v4686 = vpop.f32.mrf.mxu0
        %4687 = vmatprep.mubr.bf16.mxu0 0
        %4688 = vmatmul.mubr.bf16.gmra.mxu0 %v4629
        %v4689 = vpop.f32.mrf.mxu0
        %v4690 = vadd.f32 0.0, %v4689
        %v4691 = vpop.f32.mrf.mxu0
        %v4692 = vpop.f32.mrf.mxu0
        %v4693 = vadd.f32 0.0, %v4692
        %v4694 = vpop.f32.mrf.mxu0
        %4695 = vdwg.mxu0
        %v4696 = vadd.f32 %v4578, %v4666
        %v4697 = vadd.f32 %v4579, %v4669
        %v4698 = vadd.f32 %v4580, %v4674
        %v4699 = vadd.f32 %v4581, %v4677
        %v4700 = vadd.f32 %v4582, %v4682
        %v4701 = vadd.f32 %v4583, %v4685
        %v4702 = vadd.f32 %v4584, %v4690
        %v4703 = vadd.f32 %v4585, %v4693
        %4704 = vmatprep.subr.bf16.mxu0 0
        %4705 = vmatpush1.bf16.msra.mxu0 0
        %4706 = vmatprep.subr.bf16.mxu0 0
        %4707 = vmatpush1.bf16.msra.mxu0 0
        %4708 = vmatprep.subr.bf16.mxu0 0
        %4709 = vmatpush1.bf16.msra.mxu0 0
        %4710 = vmatprep.subr.bf16.mxu0 0
        %4711 = vmatpush1.bf16.msra.mxu0 0
        %4712 = vmatprep.subr.bf16.mxu0 0
        %4713 = vmatpush1.bf16.msra.mxu0 %v3853
        %4714 = vmatprep.subr.bf16.mxu0 0
        %4715 = vmatpush1.bf16.msra.mxu0 %v3852
        %4716 = vmatprep.subr.bf16.mxu0 0
        %4717 = vmatpush1.bf16.msra.mxu0 %v3851
        %4718 = vmatprep.subr.bf16.mxu0 0
        %4719 = vmatpush1.bf16.msra.mxu0 %v3850
        %4720 = vmatprep.subr.bf16.mxu0 0
        %4721 = vmatpush2.bf16.msra.mxu0 0
        %4722 = vmatprep.subr.bf16.mxu0 0
        %4723 = vmatpush2.bf16.msra.mxu0 0
        %4724 = vmatprep.subr.bf16.mxu0 0
        %4725 = vmatpush2.bf16.msra.mxu0 0
        %4726 = vmatprep.subr.bf16.mxu0 0
        %4727 = vmatpush2.bf16.msra.mxu0 0
        %4728 = vmatprep.subr.bf16.mxu0 0
        %4729 = vmatpush2.bf16.msra.mxu0 0
        %4730 = vmatprep.subr.bf16.mxu0 0
        %4731 = vmatpush2.bf16.msra.mxu0 0
        %4732 = vmatprep.subr.bf16.mxu0 0
        %4733 = vmatpush2.bf16.msra.mxu0 0
        %4734 = vmatprep.subr.bf16.mxu0 0
        %4735 = vmatpush2.bf16.msra.mxu0 0
        %4736 = vmatprep.mubr.bf16.mxu0 0
        %4737 = vmatmul.mubr.bf16.gmra.mxu0 %v1342
        %v4738 = vpop.f32.mrf.mxu0
        %v4739 = vadd.f32 0.0, %v4738
        %v4740 = vpop.f32.mrf.mxu0
        %v4741 = vpop.f32.mrf.mxu0
        %v4742 = vadd.f32 0.0, %v4741
        %v4743 = vpop.f32.mrf.mxu0
        %4744 = vmatprep.mubr.bf16.mxu0 0
        %4745 = vmatmul.mubr.bf16.gmra.mxu0 %v1345
        %v4746 = vpop.f32.mrf.mxu0
        %v4747 = vadd.f32 0.0, %v4746
        %v4748 = vpop.f32.mrf.mxu0
        %v4749 = vpop.f32.mrf.mxu0
        %v4750 = vadd.f32 0.0, %v4749
        %v4751 = vpop.f32.mrf.mxu0
        %4752 = vmatprep.mubr.bf16.mxu0 0
        %4753 = vmatmul.mubr.bf16.gmra.mxu0 %v1348
        %v4754 = vpop.f32.mrf.mxu0
        %v4755 = vadd.f32 0.0, %v4754
        %v4756 = vpop.f32.mrf.mxu0
        %v4757 = vpop.f32.mrf.mxu0
        %v4758 = vadd.f32 0.0, %v4757
        %v4759 = vpop.f32.mrf.mxu0
        %4760 = vmatprep.mubr.bf16.mxu0 0
        %4761 = vmatmul.mubr.bf16.gmra.mxu0 %v1351
        %v4762 = vpop.f32.mrf.mxu0
        %v4763 = vadd.f32 0.0, %v4762
        %v4764 = vpop.f32.mrf.mxu0
        %v4765 = vpop.f32.mrf.mxu0
        %v4766 = vadd.f32 0.0, %v4765
        %v4767 = vpop.f32.mrf.mxu0
        %4768 = vdwg.mxu0
        %v4769 = vpack.c.bf16 %v4742, %v4739
        %v4770 = vpack.c.bf16 %v4750, %v4747
        %v4771 = vpack.c.bf16 %v4758, %v4755
        %v4772 = vpack.c.bf16 %v4766, %v4763
        %s4773 = scalar_lea.vmem [#allocation7], 736
        %v4774 = vld [vmem:[%s4773] sm:$0xf]
        %v4775 = vld [vmem:[%s4773 + $0x4] sm:$0xf]
        %v4776 = vld [vmem:[%s4773 + $0x8] sm:$0xf]
        %v4777 = vld [vmem:[%s4773 + $0xc] sm:$0xf]
        %v4778 = vld [vmem:[%s4773 + $0x10] sm:$0xf]
        %v4779 = vld [vmem:[%s4773 + $0x14] sm:$0xf]
        %v4780 = vld [vmem:[%s4773 + $0x18] sm:$0xf]
        %v4781 = vld [vmem:[%s4773 + $0x1c] sm:$0xf]
        %v4790 = vunpack.c.l.b16 %v4774
        %v4791 = vunpack.c.l.b16 %v4775
        %v4792 = vunpack.c.l.b16 %v4776
        %v4793 = vunpack.c.l.b16 %v4777
        %v4794 = vunpack.c.l.b16 %v4778
        %v4795 = vunpack.c.l.b16 %v4779
        %v4796 = vunpack.c.l.b16 %v4780
        %v4797 = vunpack.c.l.b16 %v4781
        %v4798 = vpack.c.b16 %v4791, %v4790
        %v4799 = vpack.c.b16 %v4793, %v4792
        %v4800 = vpack.c.b16 %v4795, %v4794
        %v4801 = vpack.c.b16 %v4797, %v4796
        %v4807 = vsel %vm327, %v4769, 0
        %v4810 = vsel %vm327, %v4770, 0
        %v4813 = vsel %vm327, %v4771, 0
        %v4816 = vsel %vm327, %v4772, 0
        %4818 = vmatprep.subr.bf16.mxu0 0
        %4819 = vmatpush1.bf16.msra.mxu0 0
        %4820 = vmatprep.subr.bf16.mxu0 0
        %4821 = vmatpush1.bf16.msra.mxu0 0
        %4822 = vmatprep.subr.bf16.mxu0 0
        %4823 = vmatpush1.bf16.msra.mxu0 0
        %4824 = vmatprep.subr.bf16.mxu0 0
        %4825 = vmatpush1.bf16.msra.mxu0 0
        %4826 = vmatprep.subr.bf16.mxu0 0
        %4827 = vmatpush1.bf16.msra.mxu0 %v4801
        %4828 = vmatprep.subr.bf16.mxu0 0
        %4829 = vmatpush1.bf16.msra.mxu0 %v4800
        %4830 = vmatprep.subr.bf16.mxu0 0
        %4831 = vmatpush1.bf16.msra.mxu0 %v4799
        %4832 = vmatprep.subr.bf16.mxu0 0
        %4833 = vmatpush1.bf16.msra.mxu0 %v4798
        %4834 = vmatprep.subr.bf16.mxu0 0
        %4835 = vmatpush2.bf16.msra.mxu0 0
        %4836 = vmatprep.subr.bf16.mxu0 0
        %4837 = vmatpush2.bf16.msra.mxu0 0
        %4838 = vmatprep.subr.bf16.mxu0 0
        %4839 = vmatpush2.bf16.msra.mxu0 0
        %4840 = vmatprep.subr.bf16.mxu0 0
        %4841 = vmatpush2.bf16.msra.mxu0 0
        %4842 = vmatprep.subr.bf16.mxu0 0
        %4843 = vmatpush2.bf16.msra.mxu0 0
        %4844 = vmatprep.subr.bf16.mxu0 0
        %4845 = vmatpush2.bf16.msra.mxu0 0
        %4846 = vmatprep.subr.bf16.mxu0 0
        %4847 = vmatpush2.bf16.msra.mxu0 0
        %4848 = vmatprep.subr.bf16.mxu0 0
        %4849 = vmatpush2.bf16.msra.mxu0 0
        %4850 = vmatprep.mubr.bf16.mxu0 0
        %4851 = vmatmul.mubr.bf16.gmra.mxu0 %v4807
        %v4852 = vpop.f32.mrf.mxu0
        %v4853 = vadd.f32 0.0, %v4852
        %v4854 = vpop.f32.mrf.mxu0
        %v4855 = vpop.f32.mrf.mxu0
        %v4856 = vadd.f32 0.0, %v4855
        %v4857 = vpop.f32.mrf.mxu0
        %4858 = vmatprep.mubr.bf16.mxu0 0
        %4859 = vmatmul.mubr.bf16.gmra.mxu0 %v4810
        %v4860 = vpop.f32.mrf.mxu0
        %v4861 = vadd.f32 0.0, %v4860
        %v4862 = vpop.f32.mrf.mxu0
        %v4863 = vpop.f32.mrf.mxu0
        %v4864 = vadd.f32 0.0, %v4863
        %v4865 = vpop.f32.mrf.mxu0
        %4866 = vmatprep.mubr.bf16.mxu0 0
        %4867 = vmatmul.mubr.bf16.gmra.mxu0 %v4813
        %v4868 = vpop.f32.mrf.mxu0
        %v4869 = vadd.f32 0.0, %v4868
        %v4870 = vpop.f32.mrf.mxu0
        %v4871 = vpop.f32.mrf.mxu0
        %v4872 = vadd.f32 0.0, %v4871
        %v4873 = vpop.f32.mrf.mxu0
        %4874 = vmatprep.mubr.bf16.mxu0 0
        %4875 = vmatmul.mubr.bf16.gmra.mxu0 %v4816
        %v4876 = vpop.f32.mrf.mxu0
        %v4877 = vadd.f32 0.0, %v4876
        %v4878 = vpop.f32.mrf.mxu0
        %v4879 = vpop.f32.mrf.mxu0
        %v4880 = vadd.f32 0.0, %v4879
        %v4881 = vpop.f32.mrf.mxu0
        %4882 = vdwg.mxu0
        %v4883 = vadd.f32 %v4696, %v4853
        %v4884 = vadd.f32 %v4697, %v4856
        %v4885 = vadd.f32 %v4698, %v4861
        %v4886 = vadd.f32 %v4699, %v4864
        %v4887 = vadd.f32 %v4700, %v4869
        %v4888 = vadd.f32 %v4701, %v4872
        %v4889 = vadd.f32 %v4702, %v4877
        %v4890 = vadd.f32 %v4703, %v4880
        %4891 = vmatprep.subr.bf16.mxu0 0
        %4892 = vmatpush1.bf16.msra.mxu0 0
        %4893 = vmatprep.subr.bf16.mxu0 0
        %4894 = vmatpush1.bf16.msra.mxu0 0
        %4895 = vmatprep.subr.bf16.mxu0 0
        %4896 = vmatpush1.bf16.msra.mxu0 0
        %4897 = vmatprep.subr.bf16.mxu0 0
        %4898 = vmatpush1.bf16.msra.mxu0 0
        %4899 = vmatprep.subr.bf16.mxu0 0
        %4900 = vmatpush1.bf16.msra.mxu0 %v3853
        %4901 = vmatprep.subr.bf16.mxu0 0
        %4902 = vmatpush1.bf16.msra.mxu0 %v3852
        %4903 = vmatprep.subr.bf16.mxu0 0
        %4904 = vmatpush1.bf16.msra.mxu0 %v3851
        %4905 = vmatprep.subr.bf16.mxu0 0
        %4906 = vmatpush1.bf16.msra.mxu0 %v3850
        %4907 = vmatprep.subr.bf16.mxu0 0
        %4908 = vmatpush2.bf16.msra.mxu0 0
        %4909 = vmatprep.subr.bf16.mxu0 0
        %4910 = vmatpush2.bf16.msra.mxu0 0
        %4911 = vmatprep.subr.bf16.mxu0 0
        %4912 = vmatpush2.bf16.msra.mxu0 0
        %4913 = vmatprep.subr.bf16.mxu0 0
        %4914 = vmatpush2.bf16.msra.mxu0 0
        %4915 = vmatprep.subr.bf16.mxu0 0
        %4916 = vmatpush2.bf16.msra.mxu0 0
        %4917 = vmatprep.subr.bf16.mxu0 0
        %4918 = vmatpush2.bf16.msra.mxu0 0
        %4919 = vmatprep.subr.bf16.mxu0 0
        %4920 = vmatpush2.bf16.msra.mxu0 0
        %4921 = vmatprep.subr.bf16.mxu0 0
        %4922 = vmatpush2.bf16.msra.mxu0 0
        %4923 = vmatprep.mubr.bf16.mxu0 0
        %4924 = vmatmul.mubr.bf16.gmra.mxu0 %v1570
        %v4925 = vpop.f32.mrf.mxu0
        %v4926 = vadd.f32 0.0, %v4925
        %v4927 = vpop.f32.mrf.mxu0
        %v4928 = vpop.f32.mrf.mxu0
        %v4929 = vadd.f32 0.0, %v4928
        %v4930 = vpop.f32.mrf.mxu0
        %4931 = vmatprep.mubr.bf16.mxu0 0
        %4932 = vmatmul.mubr.bf16.gmra.mxu0 %v1573
        %v4933 = vpop.f32.mrf.mxu0
        %v4934 = vadd.f32 0.0, %v4933
        %v4935 = vpop.f32.mrf.mxu0
        %v4936 = vpop.f32.mrf.mxu0
        %v4937 = vadd.f32 0.0, %v4936
        %v4938 = vpop.f32.mrf.mxu0
        %4939 = vmatprep.mubr.bf16.mxu0 0
        %4940 = vmatmul.mubr.bf16.gmra.mxu0 %v1576
        %v4941 = vpop.f32.mrf.mxu0
        %v4942 = vadd.f32 0.0, %v4941
        %v4943 = vpop.f32.mrf.mxu0
        %v4944 = vpop.f32.mrf.mxu0
        %v4945 = vadd.f32 0.0, %v4944
        %v4946 = vpop.f32.mrf.mxu0
        %4947 = vmatprep.mubr.bf16.mxu0 0
        %4948 = vmatmul.mubr.bf16.gmra.mxu0 %v1579
        %v4949 = vpop.f32.mrf.mxu0
        %v4950 = vadd.f32 0.0, %v4949
        %v4951 = vpop.f32.mrf.mxu0
        %v4952 = vpop.f32.mrf.mxu0
        %v4953 = vadd.f32 0.0, %v4952
        %v4954 = vpop.f32.mrf.mxu0
        %4955 = vdwg.mxu0
        %v4956 = vpack.c.bf16 %v4929, %v4926
        %v4957 = vpack.c.bf16 %v4937, %v4934
        %v4958 = vpack.c.bf16 %v4945, %v4942
        %v4959 = vpack.c.bf16 %v4953, %v4950
        %s4960 = scalar_lea.vmem [#allocation7], 768
        %v4961 = vld [vmem:[%s4960] sm:$0xf]
        %v4962 = vld [vmem:[%s4960 + $0x4] sm:$0xf]
        %v4963 = vld [vmem:[%s4960 + $0x8] sm:$0xf]
        %v4964 = vld [vmem:[%s4960 + $0xc] sm:$0xf]
        %v4965 = vld [vmem:[%s4960 + $0x10] sm:$0xf]
        %v4966 = vld [vmem:[%s4960 + $0x14] sm:$0xf]
        %v4967 = vld [vmem:[%s4960 + $0x18] sm:$0xf]
        %v4968 = vld [vmem:[%s4960 + $0x1c] sm:$0xf]
        %v4977 = vunpack.c.l.b16 %v4961
        %v4978 = vunpack.c.l.b16 %v4962
        %v4979 = vunpack.c.l.b16 %v4963
        %v4980 = vunpack.c.l.b16 %v4964
        %v4981 = vunpack.c.l.b16 %v4965
        %v4982 = vunpack.c.l.b16 %v4966
        %v4983 = vunpack.c.l.b16 %v4967
        %v4984 = vunpack.c.l.b16 %v4968
        %v4985 = vpack.c.b16 %v4978, %v4977
        %v4986 = vpack.c.b16 %v4980, %v4979
        %v4987 = vpack.c.b16 %v4982, %v4981
        %v4988 = vpack.c.b16 %v4984, %v4983
        %v4994 = vsel %vm327, %v4956, 0
        %v4997 = vsel %vm327, %v4957, 0
        %v5000 = vsel %vm327, %v4958, 0
        %v5003 = vsel %vm327, %v4959, 0
        %5005 = vmatprep.subr.bf16.mxu0 0
        %5006 = vmatpush1.bf16.msra.mxu0 0
        %5007 = vmatprep.subr.bf16.mxu0 0
        %5008 = vmatpush1.bf16.msra.mxu0 0
        %5009 = vmatprep.subr.bf16.mxu0 0
        %5010 = vmatpush1.bf16.msra.mxu0 0
        %5011 = vmatprep.subr.bf16.mxu0 0
        %5012 = vmatpush1.bf16.msra.mxu0 0
        %5013 = vmatprep.subr.bf16.mxu0 0
        %5014 = vmatpush1.bf16.msra.mxu0 %v4988
        %5015 = vmatprep.subr.bf16.mxu0 0
        %5016 = vmatpush1.bf16.msra.mxu0 %v4987
        %5017 = vmatprep.subr.bf16.mxu0 0
        %5018 = vmatpush1.bf16.msra.mxu0 %v4986
        %5019 = vmatprep.subr.bf16.mxu0 0
        %5020 = vmatpush1.bf16.msra.mxu0 %v4985
        %5021 = vmatprep.subr.bf16.mxu0 0
        %5022 = vmatpush2.bf16.msra.mxu0 0
        %5023 = vmatprep.subr.bf16.mxu0 0
        %5024 = vmatpush2.bf16.msra.mxu0 0
        %5025 = vmatprep.subr.bf16.mxu0 0
        %5026 = vmatpush2.bf16.msra.mxu0 0
        %5027 = vmatprep.subr.bf16.mxu0 0
        %5028 = vmatpush2.bf16.msra.mxu0 0
        %5029 = vmatprep.subr.bf16.mxu0 0
        %5030 = vmatpush2.bf16.msra.mxu0 0
        %5031 = vmatprep.subr.bf16.mxu0 0
        %5032 = vmatpush2.bf16.msra.mxu0 0
        %5033 = vmatprep.subr.bf16.mxu0 0
        %5034 = vmatpush2.bf16.msra.mxu0 0
        %5035 = vmatprep.subr.bf16.mxu0 0
        %5036 = vmatpush2.bf16.msra.mxu0 0
        %5037 = vmatprep.mubr.bf16.mxu0 0
        %5038 = vmatmul.mubr.bf16.gmra.mxu0 %v4994
        %v5039 = vpop.f32.mrf.mxu0
        %v5040 = vadd.f32 0.0, %v5039
        %v5041 = vpop.f32.mrf.mxu0
        %v5042 = vpop.f32.mrf.mxu0
        %v5043 = vadd.f32 0.0, %v5042
        %v5044 = vpop.f32.mrf.mxu0
        %5045 = vmatprep.mubr.bf16.mxu0 0
        %5046 = vmatmul.mubr.bf16.gmra.mxu0 %v4997
        %v5047 = vpop.f32.mrf.mxu0
        %v5048 = vadd.f32 0.0, %v5047
        %v5049 = vpop.f32.mrf.mxu0
        %v5050 = vpop.f32.mrf.mxu0
        %v5051 = vadd.f32 0.0, %v5050
        %v5052 = vpop.f32.mrf.mxu0
        %5053 = vmatprep.mubr.bf16.mxu0 0
        %5054 = vmatmul.mubr.bf16.gmra.mxu0 %v5000
        %v5055 = vpop.f32.mrf.mxu0
        %v5056 = vadd.f32 0.0, %v5055
        %v5057 = vpop.f32.mrf.mxu0
        %v5058 = vpop.f32.mrf.mxu0
        %v5059 = vadd.f32 0.0, %v5058
        %v5060 = vpop.f32.mrf.mxu0
        %5061 = vmatprep.mubr.bf16.mxu0 0
        %5062 = vmatmul.mubr.bf16.gmra.mxu0 %v5003
        %v5063 = vpop.f32.mrf.mxu0
        %v5064 = vadd.f32 0.0, %v5063
        %v5065 = vpop.f32.mrf.mxu0
        %v5066 = vpop.f32.mrf.mxu0
        %v5067 = vadd.f32 0.0, %v5066
        %v5068 = vpop.f32.mrf.mxu0
        %5069 = vdwg.mxu0
        %v5070 = vadd.f32 %v4883, %v5040
        %v5071 = vadd.f32 %v4884, %v5043
        %v5072 = vadd.f32 %v4885, %v5048
        %v5073 = vadd.f32 %v4886, %v5051
        %v5074 = vadd.f32 %v4887, %v5056
        %v5075 = vadd.f32 %v4888, %v5059
        %v5076 = vadd.f32 %v4889, %v5064
        %v5077 = vadd.f32 %v4890, %v5067
        %5078 = vmatprep.subr.bf16.mxu0 0
        %5079 = vmatpush1.bf16.msra.mxu0 0
        %5080 = vmatprep.subr.bf16.mxu0 0
        %5081 = vmatpush1.bf16.msra.mxu0 0
        %5082 = vmatprep.subr.bf16.mxu0 0
        %5083 = vmatpush1.bf16.msra.mxu0 0
        %5084 = vmatprep.subr.bf16.mxu0 0
        %5085 = vmatpush1.bf16.msra.mxu0 0
        %5086 = vmatprep.subr.bf16.mxu0 0
        %5087 = vmatpush1.bf16.msra.mxu0 %v3853
        %5088 = vmatprep.subr.bf16.mxu0 0
        %5089 = vmatpush1.bf16.msra.mxu0 %v3852
        %5090 = vmatprep.subr.bf16.mxu0 0
        %5091 = vmatpush1.bf16.msra.mxu0 %v3851
        %5092 = vmatprep.subr.bf16.mxu0 0
        %5093 = vmatpush1.bf16.msra.mxu0 %v3850
        %5094 = vmatprep.subr.bf16.mxu0 0
        %5095 = vmatpush2.bf16.msra.mxu0 0
        %5096 = vmatprep.subr.bf16.mxu0 0
        %5097 = vmatpush2.bf16.msra.mxu0 0
        %5098 = vmatprep.subr.bf16.mxu0 0
        %5099 = vmatpush2.bf16.msra.mxu0 0
        %5100 = vmatprep.subr.bf16.mxu0 0
        %5101 = vmatpush2.bf16.msra.mxu0 0
        %5102 = vmatprep.subr.bf16.mxu0 0
        %5103 = vmatpush2.bf16.msra.mxu0 0
        %5104 = vmatprep.subr.bf16.mxu0 0
        %5105 = vmatpush2.bf16.msra.mxu0 0
        %5106 = vmatprep.subr.bf16.mxu0 0
        %5107 = vmatpush2.bf16.msra.mxu0 0
        %5108 = vmatprep.subr.bf16.mxu0 0
        %5109 = vmatpush2.bf16.msra.mxu0 0
        %5110 = vmatprep.mubr.bf16.mxu0 0
        %5111 = vmatmul.mubr.bf16.gmra.mxu0 %v1798
        %v5112 = vpop.f32.mrf.mxu0
        %v5113 = vadd.f32 0.0, %v5112
        %v5114 = vpop.f32.mrf.mxu0
        %v5115 = vpop.f32.mrf.mxu0
        %v5116 = vadd.f32 0.0, %v5115
        %v5117 = vpop.f32.mrf.mxu0
        %5118 = vmatprep.mubr.bf16.mxu0 0
        %5119 = vmatmul.mubr.bf16.gmra.mxu0 %v1801
        %v5120 = vpop.f32.mrf.mxu0
        %v5121 = vadd.f32 0.0, %v5120
        %v5122 = vpop.f32.mrf.mxu0
        %v5123 = vpop.f32.mrf.mxu0
        %v5124 = vadd.f32 0.0, %v5123
        %v5125 = vpop.f32.mrf.mxu0
        %5126 = vmatprep.mubr.bf16.mxu0 0
        %5127 = vmatmul.mubr.bf16.gmra.mxu0 %v1804
        %v5128 = vpop.f32.mrf.mxu0
        %v5129 = vadd.f32 0.0, %v5128
        %v5130 = vpop.f32.mrf.mxu0
        %v5131 = vpop.f32.mrf.mxu0
        %v5132 = vadd.f32 0.0, %v5131
        %v5133 = vpop.f32.mrf.mxu0
        %5134 = vmatprep.mubr.bf16.mxu0 0
        %5135 = vmatmul.mubr.bf16.gmra.mxu0 %v1807
        %v5136 = vpop.f32.mrf.mxu0
        %v5137 = vadd.f32 0.0, %v5136
        %v5138 = vpop.f32.mrf.mxu0
        %v5139 = vpop.f32.mrf.mxu0
        %v5140 = vadd.f32 0.0, %v5139
        %v5141 = vpop.f32.mrf.mxu0
        %5142 = vdwg.mxu0
        %v5143 = vpack.c.bf16 %v5116, %v5113
        %v5144 = vpack.c.bf16 %v5124, %v5121
        %v5145 = vpack.c.bf16 %v5132, %v5129
        %v5146 = vpack.c.bf16 %v5140, %v5137
        %s5147 = scalar_lea.vmem [#allocation7], 800
        %v5148 = vld [vmem:[%s5147] sm:$0xf]
        %v5149 = vld [vmem:[%s5147 + $0x4] sm:$0xf]
        %v5150 = vld [vmem:[%s5147 + $0x8] sm:$0xf]
        %v5151 = vld [vmem:[%s5147 + $0xc] sm:$0xf]
        %v5152 = vld [vmem:[%s5147 + $0x10] sm:$0xf]
        %v5153 = vld [vmem:[%s5147 + $0x14] sm:$0xf]
        %v5154 = vld [vmem:[%s5147 + $0x18] sm:$0xf]
        %v5155 = vld [vmem:[%s5147 + $0x1c] sm:$0xf]
        %v5164 = vunpack.c.l.b16 %v5148
        %v5165 = vunpack.c.l.b16 %v5149
        %v5166 = vunpack.c.l.b16 %v5150
        %v5167 = vunpack.c.l.b16 %v5151
        %v5168 = vunpack.c.l.b16 %v5152
        %v5169 = vunpack.c.l.b16 %v5153
        %v5170 = vunpack.c.l.b16 %v5154
        %v5171 = vunpack.c.l.b16 %v5155
        %v5172 = vpack.c.b16 %v5165, %v5164
        %v5173 = vpack.c.b16 %v5167, %v5166
        %v5174 = vpack.c.b16 %v5169, %v5168
        %v5175 = vpack.c.b16 %v5171, %v5170
        %v5181 = vsel %vm327, %v5143, 0
        %v5184 = vsel %vm327, %v5144, 0
        %v5187 = vsel %vm327, %v5145, 0
        %v5190 = vsel %vm327, %v5146, 0
        %5192 = vmatprep.subr.bf16.mxu0 0
        %5193 = vmatpush1.bf16.msra.mxu0 0
        %5194 = vmatprep.subr.bf16.mxu0 0
        %5195 = vmatpush1.bf16.msra.mxu0 0
        %5196 = vmatprep.subr.bf16.mxu0 0
        %5197 = vmatpush1.bf16.msra.mxu0 0
        %5198 = vmatprep.subr.bf16.mxu0 0
        %5199 = vmatpush1.bf16.msra.mxu0 0
        %5200 = vmatprep.subr.bf16.mxu0 0
        %5201 = vmatpush1.bf16.msra.mxu0 %v5175
        %5202 = vmatprep.subr.bf16.mxu0 0
        %5203 = vmatpush1.bf16.msra.mxu0 %v5174
        %5204 = vmatprep.subr.bf16.mxu0 0
        %5205 = vmatpush1.bf16.msra.mxu0 %v5173
        %5206 = vmatprep.subr.bf16.mxu0 0
        %5207 = vmatpush1.bf16.msra.mxu0 %v5172
        %5208 = vmatprep.subr.bf16.mxu0 0
        %5209 = vmatpush2.bf16.msra.mxu0 0
        %5210 = vmatprep.subr.bf16.mxu0 0
        %5211 = vmatpush2.bf16.msra.mxu0 0
        %5212 = vmatprep.subr.bf16.mxu0 0
        %5213 = vmatpush2.bf16.msra.mxu0 0
        %5214 = vmatprep.subr.bf16.mxu0 0
        %5215 = vmatpush2.bf16.msra.mxu0 0
        %5216 = vmatprep.subr.bf16.mxu0 0
        %5217 = vmatpush2.bf16.msra.mxu0 0
        %5218 = vmatprep.subr.bf16.mxu0 0
        %5219 = vmatpush2.bf16.msra.mxu0 0
        %5220 = vmatprep.subr.bf16.mxu0 0
        %5221 = vmatpush2.bf16.msra.mxu0 0
        %5222 = vmatprep.subr.bf16.mxu0 0
        %5223 = vmatpush2.bf16.msra.mxu0 0
        %5224 = vmatprep.mubr.bf16.mxu0 0
        %5225 = vmatmul.mubr.bf16.gmra.mxu0 %v5181
        %v5226 = vpop.f32.mrf.mxu0
        %v5227 = vadd.f32 0.0, %v5226
        %v5228 = vpop.f32.mrf.mxu0
        %v5229 = vpop.f32.mrf.mxu0
        %v5230 = vadd.f32 0.0, %v5229
        %v5231 = vpop.f32.mrf.mxu0
        %5232 = vmatprep.mubr.bf16.mxu0 0
        %5233 = vmatmul.mubr.bf16.gmra.mxu0 %v5184
        %v5234 = vpop.f32.mrf.mxu0
        %v5235 = vadd.f32 0.0, %v5234
        %v5236 = vpop.f32.mrf.mxu0
        %v5237 = vpop.f32.mrf.mxu0
        %v5238 = vadd.f32 0.0, %v5237
        %v5239 = vpop.f32.mrf.mxu0
        %5240 = vmatprep.mubr.bf16.mxu0 0
        %5241 = vmatmul.mubr.bf16.gmra.mxu0 %v5187
        %v5242 = vpop.f32.mrf.mxu0
        %v5243 = vadd.f32 0.0, %v5242
        %v5244 = vpop.f32.mrf.mxu0
        %v5245 = vpop.f32.mrf.mxu0
        %v5246 = vadd.f32 0.0, %v5245
        %v5247 = vpop.f32.mrf.mxu0
        %5248 = vmatprep.mubr.bf16.mxu0 0
        %5249 = vmatmul.mubr.bf16.gmra.mxu0 %v5190
        %v5250 = vpop.f32.mrf.mxu0
        %v5251 = vadd.f32 0.0, %v5250
        %v5252 = vpop.f32.mrf.mxu0
        %v5253 = vpop.f32.mrf.mxu0
        %v5254 = vadd.f32 0.0, %v5253
        %v5255 = vpop.f32.mrf.mxu0
        %5256 = vdwg.mxu0
        %v5257 = vadd.f32 %v5070, %v5227
        %v5258 = vadd.f32 %v5071, %v5230
        %v5259 = vadd.f32 %v5072, %v5235
        %v5260 = vadd.f32 %v5073, %v5238
        %v5261 = vadd.f32 %v5074, %v5243
        %v5262 = vadd.f32 %v5075, %v5246
        %v5263 = vadd.f32 %v5076, %v5251
        %v5264 = vadd.f32 %v5077, %v5254
        %5265 = vmatprep.subr.bf16.mxu0 0
        %5266 = vmatpush1.bf16.msra.mxu0 0
        %5267 = vmatprep.subr.bf16.mxu0 0
        %5268 = vmatpush1.bf16.msra.mxu0 0
        %5269 = vmatprep.subr.bf16.mxu0 0
        %5270 = vmatpush1.bf16.msra.mxu0 0
        %5271 = vmatprep.subr.bf16.mxu0 0
        %5272 = vmatpush1.bf16.msra.mxu0 0
        %5273 = vmatprep.subr.bf16.mxu0 0
        %5274 = vmatpush1.bf16.msra.mxu0 %v3853
        %5275 = vmatprep.subr.bf16.mxu0 0
        %5276 = vmatpush1.bf16.msra.mxu0 %v3852
        %5277 = vmatprep.subr.bf16.mxu0 0
        %5278 = vmatpush1.bf16.msra.mxu0 %v3851
        %5279 = vmatprep.subr.bf16.mxu0 0
        %5280 = vmatpush1.bf16.msra.mxu0 %v3850
        %5281 = vmatprep.subr.bf16.mxu0 0
        %5282 = vmatpush2.bf16.msra.mxu0 0
        %5283 = vmatprep.subr.bf16.mxu0 0
        %5284 = vmatpush2.bf16.msra.mxu0 0
        %5285 = vmatprep.subr.bf16.mxu0 0
        %5286 = vmatpush2.bf16.msra.mxu0 0
        %5287 = vmatprep.subr.bf16.mxu0 0
        %5288 = vmatpush2.bf16.msra.mxu0 0
        %5289 = vmatprep.subr.bf16.mxu0 0
        %5290 = vmatpush2.bf16.msra.mxu0 0
        %5291 = vmatprep.subr.bf16.mxu0 0
        %5292 = vmatpush2.bf16.msra.mxu0 0
        %5293 = vmatprep.subr.bf16.mxu0 0
        %5294 = vmatpush2.bf16.msra.mxu0 0
        %5295 = vmatprep.subr.bf16.mxu0 0
        %5296 = vmatpush2.bf16.msra.mxu0 0
        %5297 = vmatprep.mubr.bf16.mxu0 0
        %5298 = vmatmul.mubr.bf16.gmra.mxu0 %v2026
        %v5299 = vpop.f32.mrf.mxu0
        %v5300 = vadd.f32 0.0, %v5299
        %v5301 = vpop.f32.mrf.mxu0
        %v5302 = vpop.f32.mrf.mxu0
        %v5303 = vadd.f32 0.0, %v5302
        %v5304 = vpop.f32.mrf.mxu0
        %5305 = vmatprep.mubr.bf16.mxu0 0
        %5306 = vmatmul.mubr.bf16.gmra.mxu0 %v2029
        %v5307 = vpop.f32.mrf.mxu0
        %v5308 = vadd.f32 0.0, %v5307
        %v5309 = vpop.f32.mrf.mxu0
        %v5310 = vpop.f32.mrf.mxu0
        %v5311 = vadd.f32 0.0, %v5310
        %v5312 = vpop.f32.mrf.mxu0
        %5313 = vmatprep.mubr.bf16.mxu0 0
        %5314 = vmatmul.mubr.bf16.gmra.mxu0 %v2032
        %v5315 = vpop.f32.mrf.mxu0
        %v5316 = vadd.f32 0.0, %v5315
        %v5317 = vpop.f32.mrf.mxu0
        %v5318 = vpop.f32.mrf.mxu0
        %v5319 = vadd.f32 0.0, %v5318
        %v5320 = vpop.f32.mrf.mxu0
        %5321 = vmatprep.mubr.bf16.mxu0 0
        %5322 = vmatmul.mubr.bf16.gmra.mxu0 %v2035
        %v5323 = vpop.f32.mrf.mxu0
        %v5324 = vadd.f32 0.0, %v5323
        %v5325 = vpop.f32.mrf.mxu0
        %v5326 = vpop.f32.mrf.mxu0
        %v5327 = vadd.f32 0.0, %v5326
        %v5328 = vpop.f32.mrf.mxu0
        %5329 = vdwg.mxu0
        %v5330 = vpack.c.bf16 %v5303, %v5300
        %v5331 = vpack.c.bf16 %v5311, %v5308
        %v5332 = vpack.c.bf16 %v5319, %v5316
        %v5333 = vpack.c.bf16 %v5327, %v5324
        %s5334 = scalar_lea.vmem [#allocation7], 832
        %v5335 = vld [vmem:[%s5334] sm:$0xf]
        %v5336 = vld [vmem:[%s5334 + $0x4] sm:$0xf]
        %v5337 = vld [vmem:[%s5334 + $0x8] sm:$0xf]
        %v5338 = vld [vmem:[%s5334 + $0xc] sm:$0xf]
        %v5339 = vld [vmem:[%s5334 + $0x10] sm:$0xf]
        %v5340 = vld [vmem:[%s5334 + $0x14] sm:$0xf]
        %v5341 = vld [vmem:[%s5334 + $0x18] sm:$0xf]
        %v5342 = vld [vmem:[%s5334 + $0x1c] sm:$0xf]
        %v5351 = vunpack.c.l.b16 %v5335
        %v5352 = vunpack.c.l.b16 %v5336
        %v5353 = vunpack.c.l.b16 %v5337
        %v5354 = vunpack.c.l.b16 %v5338
        %v5355 = vunpack.c.l.b16 %v5339
        %v5356 = vunpack.c.l.b16 %v5340
        %v5357 = vunpack.c.l.b16 %v5341
        %v5358 = vunpack.c.l.b16 %v5342
        %v5359 = vpack.c.b16 %v5352, %v5351
        %v5360 = vpack.c.b16 %v5354, %v5353
        %v5361 = vpack.c.b16 %v5356, %v5355
        %v5362 = vpack.c.b16 %v5358, %v5357
        %v5368 = vsel %vm327, %v5330, 0
        %v5371 = vsel %vm327, %v5331, 0
        %v5374 = vsel %vm327, %v5332, 0
        %v5377 = vsel %vm327, %v5333, 0
        %5379 = vmatprep.subr.bf16.mxu0 0
        %5380 = vmatpush1.bf16.msra.mxu0 0
        %5381 = vmatprep.subr.bf16.mxu0 0
        %5382 = vmatpush1.bf16.msra.mxu0 0
        %5383 = vmatprep.subr.bf16.mxu0 0
        %5384 = vmatpush1.bf16.msra.mxu0 0
        %5385 = vmatprep.subr.bf16.mxu0 0
        %5386 = vmatpush1.bf16.msra.mxu0 0
        %5387 = vmatprep.subr.bf16.mxu0 0
        %5388 = vmatpush1.bf16.msra.mxu0 %v5362
        %5389 = vmatprep.subr.bf16.mxu0 0
        %5390 = vmatpush1.bf16.msra.mxu0 %v5361
        %5391 = vmatprep.subr.bf16.mxu0 0
        %5392 = vmatpush1.bf16.msra.mxu0 %v5360
        %5393 = vmatprep.subr.bf16.mxu0 0
        %5394 = vmatpush1.bf16.msra.mxu0 %v5359
        %5395 = vmatprep.subr.bf16.mxu0 0
        %5396 = vmatpush2.bf16.msra.mxu0 0
        %5397 = vmatprep.subr.bf16.mxu0 0
        %5398 = vmatpush2.bf16.msra.mxu0 0
        %5399 = vmatprep.subr.bf16.mxu0 0
        %5400 = vmatpush2.bf16.msra.mxu0 0
        %5401 = vmatprep.subr.bf16.mxu0 0
        %5402 = vmatpush2.bf16.msra.mxu0 0
        %5403 = vmatprep.subr.bf16.mxu0 0
        %5404 = vmatpush2.bf16.msra.mxu0 0
        %5405 = vmatprep.subr.bf16.mxu0 0
        %5406 = vmatpush2.bf16.msra.mxu0 0
        %5407 = vmatprep.subr.bf16.mxu0 0
        %5408 = vmatpush2.bf16.msra.mxu0 0
        %5409 = vmatprep.subr.bf16.mxu0 0
        %5410 = vmatpush2.bf16.msra.mxu0 0
        %5411 = vmatprep.mubr.bf16.mxu0 0
        %5412 = vmatmul.mubr.bf16.gmra.mxu0 %v5368
        %v5413 = vpop.f32.mrf.mxu0
        %v5414 = vadd.f32 0.0, %v5413
        %v5415 = vpop.f32.mrf.mxu0
        %v5416 = vpop.f32.mrf.mxu0
        %v5417 = vadd.f32 0.0, %v5416
        %v5418 = vpop.f32.mrf.mxu0
        %5419 = vmatprep.mubr.bf16.mxu0 0
        %5420 = vmatmul.mubr.bf16.gmra.mxu0 %v5371
        %v5421 = vpop.f32.mrf.mxu0
        %v5422 = vadd.f32 0.0, %v5421
        %v5423 = vpop.f32.mrf.mxu0
        %v5424 = vpop.f32.mrf.mxu0
        %v5425 = vadd.f32 0.0, %v5424
        %v5426 = vpop.f32.mrf.mxu0
        %5427 = vmatprep.mubr.bf16.mxu0 0
        %5428 = vmatmul.mubr.bf16.gmra.mxu0 %v5374
        %v5429 = vpop.f32.mrf.mxu0
        %v5430 = vadd.f32 0.0, %v5429
        %v5431 = vpop.f32.mrf.mxu0
        %v5432 = vpop.f32.mrf.mxu0
        %v5433 = vadd.f32 0.0, %v5432
        %v5434 = vpop.f32.mrf.mxu0
        %5435 = vmatprep.mubr.bf16.mxu0 0
        %5436 = vmatmul.mubr.bf16.gmra.mxu0 %v5377
        %v5437 = vpop.f32.mrf.mxu0
        %v5438 = vadd.f32 0.0, %v5437
        %v5439 = vpop.f32.mrf.mxu0
        %v5440 = vpop.f32.mrf.mxu0
        %v5441 = vadd.f32 0.0, %v5440
        %v5442 = vpop.f32.mrf.mxu0
        %5443 = vdwg.mxu0
        %v5444 = vadd.f32 %v5257, %v5414
        %v5445 = vadd.f32 %v5258, %v5417
        %v5446 = vadd.f32 %v5259, %v5422
        %v5447 = vadd.f32 %v5260, %v5425
        %v5448 = vadd.f32 %v5261, %v5430
        %v5449 = vadd.f32 %v5262, %v5433
        %v5450 = vadd.f32 %v5263, %v5438
        %v5451 = vadd.f32 %v5264, %v5441
        %v5452 = vmax.f32 %v5444, 0.0
        %v5453 = vmax.f32 %v5445, 0.0
        %v5454 = vmax.f32 %v5446, 0.0
        %v5455 = vmax.f32 %v5447, 0.0
        %v5456 = vmax.f32 %v5448, 0.0
        %v5457 = vmax.f32 %v5449, 0.0
        %v5458 = vmax.f32 %v5450, 0.0
        %v5459 = vmax.f32 %v5451, 0.0
        %v5460 = vpack.c.bf16 %v5453, %v5452
        %v5461 = vpack.c.bf16 %v5455, %v5454
        %v5462 = vpack.c.bf16 %v5457, %v5456
        %v5463 = vpack.c.bf16 %v5459, %v5458
        %5464 = vmatprep.subr.bf16.mxu0 0
        %5465 = vmatpush1.bf16.msra.mxu0 0
        %5466 = vmatprep.subr.bf16.mxu0 0
        %5467 = vmatpush1.bf16.msra.mxu0 0
        %5468 = vmatprep.subr.bf16.mxu0 0
        %5469 = vmatpush1.bf16.msra.mxu0 0
        %5470 = vmatprep.subr.bf16.mxu0 0
        %5471 = vmatpush1.bf16.msra.mxu0 0
        %5472 = vmatprep.subr.bf16.mxu0 0
        %5473 = vmatpush1.bf16.msra.mxu0 %v5463
        %5474 = vmatprep.subr.bf16.mxu0 0
        %5475 = vmatpush1.bf16.msra.mxu0 %v5462
        %5476 = vmatprep.subr.bf16.mxu0 0
        %5477 = vmatpush1.bf16.msra.mxu0 %v5461
        %5478 = vmatprep.subr.bf16.mxu0 0
        %5479 = vmatpush1.bf16.msra.mxu0 %v5460
        %5480 = vmatprep.subr.bf16.mxu0 0
        %5481 = vmatpush2.bf16.msra.mxu0 0
        %5482 = vmatprep.subr.bf16.mxu0 0
        %5483 = vmatpush2.bf16.msra.mxu0 0
        %5484 = vmatprep.subr.bf16.mxu0 0
        %5485 = vmatpush2.bf16.msra.mxu0 0
        %5486 = vmatprep.subr.bf16.mxu0 0
        %5487 = vmatpush2.bf16.msra.mxu0 0
        %5488 = vmatprep.subr.bf16.mxu0 0
        %5489 = vmatpush2.bf16.msra.mxu0 0
        %5490 = vmatprep.subr.bf16.mxu0 0
        %5491 = vmatpush2.bf16.msra.mxu0 0
        %5492 = vmatprep.subr.bf16.mxu0 0
        %5493 = vmatpush2.bf16.msra.mxu0 0
        %5494 = vmatprep.subr.bf16.mxu0 0
        %5495 = vmatpush2.bf16.msra.mxu0 0
        %5496 = vmatprep.mubr.bf16.mxu0 0
        %5497 = vmatmul.mubr.bf16.gmra.mxu0 %v329
        %v5498 = vpop.f32.mrf.mxu0
        %v5499 = vadd.f32 0.0, %v5498
        %v5500 = vpop.f32.mrf.mxu0
        %v5501 = vpop.f32.mrf.mxu0
        %v5502 = vadd.f32 0.0, %v5501
        %v5503 = vpop.f32.mrf.mxu0
        %5504 = vmatprep.mubr.bf16.mxu0 0
        %5505 = vmatmul.mubr.bf16.gmra.mxu0 %v332
        %v5506 = vpop.f32.mrf.mxu0
        %v5507 = vadd.f32 0.0, %v5506
        %v5508 = vpop.f32.mrf.mxu0
        %v5509 = vpop.f32.mrf.mxu0
        %v5510 = vadd.f32 0.0, %v5509
        %v5511 = vpop.f32.mrf.mxu0
        %5512 = vmatprep.mubr.bf16.mxu0 0
        %5513 = vmatmul.mubr.bf16.gmra.mxu0 %v335
        %v5514 = vpop.f32.mrf.mxu0
        %v5515 = vadd.f32 0.0, %v5514
        %v5516 = vpop.f32.mrf.mxu0
        %v5517 = vpop.f32.mrf.mxu0
        %v5518 = vadd.f32 0.0, %v5517
        %v5519 = vpop.f32.mrf.mxu0
        %5520 = vmatprep.mubr.bf16.mxu0 0
        %5521 = vmatmul.mubr.bf16.gmra.mxu0 %v338
        %v5522 = vpop.f32.mrf.mxu0
        %v5523 = vadd.f32 0.0, %v5522
        %v5524 = vpop.f32.mrf.mxu0
        %v5525 = vpop.f32.mrf.mxu0
        %v5526 = vadd.f32 0.0, %v5525
        %v5527 = vpop.f32.mrf.mxu0
        %5528 = vdwg.mxu0
        %v5529 = vpack.c.bf16 %v5502, %v5499
        %v5530 = vpack.c.bf16 %v5510, %v5507
        %v5531 = vpack.c.bf16 %v5518, %v5515
        %v5532 = vpack.c.bf16 %v5526, %v5523
        %s5533 = scalar_lea.vmem [#allocation7], 864
        %v5534 = vld [vmem:[%s5533] sm:$0xf]
        %v5535 = vld [vmem:[%s5533 + $0x4] sm:$0xf]
        %v5536 = vld [vmem:[%s5533 + $0x8] sm:$0xf]
        %v5537 = vld [vmem:[%s5533 + $0xc] sm:$0xf]
        %v5538 = vld [vmem:[%s5533 + $0x10] sm:$0xf]
        %v5539 = vld [vmem:[%s5533 + $0x14] sm:$0xf]
        %v5540 = vld [vmem:[%s5533 + $0x18] sm:$0xf]
        %v5541 = vld [vmem:[%s5533 + $0x1c] sm:$0xf]
        %5542 = vmatprep.subr.bf16.mxu0 0
        %5543 = vmatpush1.bf16.msra.mxu0 0
        %5544 = vmatprep.subr.bf16.mxu0 0
        %5545 = vmatpush1.bf16.msra.mxu0 0
        %5546 = vmatprep.subr.bf16.mxu0 0
        %5547 = vmatpush1.bf16.msra.mxu0 0
        %5548 = vmatprep.subr.bf16.mxu0 0
        %5549 = vmatpush1.bf16.msra.mxu0 0
        %5550 = vmatprep.subr.bf16.mxu0 0
        %5551 = vmatpush1.bf16.msra.mxu0 %v5463
        %5552 = vmatprep.subr.bf16.mxu0 0
        %5553 = vmatpush1.bf16.msra.mxu0 %v5462
        %5554 = vmatprep.subr.bf16.mxu0 0
        %5555 = vmatpush1.bf16.msra.mxu0 %v5461
        %5556 = vmatprep.subr.bf16.mxu0 0
        %5557 = vmatpush1.bf16.msra.mxu0 %v5460
        %5558 = vmatprep.subr.bf16.mxu0 0
        %5559 = vmatpush2.bf16.msra.mxu0 0
        %5560 = vmatprep.subr.bf16.mxu0 0
        %5561 = vmatpush2.bf16.msra.mxu0 0
        %5562 = vmatprep.subr.bf16.mxu0 0
        %5563 = vmatpush2.bf16.msra.mxu0 0
        %5564 = vmatprep.subr.bf16.mxu0 0
        %5565 = vmatpush2.bf16.msra.mxu0 0
        %5566 = vmatprep.subr.bf16.mxu0 0
        %5567 = vmatpush2.bf16.msra.mxu0 0
        %5568 = vmatprep.subr.bf16.mxu0 0
        %5569 = vmatpush2.bf16.msra.mxu0 0
        %5570 = vmatprep.subr.bf16.mxu0 0
        %5571 = vmatpush2.bf16.msra.mxu0 0
        %5572 = vmatprep.subr.bf16.mxu0 0
        %5573 = vmatpush2.bf16.msra.mxu0 0
        %5574 = vmatprep.mubr.bf16.mxu0 0
        %5575 = vmatmul.mubr.bf16.gmra.mxu0 %v447
        %v5576 = vpop.f32.mrf.mxu0
        %v5577 = vadd.f32 0.0, %v5576
        %v5578 = vpop.f32.mrf.mxu0
        %v5579 = vpop.f32.mrf.mxu0
        %v5580 = vadd.f32 0.0, %v5579
        %v5581 = vpop.f32.mrf.mxu0
        %5582 = vmatprep.mubr.bf16.mxu0 0
        %5583 = vmatmul.mubr.bf16.gmra.mxu0 %v450
        %v5584 = vpop.f32.mrf.mxu0
        %v5585 = vadd.f32 0.0, %v5584
        %v5586 = vpop.f32.mrf.mxu0
        %v5587 = vpop.f32.mrf.mxu0
        %v5588 = vadd.f32 0.0, %v5587
        %v5589 = vpop.f32.mrf.mxu0
        %5590 = vmatprep.mubr.bf16.mxu0 0
        %5591 = vmatmul.mubr.bf16.gmra.mxu0 %v453
        %v5592 = vpop.f32.mrf.mxu0
        %v5593 = vadd.f32 0.0, %v5592
        %v5594 = vpop.f32.mrf.mxu0
        %v5595 = vpop.f32.mrf.mxu0
        %v5596 = vadd.f32 0.0, %v5595
        %v5597 = vpop.f32.mrf.mxu0
        %5598 = vmatprep.mubr.bf16.mxu0 0
        %5599 = vmatmul.mubr.bf16.gmra.mxu0 %v456
        %v5600 = vpop.f32.mrf.mxu0
        %v5601 = vadd.f32 0.0, %v5600
        %v5602 = vpop.f32.mrf.mxu0
        %v5603 = vpop.f32.mrf.mxu0
        %v5604 = vadd.f32 0.0, %v5603
        %v5605 = vpop.f32.mrf.mxu0
        %5606 = vdwg.mxu0
        %v5607 = vpack.c.bf16 %v5580, %v5577
        %v5608 = vpack.c.bf16 %v5588, %v5585
        %v5609 = vpack.c.bf16 %v5596, %v5593
        %v5610 = vpack.c.bf16 %v5604, %v5601
        %s5611 = scalar_lea.vmem [#allocation7], 896
        %v5612 = vld [vmem:[%s5611] sm:$0xf]
        %v5613 = vld [vmem:[%s5611 + $0x4] sm:$0xf]
        %v5614 = vld [vmem:[%s5611 + $0x8] sm:$0xf]
        %v5615 = vld [vmem:[%s5611 + $0xc] sm:$0xf]
        %v5616 = vld [vmem:[%s5611 + $0x10] sm:$0xf]
        %v5617 = vld [vmem:[%s5611 + $0x14] sm:$0xf]
        %v5618 = vld [vmem:[%s5611 + $0x18] sm:$0xf]
        %v5619 = vld [vmem:[%s5611 + $0x1c] sm:$0xf]
        %v5628 = vunpack.c.l.b16 %v5612
        %v5629 = vunpack.c.l.b16 %v5613
        %v5630 = vunpack.c.l.b16 %v5614
        %v5631 = vunpack.c.l.b16 %v5615
        %v5632 = vunpack.c.l.b16 %v5616
        %v5633 = vunpack.c.l.b16 %v5617
        %v5634 = vunpack.c.l.b16 %v5618
        %v5635 = vunpack.c.l.b16 %v5619
        %v5636 = vpack.c.b16 %v5629, %v5628
        %v5637 = vpack.c.b16 %v5631, %v5630
        %v5638 = vpack.c.b16 %v5633, %v5632
        %v5639 = vpack.c.b16 %v5635, %v5634
        %v5645 = vsel %vm327, %v5607, 0
        %v5648 = vsel %vm327, %v5608, 0
        %v5651 = vsel %vm327, %v5609, 0
        %v5654 = vsel %vm327, %v5610, 0
        %5656 = vmatprep.subr.bf16.mxu0 0
        %5657 = vmatpush1.bf16.msra.mxu0 0
        %5658 = vmatprep.subr.bf16.mxu0 0
        %5659 = vmatpush1.bf16.msra.mxu0 0
        %5660 = vmatprep.subr.bf16.mxu0 0
        %5661 = vmatpush1.bf16.msra.mxu0 0
        %5662 = vmatprep.subr.bf16.mxu0 0
        %5663 = vmatpush1.bf16.msra.mxu0 0
        %5664 = vmatprep.subr.bf16.mxu0 0
        %5665 = vmatpush1.bf16.msra.mxu0 %v5639
        %5666 = vmatprep.subr.bf16.mxu0 0
        %5667 = vmatpush1.bf16.msra.mxu0 %v5638
        %5668 = vmatprep.subr.bf16.mxu0 0
        %5669 = vmatpush1.bf16.msra.mxu0 %v5637
        %5670 = vmatprep.subr.bf16.mxu0 0
        %5671 = vmatpush1.bf16.msra.mxu0 %v5636
        %5672 = vmatprep.subr.bf16.mxu0 0
        %5673 = vmatpush2.bf16.msra.mxu0 0
        %5674 = vmatprep.subr.bf16.mxu0 0
        %5675 = vmatpush2.bf16.msra.mxu0 0
        %5676 = vmatprep.subr.bf16.mxu0 0
        %5677 = vmatpush2.bf16.msra.mxu0 0
        %5678 = vmatprep.subr.bf16.mxu0 0
        %5679 = vmatpush2.bf16.msra.mxu0 0
        %5680 = vmatprep.subr.bf16.mxu0 0
        %5681 = vmatpush2.bf16.msra.mxu0 0
        %5682 = vmatprep.subr.bf16.mxu0 0
        %5683 = vmatpush2.bf16.msra.mxu0 0
        %5684 = vmatprep.subr.bf16.mxu0 0
        %5685 = vmatpush2.bf16.msra.mxu0 0
        %5686 = vmatprep.subr.bf16.mxu0 0
        %5687 = vmatpush2.bf16.msra.mxu0 0
        %5688 = vmatprep.mubr.bf16.mxu0 0
        %5689 = vmatmul.mubr.bf16.gmra.mxu0 %v5645
        %v5690 = vpop.f32.mrf.mxu0
        %v5691 = vadd.f32 0.0, %v5690
        %v5692 = vpop.f32.mrf.mxu0
        %v5693 = vpop.f32.mrf.mxu0
        %v5694 = vadd.f32 0.0, %v5693
        %v5695 = vpop.f32.mrf.mxu0
        %5696 = vmatprep.mubr.bf16.mxu0 0
        %5697 = vmatmul.mubr.bf16.gmra.mxu0 %v5648
        %v5698 = vpop.f32.mrf.mxu0
        %v5699 = vadd.f32 0.0, %v5698
        %v5700 = vpop.f32.mrf.mxu0
        %v5701 = vpop.f32.mrf.mxu0
        %v5702 = vadd.f32 0.0, %v5701
        %v5703 = vpop.f32.mrf.mxu0
        %5704 = vmatprep.mubr.bf16.mxu0 0
        %5705 = vmatmul.mubr.bf16.gmra.mxu0 %v5651
        %v5706 = vpop.f32.mrf.mxu0
        %v5707 = vadd.f32 0.0, %v5706
        %v5708 = vpop.f32.mrf.mxu0
        %v5709 = vpop.f32.mrf.mxu0
        %v5710 = vadd.f32 0.0, %v5709
        %v5711 = vpop.f32.mrf.mxu0
        %5712 = vmatprep.mubr.bf16.mxu0 0
        %5713 = vmatmul.mubr.bf16.gmra.mxu0 %v5654
        %v5714 = vpop.f32.mrf.mxu0
        %v5715 = vadd.f32 0.0, %v5714
        %v5716 = vpop.f32.mrf.mxu0
        %v5717 = vpop.f32.mrf.mxu0
        %v5718 = vadd.f32 0.0, %v5717
        %v5719 = vpop.f32.mrf.mxu0
        %5720 = vdwg.mxu0
        %v5729 = vunpack.c.l.b16 %v5534
        %v5730 = vunpack.c.l.b16 %v5535
        %v5731 = vunpack.c.l.b16 %v5536
        %v5732 = vunpack.c.l.b16 %v5537
        %v5733 = vunpack.c.l.b16 %v5538
        %v5734 = vunpack.c.l.b16 %v5539
        %v5735 = vunpack.c.l.b16 %v5540
        %v5736 = vunpack.c.l.b16 %v5541
        %v5737 = vpack.c.b16 %v5730, %v5729
        %v5738 = vpack.c.b16 %v5732, %v5731
        %v5739 = vpack.c.b16 %v5734, %v5733
        %v5740 = vpack.c.b16 %v5736, %v5735
        %v5746 = vsel %vm327, %v5529, 0
        %v5749 = vsel %vm327, %v5530, 0
        %v5752 = vsel %vm327, %v5531, 0
        %v5755 = vsel %vm327, %v5532, 0
        %5757 = vmatprep.subr.bf16.mxu0 0
        %5758 = vmatpush1.bf16.msra.mxu0 0
        %5759 = vmatprep.subr.bf16.mxu0 0
        %5760 = vmatpush1.bf16.msra.mxu0 0
        %5761 = vmatprep.subr.bf16.mxu0 0
        %5762 = vmatpush1.bf16.msra.mxu0 0
        %5763 = vmatprep.subr.bf16.mxu0 0
        %5764 = vmatpush1.bf16.msra.mxu0 0
        %5765 = vmatprep.subr.bf16.mxu0 0
        %5766 = vmatpush1.bf16.msra.mxu0 %v5740
        %5767 = vmatprep.subr.bf16.mxu0 0
        %5768 = vmatpush1.bf16.msra.mxu0 %v5739
        %5769 = vmatprep.subr.bf16.mxu0 0
        %5770 = vmatpush1.bf16.msra.mxu0 %v5738
        %5771 = vmatprep.subr.bf16.mxu0 0
        %5772 = vmatpush1.bf16.msra.mxu0 %v5737
        %5773 = vmatprep.subr.bf16.mxu0 0
        %5774 = vmatpush2.bf16.msra.mxu0 0
        %5775 = vmatprep.subr.bf16.mxu0 0
        %5776 = vmatpush2.bf16.msra.mxu0 0
        %5777 = vmatprep.subr.bf16.mxu0 0
        %5778 = vmatpush2.bf16.msra.mxu0 0
        %5779 = vmatprep.subr.bf16.mxu0 0
        %5780 = vmatpush2.bf16.msra.mxu0 0
        %5781 = vmatprep.subr.bf16.mxu0 0
        %5782 = vmatpush2.bf16.msra.mxu0 0
        %5783 = vmatprep.subr.bf16.mxu0 0
        %5784 = vmatpush2.bf16.msra.mxu0 0
        %5785 = vmatprep.subr.bf16.mxu0 0
        %5786 = vmatpush2.bf16.msra.mxu0 0
        %5787 = vmatprep.subr.bf16.mxu0 0
        %5788 = vmatpush2.bf16.msra.mxu0 0
        %5789 = vmatprep.mubr.bf16.mxu0 0
        %5790 = vmatmul.mubr.bf16.gmra.mxu0 %v5746
        %v5791 = vpop.f32.mrf.mxu0
        %v5792 = vadd.f32 %v5691, %v5791
        %v5793 = vpop.f32.mrf.mxu0
        %v5794 = vpop.f32.mrf.mxu0
        %v5795 = vadd.f32 %v5694, %v5794
        %v5796 = vpop.f32.mrf.mxu0
        %5797 = vmatprep.mubr.bf16.mxu0 0
        %5798 = vmatmul.mubr.bf16.gmra.mxu0 %v5749
        %v5799 = vpop.f32.mrf.mxu0
        %v5800 = vadd.f32 %v5699, %v5799
        %v5801 = vpop.f32.mrf.mxu0
        %v5802 = vpop.f32.mrf.mxu0
        %v5803 = vadd.f32 %v5702, %v5802
        %v5804 = vpop.f32.mrf.mxu0
        %5805 = vmatprep.mubr.bf16.mxu0 0
        %5806 = vmatmul.mubr.bf16.gmra.mxu0 %v5752
        %v5807 = vpop.f32.mrf.mxu0
        %v5808 = vadd.f32 %v5707, %v5807
        %v5809 = vpop.f32.mrf.mxu0
        %v5810 = vpop.f32.mrf.mxu0
        %v5811 = vadd.f32 %v5710, %v5810
        %v5812 = vpop.f32.mrf.mxu0
        %5813 = vmatprep.mubr.bf16.mxu0 0
        %5814 = vmatmul.mubr.bf16.gmra.mxu0 %v5755
        %v5815 = vpop.f32.mrf.mxu0
        %v5816 = vadd.f32 %v5715, %v5815
        %v5817 = vpop.f32.mrf.mxu0
        %v5818 = vpop.f32.mrf.mxu0
        %v5819 = vadd.f32 %v5718, %v5818
        %v5820 = vpop.f32.mrf.mxu0
        %5821 = vdwg.mxu0
        %5822 = vmatprep.subr.bf16.mxu0 0
        %5823 = vmatpush1.bf16.msra.mxu0 0
        %5824 = vmatprep.subr.bf16.mxu0 0
        %5825 = vmatpush1.bf16.msra.mxu0 0
        %5826 = vmatprep.subr.bf16.mxu0 0
        %5827 = vmatpush1.bf16.msra.mxu0 0
        %5828 = vmatprep.subr.bf16.mxu0 0
        %5829 = vmatpush1.bf16.msra.mxu0 0
        %5830 = vmatprep.subr.bf16.mxu0 0
        %5831 = vmatpush1.bf16.msra.mxu0 %v5463
        %5832 = vmatprep.subr.bf16.mxu0 0
        %5833 = vmatpush1.bf16.msra.mxu0 %v5462
        %5834 = vmatprep.subr.bf16.mxu0 0
        %5835 = vmatpush1.bf16.msra.mxu0 %v5461
        %5836 = vmatprep.subr.bf16.mxu0 0
        %5837 = vmatpush1.bf16.msra.mxu0 %v5460
        %5838 = vmatprep.subr.bf16.mxu0 0
        %5839 = vmatpush2.bf16.msra.mxu0 0
        %5840 = vmatprep.subr.bf16.mxu0 0
        %5841 = vmatpush2.bf16.msra.mxu0 0
        %5842 = vmatprep.subr.bf16.mxu0 0
        %5843 = vmatpush2.bf16.msra.mxu0 0
        %5844 = vmatprep.subr.bf16.mxu0 0
        %5845 = vmatpush2.bf16.msra.mxu0 0
        %5846 = vmatprep.subr.bf16.mxu0 0
        %5847 = vmatpush2.bf16.msra.mxu0 0
        %5848 = vmatprep.subr.bf16.mxu0 0
        %5849 = vmatpush2.bf16.msra.mxu0 0
        %5850 = vmatprep.subr.bf16.mxu0 0
        %5851 = vmatpush2.bf16.msra.mxu0 0
        %5852 = vmatprep.subr.bf16.mxu0 0
        %5853 = vmatpush2.bf16.msra.mxu0 0
        %5854 = vmatprep.mubr.bf16.mxu0 0
        %5855 = vmatmul.mubr.bf16.gmra.mxu0 %v768
        %v5856 = vpop.f32.mrf.mxu0
        %v5857 = vadd.f32 0.0, %v5856
        %v5858 = vpop.f32.mrf.mxu0
        %v5859 = vpop.f32.mrf.mxu0
        %v5860 = vadd.f32 0.0, %v5859
        %v5861 = vpop.f32.mrf.mxu0
        %5862 = vmatprep.mubr.bf16.mxu0 0
        %5863 = vmatmul.mubr.bf16.gmra.mxu0 %v771
        %v5864 = vpop.f32.mrf.mxu0
        %v5865 = vadd.f32 0.0, %v5864
        %v5866 = vpop.f32.mrf.mxu0
        %v5867 = vpop.f32.mrf.mxu0
        %v5868 = vadd.f32 0.0, %v5867
        %v5869 = vpop.f32.mrf.mxu0
        %5870 = vmatprep.mubr.bf16.mxu0 0
        %5871 = vmatmul.mubr.bf16.gmra.mxu0 %v774
        %v5872 = vpop.f32.mrf.mxu0
        %v5873 = vadd.f32 0.0, %v5872
        %v5874 = vpop.f32.mrf.mxu0
        %v5875 = vpop.f32.mrf.mxu0
        %v5876 = vadd.f32 0.0, %v5875
        %v5877 = vpop.f32.mrf.mxu0
        %5878 = vmatprep.mubr.bf16.mxu0 0
        %5879 = vmatmul.mubr.bf16.gmra.mxu0 %v777
        %v5880 = vpop.f32.mrf.mxu0
        %v5881 = vadd.f32 0.0, %v5880
        %v5882 = vpop.f32.mrf.mxu0
        %v5883 = vpop.f32.mrf.mxu0
        %v5884 = vadd.f32 0.0, %v5883
        %v5885 = vpop.f32.mrf.mxu0
        %5886 = vdwg.mxu0
        %v5887 = vpack.c.bf16 %v5860, %v5857
        %v5888 = vpack.c.bf16 %v5868, %v5865
        %v5889 = vpack.c.bf16 %v5876, %v5873
        %v5890 = vpack.c.bf16 %v5884, %v5881
        %s5891 = scalar_lea.vmem [#allocation7], 928
        %v5892 = vld [vmem:[%s5891] sm:$0xf]
        %v5893 = vld [vmem:[%s5891 + $0x4] sm:$0xf]
        %v5894 = vld [vmem:[%s5891 + $0x8] sm:$0xf]
        %v5895 = vld [vmem:[%s5891 + $0xc] sm:$0xf]
        %v5896 = vld [vmem:[%s5891 + $0x10] sm:$0xf]
        %v5897 = vld [vmem:[%s5891 + $0x14] sm:$0xf]
        %v5898 = vld [vmem:[%s5891 + $0x18] sm:$0xf]
        %v5899 = vld [vmem:[%s5891 + $0x1c] sm:$0xf]
        %v5908 = vunpack.c.l.b16 %v5892
        %v5909 = vunpack.c.l.b16 %v5893
        %v5910 = vunpack.c.l.b16 %v5894
        %v5911 = vunpack.c.l.b16 %v5895
        %v5912 = vunpack.c.l.b16 %v5896
        %v5913 = vunpack.c.l.b16 %v5897
        %v5914 = vunpack.c.l.b16 %v5898
        %v5915 = vunpack.c.l.b16 %v5899
        %v5916 = vpack.c.b16 %v5909, %v5908
        %v5917 = vpack.c.b16 %v5911, %v5910
        %v5918 = vpack.c.b16 %v5913, %v5912
        %v5919 = vpack.c.b16 %v5915, %v5914
        %v5925 = vsel %vm327, %v5887, 0
        %v5928 = vsel %vm327, %v5888, 0
        %v5931 = vsel %vm327, %v5889, 0
        %v5934 = vsel %vm327, %v5890, 0
        %5936 = vmatprep.subr.bf16.mxu0 0
        %5937 = vmatpush1.bf16.msra.mxu0 0
        %5938 = vmatprep.subr.bf16.mxu0 0
        %5939 = vmatpush1.bf16.msra.mxu0 0
        %5940 = vmatprep.subr.bf16.mxu0 0
        %5941 = vmatpush1.bf16.msra.mxu0 0
        %5942 = vmatprep.subr.bf16.mxu0 0
        %5943 = vmatpush1.bf16.msra.mxu0 0
        %5944 = vmatprep.subr.bf16.mxu0 0
        %5945 = vmatpush1.bf16.msra.mxu0 %v5919
        %5946 = vmatprep.subr.bf16.mxu0 0
        %5947 = vmatpush1.bf16.msra.mxu0 %v5918
        %5948 = vmatprep.subr.bf16.mxu0 0
        %5949 = vmatpush1.bf16.msra.mxu0 %v5917
        %5950 = vmatprep.subr.bf16.mxu0 0
        %5951 = vmatpush1.bf16.msra.mxu0 %v5916
        %5952 = vmatprep.subr.bf16.mxu0 0
        %5953 = vmatpush2.bf16.msra.mxu0 0
        %5954 = vmatprep.subr.bf16.mxu0 0
        %5955 = vmatpush2.bf16.msra.mxu0 0
        %5956 = vmatprep.subr.bf16.mxu0 0
        %5957 = vmatpush2.bf16.msra.mxu0 0
        %5958 = vmatprep.subr.bf16.mxu0 0
        %5959 = vmatpush2.bf16.msra.mxu0 0
        %5960 = vmatprep.subr.bf16.mxu0 0
        %5961 = vmatpush2.bf16.msra.mxu0 0
        %5962 = vmatprep.subr.bf16.mxu0 0
        %5963 = vmatpush2.bf16.msra.mxu0 0
        %5964 = vmatprep.subr.bf16.mxu0 0
        %5965 = vmatpush2.bf16.msra.mxu0 0
        %5966 = vmatprep.subr.bf16.mxu0 0
        %5967 = vmatpush2.bf16.msra.mxu0 0
        %5968 = vmatprep.mubr.bf16.mxu0 0
        %5969 = vmatmul.mubr.bf16.gmra.mxu0 %v5925
        %v5970 = vpop.f32.mrf.mxu0
        %v5971 = vadd.f32 0.0, %v5970
        %v5972 = vpop.f32.mrf.mxu0
        %v5973 = vpop.f32.mrf.mxu0
        %v5974 = vadd.f32 0.0, %v5973
        %v5975 = vpop.f32.mrf.mxu0
        %5976 = vmatprep.mubr.bf16.mxu0 0
        %5977 = vmatmul.mubr.bf16.gmra.mxu0 %v5928
        %v5978 = vpop.f32.mrf.mxu0
        %v5979 = vadd.f32 0.0, %v5978
        %v5980 = vpop.f32.mrf.mxu0
        %v5981 = vpop.f32.mrf.mxu0
        %v5982 = vadd.f32 0.0, %v5981
        %v5983 = vpop.f32.mrf.mxu0
        %5984 = vmatprep.mubr.bf16.mxu0 0
        %5985 = vmatmul.mubr.bf16.gmra.mxu0 %v5931
        %v5986 = vpop.f32.mrf.mxu0
        %v5987 = vadd.f32 0.0, %v5986
        %v5988 = vpop.f32.mrf.mxu0
        %v5989 = vpop.f32.mrf.mxu0
        %v5990 = vadd.f32 0.0, %v5989
        %v5991 = vpop.f32.mrf.mxu0
        %5992 = vmatprep.mubr.bf16.mxu0 0
        %5993 = vmatmul.mubr.bf16.gmra.mxu0 %v5934
        %v5994 = vpop.f32.mrf.mxu0
        %v5995 = vadd.f32 0.0, %v5994
        %v5996 = vpop.f32.mrf.mxu0
        %v5997 = vpop.f32.mrf.mxu0
        %v5998 = vadd.f32 0.0, %v5997
        %v5999 = vpop.f32.mrf.mxu0
        %6000 = vdwg.mxu0
        %v6001 = vadd.f32 %v5792, %v5971
        %v6002 = vadd.f32 %v5795, %v5974
        %v6003 = vadd.f32 %v5800, %v5979
        %v6004 = vadd.f32 %v5803, %v5982
        %v6005 = vadd.f32 %v5808, %v5987
        %v6006 = vadd.f32 %v5811, %v5990
        %v6007 = vadd.f32 %v5816, %v5995
        %v6008 = vadd.f32 %v5819, %v5998
        %6009 = vmatprep.subr.bf16.mxu0 0
        %6010 = vmatpush1.bf16.msra.mxu0 0
        %6011 = vmatprep.subr.bf16.mxu0 0
        %6012 = vmatpush1.bf16.msra.mxu0 0
        %6013 = vmatprep.subr.bf16.mxu0 0
        %6014 = vmatpush1.bf16.msra.mxu0 0
        %6015 = vmatprep.subr.bf16.mxu0 0
        %6016 = vmatpush1.bf16.msra.mxu0 0
        %6017 = vmatprep.subr.bf16.mxu0 0
        %6018 = vmatpush1.bf16.msra.mxu0 %v5463
        %6019 = vmatprep.subr.bf16.mxu0 0
        %6020 = vmatpush1.bf16.msra.mxu0 %v5462
        %6021 = vmatprep.subr.bf16.mxu0 0
        %6022 = vmatpush1.bf16.msra.mxu0 %v5461
        %6023 = vmatprep.subr.bf16.mxu0 0
        %6024 = vmatpush1.bf16.msra.mxu0 %v5460
        %6025 = vmatprep.subr.bf16.mxu0 0
        %6026 = vmatpush2.bf16.msra.mxu0 0
        %6027 = vmatprep.subr.bf16.mxu0 0
        %6028 = vmatpush2.bf16.msra.mxu0 0
        %6029 = vmatprep.subr.bf16.mxu0 0
        %6030 = vmatpush2.bf16.msra.mxu0 0
        %6031 = vmatprep.subr.bf16.mxu0 0
        %6032 = vmatpush2.bf16.msra.mxu0 0
        %6033 = vmatprep.subr.bf16.mxu0 0
        %6034 = vmatpush2.bf16.msra.mxu0 0
        %6035 = vmatprep.subr.bf16.mxu0 0
        %6036 = vmatpush2.bf16.msra.mxu0 0
        %6037 = vmatprep.subr.bf16.mxu0 0
        %6038 = vmatpush2.bf16.msra.mxu0 0
        %6039 = vmatprep.subr.bf16.mxu0 0
        %6040 = vmatpush2.bf16.msra.mxu0 0
        %6041 = vmatprep.mubr.bf16.mxu0 0
        %6042 = vmatmul.mubr.bf16.gmra.mxu0 %v996
        %v6043 = vpop.f32.mrf.mxu0
        %v6044 = vadd.f32 0.0, %v6043
        %v6045 = vpop.f32.mrf.mxu0
        %v6046 = vpop.f32.mrf.mxu0
        %v6047 = vadd.f32 0.0, %v6046
        %v6048 = vpop.f32.mrf.mxu0
        %6049 = vmatprep.mubr.bf16.mxu0 0
        %6050 = vmatmul.mubr.bf16.gmra.mxu0 %v999
        %v6051 = vpop.f32.mrf.mxu0
        %v6052 = vadd.f32 0.0, %v6051
        %v6053 = vpop.f32.mrf.mxu0
        %v6054 = vpop.f32.mrf.mxu0
        %v6055 = vadd.f32 0.0, %v6054
        %v6056 = vpop.f32.mrf.mxu0
        %6057 = vmatprep.mubr.bf16.mxu0 0
        %6058 = vmatmul.mubr.bf16.gmra.mxu0 %v1002
        %v6059 = vpop.f32.mrf.mxu0
        %v6060 = vadd.f32 0.0, %v6059
        %v6061 = vpop.f32.mrf.mxu0
        %v6062 = vpop.f32.mrf.mxu0
        %v6063 = vadd.f32 0.0, %v6062
        %v6064 = vpop.f32.mrf.mxu0
        %6065 = vmatprep.mubr.bf16.mxu0 0
        %6066 = vmatmul.mubr.bf16.gmra.mxu0 %v1005
        %v6067 = vpop.f32.mrf.mxu0
        %v6068 = vadd.f32 0.0, %v6067
        %v6069 = vpop.f32.mrf.mxu0
        %v6070 = vpop.f32.mrf.mxu0
        %v6071 = vadd.f32 0.0, %v6070
        %v6072 = vpop.f32.mrf.mxu0
        %6073 = vdwg.mxu0
        %v6074 = vpack.c.bf16 %v6047, %v6044
        %v6075 = vpack.c.bf16 %v6055, %v6052
        %v6076 = vpack.c.bf16 %v6063, %v6060
        %v6077 = vpack.c.bf16 %v6071, %v6068
        %s6078 = scalar_lea.vmem [#allocation7], 960
        %v6079 = vld [vmem:[%s6078] sm:$0xf]
        %v6080 = vld [vmem:[%s6078 + $0x4] sm:$0xf]
        %v6081 = vld [vmem:[%s6078 + $0x8] sm:$0xf]
        %v6082 = vld [vmem:[%s6078 + $0xc] sm:$0xf]
        %v6083 = vld [vmem:[%s6078 + $0x10] sm:$0xf]
        %v6084 = vld [vmem:[%s6078 + $0x14] sm:$0xf]
        %v6085 = vld [vmem:[%s6078 + $0x18] sm:$0xf]
        %v6086 = vld [vmem:[%s6078 + $0x1c] sm:$0xf]
        %v6095 = vunpack.c.l.b16 %v6079
        %v6096 = vunpack.c.l.b16 %v6080
        %v6097 = vunpack.c.l.b16 %v6081
        %v6098 = vunpack.c.l.b16 %v6082
        %v6099 = vunpack.c.l.b16 %v6083
        %v6100 = vunpack.c.l.b16 %v6084
        %v6101 = vunpack.c.l.b16 %v6085
        %v6102 = vunpack.c.l.b16 %v6086
        %v6103 = vpack.c.b16 %v6096, %v6095
        %v6104 = vpack.c.b16 %v6098, %v6097
        %v6105 = vpack.c.b16 %v6100, %v6099
        %v6106 = vpack.c.b16 %v6102, %v6101
        %v6112 = vsel %vm327, %v6074, 0
        %v6115 = vsel %vm327, %v6075, 0
        %v6118 = vsel %vm327, %v6076, 0
        %v6121 = vsel %vm327, %v6077, 0
        %6123 = vmatprep.subr.bf16.mxu0 0
        %6124 = vmatpush1.bf16.msra.mxu0 0
        %6125 = vmatprep.subr.bf16.mxu0 0
        %6126 = vmatpush1.bf16.msra.mxu0 0
        %6127 = vmatprep.subr.bf16.mxu0 0
        %6128 = vmatpush1.bf16.msra.mxu0 0
        %6129 = vmatprep.subr.bf16.mxu0 0
        %6130 = vmatpush1.bf16.msra.mxu0 0
        %6131 = vmatprep.subr.bf16.mxu0 0
        %6132 = vmatpush1.bf16.msra.mxu0 %v6106
        %6133 = vmatprep.subr.bf16.mxu0 0
        %6134 = vmatpush1.bf16.msra.mxu0 %v6105
        %6135 = vmatprep.subr.bf16.mxu0 0
        %6136 = vmatpush1.bf16.msra.mxu0 %v6104
        %6137 = vmatprep.subr.bf16.mxu0 0
        %6138 = vmatpush1.bf16.msra.mxu0 %v6103
        %6139 = vmatprep.subr.bf16.mxu0 0
        %6140 = vmatpush2.bf16.msra.mxu0 0
        %6141 = vmatprep.subr.bf16.mxu0 0
        %6142 = vmatpush2.bf16.msra.mxu0 0
        %6143 = vmatprep.subr.bf16.mxu0 0
        %6144 = vmatpush2.bf16.msra.mxu0 0
        %6145 = vmatprep.subr.bf16.mxu0 0
        %6146 = vmatpush2.bf16.msra.mxu0 0
        %6147 = vmatprep.subr.bf16.mxu0 0
        %6148 = vmatpush2.bf16.msra.mxu0 0
        %6149 = vmatprep.subr.bf16.mxu0 0
        %6150 = vmatpush2.bf16.msra.mxu0 0
        %6151 = vmatprep.subr.bf16.mxu0 0
        %6152 = vmatpush2.bf16.msra.mxu0 0
        %6153 = vmatprep.subr.bf16.mxu0 0
        %6154 = vmatpush2.bf16.msra.mxu0 0
        %6155 = vmatprep.mubr.bf16.mxu0 0
        %6156 = vmatmul.mubr.bf16.gmra.mxu0 %v6112
        %v6157 = vpop.f32.mrf.mxu0
        %v6158 = vadd.f32 0.0, %v6157
        %v6159 = vpop.f32.mrf.mxu0
        %v6160 = vpop.f32.mrf.mxu0
        %v6161 = vadd.f32 0.0, %v6160
        %v6162 = vpop.f32.mrf.mxu0
        %6163 = vmatprep.mubr.bf16.mxu0 0
        %6164 = vmatmul.mubr.bf16.gmra.mxu0 %v6115
        %v6165 = vpop.f32.mrf.mxu0
        %v6166 = vadd.f32 0.0, %v6165
        %v6167 = vpop.f32.mrf.mxu0
        %v6168 = vpop.f32.mrf.mxu0
        %v6169 = vadd.f32 0.0, %v6168
        %v6170 = vpop.f32.mrf.mxu0
        %6171 = vmatprep.mubr.bf16.mxu0 0
        %6172 = vmatmul.mubr.bf16.gmra.mxu0 %v6118
        %v6173 = vpop.f32.mrf.mxu0
        %v6174 = vadd.f32 0.0, %v6173
        %v6175 = vpop.f32.mrf.mxu0
        %v6176 = vpop.f32.mrf.mxu0
        %v6177 = vadd.f32 0.0, %v6176
        %v6178 = vpop.f32.mrf.mxu0
        %6179 = vmatprep.mubr.bf16.mxu0 0
        %6180 = vmatmul.mubr.bf16.gmra.mxu0 %v6121
        %v6181 = vpop.f32.mrf.mxu0
        %v6182 = vadd.f32 0.0, %v6181
        %v6183 = vpop.f32.mrf.mxu0
        %v6184 = vpop.f32.mrf.mxu0
        %v6185 = vadd.f32 0.0, %v6184
        %v6186 = vpop.f32.mrf.mxu0
        %6187 = vdwg.mxu0
        %v6188 = vadd.f32 %v6001, %v6158
        %v6189 = vadd.f32 %v6002, %v6161
        %v6190 = vadd.f32 %v6003, %v6166
        %v6191 = vadd.f32 %v6004, %v6169
        %v6192 = vadd.f32 %v6005, %v6174
        %v6193 = vadd.f32 %v6006, %v6177
        %v6194 = vadd.f32 %v6007, %v6182
        %v6195 = vadd.f32 %v6008, %v6185
        %s6196 = scalar_lea.vmem [#allocation7], 992
        %v6197 = vld [vmem:[%s6196] sm:$0xf]
        %v6198 = vld [vmem:[%s6196 + $0x4] sm:$0xf]
        %v6199 = vld [vmem:[%s6196 + $0x8] sm:$0xf]
        %v6200 = vld [vmem:[%s6196 + $0xc] sm:$0xf]
        %v6201 = vld [vmem:[%s6196 + $0x10] sm:$0xf]
        %v6202 = vld [vmem:[%s6196 + $0x14] sm:$0xf]
        %v6203 = vld [vmem:[%s6196 + $0x18] sm:$0xf]
        %v6204 = vld [vmem:[%s6196 + $0x1c] sm:$0xf]
        %v6213 = vunpack.c.l.b16 %v6197
        %v6214 = vunpack.c.l.b16 %v6198
        %v6215 = vunpack.c.l.b16 %v6199
        %v6216 = vunpack.c.l.b16 %v6200
        %v6217 = vunpack.c.l.b16 %v6201
        %v6218 = vunpack.c.l.b16 %v6202
        %v6219 = vunpack.c.l.b16 %v6203
        %v6220 = vunpack.c.l.b16 %v6204
        %v6221 = vpack.c.b16 %v6214, %v6213
        %v6222 = vpack.c.b16 %v6216, %v6215
        %v6223 = vpack.c.b16 %v6218, %v6217
        %v6224 = vpack.c.b16 %v6220, %v6219
        %v6230 = vsel %vm327, %v5460, 0
        %v6233 = vsel %vm327, %v5461, 0
        %v6236 = vsel %vm327, %v5462, 0
        %v6239 = vsel %vm327, %v5463, 0
        %6241 = vmatprep.subr.bf16.mxu0 0
        %6242 = vmatpush1.bf16.msra.mxu0 0
        %6243 = vmatprep.subr.bf16.mxu0 0
        %6244 = vmatpush1.bf16.msra.mxu0 0
        %6245 = vmatprep.subr.bf16.mxu0 0
        %6246 = vmatpush1.bf16.msra.mxu0 0
        %6247 = vmatprep.subr.bf16.mxu0 0
        %6248 = vmatpush1.bf16.msra.mxu0 0
        %6249 = vmatprep.subr.bf16.mxu0 0
        %6250 = vmatpush1.bf16.msra.mxu0 %v6224
        %6251 = vmatprep.subr.bf16.mxu0 0
        %6252 = vmatpush1.bf16.msra.mxu0 %v6223
        %6253 = vmatprep.subr.bf16.mxu0 0
        %6254 = vmatpush1.bf16.msra.mxu0 %v6222
        %6255 = vmatprep.subr.bf16.mxu0 0
        %6256 = vmatpush1.bf16.msra.mxu0 %v6221
        %6257 = vmatprep.subr.bf16.mxu0 0
        %6258 = vmatpush2.bf16.msra.mxu0 0
        %6259 = vmatprep.subr.bf16.mxu0 0
        %6260 = vmatpush2.bf16.msra.mxu0 0
        %6261 = vmatprep.subr.bf16.mxu0 0
        %6262 = vmatpush2.bf16.msra.mxu0 0
        %6263 = vmatprep.subr.bf16.mxu0 0
        %6264 = vmatpush2.bf16.msra.mxu0 0
        %6265 = vmatprep.subr.bf16.mxu0 0
        %6266 = vmatpush2.bf16.msra.mxu0 0
        %6267 = vmatprep.subr.bf16.mxu0 0
        %6268 = vmatpush2.bf16.msra.mxu0 0
        %6269 = vmatprep.subr.bf16.mxu0 0
        %6270 = vmatpush2.bf16.msra.mxu0 0
        %6271 = vmatprep.subr.bf16.mxu0 0
        %6272 = vmatpush2.bf16.msra.mxu0 0
        %6273 = vmatprep.mubr.bf16.mxu0 0
        %6274 = vmatmul.mubr.bf16.gmra.mxu0 %v6230
        %v6275 = vpop.f32.mrf.mxu0
        %v6276 = vadd.f32 0.0, %v6275
        %v6277 = vpop.f32.mrf.mxu0
        %v6278 = vpop.f32.mrf.mxu0
        %v6279 = vadd.f32 0.0, %v6278
        %v6280 = vpop.f32.mrf.mxu0
        %6281 = vmatprep.mubr.bf16.mxu0 0
        %6282 = vmatmul.mubr.bf16.gmra.mxu0 %v6233
        %v6283 = vpop.f32.mrf.mxu0
        %v6284 = vadd.f32 0.0, %v6283
        %v6285 = vpop.f32.mrf.mxu0
        %v6286 = vpop.f32.mrf.mxu0
        %v6287 = vadd.f32 0.0, %v6286
        %v6288 = vpop.f32.mrf.mxu0
        %6289 = vmatprep.mubr.bf16.mxu0 0
        %6290 = vmatmul.mubr.bf16.gmra.mxu0 %v6236
        %v6291 = vpop.f32.mrf.mxu0
        %v6292 = vadd.f32 0.0, %v6291
        %v6293 = vpop.f32.mrf.mxu0
        %v6294 = vpop.f32.mrf.mxu0
        %v6295 = vadd.f32 0.0, %v6294
        %v6296 = vpop.f32.mrf.mxu0
        %6297 = vmatprep.mubr.bf16.mxu0 0
        %6298 = vmatmul.mubr.bf16.gmra.mxu0 %v6239
        %v6299 = vpop.f32.mrf.mxu0
        %v6300 = vadd.f32 0.0, %v6299
        %v6301 = vpop.f32.mrf.mxu0
        %v6302 = vpop.f32.mrf.mxu0
        %v6303 = vadd.f32 0.0, %v6302
        %v6304 = vpop.f32.mrf.mxu0
        %6305 = vdwg.mxu0
        %v6306 = vadd.f32 %v6188, %v6276
        %v6307 = vadd.f32 %v6189, %v6279
        %v6308 = vadd.f32 %v6190, %v6284
        %v6309 = vadd.f32 %v6191, %v6287
        %v6310 = vadd.f32 %v6192, %v6292
        %v6311 = vadd.f32 %v6193, %v6295
        %v6312 = vadd.f32 %v6194, %v6300
        %v6313 = vadd.f32 %v6195, %v6303
        %6314 = vmatprep.subr.bf16.mxu0 0
        %6315 = vmatpush1.bf16.msra.mxu0 0
        %6316 = vmatprep.subr.bf16.mxu0 0
        %6317 = vmatpush1.bf16.msra.mxu0 0
        %6318 = vmatprep.subr.bf16.mxu0 0
        %6319 = vmatpush1.bf16.msra.mxu0 0
        %6320 = vmatprep.subr.bf16.mxu0 0
        %6321 = vmatpush1.bf16.msra.mxu0 0
        %6322 = vmatprep.subr.bf16.mxu0 0
        %6323 = vmatpush1.bf16.msra.mxu0 %v5463
        %6324 = vmatprep.subr.bf16.mxu0 0
        %6325 = vmatpush1.bf16.msra.mxu0 %v5462
        %6326 = vmatprep.subr.bf16.mxu0 0
        %6327 = vmatpush1.bf16.msra.mxu0 %v5461
        %6328 = vmatprep.subr.bf16.mxu0 0
        %6329 = vmatpush1.bf16.msra.mxu0 %v5460
        %6330 = vmatprep.subr.bf16.mxu0 0
        %6331 = vmatpush2.bf16.msra.mxu0 0
        %6332 = vmatprep.subr.bf16.mxu0 0
        %6333 = vmatpush2.bf16.msra.mxu0 0
        %6334 = vmatprep.subr.bf16.mxu0 0
        %6335 = vmatpush2.bf16.msra.mxu0 0
        %6336 = vmatprep.subr.bf16.mxu0 0
        %6337 = vmatpush2.bf16.msra.mxu0 0
        %6338 = vmatprep.subr.bf16.mxu0 0
        %6339 = vmatpush2.bf16.msra.mxu0 0
        %6340 = vmatprep.subr.bf16.mxu0 0
        %6341 = vmatpush2.bf16.msra.mxu0 0
        %6342 = vmatprep.subr.bf16.mxu0 0
        %6343 = vmatpush2.bf16.msra.mxu0 0
        %6344 = vmatprep.subr.bf16.mxu0 0
        %6345 = vmatpush2.bf16.msra.mxu0 0
        %6346 = vmatprep.mubr.bf16.mxu0 0
        %6347 = vmatmul.mubr.bf16.gmra.mxu0 %v1342
        %v6348 = vpop.f32.mrf.mxu0
        %v6349 = vadd.f32 0.0, %v6348
        %v6350 = vpop.f32.mrf.mxu0
        %v6351 = vpop.f32.mrf.mxu0
        %v6352 = vadd.f32 0.0, %v6351
        %v6353 = vpop.f32.mrf.mxu0
        %6354 = vmatprep.mubr.bf16.mxu0 0
        %6355 = vmatmul.mubr.bf16.gmra.mxu0 %v1345
        %v6356 = vpop.f32.mrf.mxu0
        %v6357 = vadd.f32 0.0, %v6356
        %v6358 = vpop.f32.mrf.mxu0
        %v6359 = vpop.f32.mrf.mxu0
        %v6360 = vadd.f32 0.0, %v6359
        %v6361 = vpop.f32.mrf.mxu0
        %6362 = vmatprep.mubr.bf16.mxu0 0
        %6363 = vmatmul.mubr.bf16.gmra.mxu0 %v1348
        %v6364 = vpop.f32.mrf.mxu0
        %v6365 = vadd.f32 0.0, %v6364
        %v6366 = vpop.f32.mrf.mxu0
        %v6367 = vpop.f32.mrf.mxu0
        %v6368 = vadd.f32 0.0, %v6367
        %v6369 = vpop.f32.mrf.mxu0
        %6370 = vmatprep.mubr.bf16.mxu0 0
        %6371 = vmatmul.mubr.bf16.gmra.mxu0 %v1351
        %v6372 = vpop.f32.mrf.mxu0
        %v6373 = vadd.f32 0.0, %v6372
        %v6374 = vpop.f32.mrf.mxu0
        %v6375 = vpop.f32.mrf.mxu0
        %v6376 = vadd.f32 0.0, %v6375
        %v6377 = vpop.f32.mrf.mxu0
        %6378 = vdwg.mxu0
        %v6379 = vpack.c.bf16 %v6352, %v6349
        %v6380 = vpack.c.bf16 %v6360, %v6357
        %v6381 = vpack.c.bf16 %v6368, %v6365
        %v6382 = vpack.c.bf16 %v6376, %v6373
        %s6383 = scalar_lea.vmem [#allocation7], 1024
        %v6384 = vld [vmem:[%s6383] sm:$0xf]
        %v6385 = vld [vmem:[%s6383 + $0x4] sm:$0xf]
        %v6386 = vld [vmem:[%s6383 + $0x8] sm:$0xf]
        %v6387 = vld [vmem:[%s6383 + $0xc] sm:$0xf]
        %v6388 = vld [vmem:[%s6383 + $0x10] sm:$0xf]
        %v6389 = vld [vmem:[%s6383 + $0x14] sm:$0xf]
        %v6390 = vld [vmem:[%s6383 + $0x18] sm:$0xf]
        %v6391 = vld [vmem:[%s6383 + $0x1c] sm:$0xf]
        %v6400 = vunpack.c.l.b16 %v6384
        %v6401 = vunpack.c.l.b16 %v6385
        %v6402 = vunpack.c.l.b16 %v6386
        %v6403 = vunpack.c.l.b16 %v6387
        %v6404 = vunpack.c.l.b16 %v6388
        %v6405 = vunpack.c.l.b16 %v6389
        %v6406 = vunpack.c.l.b16 %v6390
        %v6407 = vunpack.c.l.b16 %v6391
        %v6408 = vpack.c.b16 %v6401, %v6400
        %v6409 = vpack.c.b16 %v6403, %v6402
        %v6410 = vpack.c.b16 %v6405, %v6404
        %v6411 = vpack.c.b16 %v6407, %v6406
        %v6417 = vsel %vm327, %v6379, 0
        %v6420 = vsel %vm327, %v6380, 0
        %v6423 = vsel %vm327, %v6381, 0
        %v6426 = vsel %vm327, %v6382, 0
        %6428 = vmatprep.subr.bf16.mxu0 0
        %6429 = vmatpush1.bf16.msra.mxu0 0
        %6430 = vmatprep.subr.bf16.mxu0 0
        %6431 = vmatpush1.bf16.msra.mxu0 0
        %6432 = vmatprep.subr.bf16.mxu0 0
        %6433 = vmatpush1.bf16.msra.mxu0 0
        %6434 = vmatprep.subr.bf16.mxu0 0
        %6435 = vmatpush1.bf16.msra.mxu0 0
        %6436 = vmatprep.subr.bf16.mxu0 0
        %6437 = vmatpush1.bf16.msra.mxu0 %v6411
        %6438 = vmatprep.subr.bf16.mxu0 0
        %6439 = vmatpush1.bf16.msra.mxu0 %v6410
        %6440 = vmatprep.subr.bf16.mxu0 0
        %6441 = vmatpush1.bf16.msra.mxu0 %v6409
        %6442 = vmatprep.subr.bf16.mxu0 0
        %6443 = vmatpush1.bf16.msra.mxu0 %v6408
        %6444 = vmatprep.subr.bf16.mxu0 0
        %6445 = vmatpush2.bf16.msra.mxu0 0
        %6446 = vmatprep.subr.bf16.mxu0 0
        %6447 = vmatpush2.bf16.msra.mxu0 0
        %6448 = vmatprep.subr.bf16.mxu0 0
        %6449 = vmatpush2.bf16.msra.mxu0 0
        %6450 = vmatprep.subr.bf16.mxu0 0
        %6451 = vmatpush2.bf16.msra.mxu0 0
        %6452 = vmatprep.subr.bf16.mxu0 0
        %6453 = vmatpush2.bf16.msra.mxu0 0
        %6454 = vmatprep.subr.bf16.mxu0 0
        %6455 = vmatpush2.bf16.msra.mxu0 0
        %6456 = vmatprep.subr.bf16.mxu0 0
        %6457 = vmatpush2.bf16.msra.mxu0 0
        %6458 = vmatprep.subr.bf16.mxu0 0
        %6459 = vmatpush2.bf16.msra.mxu0 0
        %6460 = vmatprep.mubr.bf16.mxu0 0
        %6461 = vmatmul.mubr.bf16.gmra.mxu0 %v6417
        %v6462 = vpop.f32.mrf.mxu0
        %v6463 = vadd.f32 0.0, %v6462
        %v6464 = vpop.f32.mrf.mxu0
        %v6465 = vpop.f32.mrf.mxu0
        %v6466 = vadd.f32 0.0, %v6465
        %v6467 = vpop.f32.mrf.mxu0
        %6468 = vmatprep.mubr.bf16.mxu0 0
        %6469 = vmatmul.mubr.bf16.gmra.mxu0 %v6420
        %v6470 = vpop.f32.mrf.mxu0
        %v6471 = vadd.f32 0.0, %v6470
        %v6472 = vpop.f32.mrf.mxu0
        %v6473 = vpop.f32.mrf.mxu0
        %v6474 = vadd.f32 0.0, %v6473
        %v6475 = vpop.f32.mrf.mxu0
        %6476 = vmatprep.mubr.bf16.mxu0 0
        %6477 = vmatmul.mubr.bf16.gmra.mxu0 %v6423
        %v6478 = vpop.f32.mrf.mxu0
        %v6479 = vadd.f32 0.0, %v6478
        %v6480 = vpop.f32.mrf.mxu0
        %v6481 = vpop.f32.mrf.mxu0
        %v6482 = vadd.f32 0.0, %v6481
        %v6483 = vpop.f32.mrf.mxu0
        %6484 = vmatprep.mubr.bf16.mxu0 0
        %6485 = vmatmul.mubr.bf16.gmra.mxu0 %v6426
        %v6486 = vpop.f32.mrf.mxu0
        %v6487 = vadd.f32 0.0, %v6486
        %v6488 = vpop.f32.mrf.mxu0
        %v6489 = vpop.f32.mrf.mxu0
        %v6490 = vadd.f32 0.0, %v6489
        %v6491 = vpop.f32.mrf.mxu0
        %6492 = vdwg.mxu0
        %v6493 = vadd.f32 %v6306, %v6463
        %v6494 = vadd.f32 %v6307, %v6466
        %v6495 = vadd.f32 %v6308, %v6471
        %v6496 = vadd.f32 %v6309, %v6474
        %v6497 = vadd.f32 %v6310, %v6479
        %v6498 = vadd.f32 %v6311, %v6482
        %v6499 = vadd.f32 %v6312, %v6487
        %v6500 = vadd.f32 %v6313, %v6490
        %6501 = vmatprep.subr.bf16.mxu0 0
        %6502 = vmatpush1.bf16.msra.mxu0 0
        %6503 = vmatprep.subr.bf16.mxu0 0
        %6504 = vmatpush1.bf16.msra.mxu0 0
        %6505 = vmatprep.subr.bf16.mxu0 0
        %6506 = vmatpush1.bf16.msra.mxu0 0
        %6507 = vmatprep.subr.bf16.mxu0 0
        %6508 = vmatpush1.bf16.msra.mxu0 0
        %6509 = vmatprep.subr.bf16.mxu0 0
        %6510 = vmatpush1.bf16.msra.mxu0 %v5463
        %6511 = vmatprep.subr.bf16.mxu0 0
        %6512 = vmatpush1.bf16.msra.mxu0 %v5462
        %6513 = vmatprep.subr.bf16.mxu0 0
        %6514 = vmatpush1.bf16.msra.mxu0 %v5461
        %6515 = vmatprep.subr.bf16.mxu0 0
        %6516 = vmatpush1.bf16.msra.mxu0 %v5460
        %6517 = vmatprep.subr.bf16.mxu0 0
        %6518 = vmatpush2.bf16.msra.mxu0 0
        %6519 = vmatprep.subr.bf16.mxu0 0
        %6520 = vmatpush2.bf16.msra.mxu0 0
        %6521 = vmatprep.subr.bf16.mxu0 0
        %6522 = vmatpush2.bf16.msra.mxu0 0
        %6523 = vmatprep.subr.bf16.mxu0 0
        %6524 = vmatpush2.bf16.msra.mxu0 0
        %6525 = vmatprep.subr.bf16.mxu0 0
        %6526 = vmatpush2.bf16.msra.mxu0 0
        %6527 = vmatprep.subr.bf16.mxu0 0
        %6528 = vmatpush2.bf16.msra.mxu0 0
        %6529 = vmatprep.subr.bf16.mxu0 0
        %6530 = vmatpush2.bf16.msra.mxu0 0
        %6531 = vmatprep.subr.bf16.mxu0 0
        %6532 = vmatpush2.bf16.msra.mxu0 0
        %6533 = vmatprep.mubr.bf16.mxu0 0
        %6534 = vmatmul.mubr.bf16.gmra.mxu0 %v1570
        %v6535 = vpop.f32.mrf.mxu0
        %v6536 = vadd.f32 0.0, %v6535
        %v6537 = vpop.f32.mrf.mxu0
        %v6538 = vpop.f32.mrf.mxu0
        %v6539 = vadd.f32 0.0, %v6538
        %v6540 = vpop.f32.mrf.mxu0
        %6541 = vmatprep.mubr.bf16.mxu0 0
        %6542 = vmatmul.mubr.bf16.gmra.mxu0 %v1573
        %v6543 = vpop.f32.mrf.mxu0
        %v6544 = vadd.f32 0.0, %v6543
        %v6545 = vpop.f32.mrf.mxu0
        %v6546 = vpop.f32.mrf.mxu0
        %v6547 = vadd.f32 0.0, %v6546
        %v6548 = vpop.f32.mrf.mxu0
        %6549 = vmatprep.mubr.bf16.mxu0 0
        %6550 = vmatmul.mubr.bf16.gmra.mxu0 %v1576
        %v6551 = vpop.f32.mrf.mxu0
        %v6552 = vadd.f32 0.0, %v6551
        %v6553 = vpop.f32.mrf.mxu0
        %v6554 = vpop.f32.mrf.mxu0
        %v6555 = vadd.f32 0.0, %v6554
        %v6556 = vpop.f32.mrf.mxu0
        %6557 = vmatprep.mubr.bf16.mxu0 0
        %6558 = vmatmul.mubr.bf16.gmra.mxu0 %v1579
        %v6559 = vpop.f32.mrf.mxu0
        %v6560 = vadd.f32 0.0, %v6559
        %v6561 = vpop.f32.mrf.mxu0
        %v6562 = vpop.f32.mrf.mxu0
        %v6563 = vadd.f32 0.0, %v6562
        %v6564 = vpop.f32.mrf.mxu0
        %6565 = vdwg.mxu0
        %v6566 = vpack.c.bf16 %v6539, %v6536
        %v6567 = vpack.c.bf16 %v6547, %v6544
        %v6568 = vpack.c.bf16 %v6555, %v6552
        %v6569 = vpack.c.bf16 %v6563, %v6560
        %s6570 = scalar_lea.vmem [#allocation7], 1056
        %v6571 = vld [vmem:[%s6570] sm:$0xf]
        %v6572 = vld [vmem:[%s6570 + $0x4] sm:$0xf]
        %v6573 = vld [vmem:[%s6570 + $0x8] sm:$0xf]
        %v6574 = vld [vmem:[%s6570 + $0xc] sm:$0xf]
        %v6575 = vld [vmem:[%s6570 + $0x10] sm:$0xf]
        %v6576 = vld [vmem:[%s6570 + $0x14] sm:$0xf]
        %v6577 = vld [vmem:[%s6570 + $0x18] sm:$0xf]
        %v6578 = vld [vmem:[%s6570 + $0x1c] sm:$0xf]
        %v6587 = vunpack.c.l.b16 %v6571
        %v6588 = vunpack.c.l.b16 %v6572
        %v6589 = vunpack.c.l.b16 %v6573
        %v6590 = vunpack.c.l.b16 %v6574
        %v6591 = vunpack.c.l.b16 %v6575
        %v6592 = vunpack.c.l.b16 %v6576
        %v6593 = vunpack.c.l.b16 %v6577
        %v6594 = vunpack.c.l.b16 %v6578
        %v6595 = vpack.c.b16 %v6588, %v6587
        %v6596 = vpack.c.b16 %v6590, %v6589
        %v6597 = vpack.c.b16 %v6592, %v6591
        %v6598 = vpack.c.b16 %v6594, %v6593
        %v6604 = vsel %vm327, %v6566, 0
        %v6607 = vsel %vm327, %v6567, 0
        %v6610 = vsel %vm327, %v6568, 0
        %v6613 = vsel %vm327, %v6569, 0
        %6615 = vmatprep.subr.bf16.mxu0 0
        %6616 = vmatpush1.bf16.msra.mxu0 0
        %6617 = vmatprep.subr.bf16.mxu0 0
        %6618 = vmatpush1.bf16.msra.mxu0 0
        %6619 = vmatprep.subr.bf16.mxu0 0
        %6620 = vmatpush1.bf16.msra.mxu0 0
        %6621 = vmatprep.subr.bf16.mxu0 0
        %6622 = vmatpush1.bf16.msra.mxu0 0
        %6623 = vmatprep.subr.bf16.mxu0 0
        %6624 = vmatpush1.bf16.msra.mxu0 %v6598
        %6625 = vmatprep.subr.bf16.mxu0 0
        %6626 = vmatpush1.bf16.msra.mxu0 %v6597
        %6627 = vmatprep.subr.bf16.mxu0 0
        %6628 = vmatpush1.bf16.msra.mxu0 %v6596
        %6629 = vmatprep.subr.bf16.mxu0 0
        %6630 = vmatpush1.bf16.msra.mxu0 %v6595
        %6631 = vmatprep.subr.bf16.mxu0 0
        %6632 = vmatpush2.bf16.msra.mxu0 0
        %6633 = vmatprep.subr.bf16.mxu0 0
        %6634 = vmatpush2.bf16.msra.mxu0 0
        %6635 = vmatprep.subr.bf16.mxu0 0
        %6636 = vmatpush2.bf16.msra.mxu0 0
        %6637 = vmatprep.subr.bf16.mxu0 0
        %6638 = vmatpush2.bf16.msra.mxu0 0
        %6639 = vmatprep.subr.bf16.mxu0 0
        %6640 = vmatpush2.bf16.msra.mxu0 0
        %6641 = vmatprep.subr.bf16.mxu0 0
        %6642 = vmatpush2.bf16.msra.mxu0 0
        %6643 = vmatprep.subr.bf16.mxu0 0
        %6644 = vmatpush2.bf16.msra.mxu0 0
        %6645 = vmatprep.subr.bf16.mxu0 0
        %6646 = vmatpush2.bf16.msra.mxu0 0
        %6647 = vmatprep.mubr.bf16.mxu0 0
        %6648 = vmatmul.mubr.bf16.gmra.mxu0 %v6604
        %v6649 = vpop.f32.mrf.mxu0
        %v6650 = vadd.f32 0.0, %v6649
        %v6651 = vpop.f32.mrf.mxu0
        %v6652 = vpop.f32.mrf.mxu0
        %v6653 = vadd.f32 0.0, %v6652
        %v6654 = vpop.f32.mrf.mxu0
        %6655 = vmatprep.mubr.bf16.mxu0 0
        %6656 = vmatmul.mubr.bf16.gmra.mxu0 %v6607
        %v6657 = vpop.f32.mrf.mxu0
        %v6658 = vadd.f32 0.0, %v6657
        %v6659 = vpop.f32.mrf.mxu0
        %v6660 = vpop.f32.mrf.mxu0
        %v6661 = vadd.f32 0.0, %v6660
        %v6662 = vpop.f32.mrf.mxu0
        %6663 = vmatprep.mubr.bf16.mxu0 0
        %6664 = vmatmul.mubr.bf16.gmra.mxu0 %v6610
        %v6665 = vpop.f32.mrf.mxu0
        %v6666 = vadd.f32 0.0, %v6665
        %v6667 = vpop.f32.mrf.mxu0
        %v6668 = vpop.f32.mrf.mxu0
        %v6669 = vadd.f32 0.0, %v6668
        %v6670 = vpop.f32.mrf.mxu0
        %6671 = vmatprep.mubr.bf16.mxu0 0
        %6672 = vmatmul.mubr.bf16.gmra.mxu0 %v6613
        %v6673 = vpop.f32.mrf.mxu0
        %v6674 = vadd.f32 0.0, %v6673
        %v6675 = vpop.f32.mrf.mxu0
        %v6676 = vpop.f32.mrf.mxu0
        %v6677 = vadd.f32 0.0, %v6676
        %v6678 = vpop.f32.mrf.mxu0
        %6679 = vdwg.mxu0
        %v6680 = vadd.f32 %v6493, %v6650
        %v6681 = vadd.f32 %v6494, %v6653
        %v6682 = vadd.f32 %v6495, %v6658
        %v6683 = vadd.f32 %v6496, %v6661
        %v6684 = vadd.f32 %v6497, %v6666
        %v6685 = vadd.f32 %v6498, %v6669
        %v6686 = vadd.f32 %v6499, %v6674
        %v6687 = vadd.f32 %v6500, %v6677
        %6688 = vmatprep.subr.bf16.mxu0 0
        %6689 = vmatpush1.bf16.msra.mxu0 0
        %6690 = vmatprep.subr.bf16.mxu0 0
        %6691 = vmatpush1.bf16.msra.mxu0 0
        %6692 = vmatprep.subr.bf16.mxu0 0
        %6693 = vmatpush1.bf16.msra.mxu0 0
        %6694 = vmatprep.subr.bf16.mxu0 0
        %6695 = vmatpush1.bf16.msra.mxu0 0
        %6696 = vmatprep.subr.bf16.mxu0 0
        %6697 = vmatpush1.bf16.msra.mxu0 %v5463
        %6698 = vmatprep.subr.bf16.mxu0 0
        %6699 = vmatpush1.bf16.msra.mxu0 %v5462
        %6700 = vmatprep.subr.bf16.mxu0 0
        %6701 = vmatpush1.bf16.msra.mxu0 %v5461
        %6702 = vmatprep.subr.bf16.mxu0 0
        %6703 = vmatpush1.bf16.msra.mxu0 %v5460
        %6704 = vmatprep.subr.bf16.mxu0 0
        %6705 = vmatpush2.bf16.msra.mxu0 0
        %6706 = vmatprep.subr.bf16.mxu0 0
        %6707 = vmatpush2.bf16.msra.mxu0 0
        %6708 = vmatprep.subr.bf16.mxu0 0
        %6709 = vmatpush2.bf16.msra.mxu0 0
        %6710 = vmatprep.subr.bf16.mxu0 0
        %6711 = vmatpush2.bf16.msra.mxu0 0
        %6712 = vmatprep.subr.bf16.mxu0 0
        %6713 = vmatpush2.bf16.msra.mxu0 0
        %6714 = vmatprep.subr.bf16.mxu0 0
        %6715 = vmatpush2.bf16.msra.mxu0 0
        %6716 = vmatprep.subr.bf16.mxu0 0
        %6717 = vmatpush2.bf16.msra.mxu0 0
        %6718 = vmatprep.subr.bf16.mxu0 0
        %6719 = vmatpush2.bf16.msra.mxu0 0
        %6720 = vmatprep.mubr.bf16.mxu0 0
        %6721 = vmatmul.mubr.bf16.gmra.mxu0 %v1798
        %v6722 = vpop.f32.mrf.mxu0
        %v6723 = vadd.f32 0.0, %v6722
        %v6724 = vpop.f32.mrf.mxu0
        %v6725 = vpop.f32.mrf.mxu0
        %v6726 = vadd.f32 0.0, %v6725
        %v6727 = vpop.f32.mrf.mxu0
        %6728 = vmatprep.mubr.bf16.mxu0 0
        %6729 = vmatmul.mubr.bf16.gmra.mxu0 %v1801
        %v6730 = vpop.f32.mrf.mxu0
        %v6731 = vadd.f32 0.0, %v6730
        %v6732 = vpop.f32.mrf.mxu0
        %v6733 = vpop.f32.mrf.mxu0
        %v6734 = vadd.f32 0.0, %v6733
        %v6735 = vpop.f32.mrf.mxu0
        %6736 = vmatprep.mubr.bf16.mxu0 0
        %6737 = vmatmul.mubr.bf16.gmra.mxu0 %v1804
        %v6738 = vpop.f32.mrf.mxu0
        %v6739 = vadd.f32 0.0, %v6738
        %v6740 = vpop.f32.mrf.mxu0
        %v6741 = vpop.f32.mrf.mxu0
        %v6742 = vadd.f32 0.0, %v6741
        %v6743 = vpop.f32.mrf.mxu0
        %6744 = vmatprep.mubr.bf16.mxu0 0
        %6745 = vmatmul.mubr.bf16.gmra.mxu0 %v1807
        %v6746 = vpop.f32.mrf.mxu0
        %v6747 = vadd.f32 0.0, %v6746
        %v6748 = vpop.f32.mrf.mxu0
        %v6749 = vpop.f32.mrf.mxu0
        %v6750 = vadd.f32 0.0, %v6749
        %v6751 = vpop.f32.mrf.mxu0
        %6752 = vdwg.mxu0
        %v6753 = vpack.c.bf16 %v6726, %v6723
        %v6754 = vpack.c.bf16 %v6734, %v6731
        %v6755 = vpack.c.bf16 %v6742, %v6739
        %v6756 = vpack.c.bf16 %v6750, %v6747
        %s6757 = scalar_lea.vmem [#allocation7], 1088
        %v6758 = vld [vmem:[%s6757] sm:$0xf]
        %v6759 = vld [vmem:[%s6757 + $0x4] sm:$0xf]
        %v6760 = vld [vmem:[%s6757 + $0x8] sm:$0xf]
        %v6761 = vld [vmem:[%s6757 + $0xc] sm:$0xf]
        %v6762 = vld [vmem:[%s6757 + $0x10] sm:$0xf]
        %v6763 = vld [vmem:[%s6757 + $0x14] sm:$0xf]
        %v6764 = vld [vmem:[%s6757 + $0x18] sm:$0xf]
        %v6765 = vld [vmem:[%s6757 + $0x1c] sm:$0xf]
        %v6774 = vunpack.c.l.b16 %v6758
        %v6775 = vunpack.c.l.b16 %v6759
        %v6776 = vunpack.c.l.b16 %v6760
        %v6777 = vunpack.c.l.b16 %v6761
        %v6778 = vunpack.c.l.b16 %v6762
        %v6779 = vunpack.c.l.b16 %v6763
        %v6780 = vunpack.c.l.b16 %v6764
        %v6781 = vunpack.c.l.b16 %v6765
        %v6782 = vpack.c.b16 %v6775, %v6774
        %v6783 = vpack.c.b16 %v6777, %v6776
        %v6784 = vpack.c.b16 %v6779, %v6778
        %v6785 = vpack.c.b16 %v6781, %v6780
        %v6791 = vsel %vm327, %v6753, 0
        %v6794 = vsel %vm327, %v6754, 0
        %v6797 = vsel %vm327, %v6755, 0
        %v6800 = vsel %vm327, %v6756, 0
        %6802 = vmatprep.subr.bf16.mxu0 0
        %6803 = vmatpush1.bf16.msra.mxu0 0
        %6804 = vmatprep.subr.bf16.mxu0 0
        %6805 = vmatpush1.bf16.msra.mxu0 0
        %6806 = vmatprep.subr.bf16.mxu0 0
        %6807 = vmatpush1.bf16.msra.mxu0 0
        %6808 = vmatprep.subr.bf16.mxu0 0
        %6809 = vmatpush1.bf16.msra.mxu0 0
        %6810 = vmatprep.subr.bf16.mxu0 0
        %6811 = vmatpush1.bf16.msra.mxu0 %v6785
        %6812 = vmatprep.subr.bf16.mxu0 0
        %6813 = vmatpush1.bf16.msra.mxu0 %v6784
        %6814 = vmatprep.subr.bf16.mxu0 0
        %6815 = vmatpush1.bf16.msra.mxu0 %v6783
        %6816 = vmatprep.subr.bf16.mxu0 0
        %6817 = vmatpush1.bf16.msra.mxu0 %v6782
        %6818 = vmatprep.subr.bf16.mxu0 0
        %6819 = vmatpush2.bf16.msra.mxu0 0
        %6820 = vmatprep.subr.bf16.mxu0 0
        %6821 = vmatpush2.bf16.msra.mxu0 0
        %6822 = vmatprep.subr.bf16.mxu0 0
        %6823 = vmatpush2.bf16.msra.mxu0 0
        %6824 = vmatprep.subr.bf16.mxu0 0
        %6825 = vmatpush2.bf16.msra.mxu0 0
        %6826 = vmatprep.subr.bf16.mxu0 0
        %6827 = vmatpush2.bf16.msra.mxu0 0
        %6828 = vmatprep.subr.bf16.mxu0 0
        %6829 = vmatpush2.bf16.msra.mxu0 0
        %6830 = vmatprep.subr.bf16.mxu0 0
        %6831 = vmatpush2.bf16.msra.mxu0 0
        %6832 = vmatprep.subr.bf16.mxu0 0
        %6833 = vmatpush2.bf16.msra.mxu0 0
        %6834 = vmatprep.mubr.bf16.mxu0 0
        %6835 = vmatmul.mubr.bf16.gmra.mxu0 %v6791
        %v6836 = vpop.f32.mrf.mxu0
        %v6837 = vadd.f32 0.0, %v6836
        %v6838 = vpop.f32.mrf.mxu0
        %v6839 = vpop.f32.mrf.mxu0
        %v6840 = vadd.f32 0.0, %v6839
        %v6841 = vpop.f32.mrf.mxu0
        %6842 = vmatprep.mubr.bf16.mxu0 0
        %6843 = vmatmul.mubr.bf16.gmra.mxu0 %v6794
        %v6844 = vpop.f32.mrf.mxu0
        %v6845 = vadd.f32 0.0, %v6844
        %v6846 = vpop.f32.mrf.mxu0
        %v6847 = vpop.f32.mrf.mxu0
        %v6848 = vadd.f32 0.0, %v6847
        %v6849 = vpop.f32.mrf.mxu0
        %6850 = vmatprep.mubr.bf16.mxu0 0
        %6851 = vmatmul.mubr.bf16.gmra.mxu0 %v6797
        %v6852 = vpop.f32.mrf.mxu0
        %v6853 = vadd.f32 0.0, %v6852
        %v6854 = vpop.f32.mrf.mxu0
        %v6855 = vpop.f32.mrf.mxu0
        %v6856 = vadd.f32 0.0, %v6855
        %v6857 = vpop.f32.mrf.mxu0
        %6858 = vmatprep.mubr.bf16.mxu0 0
        %6859 = vmatmul.mubr.bf16.gmra.mxu0 %v6800
        %v6860 = vpop.f32.mrf.mxu0
        %v6861 = vadd.f32 0.0, %v6860
        %v6862 = vpop.f32.mrf.mxu0
        %v6863 = vpop.f32.mrf.mxu0
        %v6864 = vadd.f32 0.0, %v6863
        %v6865 = vpop.f32.mrf.mxu0
        %6866 = vdwg.mxu0
        %v6867 = vadd.f32 %v6680, %v6837
        %v6868 = vadd.f32 %v6681, %v6840
        %v6869 = vadd.f32 %v6682, %v6845
        %v6870 = vadd.f32 %v6683, %v6848
        %v6871 = vadd.f32 %v6684, %v6853
        %v6872 = vadd.f32 %v6685, %v6856
        %v6873 = vadd.f32 %v6686, %v6861
        %v6874 = vadd.f32 %v6687, %v6864
        %6875 = vmatprep.subr.bf16.mxu0 0
        %6876 = vmatpush1.bf16.msra.mxu0 0
        %6877 = vmatprep.subr.bf16.mxu0 0
        %6878 = vmatpush1.bf16.msra.mxu0 0
        %6879 = vmatprep.subr.bf16.mxu0 0
        %6880 = vmatpush1.bf16.msra.mxu0 0
        %6881 = vmatprep.subr.bf16.mxu0 0
        %6882 = vmatpush1.bf16.msra.mxu0 0
        %6883 = vmatprep.subr.bf16.mxu0 0
        %6884 = vmatpush1.bf16.msra.mxu0 %v5463
        %6885 = vmatprep.subr.bf16.mxu0 0
        %6886 = vmatpush1.bf16.msra.mxu0 %v5462
        %6887 = vmatprep.subr.bf16.mxu0 0
        %6888 = vmatpush1.bf16.msra.mxu0 %v5461
        %6889 = vmatprep.subr.bf16.mxu0 0
        %6890 = vmatpush1.bf16.msra.mxu0 %v5460
        %6891 = vmatprep.subr.bf16.mxu0 0
        %6892 = vmatpush2.bf16.msra.mxu0 0
        %6893 = vmatprep.subr.bf16.mxu0 0
        %6894 = vmatpush2.bf16.msra.mxu0 0
        %6895 = vmatprep.subr.bf16.mxu0 0
        %6896 = vmatpush2.bf16.msra.mxu0 0
        %6897 = vmatprep.subr.bf16.mxu0 0
        %6898 = vmatpush2.bf16.msra.mxu0 0
        %6899 = vmatprep.subr.bf16.mxu0 0
        %6900 = vmatpush2.bf16.msra.mxu0 0
        %6901 = vmatprep.subr.bf16.mxu0 0
        %6902 = vmatpush2.bf16.msra.mxu0 0
        %6903 = vmatprep.subr.bf16.mxu0 0
        %6904 = vmatpush2.bf16.msra.mxu0 0
        %6905 = vmatprep.subr.bf16.mxu0 0
        %6906 = vmatpush2.bf16.msra.mxu0 0
        %6907 = vmatprep.mubr.bf16.mxu0 0
        %6908 = vmatmul.mubr.bf16.gmra.mxu0 %v2026
        %v6909 = vpop.f32.mrf.mxu0
        %v6910 = vadd.f32 0.0, %v6909
        %v6911 = vpop.f32.mrf.mxu0
        %v6912 = vpop.f32.mrf.mxu0
        %v6913 = vadd.f32 0.0, %v6912
        %v6914 = vpop.f32.mrf.mxu0
        %6915 = vmatprep.mubr.bf16.mxu0 0
        %6916 = vmatmul.mubr.bf16.gmra.mxu0 %v2029
        %v6917 = vpop.f32.mrf.mxu0
        %v6918 = vadd.f32 0.0, %v6917
        %v6919 = vpop.f32.mrf.mxu0
        %v6920 = vpop.f32.mrf.mxu0
        %v6921 = vadd.f32 0.0, %v6920
        %v6922 = vpop.f32.mrf.mxu0
        %6923 = vmatprep.mubr.bf16.mxu0 0
        %6924 = vmatmul.mubr.bf16.gmra.mxu0 %v2032
        %v6925 = vpop.f32.mrf.mxu0
        %v6926 = vadd.f32 0.0, %v6925
        %v6927 = vpop.f32.mrf.mxu0
        %v6928 = vpop.f32.mrf.mxu0
        %v6929 = vadd.f32 0.0, %v6928
        %v6930 = vpop.f32.mrf.mxu0
        %6931 = vmatprep.mubr.bf16.mxu0 0
        %6932 = vmatmul.mubr.bf16.gmra.mxu0 %v2035
        %v6933 = vpop.f32.mrf.mxu0
        %v6934 = vadd.f32 0.0, %v6933
        %v6935 = vpop.f32.mrf.mxu0
        %v6936 = vpop.f32.mrf.mxu0
        %v6937 = vadd.f32 0.0, %v6936
        %v6938 = vpop.f32.mrf.mxu0
        %6939 = vdwg.mxu0
        %v6940 = vpack.c.bf16 %v6913, %v6910
        %v6941 = vpack.c.bf16 %v6921, %v6918
        %v6942 = vpack.c.bf16 %v6929, %v6926
        %v6943 = vpack.c.bf16 %v6937, %v6934
        %s6944 = scalar_lea.vmem [#allocation7], 1120
        %v6945 = vld [vmem:[%s6944] sm:$0xf]
        %v6946 = vld [vmem:[%s6944 + $0x4] sm:$0xf]
        %v6947 = vld [vmem:[%s6944 + $0x8] sm:$0xf]
        %v6948 = vld [vmem:[%s6944 + $0xc] sm:$0xf]
        %v6949 = vld [vmem:[%s6944 + $0x10] sm:$0xf]
        %v6950 = vld [vmem:[%s6944 + $0x14] sm:$0xf]
        %v6951 = vld [vmem:[%s6944 + $0x18] sm:$0xf]
        %v6952 = vld [vmem:[%s6944 + $0x1c] sm:$0xf]
        %v6961 = vunpack.c.l.b16 %v6945
        %v6962 = vunpack.c.l.b16 %v6946
        %v6963 = vunpack.c.l.b16 %v6947
        %v6964 = vunpack.c.l.b16 %v6948
        %v6965 = vunpack.c.l.b16 %v6949
        %v6966 = vunpack.c.l.b16 %v6950
        %v6967 = vunpack.c.l.b16 %v6951
        %v6968 = vunpack.c.l.b16 %v6952
        %v6969 = vpack.c.b16 %v6962, %v6961
        %v6970 = vpack.c.b16 %v6964, %v6963
        %v6971 = vpack.c.b16 %v6966, %v6965
        %v6972 = vpack.c.b16 %v6968, %v6967
        %v6978 = vsel %vm327, %v6940, 0
        %v6981 = vsel %vm327, %v6941, 0
        %v6984 = vsel %vm327, %v6942, 0
        %v6987 = vsel %vm327, %v6943, 0
        %6989 = vmatprep.subr.bf16.mxu0 0
        %6990 = vmatpush1.bf16.msra.mxu0 0
        %6991 = vmatprep.subr.bf16.mxu0 0
        %6992 = vmatpush1.bf16.msra.mxu0 0
        %6993 = vmatprep.subr.bf16.mxu0 0
        %6994 = vmatpush1.bf16.msra.mxu0 0
        %6995 = vmatprep.subr.bf16.mxu0 0
        %6996 = vmatpush1.bf16.msra.mxu0 0
        %6997 = vmatprep.subr.bf16.mxu0 0
        %6998 = vmatpush1.bf16.msra.mxu0 %v6972
        %6999 = vmatprep.subr.bf16.mxu0 0
        %7000 = vmatpush1.bf16.msra.mxu0 %v6971
        %7001 = vmatprep.subr.bf16.mxu0 0
        %7002 = vmatpush1.bf16.msra.mxu0 %v6970
        %7003 = vmatprep.subr.bf16.mxu0 0
        %7004 = vmatpush1.bf16.msra.mxu0 %v6969
        %7005 = vmatprep.subr.bf16.mxu0 0
        %7006 = vmatpush2.bf16.msra.mxu0 0
        %7007 = vmatprep.subr.bf16.mxu0 0
        %7008 = vmatpush2.bf16.msra.mxu0 0
        %7009 = vmatprep.subr.bf16.mxu0 0
        %7010 = vmatpush2.bf16.msra.mxu0 0
        %7011 = vmatprep.subr.bf16.mxu0 0
        %7012 = vmatpush2.bf16.msra.mxu0 0
        %7013 = vmatprep.subr.bf16.mxu0 0
        %7014 = vmatpush2.bf16.msra.mxu0 0
        %7015 = vmatprep.subr.bf16.mxu0 0
        %7016 = vmatpush2.bf16.msra.mxu0 0
        %7017 = vmatprep.subr.bf16.mxu0 0
        %7018 = vmatpush2.bf16.msra.mxu0 0
        %7019 = vmatprep.subr.bf16.mxu0 0
        %7020 = vmatpush2.bf16.msra.mxu0 0
        %7021 = vmatprep.mubr.bf16.mxu0 0
        %7022 = vmatmul.mubr.bf16.gmra.mxu0 %v6978
        %v7023 = vpop.f32.mrf.mxu0
        %v7024 = vadd.f32 0.0, %v7023
        %v7025 = vpop.f32.mrf.mxu0
        %v7026 = vpop.f32.mrf.mxu0
        %v7027 = vadd.f32 0.0, %v7026
        %v7028 = vpop.f32.mrf.mxu0
        %7029 = vmatprep.mubr.bf16.mxu0 0
        %7030 = vmatmul.mubr.bf16.gmra.mxu0 %v6981
        %v7031 = vpop.f32.mrf.mxu0
        %v7032 = vadd.f32 0.0, %v7031
        %v7033 = vpop.f32.mrf.mxu0
        %v7034 = vpop.f32.mrf.mxu0
        %v7035 = vadd.f32 0.0, %v7034
        %v7036 = vpop.f32.mrf.mxu0
        %7037 = vmatprep.mubr.bf16.mxu0 0
        %7038 = vmatmul.mubr.bf16.gmra.mxu0 %v6984
        %v7039 = vpop.f32.mrf.mxu0
        %v7040 = vadd.f32 0.0, %v7039
        %v7041 = vpop.f32.mrf.mxu0
        %v7042 = vpop.f32.mrf.mxu0
        %v7043 = vadd.f32 0.0, %v7042
        %v7044 = vpop.f32.mrf.mxu0
        %7045 = vmatprep.mubr.bf16.mxu0 0
        %7046 = vmatmul.mubr.bf16.gmra.mxu0 %v6987
        %v7047 = vpop.f32.mrf.mxu0
        %v7048 = vadd.f32 0.0, %v7047
        %v7049 = vpop.f32.mrf.mxu0
        %v7050 = vpop.f32.mrf.mxu0
        %v7051 = vadd.f32 0.0, %v7050
        %v7052 = vpop.f32.mrf.mxu0
        %7053 = vdwg.mxu0
        %v7054 = vadd.f32 %v6867, %v7024
        %v7055 = vadd.f32 %v6868, %v7027
        %v7056 = vadd.f32 %v6869, %v7032
        %v7057 = vadd.f32 %v6870, %v7035
        %v7058 = vadd.f32 %v6871, %v7040
        %v7059 = vadd.f32 %v6872, %v7043
        %v7060 = vadd.f32 %v6873, %v7048
        %v7061 = vadd.f32 %v6874, %v7051
        %v7062 = vmax.f32 %v7054, 0.0
        %v7063 = vmax.f32 %v7055, 0.0
        %v7064 = vmax.f32 %v7056, 0.0
        %v7065 = vmax.f32 %v7057, 0.0
        %v7066 = vmax.f32 %v7058, 0.0
        %v7067 = vmax.f32 %v7059, 0.0
        %v7068 = vmax.f32 %v7060, 0.0
        %v7069 = vmax.f32 %v7061, 0.0
        %v7070 = vadd.f32 %v7062, %v3842
        %v7071 = vadd.f32 %v7063, %v3843
        %v7072 = vadd.f32 %v7064, %v3844
        %v7073 = vadd.f32 %v7065, %v3845
        %v7074 = vadd.f32 %v7066, %v3846
        %v7075 = vadd.f32 %v7067, %v3847
        %v7076 = vadd.f32 %v7068, %v3848
        %v7077 = vadd.f32 %v7069, %v3849
        %v7078 = vpack.c.bf16 %v7071, %v7070
        %v7079 = vpack.c.bf16 %v7073, %v7072
        %v7080 = vpack.c.bf16 %v7075, %v7074
        %v7081 = vpack.c.bf16 %v7077, %v7076
        %v7082 = vld [vmem:[#allocation8] sm:$0xf]
        %v7083 = vld [vmem:[#allocation8 + $0x4] sm:$0xf]
        %v7084 = vld [vmem:[#allocation8 + $0x8] sm:$0xf]
        %v7085 = vld [vmem:[#allocation8 + $0xc] sm:$0xf]
        %v7086 = vld [vmem:[#allocation8 + $0x10] sm:$0xf]
        %v7087 = vld [vmem:[#allocation8 + $0x14] sm:$0xf]
        %v7088 = vld [vmem:[#allocation8 + $0x18] sm:$0xf]
        %v7089 = vld [vmem:[#allocation8 + $0x1c] sm:$0xf]
        %v7098 = vunpack.c.l.b16 %v7082
        %v7099 = vunpack.c.l.b16 %v7083
        %v7100 = vunpack.c.l.b16 %v7084
        %v7101 = vunpack.c.l.b16 %v7085
        %v7102 = vunpack.c.l.b16 %v7086
        %v7103 = vunpack.c.l.b16 %v7087
        %v7104 = vunpack.c.l.b16 %v7088
        %v7105 = vunpack.c.l.b16 %v7089
        %v7106 = vpack.c.b16 %v7099, %v7098
        %v7107 = vpack.c.b16 %v7101, %v7100
        %v7108 = vpack.c.b16 %v7103, %v7102
        %v7109 = vpack.c.b16 %v7105, %v7104
        %v7115 = vsel %vm327, %v7078, 0
        %v7118 = vsel %vm327, %v7079, 0
        %v7121 = vsel %vm327, %v7080, 0
        %v7124 = vsel %vm327, %v7081, 0
        %7126 = vmatprep.subr.bf16.mxu0 0
        %7127 = vmatpush1.bf16.msra.mxu0 0
        %7128 = vmatprep.subr.bf16.mxu0 0
        %7129 = vmatpush1.bf16.msra.mxu0 0
        %7130 = vmatprep.subr.bf16.mxu0 0
        %7131 = vmatpush1.bf16.msra.mxu0 0
        %7132 = vmatprep.subr.bf16.mxu0 0
        %7133 = vmatpush1.bf16.msra.mxu0 0
        %7134 = vmatprep.subr.bf16.mxu0 0
        %7135 = vmatpush1.bf16.msra.mxu0 %v7109
        %7136 = vmatprep.subr.bf16.mxu0 0
        %7137 = vmatpush1.bf16.msra.mxu0 %v7108
        %7138 = vmatprep.subr.bf16.mxu0 0
        %7139 = vmatpush1.bf16.msra.mxu0 %v7107
        %7140 = vmatprep.subr.bf16.mxu0 0
        %7141 = vmatpush1.bf16.msra.mxu0 %v7106
        %7142 = vmatprep.subr.bf16.mxu0 0
        %7143 = vmatpush2.bf16.msra.mxu0 0
        %7144 = vmatprep.subr.bf16.mxu0 0
        %7145 = vmatpush2.bf16.msra.mxu0 0
        %7146 = vmatprep.subr.bf16.mxu0 0
        %7147 = vmatpush2.bf16.msra.mxu0 0
        %7148 = vmatprep.subr.bf16.mxu0 0
        %7149 = vmatpush2.bf16.msra.mxu0 0
        %7150 = vmatprep.subr.bf16.mxu0 0
        %7151 = vmatpush2.bf16.msra.mxu0 0
        %7152 = vmatprep.subr.bf16.mxu0 0
        %7153 = vmatpush2.bf16.msra.mxu0 0
        %7154 = vmatprep.subr.bf16.mxu0 0
        %7155 = vmatpush2.bf16.msra.mxu0 0
        %7156 = vmatprep.subr.bf16.mxu0 0
        %7157 = vmatpush2.bf16.msra.mxu0 0
        %7158 = vmatprep.mubr.bf16.mxu0 0
        %7159 = vmatmul.mubr.bf16.gmra.mxu0 %v7115
        %v7160 = vpop.f32.mrf.mxu0
        %v7161 = vadd.f32 0.0, %v7160
        %v7162 = vpop.f32.mrf.mxu0
        %v7163 = vpop.f32.mrf.mxu0
        %v7164 = vadd.f32 0.0, %v7163
        %v7165 = vpop.f32.mrf.mxu0
        %7166 = vmatprep.mubr.bf16.mxu0 0
        %7167 = vmatmul.mubr.bf16.gmra.mxu0 %v7118
        %v7168 = vpop.f32.mrf.mxu0
        %v7169 = vadd.f32 0.0, %v7168
        %v7170 = vpop.f32.mrf.mxu0
        %v7171 = vpop.f32.mrf.mxu0
        %v7172 = vadd.f32 0.0, %v7171
        %v7173 = vpop.f32.mrf.mxu0
        %7174 = vmatprep.mubr.bf16.mxu0 0
        %7175 = vmatmul.mubr.bf16.gmra.mxu0 %v7121
        %v7176 = vpop.f32.mrf.mxu0
        %v7177 = vadd.f32 0.0, %v7176
        %v7178 = vpop.f32.mrf.mxu0
        %v7179 = vpop.f32.mrf.mxu0
        %v7180 = vadd.f32 0.0, %v7179
        %v7181 = vpop.f32.mrf.mxu0
        %7182 = vmatprep.mubr.bf16.mxu0 0
        %7183 = vmatmul.mubr.bf16.gmra.mxu0 %v7124
        %v7184 = vpop.f32.mrf.mxu0
        %v7185 = vadd.f32 0.0, %v7184
        %v7186 = vpop.f32.mrf.mxu0
        %v7187 = vpop.f32.mrf.mxu0
        %v7188 = vadd.f32 0.0, %v7187
        %v7189 = vpop.f32.mrf.mxu0
        %7190 = vdwg.mxu0
        %vm7191 = vcmask 80896
        %v7192 = vsel %vm7191, %v7161, 0.0
        %v7193 = vsel %vm7191, %v7164, 0.0
        %v7194 = vadd.f32 %v7192, %v7193
        %v7195 = vsel %vm7191, %v7169, 0.0
        %v7196 = vadd.f32 %v7194, %v7195
        %v7197 = vsel %vm7191, %v7172, 0.0
        %v7198 = vadd.f32 %v7196, %v7197
        %v7199 = vsel %vm7191, %v7177, 0.0
        %v7200 = vadd.f32 %v7198, %v7199
        %v7201 = vsel %vm7191, %v7180, 0.0
        %v7202 = vadd.f32 %v7200, %v7201
        %v7203 = vsel %vm7191, %v7185, 0.0
        %v7204 = vadd.f32 %v7202, %v7203
        %v7205 = vsel %vm7191, %v7188, 0.0
        %v7206 = vadd.f32 %v7204, %v7205
        %v7207 = vrot.slane %v7206, 4
        %v7208 = vadd.f32 %v7206, %v7207
        %v7209 = vrot.slane %v7208, 2
        %v7210 = vadd.f32 %v7208, %v7209
        %v7211 = vrot.slane %v7210, 1
        %v7212 = vadd.f32 %v7210, %v7211
        %v7213 = vrcp.pop 64.0
        %v7214 = vmul.f32 %v7212, %v7213
        %v7215 = vld [vmem:[%s4] sm:$0x1]
        %v7216 = vadd.f32 %v7214, %v7215
        %vm7217 = vcmask 73728
        %7218 = vst.msk [vmem:[%s285] sm:$0x1] %vm7217, %v7216
        %s7219 = sand.u32 %s142, 1
        %s7220 = scalar_lea.sflag [#allocation4], %s7219
        %s7221 = sand.u32 %s142, 1
        %s7222 = scalar_lea.vmem [#allocation10], %s7221
        // Predicated region
        $region57: #{resnet_f_forward.1} parent=39 // pred_check
          %p7223 = pneg %p152
        $region58: #{resnet_f_forward.1} parent=39 // pred_check_branch
          %7225 = sbr.rel (%p7223) target = $region60
        $region59: #{resnet_f_forward.1} parent=39 // pred_region
          %s7227 = ssub.s32 16, 16
          %7228 = vsyncadd %s7220, %s7227
          %s7229 = smul.addr %s24, 16
          %s7230 = scalar_lea.hbm %s5, %s7229
          %s7232 = sshll.u32 %s7222, 4
          %s7233 = int_to_ptr.vmem [resolvable:$true] %s7232
          %7235 = dma.vmem_to_hbm [thread:$0]  %s7233, 16, %s7230, %s7220
        $region60: #{resnet_f_forward.1} parent=39 // pred_fallthru
          _
      $region40: #{resnet_f_forward.1} parent=5 // pred_fallthru
        _
      %p7236 = scmp.le.s32.totalorder 2, %s19
      // Predicated region
      $region61: #{resnet_f_forward.1} parent=5 // pred_check
        %p7237 = pneg %p7236
      $region62: #{resnet_f_forward.1} parent=5 // pred_check_branch
        %7239 = sbr.rel (%p7237) target = $region64
      $region63: #{resnet_f_forward.1} parent=5 // pred_region
        %s7240 = ssub.s32 %s19, 2
        // Predicated region
        $region65: #{resnet_f_forward.1} parent=63 // pred_check
          %p7241 = pneg %p158
        $region66: #{resnet_f_forward.1} parent=63 // pred_check_branch
          %7243 = sbr.rel (%p7241) target = $region68
        $region67: #{resnet_f_forward.1} parent=63 // pred_region
          %s7244 = sand.u32 %s143, 1
          %s7245 = scalar_lea.sflag [#allocation4], %s7244
          %s7246 = sand.u32 %s143, 1
          %s7247 = scalar_lea.vmem [#allocation10], %s7246
          %7248 = dma.done %s7245, 16
        $region68: #{resnet_f_forward.1} parent=63 // pred_fallthru
          _
      $region64: #{resnet_f_forward.1} parent=5 // pred_fallthru
        _
    $region6: #{resnet_f_forward.1} parent=1 // loop_footer
      %s23 = sadd.s32 1, %s19
    $region7: #{resnet_f_forward.1} parent=1 // loop_footer_branch
      %18 = sbr.rel target = $region3
    $region8: #{resnet_f_forward.1} parent=1 // loop_exit
      _
    %7249 = vsyncpa [#allocation3], 1
    %s7250 = scalar_lea.sflag [#allocation3], 1
    %7251 = vsyncpa %s7250, 1
    %7252 = vsyncpa [#allocation6], 1
    %7253 = vsyncpa [#allocation9], 1
    %7254 = vsyncpa [#allocation4], 1
    %s7255 = scalar_lea.sflag [#allocation4], 1
    %7256 = vsyncpa %s7255, 1

</llo_original>
